<compile_context>
chip_gen: v6e
topology: v6e:2x2x1
jax: 0.10.0
libtpu: 0.0.40
codegen_flags: <defaults>
</compile_context>

<pallas_src>
import functools

import jax
import jax.numpy as jnp
from jax.experimental import pallas as pl
from jax.experimental.pallas import tpu as pltpu


# ----------------------------- tiling helpers -----------------------------
def _choose_tile(dim, preferred, align):
    """Largest multiple of `align` that divides `dim` and is <= preferred,
    or `dim` itself (full extent) when dim is small / nothing divides."""
    if dim <= preferred:
        return dim
    t = (preferred // align) * align
    while t >= align:
        if dim % t == 0:
            return t
        t -= align
    return dim


# ------------------------- tiled linear (+activation) -------------------------
def _linear_kernel(x_ref, w_ref, b_ref, o_ref, acc_ref, *, activation):
    @pl.when(pl.program_id(2) == 0)
    def _():
        acc_ref[...] = jnp.zeros_like(acc_ref)

    acc_ref[...] += jnp.dot(x_ref[...].astype(jnp.bfloat16), w_ref[...],
                            preferred_element_type=jnp.float32)

    @pl.when(pl.program_id(2) == pl.num_programs(2) - 1)
    def _():
        y = acc_ref[...] + b_ref[...]
        if activation == "gelu":
            # tanh-approx GELU (guaranteed Mosaic lowering).
            # TODO(synk): exact erf-GELU for bit parity with HF bert-base.
            y = 0.5 * y * (1.0 + jnp.tanh(0.7978845608028654
                                          * (y + 0.044715 * y * y * y)))
        o_ref[...] = y.astype(o_ref.dtype)


def linear(x, w, b, activation="none", out_dtype=jnp.float32):
    """x: (M, K), w: (K, N) bf16, b: (1, N) f32 -> (M, N) out_dtype."""
    M, K = x.shape
    N = w.shape[1]
    tm = _choose_tile(M, 512, 8)
    tn = _choose_tile(N, 512, 128)
    tk = _choose_tile(K, 1024, 128)          # full K when it fits -> no K loop
    grid = (M // tm, N // tn, K // tk)
    return pl.pallas_call(
        functools.partial(_linear_kernel, activation=activation),
        out_shape=jax.ShapeDtypeStruct((M, N), out_dtype),
        grid=grid,
        in_specs=[
            pl.BlockSpec((tm, tk), lambda i, j, k: (i, k)),
            pl.BlockSpec((tk, tn), lambda i, j, k: (k, j)),
            pl.BlockSpec((1, tn), lambda i, j, k: (0, j)),
        ],
        out_specs=pl.BlockSpec((tm, tn), lambda i, j, k: (i, j)),
        scratch_shapes=[pltpu.VMEM((tm, tn), jnp.float32)],
        compiler_params=pltpu.CompilerParams(
            dimension_semantics=("parallel", "parallel", "arbitrary")),
    )(x, w, b)


# ------------------ tiled linear + residual + LayerNorm (fused) ------------------
def _linear_res_ln_kernel(x_ref, w_ref, b_ref, res_ref, g_ref, beta_ref,
                          o_ref, acc_ref, *, eps):
    @pl.when(pl.program_id(1) == 0)
    def _():
        acc_ref[...] = jnp.zeros_like(acc_ref)

    acc_ref[...] += jnp.dot(x_ref[...].astype(jnp.bfloat16), w_ref[...],
                            preferred_element_type=jnp.float32)

    @pl.when(pl.program_id(1) == pl.num_programs(1) - 1)
    def _():
        h = res_ref[...] + acc_ref[...] + b_ref[...]
        mu = jnp.mean(h, axis=-1, keepdims=True)
        var = jnp.mean(jnp.square(h - mu), axis=-1, keepdims=True)
        o_ref[...] = (h - mu) * jax.lax.rsqrt(var + eps) * g_ref[...] + beta_ref[...]


def linear_residual_ln(x, w, b, residual, gamma, beta, eps=1e-12):
    """LN(residual + x @ w + b).  N kept un-tiled so LN sees the full row."""
    M, K = x.shape
    N = w.shape[1]
    tm = _choose_tile(M, 512, 8)
    tk = _choose_tile(K, 1024, 128)
    grid = (M // tm, K // tk)
    return pl.pallas_call(
        functools.partial(_linear_res_ln_kernel, eps=eps),
        out_shape=jax.ShapeDtypeStruct((M, N), jnp.float32),
        grid=grid,
        in_specs=[
            pl.BlockSpec((tm, tk), lambda i, k: (i, k)),
            pl.BlockSpec((tk, N), lambda i, k: (k, 0)),
            pl.BlockSpec((1, N), lambda i, k: (0, 0)),
            pl.BlockSpec((tm, N), lambda i, k: (i, 0)),
            pl.BlockSpec((1, N), lambda i, k: (0, 0)),
            pl.BlockSpec((1, N), lambda i, k: (0, 0)),
        ],
        out_specs=pl.BlockSpec((tm, N), lambda i, k: (i, 0)),
        scratch_shapes=[pltpu.VMEM((tm, N), jnp.float32)],
        compiler_params=pltpu.CompilerParams(
            dimension_semantics=("parallel", "arbitrary")),
    )(x, w, b, residual, gamma, beta)


# ------------------------------ tiled layernorm ------------------------------
def _layernorm_kernel(x_ref, g_ref, b_ref, o_ref, *, eps):
    x = x_ref[...]
    mu = jnp.mean(x, axis=-1, keepdims=True)
    var = jnp.mean(jnp.square(x - mu), axis=-1, keepdims=True)
    o_ref[...] = (x - mu) * jax.lax.rsqrt(var + eps) * g_ref[...] + b_ref[...]


def layernorm(x, g, b, eps=1e-12):
    M, D = x.shape
    tm = _choose_tile(M, 512, 8)
    return pl.pallas_call(
        functools.partial(_layernorm_kernel, eps=eps),
        out_shape=jax.ShapeDtypeStruct((M, D), jnp.float32),
        grid=(M // tm,),
        in_specs=[pl.BlockSpec((tm, D), lambda i: (i, 0)),
                  pl.BlockSpec((1, D), lambda i: (0, 0)),
                  pl.BlockSpec((1, D), lambda i: (0, 0))],
        out_specs=pl.BlockSpec((tm, D), lambda i: (i, 0)),
        compiler_params=pltpu.CompilerParams(dimension_semantics=("parallel",)),
    )(x, g, b)


# ------------------------------ attention kernel ------------------------------
def _attn_kernel(qkv_ref, o_ref, ctx_ref, *, n_heads, d_head, scale):
    x = qkv_ref[0]                       # (S, 3D) bf16, lane-dense
    D = n_heads * d_head
    for h in range(n_heads):             # static unroll over heads
        q = x[:, h * d_head:(h + 1) * d_head]
        k = x[:, D + h * d_head:D + (h + 1) * d_head]
        v = x[:, 2 * D + h * d_head:2 * D + (h + 1) * d_head]
        s = jax.lax.dot_general(q, k, (((1,), (1,)), ((), ())),
                                preferred_element_type=jnp.float32) * scale
        s = s - jnp.max(s, axis=-1, keepdims=True)
        p = jnp.exp(s)
        p = p * pl.reciprocal(jnp.sum(p, axis=-1, keepdims=True), approx=True)
        ctx_ref[:, h * d_head:(h + 1) * d_head] = jnp.dot(
            p.astype(jnp.bfloat16), v, preferred_element_type=jnp.float32)
    # ONE lane-dense store of the assembled context (no per-head masked
    # stores on the pipelined output buffer).
    o_ref[0] = ctx_ref[...].astype(o_ref.dtype)
    # TODO(synk): per-head slabs (d_head=64) are not 128-lane aligned; a wqkv
    # column permutation to 128-aligned slabs would remove the remaining XLU
    # relayouts.  Flash-style KV tiling unnecessary at these S.


def attention(qkv, n_heads):
    """qkv: (B, S, 3D) bf16 fused q|k|v -> ctx (B, S, D) bf16, lane-dense."""
    B, S, threeD = qkv.shape
    D = threeD // 3
    d_head = D // n_heads
    # TODO(synk): on v7x with B == 1, add a second "parallel" grid axis
    # (query tiles / head groups) so both TensorCores get work.
    return pl.pallas_call(
        functools.partial(_attn_kernel, n_heads=n_heads, d_head=d_head,
                          scale=1.0 / (d_head ** 0.5)),
        out_shape=jax.ShapeDtypeStruct((B, S, D), jnp.bfloat16),
        grid=(B,),
        in_specs=[pl.BlockSpec((1, S, threeD), lambda b: (b, 0, 0))],
        out_specs=pl.BlockSpec((1, S, D), lambda b: (b, 0, 0)),
        scratch_shapes=[pltpu.VMEM((S, D), jnp.float32)],
        compiler_params=pltpu.CompilerParams(dimension_semantics=("parallel",)),
    )(qkv)


# ----------------------- GRU input projection (both dirs) -----------------------
def _gru_proj_kernel(x_ref, w_ref, b_ref, o_ref, acc_ref, *, n_parts):
    @pl.when(pl.program_id(1) == 0)
    def _():
        acc_ref[...] = jnp.zeros_like(acc_ref)

    # one pass over x computes gate pre-activations for BOTH directions
    for d in range(2):
        upd = acc_ref[d]
        for p in range(n_parts):          # parts = prev layer's fwd/bwd halves
            upd = upd + jnp.dot(x_ref[p].astype(jnp.bfloat16), w_ref[d, p],
                                preferred_element_type=jnp.float32)
        acc_ref[d] = upd

    @pl.when(pl.program_id(1) == pl.num_programs(1) - 1)
    def _():
        o_ref[...] = acc_ref[...] + b_ref[...]


def gru_input_proj(x_parts, wih, bih):
    """x_parts: (P, M, K); wih: (2, P, K, 3H) bf16; bih: (2, 1, 3H) f32
    -> gi (2, M, 3H) f32 (gate order [r, z, n], torch layout)."""
    P, M, K = x_parts.shape
    threeH = wih.shape[-1]
    tm = _choose_tile(M, 512, 8)
    tk = _choose_tile(K, 1024, 128)
    grid = (M // tm, K // tk)
    return pl.pallas_call(
        functools.partial(_gru_proj_kernel, n_parts=P),
        out_shape=jax.ShapeDtypeStruct((2, M, threeH), jnp.float32),
        grid=grid,
        in_specs=[
            pl.BlockSpec((P, tm, tk), lambda i, k: (0, i, k)),
            pl.BlockSpec((2, P, tk, threeH), lambda i, k: (0, 0, k, 0)),
            pl.BlockSpec((2, 1, threeH), lambda i, k: (0, 0, 0)),
        ],
        out_specs=pl.BlockSpec((2, tm, threeH), lambda i, k: (0, i, 0)),
        scratch_shapes=[pltpu.VMEM((2, tm, threeH), jnp.float32)],
        compiler_params=pltpu.CompilerParams(
            dimension_semantics=("parallel", "arbitrary")),
    )(x_parts, wih, bih)


# ------------------------ bidirectional GRU recurrence ------------------------
def _bigru_kernel(gi_ref, whh_ref, bhh_ref, out_ref, hfin_ref, h_ref,
                  *, hidden, chunk):
    H, T = hidden, chunk
    d = pl.program_id(0)              # 0 = forward, 1 = backward

    @pl.when(pl.program_id(1) == 0)   # first chunk of this direction
    def _():
        h_ref[...] = jnp.zeros_like(h_ref)

    whh = whh_ref[...]                # (H, 3H) bf16  (hoisted)
    bhh = bhh_ref[...]                # (1, 3H) f32   (hoisted)

    def step(t, h):
        # forward walks local times 0..T-1, backward walks T-1..0
        t_loc = (1 - d) * t + d * (T - 1 - t)
        gi = gi_ref[t_loc]            # (B, 3H) f32
        gh = jnp.dot(h.astype(jnp.bfloat16), whh,
                     preferred_element_type=jnp.float32) + bhh
        r = jax.nn.sigmoid(gi[:, :H] + gh[:, :H])
        z = jax.nn.sigmoid(gi[:, H:2 * H] + gh[:, H:2 * H])
        n = jnp.tanh(gi[:, 2 * H:] + r * gh[:, 2 * H:])
        h_new = (1.0 - z) * n + z * h
        out_ref[t_loc] = h_new
        return h_new

    h = jax.lax.fori_loop(0, T, step, h_ref[...], unroll=(T <= 16))
    h_ref[...] = h                    # carry across time chunks
    hfin_ref[...] = h                 # final state for this direction


def bigru_layer(x_parts, lw, hidden, seq_len, batch):
    """x_parts: (P, S*B, K) time-major.
    Returns out (2, S, B, H) direction-major, h_fin (2, B, H)."""
    H, S, B = hidden, seq_len, batch
    # Input projection hoisted out of the recurrence (one tiled MXU pass).
    gi = gru_input_proj(x_parts, lw["wih"], lw["bih"])       # (2, S*B, 3H)
    gi = gi.reshape(2, S, B, 3 * H)

    T = _choose_tile(S, 32, 8)                               # time chunk
    nc = S // T

    def tsel(d, c):            # fwd chunks ascend in time, bwd chunks descend
        return (1 - d) * c + d * (nc - 1 - c)

    out, h_fin = pl.pallas_call(
        functools.partial(_bigru_kernel, hidden=H, chunk=T),
        out_shape=(jax.ShapeDtypeStruct((2, S, B, H), jnp.float32),
                   jax.ShapeDtypeStruct((2, B, H), jnp.float32)),
        grid=(2, nc),
        in_specs=[
            pl.BlockSpec((None, T, B, 3 * H),
                         lambda d, c: (d, tsel(d, c), 0, 0)),
            pl.BlockSpec((None, H, 3 * H), lambda d, c: (d, 0, 0)),
            pl.BlockSpec((None, 1, 3 * H), lambda d, c: (d, 0, 0)),
        ],
        out_specs=(
            pl.BlockSpec((None, T, B, H),
                         lambda d, c: (d, tsel(d, c), 0, 0)),
            pl.BlockSpec((None, B, H), lambda d, c: (d, 0, 0)),
        ),
        scratch_shapes=[pltpu.VMEM((B, H), jnp.float32)],
        compiler_params=pltpu.CompilerParams(
            # direction axis parallel (megacore on v7x); time axis serial.
            dimension_semantics=("parallel", "arbitrary")),
    )(gi, lw["whh"], lw["bhh"])
    return out, h_fin


# --------------------------- synthetic BERT encoder ---------------------------
def bert_layer(x2, p, B, S, n_heads):
    D = x2.shape[1]
    qkv = linear(x2, p["wqkv"], p["bqkv"], out_dtype=jnp.bfloat16)   # (B*S, 3D)
    ctx = attention(qkv.reshape(B, S, 3 * D), n_heads)               # (B,S,D) bf16
    x2 = linear_residual_ln(ctx.reshape(B * S, D), p["wo"], p["bo"],
                            x2, p["ln1_g"], p["ln1_b"])
    h1 = linear(x2, p["w1"], p["b1"], activation="gelu",
                out_dtype=jnp.bfloat16)
    x2 = linear_residual_ln(h1, p["w2"], p["b2"],
                            x2, p["ln2_g"], p["ln2_b"])
    return x2


def bert_encode(params, text):
    """Synthetic bert(text)[0] -> (B, S, D) last hidden states.
    (No attention_mask arg in the reference forward -> all-ones mask.)"""
    B, S = text.shape
    D = params["word_emb"].shape[1]
    emb = (params["word_emb"][text]
           + params["pos_emb"][:S][None, :, :]
           + params["type_emb"][0][None, None, :])
    x2 = layernorm(emb.reshape(B * S, D), params["emb_ln_g"], params["emb_ln_b"])
    for lp in params["bert_layers"]:
        x2 = bert_layer(x2, lp, B, S, params["n_heads"])
    return x2.reshape(B, S, D)


# -------------------------------- full forward --------------------------------
def bert_gru_sentiment(params, text):
    embedded = bert_encode(params, text)            # (B, S, D) == bert(text)[0]
    B, S, D = embedded.shape
    H = params["gru_hidden"]
    # time-major layout for the recurrence; single "part" for the first layer
    x_parts = jnp.transpose(embedded, (1, 0, 2)).reshape(1, S * B, D)
    h_fin = None
    for lw in params["gru"]:
        out, h_fin = bigru_layer(x_parts, lw, H, S, B)
        x_parts = out.reshape(2, S * B, H)          # fwd/bwd halves as parts
        # TODO(synk): inter-layer GRU dropout and self.dropout are identity
        # (inference mode); training-mode stochastic masking not implemented.
    # h_cat == cat(hidden[-2], hidden[-1], dim=1) of the last layer  (B, 2H)
    h_cat = jnp.swapaxes(h_fin, 0, 1).reshape(B, 2 * H)   # tiny (B,2H) copy
    logits = linear(h_cat, params["out_w"], params["out_b"])
    return logits


# ----------------------------- deterministic init -----------------------------
def init_params(key, vocab, max_pos, D, n_heads, ffn, n_bert_layers,
                gru_hidden, gru_layers, out_dim):
    keys = iter(jax.random.split(key, 512))
    bf = jnp.bfloat16
    H = gru_hidden

    def nrm(shape, scale=0.02, dtype=jnp.float32):
        return (scale * jax.random.normal(next(keys), shape)).astype(dtype)

    p = {
        "word_emb": nrm((vocab, D)),
        "pos_emb": nrm((max_pos, D)),
        "type_emb": nrm((2, D)),
        "emb_ln_g": jnp.ones((1, D), jnp.float32),
        "emb_ln_b": jnp.zeros((1, D), jnp.float32),
        "n_heads": n_heads,
        "gru_hidden": H,
    }

    layers = []
    for _ in range(n_bert_layers):
        layers.append({
            "wqkv": nrm((D, 3 * D), dtype=bf),            # fused q|k|v
            "bqkv": jnp.zeros((1, 3 * D), jnp.float32),
            "wo": nrm((D, D), dtype=bf), "bo": jnp.zeros((1, D), jnp.float32),
            "ln1_g": jnp.ones((1, D), jnp.float32), "ln1_b": jnp.zeros((1, D), jnp.float32),
            "w1": nrm((D, ffn), dtype=bf), "b1": jnp.zeros((1, ffn), jnp.float32),
            "w2": nrm((ffn, D), dtype=bf), "b2": jnp.zeros((1, D), jnp.float32),
            "ln2_g": jnp.ones((1, D), jnp.float32), "ln2_b": jnp.zeros((1, D), jnp.float32),
        })
    p["bert_layers"] = layers

    gru = []
    in_parts, in_dim = 1, D
    for _ in range(gru_layers):
        # torch layout: per direction, gate order [r, z, n]; for stacked
        # layers the input features split into `in_parts` = prev fwd/bwd parts.
        gru.append({
            "wih": nrm((2, in_parts, in_dim, 3 * H), 0.1, dtype=bf),
            "whh": nrm((2, H, 3 * H), 0.1, dtype=bf),     # per-direction, no zeros
            "bih": jnp.zeros((2, 1, 3 * H), jnp.float32),
            "bhh": jnp.zeros((2, 1, 3 * H), jnp.float32),
        })
        in_parts, in_dim = 2, H       # bidirectional -> next layer sees 2 parts
    p["gru"] = gru

    p["out_w"] = nrm((2 * H, out_dim), 0.1, dtype=bf)
    p["out_b"] = jnp.zeros((1, out_dim), jnp.float32)
    return p


if __name__ == "__main__":
    B, S = 2, 8
    VOCAB, MAX_POS, D, N_HEADS, FFN, N_BERT_LAYERS = 64, 16, 32, 2, 64, 2
    GRU_HIDDEN, GRU_LAYERS, OUT_DIM = 16, 2, 3

    key = jax.random.PRNGKey(0)
    k_params, k_text = jax.random.split(key)
    params = init_params(k_params, VOCAB, MAX_POS, D, N_HEADS, FFN,
                         N_BERT_LAYERS, GRU_HIDDEN, GRU_LAYERS, OUT_DIM)
    text = jax.random.randint(k_text, (B, S), 0, VOCAB, dtype=jnp.int32)

    forward = jax.jit(lambda t: bert_gru_sentiment(params, t))
    logits = forward(text)
    jax.block_until_ready(logits)
    assert logits.shape == (B, OUT_DIM)
    assert bool(jnp.all(jnp.isfinite(logits)))
    print("KERNEL_OK")
</pallas_src>

<mosaic_0001>
module attributes {stable_mosaic.version = 11 : i64} {
  func.func @_layernorm_kernel(%arg0: i32, %arg1: memref<16x32xf32, #tpu.memory_space<vmem>>, %arg2: memref<1x32xf32, #tpu.memory_space<vmem>>, %arg3: memref<1x32xf32, #tpu.memory_space<vmem>>, %arg4: memref<16x32xf32, #tpu.memory_space<vmem>>) attributes {dimension_semantics = [#tpu.dimension_semantics<parallel>], iteration_bounds = array<i64: 1>, scalar_prefetch = 0 : i64, scratch_operands = 0 : i64, tpu.core_type = #tpu.core_type<tc>, window_params = [{transform_indices = @transform_0, window_bounds = array<i64: 16, 32>}, {pipeline_mode = #tpu.pipeline_mode<synchronous>, transform_indices = @transform_1, window_bounds = array<i64: 1, 32>}, {pipeline_mode = #tpu.pipeline_mode<synchronous>, transform_indices = @transform_2, window_bounds = array<i64: 1, 32>}, {transform_indices = @transform_3, window_bounds = array<i64: 16, 32>}]} {
    %c0 = arith.constant 0 : index
    %c0_0 = arith.constant 0 : index
    %0 = vector.load %arg1[%c0, %c0_0] : memref<16x32xf32, #tpu.memory_space<vmem>>, vector<16x32xf32>
    %cst = arith.constant dense<0.000000e+00> : vector<16xf32>
    %1 = vector.multi_reduction <add>, %0, %cst [1] : vector<16x32xf32> to vector<16xf32>
    %2 = vector.shape_cast %1 : vector<16xf32> to vector<16x1xf32>
    %cst_1 = arith.constant 3.200000e+01 : f32
    %3 = vector.broadcast %cst_1 : f32 to vector<16x1xf32>
    %4 = arith.divf %2, %3 : vector<16x1xf32>
    %5 = vector.broadcast %4 : vector<16x1xf32> to vector<16x32xf32>
    %6 = arith.subf %0, %5 : vector<16x32xf32>
    %7 = arith.mulf %6, %6 : vector<16x32xf32>
    %cst_2 = arith.constant dense<0.000000e+00> : vector<16xf32>
    %8 = vector.multi_reduction <add>, %7, %cst_2 [1] : vector<16x32xf32> to vector<16xf32>
    %9 = vector.shape_cast %8 : vector<16xf32> to vector<16x1xf32>
    %cst_3 = arith.constant 3.200000e+01 : f32
    %10 = vector.broadcast %cst_3 : f32 to vector<16x1xf32>
    %11 = arith.divf %9, %10 : vector<16x1xf32>
    %12 = vector.broadcast %4 : vector<16x1xf32> to vector<16x32xf32>
    %13 = arith.subf %0, %12 : vector<16x32xf32>
    %cst_4 = arith.constant 9.99999996E-13 : f32
    %14 = vector.broadcast %cst_4 : f32 to vector<16x1xf32>
    %15 = arith.addf %11, %14 : vector<16x1xf32>
    %16 = math.rsqrt %15 : vector<16x1xf32>
    %17 = vector.broadcast %16 : vector<16x1xf32> to vector<16x32xf32>
    %18 = arith.mulf %13, %17 : vector<16x32xf32>
    %c0_5 = arith.constant 0 : index
    %c0_6 = arith.constant 0 : index
    %19 = vector.load %arg2[%c0_5, %c0_6] : memref<1x32xf32, #tpu.memory_space<vmem>>, vector<1x32xf32>
    %20 = vector.broadcast %19 : vector<1x32xf32> to vector<16x32xf32>
    %21 = arith.mulf %18, %20 : vector<16x32xf32>
    %c0_7 = arith.constant 0 : index
    %c0_8 = arith.constant 0 : index
    %22 = vector.load %arg3[%c0_7, %c0_8] : memref<1x32xf32, #tpu.memory_space<vmem>>, vector<1x32xf32>
    %23 = vector.broadcast %22 : vector<1x32xf32> to vector<16x32xf32>
    %24 = arith.addf %21, %23 : vector<16x32xf32>
    %c0_9 = arith.constant 0 : index
    %c0_10 = arith.constant 0 : index
    %25 = vector.load %arg4[%c0_9, %c0_10] : memref<16x32xf32, #tpu.memory_space<vmem>>, vector<16x32xf32>
    tpu.vector_store %arg4[%c0_9, %c0_10], %24 {strides = array<i32>} : memref<16x32xf32, #tpu.memory_space<vmem>>, vector<16x32xf32>,
    return
  }
  func.func @transform_0(%arg0: i32) -> (i32, i32) {
    %c0_i32 = arith.constant 0 : i32
    %c0_i32_0 = arith.constant 0 : i32
    return %arg0, %c0_i32 : i32, i32
  }
  func.func @transform_1(%arg0: i32) -> (i32, i32) {
    %c0_i32 = arith.constant 0 : i32
    %c0_i32_0 = arith.constant 0 : i32
    %c0_i32_1 = arith.constant 0 : i32
    return %c0_i32, %c0_i32_0 : i32, i32
  }
  func.func @transform_2(%arg0: i32) -> (i32, i32) {
    %c0_i32 = arith.constant 0 : i32
    %c0_i32_0 = arith.constant 0 : i32
    %c0_i32_1 = arith.constant 0 : i32
    return %c0_i32, %c0_i32_0 : i32, i32
  }
  func.func @transform_3(%arg0: i32) -> (i32, i32) {
    %c0_i32 = arith.constant 0 : i32
    %c0_i32_0 = arith.constant 0 : i32
    return %arg0, %c0_i32 : i32, i32
  }
}

module attributes {stable_mosaic.version = 11 : i64} {
  func.func @_attn_kernel(%arg0: i32, %arg1: memref<1x8x96xbf16, #tpu.memory_space<vmem>>, %arg2: memref<1x8x32xbf16, #tpu.memory_space<vmem>>, %arg3: memref<8x32xf32, #tpu.memory_space<vmem>>) attributes {dimension_semantics = [#tpu.dimension_semantics<parallel>], iteration_bounds = array<i64: 2>, scalar_prefetch = 0 : i64, scratch_operands = 1 : i64, tpu.core_type = #tpu.core_type<tc>, window_params = [{transform_indices = @transform_0, window_bounds = array<i64: 1, 8, 96>}, {transform_indices = @transform_1, window_bounds = array<i64: 1, 8, 32>}]} {
    %c0 = arith.constant 0 : index
    %c0_0 = arith.constant 0 : index
    %c0_1 = arith.constant 0 : index
    %0 = vector.load %arg1[%c0, %c0_0, %c0_1] : memref<1x8x96xbf16, #tpu.memory_space<vmem>>, vector<1x8x96xbf16>
    %1 = vector.shape_cast %0 : vector<1x8x96xbf16> to vector<8x96xbf16>
    %2 = vector.extract_strided_slice %1 {offsets = [0, 0], sizes = [8, 16], strides = [1, 1]} : vector<8x96xbf16> to vector<8x16xbf16>
    %3 = vector.extract_strided_slice %1 {offsets = [0, 32], sizes = [8, 16], strides = [1, 1]} : vector<8x96xbf16> to vector<8x16xbf16>
    %4 = vector.extract_strided_slice %1 {offsets = [0, 64], sizes = [8, 16], strides = [1, 1]} : vector<8x96xbf16> to vector<8x16xbf16>
    %cst = arith.constant dense<0.000000e+00> : vector<8x8xf32>
    %5 = tpu.matmul %2, %3, %cst {dimension_numbers = #tpu.dot_dimension_numbers<[1], [1], [0], [0], [0, 0, 1, 0], [], []>} : vector<8x16xbf16>, vector<8x16xbf16>, vector<8x8xf32> -> vector<8x8xf32>
    %cst_2 = arith.constant 2.500000e-01 : f32
    %6 = vector.broadcast %cst_2 : f32 to vector<8x8xf32>
    %7 = arith.mulf %5, %6 : vector<8x8xf32>
    %cst_3 = arith.constant dense<0xFF800000> : vector<8xf32>
    %8 = vector.multi_reduction <maximumf>, %7, %cst_3 [1] : vector<8x8xf32> to vector<8xf32>
    %9 = vector.shape_cast %8 : vector<8xf32> to vector<8x1xf32>
    %10 = vector.broadcast %9 : vector<8x1xf32> to vector<8x8xf32>
    %11 = arith.subf %7, %10 : vector<8x8xf32>
    %12 = math.exp %11 : vector<8x8xf32>
    %cst_4 = arith.constant dense<0.000000e+00> : vector<8xf32>
    %13 = vector.multi_reduction <add>, %12, %cst_4 [1] : vector<8x8xf32> to vector<8xf32>
    %14 = vector.shape_cast %13 : vector<8xf32> to vector<8x1xf32>
    %15 = tpu.reciprocal %14 {approx = true} : vector<8x1xf32> -> vector<8x1xf32>
    %16 = vector.broadcast %15 : vector<8x1xf32> to vector<8x8xf32>
    %17 = arith.mulf %12, %16 : vector<8x8xf32>
    %18 = arith.truncf %17 : vector<8x8xf32> to vector<8x8xbf16>
    %cst_5 = arith.constant dense<0.000000e+00> : vector<8x16xf32>
    %19 = tpu.matmul %18, %4, %cst_5 {dimension_numbers = #tpu.dot_dimension_numbers<[1], [0], [0], [1], [0, 0, 1, 1], [], []>} : vector<8x8xbf16>, vector<8x16xbf16>, vector<8x16xf32> -> vector<8x16xf32>
    %c0_6 = arith.constant 0 : index
    %c0_7 = arith.constant 0 : index
    %20 = vector.load %arg3[%c0_6, %c0_7] : memref<8x32xf32, #tpu.memory_space<vmem>>, vector<8x16xf32>
    tpu.vector_store %arg3[%c0_6, %c0_7], %19 {strides = array<i32>} : memref<8x32xf32, #tpu.memory_space<vmem>>, vector<8x16xf32>,
    %21 = vector.extract_strided_slice %1 {offsets = [0, 16], sizes = [8, 16], strides = [1, 1]} : vector<8x96xbf16> to vector<8x16xbf16>
    %22 = vector.extract_strided_slice %1 {offsets = [0, 48], sizes = [8, 16], strides = [1, 1]} : vector<8x96xbf16> to vector<8x16xbf16>
    %23 = vector.extract_strided_slice %1 {offsets = [0, 80], sizes = [8, 16], strides = [1, 1]} : vector<8x96xbf16> to vector<8x16xbf16>
    %cst_8 = arith.constant dense<0.000000e+00> : vector<8x8xf32>
    %24 = tpu.matmul %21, %22, %cst_8 {dimension_numbers = #tpu.dot_dimension_numbers<[1], [1], [0], [0], [0, 0, 1, 0], [], []>} : vector<8x16xbf16>, vector<8x16xbf16>, vector<8x8xf32> -> vector<8x8xf32>
    %cst_9 = arith.constant 2.500000e-01 : f32
    %25 = vector.broadcast %cst_9 : f32 to vector<8x8xf32>
    %26 = arith.mulf %24, %25 : vector<8x8xf32>
    %cst_10 = arith.constant dense<0xFF800000> : vector<8xf32>
    %27 = vector.multi_reduction <maximumf>, %26, %cst_10 [1] : vector<8x8xf32> to vector<8xf32>
    %28 = vector.shape_cast %27 : vector<8xf32> to vector<8x1xf32>
    %29 = vector.broadcast %28 : vector<8x1xf32> to vector<8x8xf32>
    %30 = arith.subf %26, %29 : vector<8x8xf32>
    %31 = math.exp %30 : vector<8x8xf32>
    %cst_11 = arith.constant dense<0.000000e+00> : vector<8xf32>
    %32 = vector.multi_reduction <add>, %31, %cst_11 [1] : vector<8x8xf32> to vector<8xf32>
    %33 = vector.shape_cast %32 : vector<8xf32> to vector<8x1xf32>
    %34 = tpu.reciprocal %33 {approx = true} : vector<8x1xf32> -> vector<8x1xf32>
    %35 = vector.broadcast %34 : vector<8x1xf32> to vector<8x8xf32>
    %36 = arith.mulf %31, %35 : vector<8x8xf32>
    %37 = arith.truncf %36 : vector<8x8xf32> to vector<8x8xbf16>
    %cst_12 = arith.constant dense<0.000000e+00> : vector<8x16xf32>
    %38 = tpu.matmul %37, %23, %cst_12 {dimension_numbers = #tpu.dot_dimension_numbers<[1], [0], [0], [1], [0, 0, 1, 1], [], []>} : vector<8x8xbf16>, vector<8x16xbf16>, vector<8x16xf32> -> vector<8x16xf32>
    %c0_13 = arith.constant 0 : index
    %c16 = arith.constant 16 : index
    %39 = vector.load %arg3[%c0_13, %c16] : memref<8x32xf32, #tpu.memory_space<vmem>>, vector<8x16xf32>
    tpu.vector_store %arg3[%c0_13, %c16], %38 {strides = array<i32>} : memref<8x32xf32, #tpu.memory_space<vmem>>, vector<8x16xf32>,
    %c0_14 = arith.constant 0 : index
    %c0_15 = arith.constant 0 : index
    %40 = vector.load %arg3[%c0_14, %c0_15] : memref<8x32xf32, #tpu.memory_space<vmem>>, vector<8x32xf32>
    %41 = arith.truncf %40 : vector<8x32xf32> to vector<8x32xbf16>
    %c0_16 = arith.constant 0 : index
    %c0_17 = arith.constant 0 : index
    %c0_18 = arith.constant 0 : index
    %42 = vector.load %arg2[%c0_16, %c0_17, %c0_18] : memref<1x8x32xbf16, #tpu.memory_space<vmem>>, vector<1x8x32xbf16>
    %43 = vector.shape_cast %42 : vector<1x8x32xbf16> to vector<8x32xbf16>
    %44 = vector.shape_cast %41 : vector<8x32xbf16> to vector<1x8x32xbf16>
    tpu.vector_store %arg2[%c0_16, %c0_17, %c0_18], %44 {strides = array<i32>} : memref<1x8x32xbf16, #tpu.memory_space<vmem>>, vector<1x8x32xbf16>,
    return
  }
  func.func @transform_0(%arg0: i32) -> (i32, i32, i32) {
    %c0_i32 = arith.constant 0 : i32
    %c0_i32_0 = arith.constant 0 : i32
    %c0_i32_1 = arith.constant 0 : i32
    return %arg0, %c0_i32, %c0_i32_0 : i32, i32, i32
  }
  func.func @transform_1(%arg0: i32) -> (i32, i32, i32) {
    %c0_i32 = arith.constant 0 : i32
    %c0_i32_0 = arith.constant 0 : i32
    %c0_i32_1 = arith.constant 0 : i32
    return %arg0, %c0_i32, %c0_i32_0 : i32, i32, i32
  }
}

module attributes {stable_mosaic.version = 11 : i64} {
  func.func @_linear_res_ln_kernel(%arg0: i32, %arg1: i32, %arg2: memref<16x32xbf16, #tpu.memory_space<vmem>>, %arg3: memref<32x32xbf16, #tpu.memory_space<vmem>>, %arg4: memref<1x32xf32, #tpu.memory_space<vmem>>, %arg5: memref<16x32xf32, #tpu.memory_space<vmem>>, %arg6: memref<1x32xf32, #tpu.memory_space<vmem>>, %arg7: memref<1x32xf32, #tpu.memory_space<vmem>>, %arg8: memref<16x32xf32, #tpu.memory_space<vmem>>, %arg9: memref<16x32xf32, #tpu.memory_space<vmem>>) attributes {dimension_semantics = [#tpu.dimension_semantics<parallel>, #tpu.dimension_semantics<arbitrary>], iteration_bounds = array<i64: 1, 1>, scalar_prefetch = 0 : i64, scratch_operands = 1 : i64, tpu.core_type = #tpu.core_type<tc>, window_params = [{transform_indices = @transform_0, window_bounds = array<i64: 16, 32>}, {transform_indices = @transform_1, window_bounds = array<i64: 32, 32>}, {pipeline_mode = #tpu.pipeline_mode<synchronous>, transform_indices = @transform_2, window_bounds = array<i64: 1, 32>}, {transform_indices = @transform_3, window_bounds = array<i64: 16, 32>}, {pipeline_mode = #tpu.pipeline_mode<synchronous>, transform_indices = @transform_4, window_bounds = array<i64: 1, 32>}, {pipeline_mode = #tpu.pipeline_mode<synchronous>, transform_indices = @transform_5, window_bounds = array<i64: 1, 32>}, {transform_indices = @transform_6, window_bounds = array<i64: 16, 32>}]} {
    %c0_i32 = arith.constant 0 : i32
    %0 = arith.cmpi eq, %arg1, %c0_i32 : i32
    %1 = arith.extui %0 : i1 to i32
    %c0_i32_0 = arith.constant 0 : i32
    %2 = arith.cmpi ne, %1, %c0_i32_0 : i32
    scf.if %2 {
      %cst_10 = arith.constant 0.000000e+00 : f32
      %12 = vector.broadcast %cst_10 : f32 to vector<16x32xf32>
      %c0_11 = arith.constant 0 : index
      %c0_12 = arith.constant 0 : index
      %13 = vector.load %arg9[%c0_11, %c0_12] : memref<16x32xf32, #tpu.memory_space<vmem>>, vector<16x32xf32>
      tpu.vector_store %arg9[%c0_11, %c0_12], %12 {strides = array<i32>} : memref<16x32xf32, #tpu.memory_space<vmem>>, vector<16x32xf32>,
    } else {
    }
    %c0 = arith.constant 0 : index
    %c0_1 = arith.constant 0 : index
    %3 = vector.load %arg9[%c0, %c0_1] : memref<16x32xf32, #tpu.memory_space<vmem>>, vector<16x32xf32>
    %c0_2 = arith.constant 0 : index
    %c0_3 = arith.constant 0 : index
    %4 = vector.load %arg2[%c0_2, %c0_3] : memref<16x32xbf16, #tpu.memory_space<vmem>>, vector<16x32xbf16>
    %c0_4 = arith.constant 0 : index
    %c0_5 = arith.constant 0 : index
    %5 = vector.load %arg3[%c0_4, %c0_5] : memref<32x32xbf16, #tpu.memory_space<vmem>>, vector<32x32xbf16>
    %cst = arith.constant dense<0.000000e+00> : vector<16x32xf32>
    %6 = tpu.matmul %4, %5, %cst {dimension_numbers = #tpu.dot_dimension_numbers<[1], [0], [0], [1], [0, 0, 1, 1], [], []>} : vector<16x32xbf16>, vector<32x32xbf16>, vector<16x32xf32> -> vector<16x32xf32>
    %7 = arith.addf %3, %6 : vector<16x32xf32>
    %c0_6 = arith.constant 0 : index
    %c0_7 = arith.constant 0 : index
    %8 = vector.load %arg9[%c0_6, %c0_7] : memref<16x32xf32, #tpu.memory_space<vmem>>, vector<16x32xf32>
    tpu.vector_store %arg9[%c0_6, %c0_7], %7 {strides = array<i32>} : memref<16x32xf32, #tpu.memory_space<vmem>>, vector<16x32xf32>,
    %c0_i32_8 = arith.constant 0 : i32
    %9 = arith.cmpi eq, %arg1, %c0_i32_8 : i32
    %10 = arith.extui %9 : i1 to i32
    %c0_i32_9 = arith.constant 0 : i32
    %11 = arith.cmpi ne, %10, %c0_i32_9 : i32
    scf.if %11 {
      %c0_10 = arith.constant 0 : index
      %c0_11 = arith.constant 0 : index
      %12 = vector.load %arg5[%c0_10, %c0_11] : memref<16x32xf32, #tpu.memory_space<vmem>>, vector<16x32xf32>
      %c0_12 = arith.constant 0 : index
      %c0_13 = arith.constant 0 : index
      %13 = vector.load %arg9[%c0_12, %c0_13] : memref<16x32xf32, #tpu.memory_space<vmem>>, vector<16x32xf32>
      %14 = arith.addf %12, %13 : vector<16x32xf32>
      %c0_14 = arith.constant 0 : index
      %c0_15 = arith.constant 0 : index
      %15 = vector.load %arg4[%c0_14, %c0_15] : memref<1x32xf32, #tpu.memory_space<vmem>>, vector<1x32xf32>
      %16 = vector.broadcast %15 : vector<1x32xf32> to vector<16x32xf32>
      %17 = arith.addf %14, %16 : vector<16x32xf32>
      %cst_16 = arith.constant dense<0.000000e+00> : vector<16xf32>
      %18 = vector.multi_reduction <add>, %17, %cst_16 [1] : vector<16x32xf32> to vector<16xf32>
      %19 = vector.shape_cast %18 : vector<16xf32> to vector<16x1xf32>
      %cst_17 = arith.constant 3.200000e+01 : f32
      %20 = vector.broadcast %cst_17 : f32 to vector<16x1xf32>
      %21 = arith.divf %19, %20 : vector<16x1xf32>
      %22 = vector.broadcast %21 : vector<16x1xf32> to vector<16x32xf32>
      %23 = arith.subf %17, %22 : vector<16x32xf32>
      %24 = arith.mulf %23, %23 : vector<16x32xf32>
      %cst_18 = arith.constant dense<0.000000e+00> : vector<16xf32>
      %25 = vector.multi_reduction <add>, %24, %cst_18 [1] : vector<16x32xf32> to vector<16xf32>
      %26 = vector.shape_cast %25 : vector<16xf32> to vector<16x1xf32>
      %cst_19 = arith.constant 3.200000e+01 : f32
      %27 = vector.broadcast %cst_19 : f32 to vector<16x1xf32>
      %28 = arith.divf %26, %27 : vector<16x1xf32>
      %29 = vector.broadcast %21 : vector<16x1xf32> to vector<16x32xf32>
      %30 = arith.subf %17, %29 : vector<16x32xf32>
      %cst_20 = arith.constant 9.99999996E-13 : f32
      %31 = vector.broadcast %cst_20 : f32 to vector<16x1xf32>
      %32 = arith.addf %28, %31 : vector<16x1xf32>
      %33 = math.rsqrt %32 : vector<16x1xf32>
      %34 = vector.broadcast %33 : vector<16x1xf32> to vector<16x32xf32>
      %35 = arith.mulf %30, %34 : vector<16x32xf32>
      %c0_21 = arith.constant 0 : index
      %c0_22 = arith.constant 0 : index
      %36 = vector.load %arg6[%c0_21, %c0_22] : memref<1x32xf32, #tpu.memory_space<vmem>>, vector<1x32xf32>
      %37 = vector.broadcast %36 : vector<1x32xf32> to vector<16x32xf32>
      %38 = arith.mulf %35, %37 : vector<16x32xf32>
      %c0_23 = arith.constant 0 : index
      %c0_24 = arith.constant 0 : index
      %39 = vector.load %arg7[%c0_23, %c0_24] : memref<1x32xf32, #tpu.memory_space<vmem>>, vector<1x32xf32>
      %40 = vector.broadcast %39 : vector<1x32xf32> to vector<16x32xf32>
      %41 = arith.addf %38, %40 : vector<16x32xf32>
      %c0_25 = arith.constant 0 : index
      %c0_26 = arith.constant 0 : index
      %42 = vector.load %arg8[%c0_25, %c0_26] : memref<16x32xf32, #tpu.memory_space<vmem>>, vector<16x32xf32>
      tpu.vector_store %arg8[%c0_25, %c0_26], %41 {strides = array<i32>} : memref<16x32xf32, #tpu.memory_space<vmem>>, vector<16x32xf32>,
    } else {
    }
    return
  }
  func.func @transform_0(%arg0: i32, %arg1: i32) -> (i32, i32) {
    %c0_i32 = arith.constant 0 : i32
    return %arg0, %arg1 : i32, i32
  }
  func.func @transform_1(%arg0: i32, %arg1: i32) -> (i32, i32) {
    %c0_i32 = arith.constant 0 : i32
    %c0_i32_0 = arith.constant 0 : i32
    return %arg1, %c0_i32 : i32, i32
  }
  func.func @transform_2(%arg0: i32, %arg1: i32) -> (i32, i32) {
    %c0_i32 = arith.constant 0 : i32
    %c0_i32_0 = arith.constant 0 : i32
    %c0_i32_1 = arith.constant 0 : i32
    return %c0_i32, %c0_i32_0 : i32, i32
  }
  func.func @transform_3(%arg0: i32, %arg1: i32) -> (i32, i32) {
    %c0_i32 = arith.constant 0 : i32
    %c0_i32_0 = arith.constant 0 : i32
    return %arg0, %c0_i32 : i32, i32
  }
  func.func @transform_4(%arg0: i32, %arg1: i32) -> (i32, i32) {
    %c0_i32 = arith.constant 0 : i32
    %c0_i32_0 = arith.constant 0 : i32
    %c0_i32_1 = arith.constant 0 : i32
    return %c0_i32, %c0_i32_0 : i32, i32
  }
  func.func @transform_5(%arg0: i32, %arg1: i32) -> (i32, i32) {
    %c0_i32 = arith.constant 0 : i32
    %c0_i32_0 = arith.constant 0 : i32
    %c0_i32_1 = arith.constant 0 : i32
    return %c0_i32, %c0_i32_0 : i32, i32
  }
  func.func @transform_6(%arg0: i32, %arg1: i32) -> (i32, i32) {
    %c0_i32 = arith.constant 0 : i32
    %c0_i32_0 = arith.constant 0 : i32
    return %arg0, %c0_i32 : i32, i32
  }
}

module attributes {stable_mosaic.version = 11 : i64} {
  func.func @_linear_kernel(%arg0: i32, %arg1: i32, %arg2: i32, %arg3: memref<16x32xf32, #tpu.memory_space<vmem>>, %arg4: memref<32x96xbf16, #tpu.memory_space<vmem>>, %arg5: memref<1x96xf32, #tpu.memory_space<vmem>>, %arg6: memref<16x96xbf16, #tpu.memory_space<vmem>>, %arg7: memref<16x96xf32, #tpu.memory_space<vmem>>) attributes {dimension_semantics = [#tpu.dimension_semantics<parallel>, #tpu.dimension_semantics<parallel>, #tpu.dimension_semantics<arbitrary>], iteration_bounds = array<i64: 1, 1, 1>, scalar_prefetch = 0 : i64, scratch_operands = 1 : i64, tpu.core_type = #tpu.core_type<tc>, window_params = [{transform_indices = @transform_0, window_bounds = array<i64: 16, 32>}, {transform_indices = @transform_1, window_bounds = array<i64: 32, 96>}, {transform_indices = @transform_2, window_bounds = array<i64: 1, 96>}, {transform_indices = @transform_3, window_bounds = array<i64: 16, 96>}]} {
    %c0_i32 = arith.constant 0 : i32
    %0 = arith.cmpi eq, %arg2, %c0_i32 : i32
    %1 = arith.extui %0 : i1 to i32
    %c0_i32_0 = arith.constant 0 : i32
    %2 = arith.cmpi ne, %1, %c0_i32_0 : i32
    scf.if %2 {
      %cst_10 = arith.constant 0.000000e+00 : f32
      %13 = vector.broadcast %cst_10 : f32 to vector<16x96xf32>
      %c0_11 = arith.constant 0 : index
      %c0_12 = arith.constant 0 : index
      %14 = vector.load %arg7[%c0_11, %c0_12] : memref<16x96xf32, #tpu.memory_space<vmem>>, vector<16x96xf32>
      tpu.vector_store %arg7[%c0_11, %c0_12], %13 {strides = array<i32>} : memref<16x96xf32, #tpu.memory_space<vmem>>, vector<16x96xf32>,
    } else {
    }
    %c0 = arith.constant 0 : index
    %c0_1 = arith.constant 0 : index
    %3 = vector.load %arg7[%c0, %c0_1] : memref<16x96xf32, #tpu.memory_space<vmem>>, vector<16x96xf32>
    %c0_2 = arith.constant 0 : index
    %c0_3 = arith.constant 0 : index
    %4 = vector.load %arg3[%c0_2, %c0_3] : memref<16x32xf32, #tpu.memory_space<vmem>>, vector<16x32xf32>
    %5 = arith.truncf %4 : vector<16x32xf32> to vector<16x32xbf16>
    %c0_4 = arith.constant 0 : index
    %c0_5 = arith.constant 0 : index
    %6 = vector.load %arg4[%c0_4, %c0_5] : memref<32x96xbf16, #tpu.memory_space<vmem>>, vector<32x96xbf16>
    %cst = arith.constant dense<0.000000e+00> : vector<16x96xf32>
    %7 = tpu.matmul %5, %6, %cst {dimension_numbers = #tpu.dot_dimension_numbers<[1], [0], [0], [1], [0, 0, 1, 1], [], []>} : vector<16x32xbf16>, vector<32x96xbf16>, vector<16x96xf32> -> vector<16x96xf32>
    %8 = arith.addf %3, %7 : vector<16x96xf32>
    %c0_6 = arith.constant 0 : index
    %c0_7 = arith.constant 0 : index
    %9 = vector.load %arg7[%c0_6, %c0_7] : memref<16x96xf32, #tpu.memory_space<vmem>>, vector<16x96xf32>
    tpu.vector_store %arg7[%c0_6, %c0_7], %8 {strides = array<i32>} : memref<16x96xf32, #tpu.memory_space<vmem>>, vector<16x96xf32>,
    %c0_i32_8 = arith.constant 0 : i32
    %10 = arith.cmpi eq, %arg2, %c0_i32_8 : i32
    %11 = arith.extui %10 : i1 to i32
    %c0_i32_9 = arith.constant 0 : i32
    %12 = arith.cmpi ne, %11, %c0_i32_9 : i32
    scf.if %12 {
      %c0_10 = arith.constant 0 : index
      %c0_11 = arith.constant 0 : index
      %13 = vector.load %arg7[%c0_10, %c0_11] : memref<16x96xf32, #tpu.memory_space<vmem>>, vector<16x96xf32>
      %c0_12 = arith.constant 0 : index
      %c0_13 = arith.constant 0 : index
      %14 = vector.load %arg5[%c0_12, %c0_13] : memref<1x96xf32, #tpu.memory_space<vmem>>, vector<1x96xf32>
      %15 = vector.broadcast %14 : vector<1x96xf32> to vector<16x96xf32>
      %16 = arith.addf %13, %15 : vector<16x96xf32>
      %17 = arith.truncf %16 : vector<16x96xf32> to vector<16x96xbf16>
      %c0_14 = arith.constant 0 : index
      %c0_15 = arith.constant 0 : index
      %18 = vector.load %arg6[%c0_14, %c0_15] : memref<16x96xbf16, #tpu.memory_space<vmem>>, vector<16x96xbf16>
      tpu.vector_store %arg6[%c0_14, %c0_15], %17 {strides = array<i32>} : memref<16x96xbf16, #tpu.memory_space<vmem>>, vector<16x96xbf16>,
    } else {
    }
    return
  }
  func.func @transform_0(%arg0: i32, %arg1: i32, %arg2: i32) -> (i32, i32) {
    %c0_i32 = arith.constant 0 : i32
    return %arg0, %arg2 : i32, i32
  }
  func.func @transform_1(%arg0: i32, %arg1: i32, %arg2: i32) -> (i32, i32) {
    %c0_i32 = arith.constant 0 : i32
    return %arg2, %arg1 : i32, i32
  }
  func.func @transform_2(%arg0: i32, %arg1: i32, %arg2: i32) -> (i32, i32) {
    %c0_i32 = arith.constant 0 : i32
    %c0_i32_0 = arith.constant 0 : i32
    return %c0_i32, %arg1 : i32, i32
  }
  func.func @transform_3(%arg0: i32, %arg1: i32, %arg2: i32) -> (i32, i32) {
    %c0_i32 = arith.constant 0 : i32
    return %arg0, %arg1 : i32, i32
  }
}

module attributes {stable_mosaic.version = 11 : i64} {
  func.func @_linear_kernel(%arg0: i32, %arg1: i32, %arg2: i32, %arg3: memref<16x32xf32, #tpu.memory_space<vmem>>, %arg4: memref<32x64xbf16, #tpu.memory_space<vmem>>, %arg5: memref<1x64xf32, #tpu.memory_space<vmem>>, %arg6: memref<16x64xbf16, #tpu.memory_space<vmem>>, %arg7: memref<16x64xf32, #tpu.memory_space<vmem>>) attributes {dimension_semantics = [#tpu.dimension_semantics<parallel>, #tpu.dimension_semantics<parallel>, #tpu.dimension_semantics<arbitrary>], iteration_bounds = array<i64: 1, 1, 1>, scalar_prefetch = 0 : i64, scratch_operands = 1 : i64, tpu.core_type = #tpu.core_type<tc>, window_params = [{transform_indices = @transform_0, window_bounds = array<i64: 16, 32>}, {transform_indices = @transform_1, window_bounds = array<i64: 32, 64>}, {transform_indices = @transform_2, window_bounds = array<i64: 1, 64>}, {transform_indices = @transform_3, window_bounds = array<i64: 16, 64>}]} {
    %c0_i32 = arith.constant 0 : i32
    %0 = arith.cmpi eq, %arg2, %c0_i32 : i32
    %1 = arith.extui %0 : i1 to i32
    %c0_i32_0 = arith.constant 0 : i32
    %2 = arith.cmpi ne, %1, %c0_i32_0 : i32
    scf.if %2 {
      %cst_10 = arith.constant 0.000000e+00 : f32
      %13 = vector.broadcast %cst_10 : f32 to vector<16x64xf32>
      %c0_11 = arith.constant 0 : index
      %c0_12 = arith.constant 0 : index
      %14 = vector.load %arg7[%c0_11, %c0_12] : memref<16x64xf32, #tpu.memory_space<vmem>>, vector<16x64xf32>
      tpu.vector_store %arg7[%c0_11, %c0_12], %13 {strides = array<i32>} : memref<16x64xf32, #tpu.memory_space<vmem>>, vector<16x64xf32>,
    } else {
    }
    %c0 = arith.constant 0 : index
    %c0_1 = arith.constant 0 : index
    %3 = vector.load %arg7[%c0, %c0_1] : memref<16x64xf32, #tpu.memory_space<vmem>>, vector<16x64xf32>
    %c0_2 = arith.constant 0 : index
    %c0_3 = arith.constant 0 : index
    %4 = vector.load %arg3[%c0_2, %c0_3] : memref<16x32xf32, #tpu.memory_space<vmem>>, vector<16x32xf32>
    %5 = arith.truncf %4 : vector<16x32xf32> to vector<16x32xbf16>
    %c0_4 = arith.constant 0 : index
    %c0_5 = arith.constant 0 : index
    %6 = vector.load %arg4[%c0_4, %c0_5] : memref<32x64xbf16, #tpu.memory_space<vmem>>, vector<32x64xbf16>
    %cst = arith.constant dense<0.000000e+00> : vector<16x64xf32>
    %7 = tpu.matmul %5, %6, %cst {dimension_numbers = #tpu.dot_dimension_numbers<[1], [0], [0], [1], [0, 0, 1, 1], [], []>} : vector<16x32xbf16>, vector<32x64xbf16>, vector<16x64xf32> -> vector<16x64xf32>
    %8 = arith.addf %3, %7 : vector<16x64xf32>
    %c0_6 = arith.constant 0 : index
    %c0_7 = arith.constant 0 : index
    %9 = vector.load %arg7[%c0_6, %c0_7] : memref<16x64xf32, #tpu.memory_space<vmem>>, vector<16x64xf32>
    tpu.vector_store %arg7[%c0_6, %c0_7], %8 {strides = array<i32>} : memref<16x64xf32, #tpu.memory_space<vmem>>, vector<16x64xf32>,
    %c0_i32_8 = arith.constant 0 : i32
    %10 = arith.cmpi eq, %arg2, %c0_i32_8 : i32
    %11 = arith.extui %10 : i1 to i32
    %c0_i32_9 = arith.constant 0 : i32
    %12 = arith.cmpi ne, %11, %c0_i32_9 : i32
    scf.if %12 {
      %c0_10 = arith.constant 0 : index
      %c0_11 = arith.constant 0 : index
      %13 = vector.load %arg7[%c0_10, %c0_11] : memref<16x64xf32, #tpu.memory_space<vmem>>, vector<16x64xf32>
      %c0_12 = arith.constant 0 : index
      %c0_13 = arith.constant 0 : index
      %14 = vector.load %arg5[%c0_12, %c0_13] : memref<1x64xf32, #tpu.memory_space<vmem>>, vector<1x64xf32>
      %15 = vector.broadcast %14 : vector<1x64xf32> to vector<16x64xf32>
      %16 = arith.addf %13, %15 : vector<16x64xf32>
      %cst_14 = arith.constant 5.000000e-01 : f32
      %17 = vector.broadcast %cst_14 : f32 to vector<16x64xf32>
      %18 = arith.mulf %17, %16 : vector<16x64xf32>
      %cst_15 = arith.constant 4.471500e-02 : f32
      %19 = vector.broadcast %cst_15 : f32 to vector<16x64xf32>
      %20 = arith.mulf %19, %16 : vector<16x64xf32>
      %21 = arith.mulf %20, %16 : vector<16x64xf32>
      %22 = arith.mulf %21, %16 : vector<16x64xf32>
      %23 = arith.addf %16, %22 : vector<16x64xf32>
      %cst_16 = arith.constant 0.797884583 : f32
      %24 = vector.broadcast %cst_16 : f32 to vector<16x64xf32>
      %25 = arith.mulf %24, %23 : vector<16x64xf32>
      %26 = math.tanh %25 : vector<16x64xf32>
      %cst_17 = arith.constant 1.000000e+00 : f32
      %27 = vector.broadcast %cst_17 : f32 to vector<16x64xf32>
      %28 = arith.addf %27, %26 : vector<16x64xf32>
      %29 = arith.mulf %18, %28 : vector<16x64xf32>
      %30 = arith.truncf %29 : vector<16x64xf32> to vector<16x64xbf16>
      %c0_18 = arith.constant 0 : index
      %c0_19 = arith.constant 0 : index
      %31 = vector.load %arg6[%c0_18, %c0_19] : memref<16x64xbf16, #tpu.memory_space<vmem>>, vector<16x64xbf16>
      tpu.vector_store %arg6[%c0_18, %c0_19], %30 {strides = array<i32>} : memref<16x64xbf16, #tpu.memory_space<vmem>>, vector<16x64xbf16>,
    } else {
    }
    return
  }
  func.func @transform_0(%arg0: i32, %arg1: i32, %arg2: i32) -> (i32, i32) {
    %c0_i32 = arith.constant 0 : i32
    return %arg0, %arg2 : i32, i32
  }
  func.func @transform_1(%arg0: i32, %arg1: i32, %arg2: i32) -> (i32, i32) {
    %c0_i32 = arith.constant 0 : i32
    return %arg2, %arg1 : i32, i32
  }
  func.func @transform_2(%arg0: i32, %arg1: i32, %arg2: i32) -> (i32, i32) {
    %c0_i32 = arith.constant 0 : i32
    %c0_i32_0 = arith.constant 0 : i32
    return %c0_i32, %arg1 : i32, i32
  }
  func.func @transform_3(%arg0: i32, %arg1: i32, %arg2: i32) -> (i32, i32) {
    %c0_i32 = arith.constant 0 : i32
    return %arg0, %arg1 : i32, i32
  }
}

module attributes {stable_mosaic.version = 11 : i64} {
  func.func @_linear_res_ln_kernel(%arg0: i32, %arg1: i32, %arg2: memref<16x64xbf16, #tpu.memory_space<vmem>>, %arg3: memref<64x32xbf16, #tpu.memory_space<vmem>>, %arg4: memref<1x32xf32, #tpu.memory_space<vmem>>, %arg5: memref<16x32xf32, #tpu.memory_space<vmem>>, %arg6: memref<1x32xf32, #tpu.memory_space<vmem>>, %arg7: memref<1x32xf32, #tpu.memory_space<vmem>>, %arg8: memref<16x32xf32, #tpu.memory_space<vmem>>, %arg9: memref<16x32xf32, #tpu.memory_space<vmem>>) attributes {dimension_semantics = [#tpu.dimension_semantics<parallel>, #tpu.dimension_semantics<arbitrary>], iteration_bounds = array<i64: 1, 1>, scalar_prefetch = 0 : i64, scratch_operands = 1 : i64, tpu.core_type = #tpu.core_type<tc>, window_params = [{transform_indices = @transform_0, window_bounds = array<i64: 16, 64>}, {transform_indices = @transform_1, window_bounds = array<i64: 64, 32>}, {pipeline_mode = #tpu.pipeline_mode<synchronous>, transform_indices = @transform_2, window_bounds = array<i64: 1, 32>}, {transform_indices = @transform_3, window_bounds = array<i64: 16, 32>}, {pipeline_mode = #tpu.pipeline_mode<synchronous>, transform_indices = @transform_4, window_bounds = array<i64: 1, 32>}, {pipeline_mode = #tpu.pipeline_mode<synchronous>, transform_indices = @transform_5, window_bounds = array<i64: 1, 32>}, {transform_indices = @transform_6, window_bounds = array<i64: 16, 32>}]} {
    %c0_i32 = arith.constant 0 : i32
    %0 = arith.cmpi eq, %arg1, %c0_i32 : i32
    %1 = arith.extui %0 : i1 to i32
    %c0_i32_0 = arith.constant 0 : i32
    %2 = arith.cmpi ne, %1, %c0_i32_0 : i32
    scf.if %2 {
      %cst_10 = arith.constant 0.000000e+00 : f32
      %12 = vector.broadcast %cst_10 : f32 to vector<16x32xf32>
      %c0_11 = arith.constant 0 : index
      %c0_12 = arith.constant 0 : index
      %13 = vector.load %arg9[%c0_11, %c0_12] : memref<16x32xf32, #tpu.memory_space<vmem>>, vector<16x32xf32>
      tpu.vector_store %arg9[%c0_11, %c0_12], %12 {strides = array<i32>} : memref<16x32xf32, #tpu.memory_space<vmem>>, vector<16x32xf32>,
    } else {
    }
    %c0 = arith.constant 0 : index
    %c0_1 = arith.constant 0 : index
    %3 = vector.load %arg9[%c0, %c0_1] : memref<16x32xf32, #tpu.memory_space<vmem>>, vector<16x32xf32>
    %c0_2 = arith.constant 0 : index
    %c0_3 = arith.constant 0 : index
    %4 = vector.load %arg2[%c0_2, %c0_3] : memref<16x64xbf16, #tpu.memory_space<vmem>>, vector<16x64xbf16>
    %c0_4 = arith.constant 0 : index
    %c0_5 = arith.constant 0 : index
    %5 = vector.load %arg3[%c0_4, %c0_5] : memref<64x32xbf16, #tpu.memory_space<vmem>>, vector<64x32xbf16>
    %cst = arith.constant dense<0.000000e+00> : vector<16x32xf32>
    %6 = tpu.matmul %4, %5, %cst {dimension_numbers = #tpu.dot_dimension_numbers<[1], [0], [0], [1], [0, 0, 1, 1], [], []>} : vector<16x64xbf16>, vector<64x32xbf16>, vector<16x32xf32> -> vector<16x32xf32>
    %7 = arith.addf %3, %6 : vector<16x32xf32>
    %c0_6 = arith.constant 0 : index
    %c0_7 = arith.constant 0 : index
    %8 = vector.load %arg9[%c0_6, %c0_7] : memref<16x32xf32, #tpu.memory_space<vmem>>, vector<16x32xf32>
    tpu.vector_store %arg9[%c0_6, %c0_7], %7 {strides = array<i32>} : memref<16x32xf32, #tpu.memory_space<vmem>>, vector<16x32xf32>,
    %c0_i32_8 = arith.constant 0 : i32
    %9 = arith.cmpi eq, %arg1, %c0_i32_8 : i32
    %10 = arith.extui %9 : i1 to i32
    %c0_i32_9 = arith.constant 0 : i32
    %11 = arith.cmpi ne, %10, %c0_i32_9 : i32
    scf.if %11 {
      %c0_10 = arith.constant 0 : index
      %c0_11 = arith.constant 0 : index
      %12 = vector.load %arg5[%c0_10, %c0_11] : memref<16x32xf32, #tpu.memory_space<vmem>>, vector<16x32xf32>
      %c0_12 = arith.constant 0 : index
      %c0_13 = arith.constant 0 : index
      %13 = vector.load %arg9[%c0_12, %c0_13] : memref<16x32xf32, #tpu.memory_space<vmem>>, vector<16x32xf32>
      %14 = arith.addf %12, %13 : vector<16x32xf32>
      %c0_14 = arith.constant 0 : index
      %c0_15 = arith.constant 0 : index
      %15 = vector.load %arg4[%c0_14, %c0_15] : memref<1x32xf32, #tpu.memory_space<vmem>>, vector<1x32xf32>
      %16 = vector.broadcast %15 : vector<1x32xf32> to vector<16x32xf32>
      %17 = arith.addf %14, %16 : vector<16x32xf32>
      %cst_16 = arith.constant dense<0.000000e+00> : vector<16xf32>
      %18 = vector.multi_reduction <add>, %17, %cst_16 [1] : vector<16x32xf32> to vector<16xf32>
      %19 = vector.shape_cast %18 : vector<16xf32> to vector<16x1xf32>
      %cst_17 = arith.constant 3.200000e+01 : f32
      %20 = vector.broadcast %cst_17 : f32 to vector<16x1xf32>
      %21 = arith.divf %19, %20 : vector<16x1xf32>
      %22 = vector.broadcast %21 : vector<16x1xf32> to vector<16x32xf32>
      %23 = arith.subf %17, %22 : vector<16x32xf32>
      %24 = arith.mulf %23, %23 : vector<16x32xf32>
      %cst_18 = arith.constant dense<0.000000e+00> : vector<16xf32>
      %25 = vector.multi_reduction <add>, %24, %cst_18 [1] : vector<16x32xf32> to vector<16xf32>
      %26 = vector.shape_cast %25 : vector<16xf32> to vector<16x1xf32>
      %cst_19 = arith.constant 3.200000e+01 : f32
      %27 = vector.broadcast %cst_19 : f32 to vector<16x1xf32>
      %28 = arith.divf %26, %27 : vector<16x1xf32>
      %29 = vector.broadcast %21 : vector<16x1xf32> to vector<16x32xf32>
      %30 = arith.subf %17, %29 : vector<16x32xf32>
      %cst_20 = arith.constant 9.99999996E-13 : f32
      %31 = vector.broadcast %cst_20 : f32 to vector<16x1xf32>
      %32 = arith.addf %28, %31 : vector<16x1xf32>
      %33 = math.rsqrt %32 : vector<16x1xf32>
      %34 = vector.broadcast %33 : vector<16x1xf32> to vector<16x32xf32>
      %35 = arith.mulf %30, %34 : vector<16x32xf32>
      %c0_21 = arith.constant 0 : index
      %c0_22 = arith.constant 0 : index
      %36 = vector.load %arg6[%c0_21, %c0_22] : memref<1x32xf32, #tpu.memory_space<vmem>>, vector<1x32xf32>
      %37 = vector.broadcast %36 : vector<1x32xf32> to vector<16x32xf32>
      %38 = arith.mulf %35, %37 : vector<16x32xf32>
      %c0_23 = arith.constant 0 : index
      %c0_24 = arith.constant 0 : index
      %39 = vector.load %arg7[%c0_23, %c0_24] : memref<1x32xf32, #tpu.memory_space<vmem>>, vector<1x32xf32>
      %40 = vector.broadcast %39 : vector<1x32xf32> to vector<16x32xf32>
      %41 = arith.addf %38, %40 : vector<16x32xf32>
      %c0_25 = arith.constant 0 : index
      %c0_26 = arith.constant 0 : index
      %42 = vector.load %arg8[%c0_25, %c0_26] : memref<16x32xf32, #tpu.memory_space<vmem>>, vector<16x32xf32>
      tpu.vector_store %arg8[%c0_25, %c0_26], %41 {strides = array<i32>} : memref<16x32xf32, #tpu.memory_space<vmem>>, vector<16x32xf32>,
    } else {
    }
    return
  }
  func.func @transform_0(%arg0: i32, %arg1: i32) -> (i32, i32) {
    %c0_i32 = arith.constant 0 : i32
    return %arg0, %arg1 : i32, i32
  }
  func.func @transform_1(%arg0: i32, %arg1: i32) -> (i32, i32) {
    %c0_i32 = arith.constant 0 : i32
    %c0_i32_0 = arith.constant 0 : i32
    return %arg1, %c0_i32 : i32, i32
  }
  func.func @transform_2(%arg0: i32, %arg1: i32) -> (i32, i32) {
    %c0_i32 = arith.constant 0 : i32
    %c0_i32_0 = arith.constant 0 : i32
    %c0_i32_1 = arith.constant 0 : i32
    return %c0_i32, %c0_i32_0 : i32, i32
  }
  func.func @transform_3(%arg0: i32, %arg1: i32) -> (i32, i32) {
    %c0_i32 = arith.constant 0 : i32
    %c0_i32_0 = arith.constant 0 : i32
    return %arg0, %c0_i32 : i32, i32
  }
  func.func @transform_4(%arg0: i32, %arg1: i32) -> (i32, i32) {
    %c0_i32 = arith.constant 0 : i32
    %c0_i32_0 = arith.constant 0 : i32
    %c0_i32_1 = arith.constant 0 : i32
    return %c0_i32, %c0_i32_0 : i32, i32
  }
  func.func @transform_5(%arg0: i32, %arg1: i32) -> (i32, i32) {
    %c0_i32 = arith.constant 0 : i32
    %c0_i32_0 = arith.constant 0 : i32
    %c0_i32_1 = arith.constant 0 : i32
    return %c0_i32, %c0_i32_0 : i32, i32
  }
  func.func @transform_6(%arg0: i32, %arg1: i32) -> (i32, i32) {
    %c0_i32 = arith.constant 0 : i32
    %c0_i32_0 = arith.constant 0 : i32
    return %arg0, %c0_i32 : i32, i32
  }
}

module attributes {stable_mosaic.version = 11 : i64} {
  func.func @_gru_proj_kernel(%arg0: i32, %arg1: i32, %arg2: memref<1x16x32xf32, #tpu.memory_space<vmem>>, %arg3: memref<2x1x32x48xbf16, #tpu.memory_space<vmem>>, %arg4: memref<2x1x48xf32, #tpu.memory_space<vmem>>, %arg5: memref<2x16x48xf32, #tpu.memory_space<vmem>>, %arg6: memref<2x16x48xf32, #tpu.memory_space<vmem>>) attributes {dimension_semantics = [#tpu.dimension_semantics<parallel>, #tpu.dimension_semantics<arbitrary>], iteration_bounds = array<i64: 1, 1>, scalar_prefetch = 0 : i64, scratch_operands = 1 : i64, tpu.core_type = #tpu.core_type<tc>, window_params = [{transform_indices = @transform_0, window_bounds = array<i64: 1, 16, 32>}, {transform_indices = @transform_1, window_bounds = array<i64: 2, 1, 32, 48>}, {pipeline_mode = #tpu.pipeline_mode<synchronous>, transform_indices = @transform_2, window_bounds = array<i64: 2, 1, 48>}, {transform_indices = @transform_3, window_bounds = array<i64: 2, 16, 48>}]} {
    %c0_i32 = arith.constant 0 : i32
    %0 = arith.cmpi eq, %arg1, %c0_i32 : i32
    %1 = arith.extui %0 : i1 to i32
    %c0_i32_0 = arith.constant 0 : i32
    %2 = arith.cmpi ne, %1, %c0_i32_0 : i32
    scf.if %2 {
      %cst_28 = arith.constant 0.000000e+00 : f32
      %30 = vector.broadcast %cst_28 : f32 to vector<2x16x48xf32>
      %c0_29 = arith.constant 0 : index
      %c0_30 = arith.constant 0 : index
      %c0_31 = arith.constant 0 : index
      %31 = vector.load %arg6[%c0_29, %c0_30, %c0_31] : memref<2x16x48xf32, #tpu.memory_space<vmem>>, vector<2x16x48xf32>
      tpu.vector_store %arg6[%c0_29, %c0_30, %c0_31], %30 {strides = array<i32>} : memref<2x16x48xf32, #tpu.memory_space<vmem>>, vector<2x16x48xf32>,
    } else {
    }
    %c0 = arith.constant 0 : index
    %c0_1 = arith.constant 0 : index
    %c0_2 = arith.constant 0 : index
    %3 = vector.load %arg6[%c0, %c0_1, %c0_2] : memref<2x16x48xf32, #tpu.memory_space<vmem>>, vector<1x16x48xf32>
    %4 = vector.shape_cast %3 : vector<1x16x48xf32> to vector<16x48xf32>
    %c0_3 = arith.constant 0 : index
    %c0_4 = arith.constant 0 : index
    %c0_5 = arith.constant 0 : index
    %5 = vector.load %arg2[%c0_3, %c0_4, %c0_5] : memref<1x16x32xf32, #tpu.memory_space<vmem>>, vector<1x16x32xf32>
    %6 = vector.shape_cast %5 : vector<1x16x32xf32> to vector<16x32xf32>
    %7 = arith.truncf %6 : vector<16x32xf32> to vector<16x32xbf16>
    %c0_6 = arith.constant 0 : index
    %c0_7 = arith.constant 0 : index
    %c0_8 = arith.constant 0 : index
    %c0_9 = arith.constant 0 : index
    %8 = vector.load %arg3[%c0_6, %c0_7, %c0_8, %c0_9] : memref<2x1x32x48xbf16, #tpu.memory_space<vmem>>, vector<1x1x32x48xbf16>
    %9 = vector.shape_cast %8 : vector<1x1x32x48xbf16> to vector<32x48xbf16>
    %cst = arith.constant dense<0.000000e+00> : vector<16x48xf32>
    %10 = tpu.matmul %7, %9, %cst {dimension_numbers = #tpu.dot_dimension_numbers<[1], [0], [0], [1], [0, 0, 1, 1], [], []>} : vector<16x32xbf16>, vector<32x48xbf16>, vector<16x48xf32> -> vector<16x48xf32>
    %11 = arith.addf %4, %10 : vector<16x48xf32>
    %c0_10 = arith.constant 0 : index
    %c0_11 = arith.constant 0 : index
    %c0_12 = arith.constant 0 : index
    %12 = vector.load %arg6[%c0_10, %c0_11, %c0_12] : memref<2x16x48xf32, #tpu.memory_space<vmem>>, vector<1x16x48xf32>
    %13 = vector.shape_cast %12 : vector<1x16x48xf32> to vector<16x48xf32>
    %14 = vector.shape_cast %11 : vector<16x48xf32> to vector<1x16x48xf32>
    tpu.vector_store %arg6[%c0_10, %c0_11, %c0_12], %14 {strides = array<i32>} : memref<2x16x48xf32, #tpu.memory_space<vmem>>, vector<1x16x48xf32>,
    %c1 = arith.constant 1 : index
    %c0_13 = arith.constant 0 : index
    %c0_14 = arith.constant 0 : index
    %15 = vector.load %arg6[%c1, %c0_13, %c0_14] : memref<2x16x48xf32, #tpu.memory_space<vmem>>, vector<1x16x48xf32>
    %16 = vector.shape_cast %15 : vector<1x16x48xf32> to vector<16x48xf32>
    %c0_15 = arith.constant 0 : index
    %c0_16 = arith.constant 0 : index
    %c0_17 = arith.constant 0 : index
    %17 = vector.load %arg2[%c0_15, %c0_16, %c0_17] : memref<1x16x32xf32, #tpu.memory_space<vmem>>, vector<1x16x32xf32>
    %18 = vector.shape_cast %17 : vector<1x16x32xf32> to vector<16x32xf32>
    %19 = arith.truncf %18 : vector<16x32xf32> to vector<16x32xbf16>
    %c1_18 = arith.constant 1 : index
    %c0_19 = arith.constant 0 : index
    %c0_20 = arith.constant 0 : index
    %c0_21 = arith.constant 0 : index
    %20 = vector.load %arg3[%c1_18, %c0_19, %c0_20, %c0_21] : memref<2x1x32x48xbf16, #tpu.memory_space<vmem>>, vector<1x1x32x48xbf16>
    %21 = vector.shape_cast %20 : vector<1x1x32x48xbf16> to vector<32x48xbf16>
    %cst_22 = arith.constant dense<0.000000e+00> : vector<16x48xf32>
    %22 = tpu.matmul %19, %21, %cst_22 {dimension_numbers = #tpu.dot_dimension_numbers<[1], [0], [0], [1], [0, 0, 1, 1], [], []>} : vector<16x32xbf16>, vector<32x48xbf16>, vector<16x48xf32> -> vector<16x48xf32>
    %23 = arith.addf %16, %22 : vector<16x48xf32>
    %c1_23 = arith.constant 1 : index
    %c0_24 = arith.constant 0 : index
    %c0_25 = arith.constant 0 : index
    %24 = vector.load %arg6[%c1_23, %c0_24, %c0_25] : memref<2x16x48xf32, #tpu.memory_space<vmem>>, vector<1x16x48xf32>
    %25 = vector.shape_cast %24 : vector<1x16x48xf32> to vector<16x48xf32>
    %26 = vector.shape_cast %23 : vector<16x48xf32> to vector<1x16x48xf32>
    tpu.vector_store %arg6[%c1_23, %c0_24, %c0_25], %26 {strides = array<i32>} : memref<2x16x48xf32, #tpu.memory_space<vmem>>, vector<1x16x48xf32>,
    %c0_i32_26 = arith.constant 0 : i32
    %27 = arith.cmpi eq, %arg1, %c0_i32_26 : i32
    %28 = arith.extui %27 : i1 to i32
    %c0_i32_27 = arith.constant 0 : i32
    %29 = arith.cmpi ne, %28, %c0_i32_27 : i32
    scf.if %29 {
      %c0_28 = arith.constant 0 : index
      %c0_29 = arith.constant 0 : index
      %c0_30 = arith.constant 0 : index
      %30 = vector.load %arg6[%c0_28, %c0_29, %c0_30] : memref<2x16x48xf32, #tpu.memory_space<vmem>>, vector<2x16x48xf32>
      %c0_31 = arith.constant 0 : index
      %c0_32 = arith.constant 0 : index
      %c0_33 = arith.constant 0 : index
      %31 = vector.load %arg4[%c0_31, %c0_32, %c0_33] : memref<2x1x48xf32, #tpu.memory_space<vmem>>, vector<2x1x48xf32>
      %32 = vector.broadcast %31 : vector<2x1x48xf32> to vector<2x16x48xf32>
      %33 = arith.addf %30, %32 : vector<2x16x48xf32>
      %c0_34 = arith.constant 0 : index
      %c0_35 = arith.constant 0 : index
      %c0_36 = arith.constant 0 : index
      %34 = vector.load %arg5[%c0_34, %c0_35, %c0_36] : memref<2x16x48xf32, #tpu.memory_space<vmem>>, vector<2x16x48xf32>
      tpu.vector_store %arg5[%c0_34, %c0_35, %c0_36], %33 {strides = array<i32>} : memref<2x16x48xf32, #tpu.memory_space<vmem>>, vector<2x16x48xf32>,
    } else {
    }
    return
  }
  func.func @transform_0(%arg0: i32, %arg1: i32) -> (i32, i32, i32) {
    %c0_i32 = arith.constant 0 : i32
    %c0_i32_0 = arith.constant 0 : i32
    return %c0_i32, %arg0, %arg1 : i32, i32, i32
  }
  func.func @transform_1(%arg0: i32, %arg1: i32) -> (i32, i32, i32, i32) {
    %c0_i32 = arith.constant 0 : i32
    %c0_i32_0 = arith.constant 0 : i32
    %c0_i32_1 = arith.constant 0 : i32
    %c0_i32_2 = arith.constant 0 : i32
    return %c0_i32, %c0_i32_0, %arg1, %c0_i32_1 : i32, i32, i32, i32
  }
  func.func @transform_2(%arg0: i32, %arg1: i32) -> (i32, i32, i32) {
    %c0_i32 = arith.constant 0 : i32
    %c0_i32_0 = arith.constant 0 : i32
    %c0_i32_1 = arith.constant 0 : i32
    %c0_i32_2 = arith.constant 0 : i32
    return %c0_i32, %c0_i32_0, %c0_i32_1 : i32, i32, i32
  }
  func.func @transform_3(%arg0: i32, %arg1: i32) -> (i32, i32, i32) {
    %c0_i32 = arith.constant 0 : i32
    %c0_i32_0 = arith.constant 0 : i32
    %c0_i32_1 = arith.constant 0 : i32
    return %c0_i32, %arg0, %c0_i32_0 : i32, i32, i32
  }
}

module attributes {stable_mosaic.version = 11 : i64} {
  func.func @_bigru_kernel(%arg0: i32, %arg1: i32, %arg2: memref<1x8x2x48xf32, #tpu.memory_space<vmem>>, %arg3: memref<1x16x48xbf16, #tpu.memory_space<vmem>>, %arg4: memref<1x1x48xf32, #tpu.memory_space<vmem>>, %arg5: memref<1x8x2x16xf32, #tpu.memory_space<vmem>>, %arg6: memref<1x2x16xf32, #tpu.memory_space<vmem>>, %arg7: memref<2x16xf32, #tpu.memory_space<vmem>>) attributes {dimension_semantics = [#tpu.dimension_semantics<parallel>, #tpu.dimension_semantics<arbitrary>], iteration_bounds = array<i64: 2, 1>, scalar_prefetch = 0 : i64, scratch_operands = 1 : i64, tpu.core_type = #tpu.core_type<tc>, window_params = [{transform_indices = @transform_0, window_bounds = array<i64: 1, 8, 2, 48>}, {transform_indices = @transform_1, window_bounds = array<i64: 1, 16, 48>}, {transform_indices = @transform_2, window_bounds = array<i64: 1, 1, 48>}, {transform_indices = @transform_3, window_bounds = array<i64: 1, 8, 2, 16>}, {transform_indices = @transform_4, window_bounds = array<i64: 1, 2, 16>}]} {
    %c0_i32 = arith.constant 0 : i32
    %0 = arith.cmpi eq, %arg1, %c0_i32 : i32
    %1 = arith.extui %0 : i1 to i32
    %c0_i32_0 = arith.constant 0 : i32
    %2 = arith.cmpi ne, %1, %c0_i32_0 : i32
    scf.if %2 {
      %cst_109 = arith.constant 0.000000e+00 : f32
      %348 = vector.broadcast %cst_109 : f32 to vector<2x16xf32>
      %c0_110 = arith.constant 0 : index
      %c0_111 = arith.constant 0 : index
      %349 = vector.load %arg7[%c0_110, %c0_111] : memref<2x16xf32, #tpu.memory_space<vmem>>, vector<2x16xf32>
      tpu.vector_store %arg7[%c0_110, %c0_111], %348 {strides = array<i32>} : memref<2x16xf32, #tpu.memory_space<vmem>>, vector<2x16xf32>,
    } else {
    }
    %c0 = arith.constant 0 : index
    %c0_1 = arith.constant 0 : index
    %c0_2 = arith.constant 0 : index
    %3 = vector.load %arg3[%c0, %c0_1, %c0_2] : memref<1x16x48xbf16, #tpu.memory_space<vmem>>, vector<1x16x48xbf16>
    %4 = vector.shape_cast %3 : vector<1x16x48xbf16> to vector<16x48xbf16>
    %c0_3 = arith.constant 0 : index
    %c0_4 = arith.constant 0 : index
    %c0_5 = arith.constant 0 : index
    %5 = vector.load %arg4[%c0_3, %c0_4, %c0_5] : memref<1x1x48xf32, #tpu.memory_space<vmem>>, vector<1x1x48xf32>
    %6 = vector.shape_cast %5 : vector<1x1x48xf32> to vector<1x48xf32>
    %c0_6 = arith.constant 0 : index
    %c0_7 = arith.constant 0 : index
    %7 = vector.load %arg7[%c0_6, %c0_7] : memref<2x16xf32, #tpu.memory_space<vmem>>, vector<2x16xf32>
    %c0_i32_8 = arith.constant 0 : i32
    %c1_i32 = arith.constant 1 : i32
    %8 = arith.subi %c1_i32, %arg0 : i32
    %9 = arith.muli %8, %c0_i32_8 : i32
    %c7_i32 = arith.constant 7 : i32
    %10 = arith.subi %c7_i32, %c0_i32_8 : i32
    %11 = arith.muli %arg0, %10 : i32
    %12 = arith.addi %9, %11 : i32
    %c0_9 = arith.constant 0 : index
    %13 = arith.index_cast %12 : i32 to index
    %c0_10 = arith.constant 0 : index
    %c0_11 = arith.constant 0 : index
    %14 = vector.load %arg2[%c0_9, %13, %c0_10, %c0_11] : memref<1x8x2x48xf32, #tpu.memory_space<vmem>>, vector<1x1x2x48xf32>
    %15 = vector.shape_cast %14 : vector<1x1x2x48xf32> to vector<2x48xf32>
    %16 = arith.truncf %7 : vector<2x16xf32> to vector<2x16xbf16>
    %cst = arith.constant dense<0.000000e+00> : vector<2x48xf32>
    %17 = tpu.matmul %16, %4, %cst {dimension_numbers = #tpu.dot_dimension_numbers<[1], [0], [0], [1], [0, 0, 1, 1], [], []>} : vector<2x16xbf16>, vector<16x48xbf16>, vector<2x48xf32> -> vector<2x48xf32>
    %18 = vector.broadcast %6 : vector<1x48xf32> to vector<2x48xf32>
    %19 = arith.addf %17, %18 : vector<2x48xf32>
    %20 = vector.extract_strided_slice %15 {offsets = [0, 0], sizes = [2, 16], strides = [1, 1]} : vector<2x48xf32> to vector<2x16xf32>
    %21 = vector.extract_strided_slice %19 {offsets = [0, 0], sizes = [2, 16], strides = [1, 1]} : vector<2x48xf32> to vector<2x16xf32>
    %22 = arith.addf %20, %21 : vector<2x16xf32>
    %23 = arith.negf %22 : vector<2x16xf32>
    %24 = math.exp %23 : vector<2x16xf32>
    %cst_12 = arith.constant 1.000000e+00 : f32
    %25 = vector.broadcast %cst_12 : f32 to vector<2x16xf32>
    %26 = arith.addf %25, %24 : vector<2x16xf32>
    %27 = arith.divf %25, %26 : vector<2x16xf32>
    %28 = vector.extract_strided_slice %15 {offsets = [0, 16], sizes = [2, 16], strides = [1, 1]} : vector<2x48xf32> to vector<2x16xf32>
    %29 = vector.extract_strided_slice %19 {offsets = [0, 16], sizes = [2, 16], strides = [1, 1]} : vector<2x48xf32> to vector<2x16xf32>
    %30 = arith.addf %28, %29 : vector<2x16xf32>
    %31 = arith.negf %30 : vector<2x16xf32>
    %32 = math.exp %31 : vector<2x16xf32>
    %cst_13 = arith.constant 1.000000e+00 : f32
    %33 = vector.broadcast %cst_13 : f32 to vector<2x16xf32>
    %34 = arith.addf %33, %32 : vector<2x16xf32>
    %35 = arith.divf %33, %34 : vector<2x16xf32>
    %36 = vector.extract_strided_slice %15 {offsets = [0, 32], sizes = [2, 16], strides = [1, 1]} : vector<2x48xf32> to vector<2x16xf32>
    %37 = vector.extract_strided_slice %19 {offsets = [0, 32], sizes = [2, 16], strides = [1, 1]} : vector<2x48xf32> to vector<2x16xf32>
    %38 = arith.mulf %27, %37 : vector<2x16xf32>
    %39 = arith.addf %36, %38 : vector<2x16xf32>
    %40 = math.tanh %39 : vector<2x16xf32>
    %cst_14 = arith.constant 1.000000e+00 : f32
    %41 = vector.broadcast %cst_14 : f32 to vector<2x16xf32>
    %42 = arith.subf %41, %35 : vector<2x16xf32>
    %43 = arith.mulf %42, %40 : vector<2x16xf32>
    %44 = arith.mulf %35, %7 : vector<2x16xf32>
    %45 = arith.addf %43, %44 : vector<2x16xf32>
    %c0_15 = arith.constant 0 : index
    %46 = arith.index_cast %12 : i32 to index
    %c0_16 = arith.constant 0 : index
    %c0_17 = arith.constant 0 : index
    %47 = vector.load %arg5[%c0_15, %46, %c0_16, %c0_17] : memref<1x8x2x16xf32, #tpu.memory_space<vmem>>, vector<1x1x2x16xf32>
    %48 = vector.shape_cast %47 : vector<1x1x2x16xf32> to vector<2x16xf32>
    %49 = vector.shape_cast %45 : vector<2x16xf32> to vector<1x1x2x16xf32>
    tpu.vector_store %arg5[%c0_15, %46, %c0_16, %c0_17], %49 {strides = array<i32>} : memref<1x8x2x16xf32, #tpu.memory_space<vmem>>, vector<1x1x2x16xf32>,
    %c1_i32_18 = arith.constant 1 : i32
    %c1_i32_19 = arith.constant 1 : i32
    %50 = arith.subi %c1_i32_19, %arg0 : i32
    %51 = arith.muli %50, %c1_i32_18 : i32
    %c7_i32_20 = arith.constant 7 : i32
    %52 = arith.subi %c7_i32_20, %c1_i32_18 : i32
    %53 = arith.muli %arg0, %52 : i32
    %54 = arith.addi %51, %53 : i32
    %c0_21 = arith.constant 0 : index
    %55 = arith.index_cast %54 : i32 to index
    %c0_22 = arith.constant 0 : index
    %c0_23 = arith.constant 0 : index
    %56 = vector.load %arg2[%c0_21, %55, %c0_22, %c0_23] : memref<1x8x2x48xf32, #tpu.memory_space<vmem>>, vector<1x1x2x48xf32>
    %57 = vector.shape_cast %56 : vector<1x1x2x48xf32> to vector<2x48xf32>
    %58 = arith.truncf %45 : vector<2x16xf32> to vector<2x16xbf16>
    %cst_24 = arith.constant dense<0.000000e+00> : vector<2x48xf32>
    %59 = tpu.matmul %58, %4, %cst_24 {dimension_numbers = #tpu.dot_dimension_numbers<[1], [0], [0], [1], [0, 0, 1, 1], [], []>} : vector<2x16xbf16>, vector<16x48xbf16>, vector<2x48xf32> -> vector<2x48xf32>
    %60 = vector.broadcast %6 : vector<1x48xf32> to vector<2x48xf32>
    %61 = arith.addf %59, %60 : vector<2x48xf32>
    %62 = vector.extract_strided_slice %57 {offsets = [0, 0], sizes = [2, 16], strides = [1, 1]} : vector<2x48xf32> to vector<2x16xf32>
    %63 = vector.extract_strided_slice %61 {offsets = [0, 0], sizes = [2, 16], strides = [1, 1]} : vector<2x48xf32> to vector<2x16xf32>
    %64 = arith.addf %62, %63 : vector<2x16xf32>
    %65 = arith.negf %64 : vector<2x16xf32>
    %66 = math.exp %65 : vector<2x16xf32>
    %cst_25 = arith.constant 1.000000e+00 : f32
    %67 = vector.broadcast %cst_25 : f32 to vector<2x16xf32>
    %68 = arith.addf %67, %66 : vector<2x16xf32>
    %69 = arith.divf %67, %68 : vector<2x16xf32>
    %70 = vector.extract_strided_slice %57 {offsets = [0, 16], sizes = [2, 16], strides = [1, 1]} : vector<2x48xf32> to vector<2x16xf32>
    %71 = vector.extract_strided_slice %61 {offsets = [0, 16], sizes = [2, 16], strides = [1, 1]} : vector<2x48xf32> to vector<2x16xf32>
    %72 = arith.addf %70, %71 : vector<2x16xf32>
    %73 = arith.negf %72 : vector<2x16xf32>
    %74 = math.exp %73 : vector<2x16xf32>
    %cst_26 = arith.constant 1.000000e+00 : f32
    %75 = vector.broadcast %cst_26 : f32 to vector<2x16xf32>
    %76 = arith.addf %75, %74 : vector<2x16xf32>
    %77 = arith.divf %75, %76 : vector<2x16xf32>
    %78 = vector.extract_strided_slice %57 {offsets = [0, 32], sizes = [2, 16], strides = [1, 1]} : vector<2x48xf32> to vector<2x16xf32>
    %79 = vector.extract_strided_slice %61 {offsets = [0, 32], sizes = [2, 16], strides = [1, 1]} : vector<2x48xf32> to vector<2x16xf32>
    %80 = arith.mulf %69, %79 : vector<2x16xf32>
    %81 = arith.addf %78, %80 : vector<2x16xf32>
    %82 = math.tanh %81 : vector<2x16xf32>
    %cst_27 = arith.constant 1.000000e+00 : f32
    %83 = vector.broadcast %cst_27 : f32 to vector<2x16xf32>
    %84 = arith.subf %83, %77 : vector<2x16xf32>
    %85 = arith.mulf %84, %82 : vector<2x16xf32>
    %86 = arith.mulf %77, %45 : vector<2x16xf32>
    %87 = arith.addf %85, %86 : vector<2x16xf32>
    %c0_28 = arith.constant 0 : index
    %88 = arith.index_cast %54 : i32 to index
    %c0_29 = arith.constant 0 : index
    %c0_30 = arith.constant 0 : index
    %89 = vector.load %arg5[%c0_28, %88, %c0_29, %c0_30] : memref<1x8x2x16xf32, #tpu.memory_space<vmem>>, vector<1x1x2x16xf32>
    %90 = vector.shape_cast %89 : vector<1x1x2x16xf32> to vector<2x16xf32>
    %91 = vector.shape_cast %87 : vector<2x16xf32> to vector<1x1x2x16xf32>
    tpu.vector_store %arg5[%c0_28, %88, %c0_29, %c0_30], %91 {strides = array<i32>} : memref<1x8x2x16xf32, #tpu.memory_space<vmem>>, vector<1x1x2x16xf32>,
    %c2_i32 = arith.constant 2 : i32
    %c1_i32_31 = arith.constant 1 : i32
    %92 = arith.subi %c1_i32_31, %arg0 : i32
    %93 = arith.muli %92, %c2_i32 : i32
    %c7_i32_32 = arith.constant 7 : i32
    %94 = arith.subi %c7_i32_32, %c2_i32 : i32
    %95 = arith.muli %arg0, %94 : i32
    %96 = arith.addi %93, %95 : i32
    %c0_33 = arith.constant 0 : index
    %97 = arith.index_cast %96 : i32 to index
    %c0_34 = arith.constant 0 : index
    %c0_35 = arith.constant 0 : index
    %98 = vector.load %arg2[%c0_33, %97, %c0_34, %c0_35] : memref<1x8x2x48xf32, #tpu.memory_space<vmem>>, vector<1x1x2x48xf32>
    %99 = vector.shape_cast %98 : vector<1x1x2x48xf32> to vector<2x48xf32>
    %100 = arith.truncf %87 : vector<2x16xf32> to vector<2x16xbf16>
    %cst_36 = arith.constant dense<0.000000e+00> : vector<2x48xf32>
    %101 = tpu.matmul %100, %4, %cst_36 {dimension_numbers = #tpu.dot_dimension_numbers<[1], [0], [0], [1], [0, 0, 1, 1], [], []>} : vector<2x16xbf16>, vector<16x48xbf16>, vector<2x48xf32> -> vector<2x48xf32>
    %102 = vector.broadcast %6 : vector<1x48xf32> to vector<2x48xf32>
    %103 = arith.addf %101, %102 : vector<2x48xf32>
    %104 = vector.extract_strided_slice %99 {offsets = [0, 0], sizes = [2, 16], strides = [1, 1]} : vector<2x48xf32> to vector<2x16xf32>
    %105 = vector.extract_strided_slice %103 {offsets = [0, 0], sizes = [2, 16], strides = [1, 1]} : vector<2x48xf32> to vector<2x16xf32>
    %106 = arith.addf %104, %105 : vector<2x16xf32>
    %107 = arith.negf %106 : vector<2x16xf32>
    %108 = math.exp %107 : vector<2x16xf32>
    %cst_37 = arith.constant 1.000000e+00 : f32
    %109 = vector.broadcast %cst_37 : f32 to vector<2x16xf32>
    %110 = arith.addf %109, %108 : vector<2x16xf32>
    %111 = arith.divf %109, %110 : vector<2x16xf32>
    %112 = vector.extract_strided_slice %99 {offsets = [0, 16], sizes = [2, 16], strides = [1, 1]} : vector<2x48xf32> to vector<2x16xf32>
    %113 = vector.extract_strided_slice %103 {offsets = [0, 16], sizes = [2, 16], strides = [1, 1]} : vector<2x48xf32> to vector<2x16xf32>
    %114 = arith.addf %112, %113 : vector<2x16xf32>
    %115 = arith.negf %114 : vector<2x16xf32>
    %116 = math.exp %115 : vector<2x16xf32>
    %cst_38 = arith.constant 1.000000e+00 : f32
    %117 = vector.broadcast %cst_38 : f32 to vector<2x16xf32>
    %118 = arith.addf %117, %116 : vector<2x16xf32>
    %119 = arith.divf %117, %118 : vector<2x16xf32>
    %120 = vector.extract_strided_slice %99 {offsets = [0, 32], sizes = [2, 16], strides = [1, 1]} : vector<2x48xf32> to vector<2x16xf32>
    %121 = vector.extract_strided_slice %103 {offsets = [0, 32], sizes = [2, 16], strides = [1, 1]} : vector<2x48xf32> to vector<2x16xf32>
    %122 = arith.mulf %111, %121 : vector<2x16xf32>
    %123 = arith.addf %120, %122 : vector<2x16xf32>
    %124 = math.tanh %123 : vector<2x16xf32>
    %cst_39 = arith.constant 1.000000e+00 : f32
    %125 = vector.broadcast %cst_39 : f32 to vector<2x16xf32>
    %126 = arith.subf %125, %119 : vector<2x16xf32>
    %127 = arith.mulf %126, %124 : vector<2x16xf32>
    %128 = arith.mulf %119, %87 : vector<2x16xf32>
    %129 = arith.addf %127, %128 : vector<2x16xf32>
    %c0_40 = arith.constant 0 : index
    %130 = arith.index_cast %96 : i32 to index
    %c0_41 = arith.constant 0 : index
    %c0_42 = arith.constant 0 : index
    %131 = vector.load %arg5[%c0_40, %130, %c0_41, %c0_42] : memref<1x8x2x16xf32, #tpu.memory_space<vmem>>, vector<1x1x2x16xf32>
    %132 = vector.shape_cast %131 : vector<1x1x2x16xf32> to vector<2x16xf32>
    %133 = vector.shape_cast %129 : vector<2x16xf32> to vector<1x1x2x16xf32>
    tpu.vector_store %arg5[%c0_40, %130, %c0_41, %c0_42], %133 {strides = array<i32>} : memref<1x8x2x16xf32, #tpu.memory_space<vmem>>, vector<1x1x2x16xf32>,
    %c3_i32 = arith.constant 3 : i32
    %c1_i32_43 = arith.constant 1 : i32
    %134 = arith.subi %c1_i32_43, %arg0 : i32
    %135 = arith.muli %134, %c3_i32 : i32
    %c7_i32_44 = arith.constant 7 : i32
    %136 = arith.subi %c7_i32_44, %c3_i32 : i32
    %137 = arith.muli %arg0, %136 : i32
    %138 = arith.addi %135, %137 : i32
    %c0_45 = arith.constant 0 : index
    %139 = arith.index_cast %138 : i32 to index
    %c0_46 = arith.constant 0 : index
    %c0_47 = arith.constant 0 : index
    %140 = vector.load %arg2[%c0_45, %139, %c0_46, %c0_47] : memref<1x8x2x48xf32, #tpu.memory_space<vmem>>, vector<1x1x2x48xf32>
    %141 = vector.shape_cast %140 : vector<1x1x2x48xf32> to vector<2x48xf32>
    %142 = arith.truncf %129 : vector<2x16xf32> to vector<2x16xbf16>
    %cst_48 = arith.constant dense<0.000000e+00> : vector<2x48xf32>
    %143 = tpu.matmul %142, %4, %cst_48 {dimension_numbers = #tpu.dot_dimension_numbers<[1], [0], [0], [1], [0, 0, 1, 1], [], []>} : vector<2x16xbf16>, vector<16x48xbf16>, vector<2x48xf32> -> vector<2x48xf32>
    %144 = vector.broadcast %6 : vector<1x48xf32> to vector<2x48xf32>
    %145 = arith.addf %143, %144 : vector<2x48xf32>
    %146 = vector.extract_strided_slice %141 {offsets = [0, 0], sizes = [2, 16], strides = [1, 1]} : vector<2x48xf32> to vector<2x16xf32>
    %147 = vector.extract_strided_slice %145 {offsets = [0, 0], sizes = [2, 16], strides = [1, 1]} : vector<2x48xf32> to vector<2x16xf32>
    %148 = arith.addf %146, %147 : vector<2x16xf32>
    %149 = arith.negf %148 : vector<2x16xf32>
    %150 = math.exp %149 : vector<2x16xf32>
    %cst_49 = arith.constant 1.000000e+00 : f32
    %151 = vector.broadcast %cst_49 : f32 to vector<2x16xf32>
    %152 = arith.addf %151, %150 : vector<2x16xf32>
    %153 = arith.divf %151, %152 : vector<2x16xf32>
    %154 = vector.extract_strided_slice %141 {offsets = [0, 16], sizes = [2, 16], strides = [1, 1]} : vector<2x48xf32> to vector<2x16xf32>
    %155 = vector.extract_strided_slice %145 {offsets = [0, 16], sizes = [2, 16], strides = [1, 1]} : vector<2x48xf32> to vector<2x16xf32>
    %156 = arith.addf %154, %155 : vector<2x16xf32>
    %157 = arith.negf %156 : vector<2x16xf32>
    %158 = math.exp %157 : vector<2x16xf32>
    %cst_50 = arith.constant 1.000000e+00 : f32
    %159 = vector.broadcast %cst_50 : f32 to vector<2x16xf32>
    %160 = arith.addf %159, %158 : vector<2x16xf32>
    %161 = arith.divf %159, %160 : vector<2x16xf32>
    %162 = vector.extract_strided_slice %141 {offsets = [0, 32], sizes = [2, 16], strides = [1, 1]} : vector<2x48xf32> to vector<2x16xf32>
    %163 = vector.extract_strided_slice %145 {offsets = [0, 32], sizes = [2, 16], strides = [1, 1]} : vector<2x48xf32> to vector<2x16xf32>
    %164 = arith.mulf %153, %163 : vector<2x16xf32>
    %165 = arith.addf %162, %164 : vector<2x16xf32>
    %166 = math.tanh %165 : vector<2x16xf32>
    %cst_51 = arith.constant 1.000000e+00 : f32
    %167 = vector.broadcast %cst_51 : f32 to vector<2x16xf32>
    %168 = arith.subf %167, %161 : vector<2x16xf32>
    %169 = arith.mulf %168, %166 : vector<2x16xf32>
    %170 = arith.mulf %161, %129 : vector<2x16xf32>
    %171 = arith.addf %169, %170 : vector<2x16xf32>
    %c0_52 = arith.constant 0 : index
    %172 = arith.index_cast %138 : i32 to index
    %c0_53 = arith.constant 0 : index
    %c0_54 = arith.constant 0 : index
    %173 = vector.load %arg5[%c0_52, %172, %c0_53, %c0_54] : memref<1x8x2x16xf32, #tpu.memory_space<vmem>>, vector<1x1x2x16xf32>
    %174 = vector.shape_cast %173 : vector<1x1x2x16xf32> to vector<2x16xf32>
    %175 = vector.shape_cast %171 : vector<2x16xf32> to vector<1x1x2x16xf32>
    tpu.vector_store %arg5[%c0_52, %172, %c0_53, %c0_54], %175 {strides = array<i32>} : memref<1x8x2x16xf32, #tpu.memory_space<vmem>>, vector<1x1x2x16xf32>,
    %c4_i32 = arith.constant 4 : i32
    %c1_i32_55 = arith.constant 1 : i32
    %176 = arith.subi %c1_i32_55, %arg0 : i32
    %177 = arith.muli %176, %c4_i32 : i32
    %c7_i32_56 = arith.constant 7 : i32
    %178 = arith.subi %c7_i32_56, %c4_i32 : i32
    %179 = arith.muli %arg0, %178 : i32
    %180 = arith.addi %177, %179 : i32
    %c0_57 = arith.constant 0 : index
    %181 = arith.index_cast %180 : i32 to index
    %c0_58 = arith.constant 0 : index
    %c0_59 = arith.constant 0 : index
    %182 = vector.load %arg2[%c0_57, %181, %c0_58, %c0_59] : memref<1x8x2x48xf32, #tpu.memory_space<vmem>>, vector<1x1x2x48xf32>
    %183 = vector.shape_cast %182 : vector<1x1x2x48xf32> to vector<2x48xf32>
    %184 = arith.truncf %171 : vector<2x16xf32> to vector<2x16xbf16>
    %cst_60 = arith.constant dense<0.000000e+00> : vector<2x48xf32>
    %185 = tpu.matmul %184, %4, %cst_60 {dimension_numbers = #tpu.dot_dimension_numbers<[1], [0], [0], [1], [0, 0, 1, 1], [], []>} : vector<2x16xbf16>, vector<16x48xbf16>, vector<2x48xf32> -> vector<2x48xf32>
    %186 = vector.broadcast %6 : vector<1x48xf32> to vector<2x48xf32>
    %187 = arith.addf %185, %186 : vector<2x48xf32>
    %188 = vector.extract_strided_slice %183 {offsets = [0, 0], sizes = [2, 16], strides = [1, 1]} : vector<2x48xf32> to vector<2x16xf32>
    %189 = vector.extract_strided_slice %187 {offsets = [0, 0], sizes = [2, 16], strides = [1, 1]} : vector<2x48xf32> to vector<2x16xf32>
    %190 = arith.addf %188, %189 : vector<2x16xf32>
    %191 = arith.negf %190 : vector<2x16xf32>
    %192 = math.exp %191 : vector<2x16xf32>
    %cst_61 = arith.constant 1.000000e+00 : f32
    %193 = vector.broadcast %cst_61 : f32 to vector<2x16xf32>
    %194 = arith.addf %193, %192 : vector<2x16xf32>
    %195 = arith.divf %193, %194 : vector<2x16xf32>
    %196 = vector.extract_strided_slice %183 {offsets = [0, 16], sizes = [2, 16], strides = [1, 1]} : vector<2x48xf32> to vector<2x16xf32>
    %197 = vector.extract_strided_slice %187 {offsets = [0, 16], sizes = [2, 16], strides = [1, 1]} : vector<2x48xf32> to vector<2x16xf32>
    %198 = arith.addf %196, %197 : vector<2x16xf32>
    %199 = arith.negf %198 : vector<2x16xf32>
    %200 = math.exp %199 : vector<2x16xf32>
    %cst_62 = arith.constant 1.000000e+00 : f32
    %201 = vector.broadcast %cst_62 : f32 to vector<2x16xf32>
    %202 = arith.addf %201, %200 : vector<2x16xf32>
    %203 = arith.divf %201, %202 : vector<2x16xf32>
    %204 = vector.extract_strided_slice %183 {offsets = [0, 32], sizes = [2, 16], strides = [1, 1]} : vector<2x48xf32> to vector<2x16xf32>
    %205 = vector.extract_strided_slice %187 {offsets = [0, 32], sizes = [2, 16], strides = [1, 1]} : vector<2x48xf32> to vector<2x16xf32>
    %206 = arith.mulf %195, %205 : vector<2x16xf32>
    %207 = arith.addf %204, %206 : vector<2x16xf32>
    %208 = math.tanh %207 : vector<2x16xf32>
    %cst_63 = arith.constant 1.000000e+00 : f32
    %209 = vector.broadcast %cst_63 : f32 to vector<2x16xf32>
    %210 = arith.subf %209, %203 : vector<2x16xf32>
    %211 = arith.mulf %210, %208 : vector<2x16xf32>
    %212 = arith.mulf %203, %171 : vector<2x16xf32>
    %213 = arith.addf %211, %212 : vector<2x16xf32>
    %c0_64 = arith.constant 0 : index
    %214 = arith.index_cast %180 : i32 to index
    %c0_65 = arith.constant 0 : index
    %c0_66 = arith.constant 0 : index
    %215 = vector.load %arg5[%c0_64, %214, %c0_65, %c0_66] : memref<1x8x2x16xf32, #tpu.memory_space<vmem>>, vector<1x1x2x16xf32>
    %216 = vector.shape_cast %215 : vector<1x1x2x16xf32> to vector<2x16xf32>
    %217 = vector.shape_cast %213 : vector<2x16xf32> to vector<1x1x2x16xf32>
    tpu.vector_store %arg5[%c0_64, %214, %c0_65, %c0_66], %217 {strides = array<i32>} : memref<1x8x2x16xf32, #tpu.memory_space<vmem>>, vector<1x1x2x16xf32>,
    %c5_i32 = arith.constant 5 : i32
    %c1_i32_67 = arith.constant 1 : i32
    %218 = arith.subi %c1_i32_67, %arg0 : i32
    %219 = arith.muli %218, %c5_i32 : i32
    %c7_i32_68 = arith.constant 7 : i32
    %220 = arith.subi %c7_i32_68, %c5_i32 : i32
    %221 = arith.muli %arg0, %220 : i32
    %222 = arith.addi %219, %221 : i32
    %c0_69 = arith.constant 0 : index
    %223 = arith.index_cast %222 : i32 to index
    %c0_70 = arith.constant 0 : index
    %c0_71 = arith.constant 0 : index
    %224 = vector.load %arg2[%c0_69, %223, %c0_70, %c0_71] : memref<1x8x2x48xf32, #tpu.memory_space<vmem>>, vector<1x1x2x48xf32>
    %225 = vector.shape_cast %224 : vector<1x1x2x48xf32> to vector<2x48xf32>
    %226 = arith.truncf %213 : vector<2x16xf32> to vector<2x16xbf16>
    %cst_72 = arith.constant dense<0.000000e+00> : vector<2x48xf32>
    %227 = tpu.matmul %226, %4, %cst_72 {dimension_numbers = #tpu.dot_dimension_numbers<[1], [0], [0], [1], [0, 0, 1, 1], [], []>} : vector<2x16xbf16>, vector<16x48xbf16>, vector<2x48xf32> -> vector<2x48xf32>
    %228 = vector.broadcast %6 : vector<1x48xf32> to vector<2x48xf32>
    %229 = arith.addf %227, %228 : vector<2x48xf32>
    %230 = vector.extract_strided_slice %225 {offsets = [0, 0], sizes = [2, 16], strides = [1, 1]} : vector<2x48xf32> to vector<2x16xf32>
    %231 = vector.extract_strided_slice %229 {offsets = [0, 0], sizes = [2, 16], strides = [1, 1]} : vector<2x48xf32> to vector<2x16xf32>
    %232 = arith.addf %230, %231 : vector<2x16xf32>
    %233 = arith.negf %232 : vector<2x16xf32>
    %234 = math.exp %233 : vector<2x16xf32>
    %cst_73 = arith.constant 1.000000e+00 : f32
    %235 = vector.broadcast %cst_73 : f32 to vector<2x16xf32>
    %236 = arith.addf %235, %234 : vector<2x16xf32>
    %237 = arith.divf %235, %236 : vector<2x16xf32>
    %238 = vector.extract_strided_slice %225 {offsets = [0, 16], sizes = [2, 16], strides = [1, 1]} : vector<2x48xf32> to vector<2x16xf32>
    %239 = vector.extract_strided_slice %229 {offsets = [0, 16], sizes = [2, 16], strides = [1, 1]} : vector<2x48xf32> to vector<2x16xf32>
    %240 = arith.addf %238, %239 : vector<2x16xf32>
    %241 = arith.negf %240 : vector<2x16xf32>
    %242 = math.exp %241 : vector<2x16xf32>
    %cst_74 = arith.constant 1.000000e+00 : f32
    %243 = vector.broadcast %cst_74 : f32 to vector<2x16xf32>
    %244 = arith.addf %243, %242 : vector<2x16xf32>
    %245 = arith.divf %243, %244 : vector<2x16xf32>
    %246 = vector.extract_strided_slice %225 {offsets = [0, 32], sizes = [2, 16], strides = [1, 1]} : vector<2x48xf32> to vector<2x16xf32>
    %247 = vector.extract_strided_slice %229 {offsets = [0, 32], sizes = [2, 16], strides = [1, 1]} : vector<2x48xf32> to vector<2x16xf32>
    %248 = arith.mulf %237, %247 : vector<2x16xf32>
    %249 = arith.addf %246, %248 : vector<2x16xf32>
    %250 = math.tanh %249 : vector<2x16xf32>
    %cst_75 = arith.constant 1.000000e+00 : f32
    %251 = vector.broadcast %cst_75 : f32 to vector<2x16xf32>
    %252 = arith.subf %251, %245 : vector<2x16xf32>
    %253 = arith.mulf %252, %250 : vector<2x16xf32>
    %254 = arith.mulf %245, %213 : vector<2x16xf32>
    %255 = arith.addf %253, %254 : vector<2x16xf32>
    %c0_76 = arith.constant 0 : index
    %256 = arith.index_cast %222 : i32 to index
    %c0_77 = arith.constant 0 : index
    %c0_78 = arith.constant 0 : index
    %257 = vector.load %arg5[%c0_76, %256, %c0_77, %c0_78] : memref<1x8x2x16xf32, #tpu.memory_space<vmem>>, vector<1x1x2x16xf32>
    %258 = vector.shape_cast %257 : vector<1x1x2x16xf32> to vector<2x16xf32>
    %259 = vector.shape_cast %255 : vector<2x16xf32> to vector<1x1x2x16xf32>
    tpu.vector_store %arg5[%c0_76, %256, %c0_77, %c0_78], %259 {strides = array<i32>} : memref<1x8x2x16xf32, #tpu.memory_space<vmem>>, vector<1x1x2x16xf32>,
    %c6_i32 = arith.constant 6 : i32
    %c1_i32_79 = arith.constant 1 : i32
    %260 = arith.subi %c1_i32_79, %arg0 : i32
    %261 = arith.muli %260, %c6_i32 : i32
    %c7_i32_80 = arith.constant 7 : i32
    %262 = arith.subi %c7_i32_80, %c6_i32 : i32
    %263 = arith.muli %arg0, %262 : i32
    %264 = arith.addi %261, %263 : i32
    %c0_81 = arith.constant 0 : index
    %265 = arith.index_cast %264 : i32 to index
    %c0_82 = arith.constant 0 : index
    %c0_83 = arith.constant 0 : index
    %266 = vector.load %arg2[%c0_81, %265, %c0_82, %c0_83] : memref<1x8x2x48xf32, #tpu.memory_space<vmem>>, vector<1x1x2x48xf32>
    %267 = vector.shape_cast %266 : vector<1x1x2x48xf32> to vector<2x48xf32>
    %268 = arith.truncf %255 : vector<2x16xf32> to vector<2x16xbf16>
    %cst_84 = arith.constant dense<0.000000e+00> : vector<2x48xf32>
    %269 = tpu.matmul %268, %4, %cst_84 {dimension_numbers = #tpu.dot_dimension_numbers<[1], [0], [0], [1], [0, 0, 1, 1], [], []>} : vector<2x16xbf16>, vector<16x48xbf16>, vector<2x48xf32> -> vector<2x48xf32>
    %270 = vector.broadcast %6 : vector<1x48xf32> to vector<2x48xf32>
    %271 = arith.addf %269, %270 : vector<2x48xf32>
    %272 = vector.extract_strided_slice %267 {offsets = [0, 0], sizes = [2, 16], strides = [1, 1]} : vector<2x48xf32> to vector<2x16xf32>
    %273 = vector.extract_strided_slice %271 {offsets = [0, 0], sizes = [2, 16], strides = [1, 1]} : vector<2x48xf32> to vector<2x16xf32>
    %274 = arith.addf %272, %273 : vector<2x16xf32>
    %275 = arith.negf %274 : vector<2x16xf32>
    %276 = math.exp %275 : vector<2x16xf32>
    %cst_85 = arith.constant 1.000000e+00 : f32
    %277 = vector.broadcast %cst_85 : f32 to vector<2x16xf32>
    %278 = arith.addf %277, %276 : vector<2x16xf32>
    %279 = arith.divf %277, %278 : vector<2x16xf32>
    %280 = vector.extract_strided_slice %267 {offsets = [0, 16], sizes = [2, 16], strides = [1, 1]} : vector<2x48xf32> to vector<2x16xf32>
    %281 = vector.extract_strided_slice %271 {offsets = [0, 16], sizes = [2, 16], strides = [1, 1]} : vector<2x48xf32> to vector<2x16xf32>
    %282 = arith.addf %280, %281 : vector<2x16xf32>
    %283 = arith.negf %282 : vector<2x16xf32>
    %284 = math.exp %283 : vector<2x16xf32>
    %cst_86 = arith.constant 1.000000e+00 : f32
    %285 = vector.broadcast %cst_86 : f32 to vector<2x16xf32>
    %286 = arith.addf %285, %284 : vector<2x16xf32>
    %287 = arith.divf %285, %286 : vector<2x16xf32>
    %288 = vector.extract_strided_slice %267 {offsets = [0, 32], sizes = [2, 16], strides = [1, 1]} : vector<2x48xf32> to vector<2x16xf32>
    %289 = vector.extract_strided_slice %271 {offsets = [0, 32], sizes = [2, 16], strides = [1, 1]} : vector<2x48xf32> to vector<2x16xf32>
    %290 = arith.mulf %279, %289 : vector<2x16xf32>
    %291 = arith.addf %288, %290 : vector<2x16xf32>
    %292 = math.tanh %291 : vector<2x16xf32>
    %cst_87 = arith.constant 1.000000e+00 : f32
    %293 = vector.broadcast %cst_87 : f32 to vector<2x16xf32>
    %294 = arith.subf %293, %287 : vector<2x16xf32>
    %295 = arith.mulf %294, %292 : vector<2x16xf32>
    %296 = arith.mulf %287, %255 : vector<2x16xf32>
    %297 = arith.addf %295, %296 : vector<2x16xf32>
    %c0_88 = arith.constant 0 : index
    %298 = arith.index_cast %264 : i32 to index
    %c0_89 = arith.constant 0 : index
    %c0_90 = arith.constant 0 : index
    %299 = vector.load %arg5[%c0_88, %298, %c0_89, %c0_90] : memref<1x8x2x16xf32, #tpu.memory_space<vmem>>, vector<1x1x2x16xf32>
    %300 = vector.shape_cast %299 : vector<1x1x2x16xf32> to vector<2x16xf32>
    %301 = vector.shape_cast %297 : vector<2x16xf32> to vector<1x1x2x16xf32>
    tpu.vector_store %arg5[%c0_88, %298, %c0_89, %c0_90], %301 {strides = array<i32>} : memref<1x8x2x16xf32, #tpu.memory_space<vmem>>, vector<1x1x2x16xf32>,
    %c7_i32_91 = arith.constant 7 : i32
    %c1_i32_92 = arith.constant 1 : i32
    %302 = arith.subi %c1_i32_92, %arg0 : i32
    %303 = arith.muli %302, %c7_i32_91 : i32
    %c7_i32_93 = arith.constant 7 : i32
    %304 = arith.subi %c7_i32_93, %c7_i32_91 : i32
    %305 = arith.muli %arg0, %304 : i32
    %306 = arith.addi %303, %305 : i32
    %c0_94 = arith.constant 0 : index
    %307 = arith.index_cast %306 : i32 to index
    %c0_95 = arith.constant 0 : index
    %c0_96 = arith.constant 0 : index
    %308 = vector.load %arg2[%c0_94, %307, %c0_95, %c0_96] : memref<1x8x2x48xf32, #tpu.memory_space<vmem>>, vector<1x1x2x48xf32>
    %309 = vector.shape_cast %308 : vector<1x1x2x48xf32> to vector<2x48xf32>
    %310 = arith.truncf %297 : vector<2x16xf32> to vector<2x16xbf16>
    %cst_97 = arith.constant dense<0.000000e+00> : vector<2x48xf32>
    %311 = tpu.matmul %310, %4, %cst_97 {dimension_numbers = #tpu.dot_dimension_numbers<[1], [0], [0], [1], [0, 0, 1, 1], [], []>} : vector<2x16xbf16>, vector<16x48xbf16>, vector<2x48xf32> -> vector<2x48xf32>
    %312 = vector.broadcast %6 : vector<1x48xf32> to vector<2x48xf32>
    %313 = arith.addf %311, %312 : vector<2x48xf32>
    %314 = vector.extract_strided_slice %309 {offsets = [0, 0], sizes = [2, 16], strides = [1, 1]} : vector<2x48xf32> to vector<2x16xf32>
    %315 = vector.extract_strided_slice %313 {offsets = [0, 0], sizes = [2, 16], strides = [1, 1]} : vector<2x48xf32> to vector<2x16xf32>
    %316 = arith.addf %314, %315 : vector<2x16xf32>
    %317 = arith.negf %316 : vector<2x16xf32>
    %318 = math.exp %317 : vector<2x16xf32>
    %cst_98 = arith.constant 1.000000e+00 : f32
    %319 = vector.broadcast %cst_98 : f32 to vector<2x16xf32>
    %320 = arith.addf %319, %318 : vector<2x16xf32>
    %321 = arith.divf %319, %320 : vector<2x16xf32>
    %322 = vector.extract_strided_slice %309 {offsets = [0, 16], sizes = [2, 16], strides = [1, 1]} : vector<2x48xf32> to vector<2x16xf32>
    %323 = vector.extract_strided_slice %313 {offsets = [0, 16], sizes = [2, 16], strides = [1, 1]} : vector<2x48xf32> to vector<2x16xf32>
    %324 = arith.addf %322, %323 : vector<2x16xf32>
    %325 = arith.negf %324 : vector<2x16xf32>
    %326 = math.exp %325 : vector<2x16xf32>
    %cst_99 = arith.constant 1.000000e+00 : f32
    %327 = vector.broadcast %cst_99 : f32 to vector<2x16xf32>
    %328 = arith.addf %327, %326 : vector<2x16xf32>
    %329 = arith.divf %327, %328 : vector<2x16xf32>
    %330 = vector.extract_strided_slice %309 {offsets = [0, 32], sizes = [2, 16], strides = [1, 1]} : vector<2x48xf32> to vector<2x16xf32>
    %331 = vector.extract_strided_slice %313 {offsets = [0, 32], sizes = [2, 16], strides = [1, 1]} : vector<2x48xf32> to vector<2x16xf32>
    %332 = arith.mulf %321, %331 : vector<2x16xf32>
    %333 = arith.addf %330, %332 : vector<2x16xf32>
    %334 = math.tanh %333 : vector<2x16xf32>
    %cst_100 = arith.constant 1.000000e+00 : f32
    %335 = vector.broadcast %cst_100 : f32 to vector<2x16xf32>
    %336 = arith.subf %335, %329 : vector<2x16xf32>
    %337 = arith.mulf %336, %334 : vector<2x16xf32>
    %338 = arith.mulf %329, %297 : vector<2x16xf32>
    %339 = arith.addf %337, %338 : vector<2x16xf32>
    %c0_101 = arith.constant 0 : index
    %340 = arith.index_cast %306 : i32 to index
    %c0_102 = arith.constant 0 : index
    %c0_103 = arith.constant 0 : index
    %341 = vector.load %arg5[%c0_101, %340, %c0_102, %c0_103] : memref<1x8x2x16xf32, #tpu.memory_space<vmem>>, vector<1x1x2x16xf32>
    %342 = vector.shape_cast %341 : vector<1x1x2x16xf32> to vector<2x16xf32>
    %343 = vector.shape_cast %339 : vector<2x16xf32> to vector<1x1x2x16xf32>
    tpu.vector_store %arg5[%c0_101, %340, %c0_102, %c0_103], %343 {strides = array<i32>} : memref<1x8x2x16xf32, #tpu.memory_space<vmem>>, vector<1x1x2x16xf32>,
    %c8_i32 = arith.constant 8 : i32
    %c0_104 = arith.constant 0 : index
    %c0_105 = arith.constant 0 : index
    %344 = vector.load %arg7[%c0_104, %c0_105] : memref<2x16xf32, #tpu.memory_space<vmem>>, vector<2x16xf32>
    tpu.vector_store %arg7[%c0_104, %c0_105], %339 {strides = array<i32>} : memref<2x16xf32, #tpu.memory_space<vmem>>, vector<2x16xf32>,
    %c0_106 = arith.constant 0 : index
    %c0_107 = arith.constant 0 : index
    %c0_108 = arith.constant 0 : index
    %345 = vector.load %arg6[%c0_106, %c0_107, %c0_108] : memref<1x2x16xf32, #tpu.memory_space<vmem>>, vector<1x2x16xf32>
    %346 = vector.shape_cast %345 : vector<1x2x16xf32> to vector<2x16xf32>
    %347 = vector.shape_cast %339 : vector<2x16xf32> to vector<1x2x16xf32>
    tpu.vector_store %arg6[%c0_106, %c0_107, %c0_108], %347 {strides = array<i32>} : memref<1x2x16xf32, #tpu.memory_space<vmem>>, vector<1x2x16xf32>,
    return
  }
  func.func @transform_0(%arg0: i32, %arg1: i32) -> (i32, i32, i32, i32) {
    %c1_i32 = arith.constant 1 : i32
    %0 = arith.subi %c1_i32, %arg0 : i32
    %1 = arith.muli %0, %arg1 : i32
    %c0_i32 = arith.constant 0 : i32
    %2 = arith.subi %c0_i32, %arg1 : i32
    %3 = arith.muli %arg0, %2 : i32
    %4 = arith.addi %1, %3 : i32
    %c0_i32_0 = arith.constant 0 : i32
    %c0_i32_1 = arith.constant 0 : i32
    %c0_i32_2 = arith.constant 0 : i32
    return %arg0, %4, %c0_i32_0, %c0_i32_1 : i32, i32, i32, i32
  }
  func.func @transform_1(%arg0: i32, %arg1: i32) -> (i32, i32, i32) {
    %c0_i32 = arith.constant 0 : i32
    %c0_i32_0 = arith.constant 0 : i32
    %c0_i32_1 = arith.constant 0 : i32
    return %arg0, %c0_i32, %c0_i32_0 : i32, i32, i32
  }
  func.func @transform_2(%arg0: i32, %arg1: i32) -> (i32, i32, i32) {
    %c0_i32 = arith.constant 0 : i32
    %c0_i32_0 = arith.constant 0 : i32
    %c0_i32_1 = arith.constant 0 : i32
    return %arg0, %c0_i32, %c0_i32_0 : i32, i32, i32
  }
  func.func @transform_3(%arg0: i32, %arg1: i32) -> (i32, i32, i32, i32) {
    %c1_i32 = arith.constant 1 : i32
    %0 = arith.subi %c1_i32, %arg0 : i32
    %1 = arith.muli %0, %arg1 : i32
    %c0_i32 = arith.constant 0 : i32
    %2 = arith.subi %c0_i32, %arg1 : i32
    %3 = arith.muli %arg0, %2 : i32
    %4 = arith.addi %1, %3 : i32
    %c0_i32_0 = arith.constant 0 : i32
    %c0_i32_1 = arith.constant 0 : i32
    %c0_i32_2 = arith.constant 0 : i32
    return %arg0, %4, %c0_i32_0, %c0_i32_1 : i32, i32, i32, i32
  }
  func.func @transform_4(%arg0: i32, %arg1: i32) -> (i32, i32, i32) {
    %c0_i32 = arith.constant 0 : i32
    %c0_i32_0 = arith.constant 0 : i32
    %c0_i32_1 = arith.constant 0 : i32
    return %arg0, %c0_i32, %c0_i32_0 : i32, i32, i32
  }
}

module attributes {stable_mosaic.version = 11 : i64} {
  func.func @_gru_proj_kernel(%arg0: i32, %arg1: i32, %arg2: memref<2x16x16xf32, #tpu.memory_space<vmem>>, %arg3: memref<2x2x16x48xbf16, #tpu.memory_space<vmem>>, %arg4: memref<2x1x48xf32, #tpu.memory_space<vmem>>, %arg5: memref<2x16x48xf32, #tpu.memory_space<vmem>>, %arg6: memref<2x16x48xf32, #tpu.memory_space<vmem>>) attributes {dimension_semantics = [#tpu.dimension_semantics<parallel>, #tpu.dimension_semantics<arbitrary>], iteration_bounds = array<i64: 1, 1>, scalar_prefetch = 0 : i64, scratch_operands = 1 : i64, tpu.core_type = #tpu.core_type<tc>, window_params = [{transform_indices = @transform_0, window_bounds = array<i64: 2, 16, 16>}, {transform_indices = @transform_1, window_bounds = array<i64: 2, 2, 16, 48>}, {pipeline_mode = #tpu.pipeline_mode<synchronous>, transform_indices = @transform_2, window_bounds = array<i64: 2, 1, 48>}, {transform_indices = @transform_3, window_bounds = array<i64: 2, 16, 48>}]} {
    %c0_i32 = arith.constant 0 : i32
    %0 = arith.cmpi eq, %arg1, %c0_i32 : i32
    %1 = arith.extui %0 : i1 to i32
    %c0_i32_0 = arith.constant 0 : i32
    %2 = arith.cmpi ne, %1, %c0_i32_0 : i32
    scf.if %2 {
      %cst_44 = arith.constant 0.000000e+00 : f32
      %44 = vector.broadcast %cst_44 : f32 to vector<2x16x48xf32>
      %c0_45 = arith.constant 0 : index
      %c0_46 = arith.constant 0 : index
      %c0_47 = arith.constant 0 : index
      %45 = vector.load %arg6[%c0_45, %c0_46, %c0_47] : memref<2x16x48xf32, #tpu.memory_space<vmem>>, vector<2x16x48xf32>
      tpu.vector_store %arg6[%c0_45, %c0_46, %c0_47], %44 {strides = array<i32>} : memref<2x16x48xf32, #tpu.memory_space<vmem>>, vector<2x16x48xf32>,
    } else {
    }
    %c0 = arith.constant 0 : index
    %c0_1 = arith.constant 0 : index
    %c0_2 = arith.constant 0 : index
    %3 = vector.load %arg6[%c0, %c0_1, %c0_2] : memref<2x16x48xf32, #tpu.memory_space<vmem>>, vector<1x16x48xf32>
    %4 = vector.shape_cast %3 : vector<1x16x48xf32> to vector<16x48xf32>
    %c0_3 = arith.constant 0 : index
    %c0_4 = arith.constant 0 : index
    %c0_5 = arith.constant 0 : index
    %5 = vector.load %arg2[%c0_3, %c0_4, %c0_5] : memref<2x16x16xf32, #tpu.memory_space<vmem>>, vector<1x16x16xf32>
    %6 = vector.shape_cast %5 : vector<1x16x16xf32> to vector<16x16xf32>
    %7 = arith.truncf %6 : vector<16x16xf32> to vector<16x16xbf16>
    %c0_6 = arith.constant 0 : index
    %c0_7 = arith.constant 0 : index
    %c0_8 = arith.constant 0 : index
    %c0_9 = arith.constant 0 : index
    %8 = vector.load %arg3[%c0_6, %c0_7, %c0_8, %c0_9] : memref<2x2x16x48xbf16, #tpu.memory_space<vmem>>, vector<1x1x16x48xbf16>
    %9 = vector.shape_cast %8 : vector<1x1x16x48xbf16> to vector<16x48xbf16>
    %cst = arith.constant dense<0.000000e+00> : vector<16x48xf32>
    %10 = tpu.matmul %7, %9, %cst {dimension_numbers = #tpu.dot_dimension_numbers<[1], [0], [0], [1], [0, 0, 1, 1], [], []>} : vector<16x16xbf16>, vector<16x48xbf16>, vector<16x48xf32> -> vector<16x48xf32>
    %11 = arith.addf %4, %10 : vector<16x48xf32>
    %c1 = arith.constant 1 : index
    %c0_10 = arith.constant 0 : index
    %c0_11 = arith.constant 0 : index
    %12 = vector.load %arg2[%c1, %c0_10, %c0_11] : memref<2x16x16xf32, #tpu.memory_space<vmem>>, vector<1x16x16xf32>
    %13 = vector.shape_cast %12 : vector<1x16x16xf32> to vector<16x16xf32>
    %14 = arith.truncf %13 : vector<16x16xf32> to vector<16x16xbf16>
    %c0_12 = arith.constant 0 : index
    %c1_13 = arith.constant 1 : index
    %c0_14 = arith.constant 0 : index
    %c0_15 = arith.constant 0 : index
    %15 = vector.load %arg3[%c0_12, %c1_13, %c0_14, %c0_15] : memref<2x2x16x48xbf16, #tpu.memory_space<vmem>>, vector<1x1x16x48xbf16>
    %16 = vector.shape_cast %15 : vector<1x1x16x48xbf16> to vector<16x48xbf16>
    %cst_16 = arith.constant dense<0.000000e+00> : vector<16x48xf32>
    %17 = tpu.matmul %14, %16, %cst_16 {dimension_numbers = #tpu.dot_dimension_numbers<[1], [0], [0], [1], [0, 0, 1, 1], [], []>} : vector<16x16xbf16>, vector<16x48xbf16>, vector<16x48xf32> -> vector<16x48xf32>
    %18 = arith.addf %11, %17 : vector<16x48xf32>
    %c0_17 = arith.constant 0 : index
    %c0_18 = arith.constant 0 : index
    %c0_19 = arith.constant 0 : index
    %19 = vector.load %arg6[%c0_17, %c0_18, %c0_19] : memref<2x16x48xf32, #tpu.memory_space<vmem>>, vector<1x16x48xf32>
    %20 = vector.shape_cast %19 : vector<1x16x48xf32> to vector<16x48xf32>
    %21 = vector.shape_cast %18 : vector<16x48xf32> to vector<1x16x48xf32>
    tpu.vector_store %arg6[%c0_17, %c0_18, %c0_19], %21 {strides = array<i32>} : memref<2x16x48xf32, #tpu.memory_space<vmem>>, vector<1x16x48xf32>,
    %c1_20 = arith.constant 1 : index
    %c0_21 = arith.constant 0 : index
    %c0_22 = arith.constant 0 : index
    %22 = vector.load %arg6[%c1_20, %c0_21, %c0_22] : memref<2x16x48xf32, #tpu.memory_space<vmem>>, vector<1x16x48xf32>
    %23 = vector.shape_cast %22 : vector<1x16x48xf32> to vector<16x48xf32>
    %c0_23 = arith.constant 0 : index
    %c0_24 = arith.constant 0 : index
    %c0_25 = arith.constant 0 : index
    %24 = vector.load %arg2[%c0_23, %c0_24, %c0_25] : memref<2x16x16xf32, #tpu.memory_space<vmem>>, vector<1x16x16xf32>
    %25 = vector.shape_cast %24 : vector<1x16x16xf32> to vector<16x16xf32>
    %26 = arith.truncf %25 : vector<16x16xf32> to vector<16x16xbf16>
    %c1_26 = arith.constant 1 : index
    %c0_27 = arith.constant 0 : index
    %c0_28 = arith.constant 0 : index
    %c0_29 = arith.constant 0 : index
    %27 = vector.load %arg3[%c1_26, %c0_27, %c0_28, %c0_29] : memref<2x2x16x48xbf16, #tpu.memory_space<vmem>>, vector<1x1x16x48xbf16>
    %28 = vector.shape_cast %27 : vector<1x1x16x48xbf16> to vector<16x48xbf16>
    %cst_30 = arith.constant dense<0.000000e+00> : vector<16x48xf32>
    %29 = tpu.matmul %26, %28, %cst_30 {dimension_numbers = #tpu.dot_dimension_numbers<[1], [0], [0], [1], [0, 0, 1, 1], [], []>} : vector<16x16xbf16>, vector<16x48xbf16>, vector<16x48xf32> -> vector<16x48xf32>
    %30 = arith.addf %23, %29 : vector<16x48xf32>
    %c1_31 = arith.constant 1 : index
    %c0_32 = arith.constant 0 : index
    %c0_33 = arith.constant 0 : index
    %31 = vector.load %arg2[%c1_31, %c0_32, %c0_33] : memref<2x16x16xf32, #tpu.memory_space<vmem>>, vector<1x16x16xf32>
    %32 = vector.shape_cast %31 : vector<1x16x16xf32> to vector<16x16xf32>
    %33 = arith.truncf %32 : vector<16x16xf32> to vector<16x16xbf16>
    %c1_34 = arith.constant 1 : index
    %c1_35 = arith.constant 1 : index
    %c0_36 = arith.constant 0 : index
    %c0_37 = arith.constant 0 : index
    %34 = vector.load %arg3[%c1_34, %c1_35, %c0_36, %c0_37] : memref<2x2x16x48xbf16, #tpu.memory_space<vmem>>, vector<1x1x16x48xbf16>
    %35 = vector.shape_cast %34 : vector<1x1x16x48xbf16> to vector<16x48xbf16>
    %cst_38 = arith.constant dense<0.000000e+00> : vector<16x48xf32>
    %36 = tpu.matmul %33, %35, %cst_38 {dimension_numbers = #tpu.dot_dimension_numbers<[1], [0], [0], [1], [0, 0, 1, 1], [], []>} : vector<16x16xbf16>, vector<16x48xbf16>, vector<16x48xf32> -> vector<16x48xf32>
    %37 = arith.addf %30, %36 : vector<16x48xf32>
    %c1_39 = arith.constant 1 : index
    %c0_40 = arith.constant 0 : index
    %c0_41 = arith.constant 0 : index
    %38 = vector.load %arg6[%c1_39, %c0_40, %c0_41] : memref<2x16x48xf32, #tpu.memory_space<vmem>>, vector<1x16x48xf32>
    %39 = vector.shape_cast %38 : vector<1x16x48xf32> to vector<16x48xf32>
    %40 = vector.shape_cast %37 : vector<16x48xf32> to vector<1x16x48xf32>
    tpu.vector_store %arg6[%c1_39, %c0_40, %c0_41], %40 {strides = array<i32>} : memref<2x16x48xf32, #tpu.memory_space<vmem>>, vector<1x16x48xf32>,
    %c0_i32_42 = arith.constant 0 : i32
    %41 = arith.cmpi eq, %arg1, %c0_i32_42 : i32
    %42 = arith.extui %41 : i1 to i32
    %c0_i32_43 = arith.constant 0 : i32
    %43 = arith.cmpi ne, %42, %c0_i32_43 : i32
    scf.if %43 {
      %c0_44 = arith.constant 0 : index
      %c0_45 = arith.constant 0 : index
      %c0_46 = arith.constant 0 : index
      %44 = vector.load %arg6[%c0_44, %c0_45, %c0_46] : memref<2x16x48xf32, #tpu.memory_space<vmem>>, vector<2x16x48xf32>
      %c0_47 = arith.constant 0 : index
      %c0_48 = arith.constant 0 : index
      %c0_49 = arith.constant 0 : index
      %45 = vector.load %arg4[%c0_47, %c0_48, %c0_49] : memref<2x1x48xf32, #tpu.memory_space<vmem>>, vector<2x1x48xf32>
      %46 = vector.broadcast %45 : vector<2x1x48xf32> to vector<2x16x48xf32>
      %47 = arith.addf %44, %46 : vector<2x16x48xf32>
      %c0_50 = arith.constant 0 : index
      %c0_51 = arith.constant 0 : index
      %c0_52 = arith.constant 0 : index
      %48 = vector.load %arg5[%c0_50, %c0_51, %c0_52] : memref<2x16x48xf32, #tpu.memory_space<vmem>>, vector<2x16x48xf32>
      tpu.vector_store %arg5[%c0_50, %c0_51, %c0_52], %47 {strides = array<i32>} : memref<2x16x48xf32, #tpu.memory_space<vmem>>, vector<2x16x48xf32>,
    } else {
    }
    return
  }
  func.func @transform_0(%arg0: i32, %arg1: i32) -> (i32, i32, i32) {
    %c0_i32 = arith.constant 0 : i32
    %c0_i32_0 = arith.constant 0 : i32
    return %c0_i32, %arg0, %arg1 : i32, i32, i32
  }
  func.func @transform_1(%arg0: i32, %arg1: i32) -> (i32, i32, i32, i32) {
    %c0_i32 = arith.constant 0 : i32
    %c0_i32_0 = arith.constant 0 : i32
    %c0_i32_1 = arith.constant 0 : i32
    %c0_i32_2 = arith.constant 0 : i32
    return %c0_i32, %c0_i32_0, %arg1, %c0_i32_1 : i32, i32, i32, i32
  }
  func.func @transform_2(%arg0: i32, %arg1: i32) -> (i32, i32, i32) {
    %c0_i32 = arith.constant 0 : i32
    %c0_i32_0 = arith.constant 0 : i32
    %c0_i32_1 = arith.constant 0 : i32
    %c0_i32_2 = arith.constant 0 : i32
    return %c0_i32, %c0_i32_0, %c0_i32_1 : i32, i32, i32
  }
  func.func @transform_3(%arg0: i32, %arg1: i32) -> (i32, i32, i32) {
    %c0_i32 = arith.constant 0 : i32
    %c0_i32_0 = arith.constant 0 : i32
    %c0_i32_1 = arith.constant 0 : i32
    return %c0_i32, %arg0, %c0_i32_0 : i32, i32, i32
  }
}

module attributes {stable_mosaic.version = 11 : i64} {
  func.func @_bigru_kernel(%arg0: i32, %arg1: i32, %arg2: memref<1x8x2x48xf32, #tpu.memory_space<vmem>>, %arg3: memref<1x16x48xbf16, #tpu.memory_space<vmem>>, %arg4: memref<1x1x48xf32, #tpu.memory_space<vmem>>, %arg5: memref<1x8x2x16xf32, #tpu.memory_space<vmem>>, %arg6: memref<1x2x16xf32, #tpu.memory_space<vmem>>, %arg7: memref<2x16xf32, #tpu.memory_space<vmem>>) attributes {dimension_semantics = [#tpu.dimension_semantics<parallel>, #tpu.dimension_semantics<arbitrary>], iteration_bounds = array<i64: 2, 1>, scalar_prefetch = 0 : i64, scratch_operands = 1 : i64, tpu.core_type = #tpu.core_type<tc>, window_params = [{transform_indices = @transform_0, window_bounds = array<i64: 1, 8, 2, 48>}, {transform_indices = @transform_1, window_bounds = array<i64: 1, 16, 48>}, {transform_indices = @transform_2, window_bounds = array<i64: 1, 1, 48>}, {transform_indices = @transform_3, window_bounds = array<i64: 1, 8, 2, 16>}, {transform_indices = @transform_4, window_bounds = array<i64: 1, 2, 16>}]} {
    %c0_i32 = arith.constant 0 : i32
    %0 = arith.cmpi eq, %arg1, %c0_i32 : i32
    %1 = arith.extui %0 : i1 to i32
    %c0_i32_0 = arith.constant 0 : i32
    %2 = arith.cmpi ne, %1, %c0_i32_0 : i32
    scf.if %2 {
      %cst_109 = arith.constant 0.000000e+00 : f32
      %348 = vector.broadcast %cst_109 : f32 to vector<2x16xf32>
      %c0_110 = arith.constant 0 : index
      %c0_111 = arith.constant 0 : index
      %349 = vector.load %arg7[%c0_110, %c0_111] : memref<2x16xf32, #tpu.memory_space<vmem>>, vector<2x16xf32>
      tpu.vector_store %arg7[%c0_110, %c0_111], %348 {strides = array<i32>} : memref<2x16xf32, #tpu.memory_space<vmem>>, vector<2x16xf32>,
    } else {
    }
    %c0 = arith.constant 0 : index
    %c0_1 = arith.constant 0 : index
    %c0_2 = arith.constant 0 : index
    %3 = vector.load %arg3[%c0, %c0_1, %c0_2] : memref<1x16x48xbf16, #tpu.memory_space<vmem>>, vector<1x16x48xbf16>
    %4 = vector.shape_cast %3 : vector<1x16x48xbf16> to vector<16x48xbf16>
    %c0_3 = arith.constant 0 : index
    %c0_4 = arith.constant 0 : index
    %c0_5 = arith.constant 0 : index
    %5 = vector.load %arg4[%c0_3, %c0_4, %c0_5] : memref<1x1x48xf32, #tpu.memory_space<vmem>>, vector<1x1x48xf32>
    %6 = vector.shape_cast %5 : vector<1x1x48xf32> to vector<1x48xf32>
    %c0_6 = arith.constant 0 : index
    %c0_7 = arith.constant 0 : index
    %7 = vector.load %arg7[%c0_6, %c0_7] : memref<2x16xf32, #tpu.memory_space<vmem>>, vector<2x16xf32>
    %c0_i32_8 = arith.constant 0 : i32
    %c1_i32 = arith.constant 1 : i32
    %8 = arith.subi %c1_i32, %arg0 : i32
    %9 = arith.muli %8, %c0_i32_8 : i32
    %c7_i32 = arith.constant 7 : i32
    %10 = arith.subi %c7_i32, %c0_i32_8 : i32
    %11 = arith.muli %arg0, %10 : i32
    %12 = arith.addi %9, %11 : i32
    %c0_9 = arith.constant 0 : index
    %13 = arith.index_cast %12 : i32 to index
    %c0_10 = arith.constant 0 : index
    %c0_11 = arith.constant 0 : index
    %14 = vector.load %arg2[%c0_9, %13, %c0_10, %c0_11] : memref<1x8x2x48xf32, #tpu.memory_space<vmem>>, vector<1x1x2x48xf32>
    %15 = vector.shape_cast %14 : vector<1x1x2x48xf32> to vector<2x48xf32>
    %16 = arith.truncf %7 : vector<2x16xf32> to vector<2x16xbf16>
    %cst = arith.constant dense<0.000000e+00> : vector<2x48xf32>
    %17 = tpu.matmul %16, %4, %cst {dimension_numbers = #tpu.dot_dimension_numbers<[1], [0], [0], [1], [0, 0, 1, 1], [], []>} : vector<2x16xbf16>, vector<16x48xbf16>, vector<2x48xf32> -> vector<2x48xf32>
    %18 = vector.broadcast %6 : vector<1x48xf32> to vector<2x48xf32>
    %19 = arith.addf %17, %18 : vector<2x48xf32>
    %20 = vector.extract_strided_slice %15 {offsets = [0, 0], sizes = [2, 16], strides = [1, 1]} : vector<2x48xf32> to vector<2x16xf32>
    %21 = vector.extract_strided_slice %19 {offsets = [0, 0], sizes = [2, 16], strides = [1, 1]} : vector<2x48xf32> to vector<2x16xf32>
    %22 = arith.addf %20, %21 : vector<2x16xf32>
    %23 = arith.negf %22 : vector<2x16xf32>
    %24 = math.exp %23 : vector<2x16xf32>
    %cst_12 = arith.constant 1.000000e+00 : f32
    %25 = vector.broadcast %cst_12 : f32 to vector<2x16xf32>
    %26 = arith.addf %25, %24 : vector<2x16xf32>
    %27 = arith.divf %25, %26 : vector<2x16xf32>
    %28 = vector.extract_strided_slice %15 {offsets = [0, 16], sizes = [2, 16], strides = [1, 1]} : vector<2x48xf32> to vector<2x16xf32>
    %29 = vector.extract_strided_slice %19 {offsets = [0, 16], sizes = [2, 16], strides = [1, 1]} : vector<2x48xf32> to vector<2x16xf32>
    %30 = arith.addf %28, %29 : vector<2x16xf32>
    %31 = arith.negf %30 : vector<2x16xf32>
    %32 = math.exp %31 : vector<2x16xf32>
    %cst_13 = arith.constant 1.000000e+00 : f32
    %33 = vector.broadcast %cst_13 : f32 to vector<2x16xf32>
    %34 = arith.addf %33, %32 : vector<2x16xf32>
    %35 = arith.divf %33, %34 : vector<2x16xf32>
    %36 = vector.extract_strided_slice %15 {offsets = [0, 32], sizes = [2, 16], strides = [1, 1]} : vector<2x48xf32> to vector<2x16xf32>
    %37 = vector.extract_strided_slice %19 {offsets = [0, 32], sizes = [2, 16], strides = [1, 1]} : vector<2x48xf32> to vector<2x16xf32>
    %38 = arith.mulf %27, %37 : vector<2x16xf32>
    %39 = arith.addf %36, %38 : vector<2x16xf32>
    %40 = math.tanh %39 : vector<2x16xf32>
    %cst_14 = arith.constant 1.000000e+00 : f32
    %41 = vector.broadcast %cst_14 : f32 to vector<2x16xf32>
    %42 = arith.subf %41, %35 : vector<2x16xf32>
    %43 = arith.mulf %42, %40 : vector<2x16xf32>
    %44 = arith.mulf %35, %7 : vector<2x16xf32>
    %45 = arith.addf %43, %44 : vector<2x16xf32>
    %c0_15 = arith.constant 0 : index
    %46 = arith.index_cast %12 : i32 to index
    %c0_16 = arith.constant 0 : index
    %c0_17 = arith.constant 0 : index
    %47 = vector.load %arg5[%c0_15, %46, %c0_16, %c0_17] : memref<1x8x2x16xf32, #tpu.memory_space<vmem>>, vector<1x1x2x16xf32>
    %48 = vector.shape_cast %47 : vector<1x1x2x16xf32> to vector<2x16xf32>
    %49 = vector.shape_cast %45 : vector<2x16xf32> to vector<1x1x2x16xf32>
    tpu.vector_store %arg5[%c0_15, %46, %c0_16, %c0_17], %49 {strides = array<i32>} : memref<1x8x2x16xf32, #tpu.memory_space<vmem>>, vector<1x1x2x16xf32>,
    %c1_i32_18 = arith.constant 1 : i32
    %c1_i32_19 = arith.constant 1 : i32
    %50 = arith.subi %c1_i32_19, %arg0 : i32
    %51 = arith.muli %50, %c1_i32_18 : i32
    %c7_i32_20 = arith.constant 7 : i32
    %52 = arith.subi %c7_i32_20, %c1_i32_18 : i32
    %53 = arith.muli %arg0, %52 : i32
    %54 = arith.addi %51, %53 : i32
    %c0_21 = arith.constant 0 : index
    %55 = arith.index_cast %54 : i32 to index
    %c0_22 = arith.constant 0 : index
    %c0_23 = arith.constant 0 : index
    %56 = vector.load %arg2[%c0_21, %55, %c0_22, %c0_23] : memref<1x8x2x48xf32, #tpu.memory_space<vmem>>, vector<1x1x2x48xf32>
    %57 = vector.shape_cast %56 : vector<1x1x2x48xf32> to vector<2x48xf32>
    %58 = arith.truncf %45 : vector<2x16xf32> to vector<2x16xbf16>
    %cst_24 = arith.constant dense<0.000000e+00> : vector<2x48xf32>
    %59 = tpu.matmul %58, %4, %cst_24 {dimension_numbers = #tpu.dot_dimension_numbers<[1], [0], [0], [1], [0, 0, 1, 1], [], []>} : vector<2x16xbf16>, vector<16x48xbf16>, vector<2x48xf32> -> vector<2x48xf32>
    %60 = vector.broadcast %6 : vector<1x48xf32> to vector<2x48xf32>
    %61 = arith.addf %59, %60 : vector<2x48xf32>
    %62 = vector.extract_strided_slice %57 {offsets = [0, 0], sizes = [2, 16], strides = [1, 1]} : vector<2x48xf32> to vector<2x16xf32>
    %63 = vector.extract_strided_slice %61 {offsets = [0, 0], sizes = [2, 16], strides = [1, 1]} : vector<2x48xf32> to vector<2x16xf32>
    %64 = arith.addf %62, %63 : vector<2x16xf32>
    %65 = arith.negf %64 : vector<2x16xf32>
    %66 = math.exp %65 : vector<2x16xf32>
    %cst_25 = arith.constant 1.000000e+00 : f32
    %67 = vector.broadcast %cst_25 : f32 to vector<2x16xf32>
    %68 = arith.addf %67, %66 : vector<2x16xf32>
    %69 = arith.divf %67, %68 : vector<2x16xf32>
    %70 = vector.extract_strided_slice %57 {offsets = [0, 16], sizes = [2, 16], strides = [1, 1]} : vector<2x48xf32> to vector<2x16xf32>
    %71 = vector.extract_strided_slice %61 {offsets = [0, 16], sizes = [2, 16], strides = [1, 1]} : vector<2x48xf32> to vector<2x16xf32>
    %72 = arith.addf %70, %71 : vector<2x16xf32>
    %73 = arith.negf %72 : vector<2x16xf32>
    %74 = math.exp %73 : vector<2x16xf32>
    %cst_26 = arith.constant 1.000000e+00 : f32
    %75 = vector.broadcast %cst_26 : f32 to vector<2x16xf32>
    %76 = arith.addf %75, %74 : vector<2x16xf32>
    %77 = arith.divf %75, %76 : vector<2x16xf32>
    %78 = vector.extract_strided_slice %57 {offsets = [0, 32], sizes = [2, 16], strides = [1, 1]} : vector<2x48xf32> to vector<2x16xf32>
    %79 = vector.extract_strided_slice %61 {offsets = [0, 32], sizes = [2, 16], strides = [1, 1]} : vector<2x48xf32> to vector<2x16xf32>
    %80 = arith.mulf %69, %79 : vector<2x16xf32>
    %81 = arith.addf %78, %80 : vector<2x16xf32>
    %82 = math.tanh %81 : vector<2x16xf32>
    %cst_27 = arith.constant 1.000000e+00 : f32
    %83 = vector.broadcast %cst_27 : f32 to vector<2x16xf32>
    %84 = arith.subf %83, %77 : vector<2x16xf32>
    %85 = arith.mulf %84, %82 : vector<2x16xf32>
    %86 = arith.mulf %77, %45 : vector<2x16xf32>
    %87 = arith.addf %85, %86 : vector<2x16xf32>
    %c0_28 = arith.constant 0 : index
    %88 = arith.index_cast %54 : i32 to index
    %c0_29 = arith.constant 0 : index
    %c0_30 = arith.constant 0 : index
    %89 = vector.load %arg5[%c0_28, %88, %c0_29, %c0_30] : memref<1x8x2x16xf32, #tpu.memory_space<vmem>>, vector<1x1x2x16xf32>
    %90 = vector.shape_cast %89 : vector<1x1x2x16xf32> to vector<2x16xf32>
    %91 = vector.shape_cast %87 : vector<2x16xf32> to vector<1x1x2x16xf32>
    tpu.vector_store %arg5[%c0_28, %88, %c0_29, %c0_30], %91 {strides = array<i32>} : memref<1x8x2x16xf32, #tpu.memory_space<vmem>>, vector<1x1x2x16xf32>,
    %c2_i32 = arith.constant 2 : i32
    %c1_i32_31 = arith.constant 1 : i32
    %92 = arith.subi %c1_i32_31, %arg0 : i32
    %93 = arith.muli %92, %c2_i32 : i32
    %c7_i32_32 = arith.constant 7 : i32
    %94 = arith.subi %c7_i32_32, %c2_i32 : i32
    %95 = arith.muli %arg0, %94 : i32
    %96 = arith.addi %93, %95 : i32
    %c0_33 = arith.constant 0 : index
    %97 = arith.index_cast %96 : i32 to index
    %c0_34 = arith.constant 0 : index
    %c0_35 = arith.constant 0 : index
    %98 = vector.load %arg2[%c0_33, %97, %c0_34, %c0_35] : memref<1x8x2x48xf32, #tpu.memory_space<vmem>>, vector<1x1x2x48xf32>
    %99 = vector.shape_cast %98 : vector<1x1x2x48xf32> to vector<2x48xf32>
    %100 = arith.truncf %87 : vector<2x16xf32> to vector<2x16xbf16>
    %cst_36 = arith.constant dense<0.000000e+00> : vector<2x48xf32>
    %101 = tpu.matmul %100, %4, %cst_36 {dimension_numbers = #tpu.dot_dimension_numbers<[1], [0], [0], [1], [0, 0, 1, 1], [], []>} : vector<2x16xbf16>, vector<16x48xbf16>, vector<2x48xf32> -> vector<2x48xf32>
    %102 = vector.broadcast %6 : vector<1x48xf32> to vector<2x48xf32>
    %103 = arith.addf %101, %102 : vector<2x48xf32>
    %104 = vector.extract_strided_slice %99 {offsets = [0, 0], sizes = [2, 16], strides = [1, 1]} : vector<2x48xf32> to vector<2x16xf32>
    %105 = vector.extract_strided_slice %103 {offsets = [0, 0], sizes = [2, 16], strides = [1, 1]} : vector<2x48xf32> to vector<2x16xf32>
    %106 = arith.addf %104, %105 : vector<2x16xf32>
    %107 = arith.negf %106 : vector<2x16xf32>
    %108 = math.exp %107 : vector<2x16xf32>
    %cst_37 = arith.constant 1.000000e+00 : f32
    %109 = vector.broadcast %cst_37 : f32 to vector<2x16xf32>
    %110 = arith.addf %109, %108 : vector<2x16xf32>
    %111 = arith.divf %109, %110 : vector<2x16xf32>
    %112 = vector.extract_strided_slice %99 {offsets = [0, 16], sizes = [2, 16], strides = [1, 1]} : vector<2x48xf32> to vector<2x16xf32>
    %113 = vector.extract_strided_slice %103 {offsets = [0, 16], sizes = [2, 16], strides = [1, 1]} : vector<2x48xf32> to vector<2x16xf32>
    %114 = arith.addf %112, %113 : vector<2x16xf32>
    %115 = arith.negf %114 : vector<2x16xf32>
    %116 = math.exp %115 : vector<2x16xf32>
    %cst_38 = arith.constant 1.000000e+00 : f32
    %117 = vector.broadcast %cst_38 : f32 to vector<2x16xf32>
    %118 = arith.addf %117, %116 : vector<2x16xf32>
    %119 = arith.divf %117, %118 : vector<2x16xf32>
    %120 = vector.extract_strided_slice %99 {offsets = [0, 32], sizes = [2, 16], strides = [1, 1]} : vector<2x48xf32> to vector<2x16xf32>
    %121 = vector.extract_strided_slice %103 {offsets = [0, 32], sizes = [2, 16], strides = [1, 1]} : vector<2x48xf32> to vector<2x16xf32>
    %122 = arith.mulf %111, %121 : vector<2x16xf32>
    %123 = arith.addf %120, %122 : vector<2x16xf32>
    %124 = math.tanh %123 : vector<2x16xf32>
    %cst_39 = arith.constant 1.000000e+00 : f32
    %125 = vector.broadcast %cst_39 : f32 to vector<2x16xf32>
    %126 = arith.subf %125, %119 : vector<2x16xf32>
    %127 = arith.mulf %126, %124 : vector<2x16xf32>
    %128 = arith.mulf %119, %87 : vector<2x16xf32>
    %129 = arith.addf %127, %128 : vector<2x16xf32>
    %c0_40 = arith.constant 0 : index
    %130 = arith.index_cast %96 : i32 to index
    %c0_41 = arith.constant 0 : index
    %c0_42 = arith.constant 0 : index
    %131 = vector.load %arg5[%c0_40, %130, %c0_41, %c0_42] : memref<1x8x2x16xf32, #tpu.memory_space<vmem>>, vector<1x1x2x16xf32>
    %132 = vector.shape_cast %131 : vector<1x1x2x16xf32> to vector<2x16xf32>
    %133 = vector.shape_cast %129 : vector<2x16xf32> to vector<1x1x2x16xf32>
    tpu.vector_store %arg5[%c0_40, %130, %c0_41, %c0_42], %133 {strides = array<i32>} : memref<1x8x2x16xf32, #tpu.memory_space<vmem>>, vector<1x1x2x16xf32>,
    %c3_i32 = arith.constant 3 : i32
    %c1_i32_43 = arith.constant 1 : i32
    %134 = arith.subi %c1_i32_43, %arg0 : i32
    %135 = arith.muli %134, %c3_i32 : i32
    %c7_i32_44 = arith.constant 7 : i32
    %136 = arith.subi %c7_i32_44, %c3_i32 : i32
    %137 = arith.muli %arg0, %136 : i32
    %138 = arith.addi %135, %137 : i32
    %c0_45 = arith.constant 0 : index
    %139 = arith.index_cast %138 : i32 to index
    %c0_46 = arith.constant 0 : index
    %c0_47 = arith.constant 0 : index
    %140 = vector.load %arg2[%c0_45, %139, %c0_46, %c0_47] : memref<1x8x2x48xf32, #tpu.memory_space<vmem>>, vector<1x1x2x48xf32>
    %141 = vector.shape_cast %140 : vector<1x1x2x48xf32> to vector<2x48xf32>
    %142 = arith.truncf %129 : vector<2x16xf32> to vector<2x16xbf16>
    %cst_48 = arith.constant dense<0.000000e+00> : vector<2x48xf32>
    %143 = tpu.matmul %142, %4, %cst_48 {dimension_numbers = #tpu.dot_dimension_numbers<[1], [0], [0], [1], [0, 0, 1, 1], [], []>} : vector<2x16xbf16>, vector<16x48xbf16>, vector<2x48xf32> -> vector<2x48xf32>
    %144 = vector.broadcast %6 : vector<1x48xf32> to vector<2x48xf32>
    %145 = arith.addf %143, %144 : vector<2x48xf32>
    %146 = vector.extract_strided_slice %141 {offsets = [0, 0], sizes = [2, 16], strides = [1, 1]} : vector<2x48xf32> to vector<2x16xf32>
    %147 = vector.extract_strided_slice %145 {offsets = [0, 0], sizes = [2, 16], strides = [1, 1]} : vector<2x48xf32> to vector<2x16xf32>
    %148 = arith.addf %146, %147 : vector<2x16xf32>
    %149 = arith.negf %148 : vector<2x16xf32>
    %150 = math.exp %149 : vector<2x16xf32>
    %cst_49 = arith.constant 1.000000e+00 : f32
    %151 = vector.broadcast %cst_49 : f32 to vector<2x16xf32>
    %152 = arith.addf %151, %150 : vector<2x16xf32>
    %153 = arith.divf %151, %152 : vector<2x16xf32>
    %154 = vector.extract_strided_slice %141 {offsets = [0, 16], sizes = [2, 16], strides = [1, 1]} : vector<2x48xf32> to vector<2x16xf32>
    %155 = vector.extract_strided_slice %145 {offsets = [0, 16], sizes = [2, 16], strides = [1, 1]} : vector<2x48xf32> to vector<2x16xf32>
    %156 = arith.addf %154, %155 : vector<2x16xf32>
    %157 = arith.negf %156 : vector<2x16xf32>
    %158 = math.exp %157 : vector<2x16xf32>
    %cst_50 = arith.constant 1.000000e+00 : f32
    %159 = vector.broadcast %cst_50 : f32 to vector<2x16xf32>
    %160 = arith.addf %159, %158 : vector<2x16xf32>
    %161 = arith.divf %159, %160 : vector<2x16xf32>
    %162 = vector.extract_strided_slice %141 {offsets = [0, 32], sizes = [2, 16], strides = [1, 1]} : vector<2x48xf32> to vector<2x16xf32>
    %163 = vector.extract_strided_slice %145 {offsets = [0, 32], sizes = [2, 16], strides = [1, 1]} : vector<2x48xf32> to vector<2x16xf32>
    %164 = arith.mulf %153, %163 : vector<2x16xf32>
    %165 = arith.addf %162, %164 : vector<2x16xf32>
    %166 = math.tanh %165 : vector<2x16xf32>
    %cst_51 = arith.constant 1.000000e+00 : f32
    %167 = vector.broadcast %cst_51 : f32 to vector<2x16xf32>
    %168 = arith.subf %167, %161 : vector<2x16xf32>
    %169 = arith.mulf %168, %166 : vector<2x16xf32>
    %170 = arith.mulf %161, %129 : vector<2x16xf32>
    %171 = arith.addf %169, %170 : vector<2x16xf32>
    %c0_52 = arith.constant 0 : index
    %172 = arith.index_cast %138 : i32 to index
    %c0_53 = arith.constant 0 : index
    %c0_54 = arith.constant 0 : index
    %173 = vector.load %arg5[%c0_52, %172, %c0_53, %c0_54] : memref<1x8x2x16xf32, #tpu.memory_space<vmem>>, vector<1x1x2x16xf32>
    %174 = vector.shape_cast %173 : vector<1x1x2x16xf32> to vector<2x16xf32>
    %175 = vector.shape_cast %171 : vector<2x16xf32> to vector<1x1x2x16xf32>
    tpu.vector_store %arg5[%c0_52, %172, %c0_53, %c0_54], %175 {strides = array<i32>} : memref<1x8x2x16xf32, #tpu.memory_space<vmem>>, vector<1x1x2x16xf32>,
    %c4_i32 = arith.constant 4 : i32
    %c1_i32_55 = arith.constant 1 : i32
    %176 = arith.subi %c1_i32_55, %arg0 : i32
    %177 = arith.muli %176, %c4_i32 : i32
    %c7_i32_56 = arith.constant 7 : i32
    %178 = arith.subi %c7_i32_56, %c4_i32 : i32
    %179 = arith.muli %arg0, %178 : i32
    %180 = arith.addi %177, %179 : i32
    %c0_57 = arith.constant 0 : index
    %181 = arith.index_cast %180 : i32 to index
    %c0_58 = arith.constant 0 : index
    %c0_59 = arith.constant 0 : index
    %182 = vector.load %arg2[%c0_57, %181, %c0_58, %c0_59] : memref<1x8x2x48xf32, #tpu.memory_space<vmem>>, vector<1x1x2x48xf32>
    %183 = vector.shape_cast %182 : vector<1x1x2x48xf32> to vector<2x48xf32>
    %184 = arith.truncf %171 : vector<2x16xf32> to vector<2x16xbf16>
    %cst_60 = arith.constant dense<0.000000e+00> : vector<2x48xf32>
    %185 = tpu.matmul %184, %4, %cst_60 {dimension_numbers = #tpu.dot_dimension_numbers<[1], [0], [0], [1], [0, 0, 1, 1], [], []>} : vector<2x16xbf16>, vector<16x48xbf16>, vector<2x48xf32> -> vector<2x48xf32>
    %186 = vector.broadcast %6 : vector<1x48xf32> to vector<2x48xf32>
    %187 = arith.addf %185, %186 : vector<2x48xf32>
    %188 = vector.extract_strided_slice %183 {offsets = [0, 0], sizes = [2, 16], strides = [1, 1]} : vector<2x48xf32> to vector<2x16xf32>
    %189 = vector.extract_strided_slice %187 {offsets = [0, 0], sizes = [2, 16], strides = [1, 1]} : vector<2x48xf32> to vector<2x16xf32>
    %190 = arith.addf %188, %189 : vector<2x16xf32>
    %191 = arith.negf %190 : vector<2x16xf32>
    %192 = math.exp %191 : vector<2x16xf32>
    %cst_61 = arith.constant 1.000000e+00 : f32
    %193 = vector.broadcast %cst_61 : f32 to vector<2x16xf32>
    %194 = arith.addf %193, %192 : vector<2x16xf32>
    %195 = arith.divf %193, %194 : vector<2x16xf32>
    %196 = vector.extract_strided_slice %183 {offsets = [0, 16], sizes = [2, 16], strides = [1, 1]} : vector<2x48xf32> to vector<2x16xf32>
    %197 = vector.extract_strided_slice %187 {offsets = [0, 16], sizes = [2, 16], strides = [1, 1]} : vector<2x48xf32> to vector<2x16xf32>
    %198 = arith.addf %196, %197 : vector<2x16xf32>
    %199 = arith.negf %198 : vector<2x16xf32>
    %200 = math.exp %199 : vector<2x16xf32>
    %cst_62 = arith.constant 1.000000e+00 : f32
    %201 = vector.broadcast %cst_62 : f32 to vector<2x16xf32>
    %202 = arith.addf %201, %200 : vector<2x16xf32>
    %203 = arith.divf %201, %202 : vector<2x16xf32>
    %204 = vector.extract_strided_slice %183 {offsets = [0, 32], sizes = [2, 16], strides = [1, 1]} : vector<2x48xf32> to vector<2x16xf32>
    %205 = vector.extract_strided_slice %187 {offsets = [0, 32], sizes = [2, 16], strides = [1, 1]} : vector<2x48xf32> to vector<2x16xf32>
    %206 = arith.mulf %195, %205 : vector<2x16xf32>
    %207 = arith.addf %204, %206 : vector<2x16xf32>
    %208 = math.tanh %207 : vector<2x16xf32>
    %cst_63 = arith.constant 1.000000e+00 : f32
    %209 = vector.broadcast %cst_63 : f32 to vector<2x16xf32>
    %210 = arith.subf %209, %203 : vector<2x16xf32>
    %211 = arith.mulf %210, %208 : vector<2x16xf32>
    %212 = arith.mulf %203, %171 : vector<2x16xf32>
    %213 = arith.addf %211, %212 : vector<2x16xf32>
    %c0_64 = arith.constant 0 : index
    %214 = arith.index_cast %180 : i32 to index
    %c0_65 = arith.constant 0 : index
    %c0_66 = arith.constant 0 : index
    %215 = vector.load %arg5[%c0_64, %214, %c0_65, %c0_66] : memref<1x8x2x16xf32, #tpu.memory_space<vmem>>, vector<1x1x2x16xf32>
    %216 = vector.shape_cast %215 : vector<1x1x2x16xf32> to vector<2x16xf32>
    %217 = vector.shape_cast %213 : vector<2x16xf32> to vector<1x1x2x16xf32>
    tpu.vector_store %arg5[%c0_64, %214, %c0_65, %c0_66], %217 {strides = array<i32>} : memref<1x8x2x16xf32, #tpu.memory_space<vmem>>, vector<1x1x2x16xf32>,
    %c5_i32 = arith.constant 5 : i32
    %c1_i32_67 = arith.constant 1 : i32
    %218 = arith.subi %c1_i32_67, %arg0 : i32
    %219 = arith.muli %218, %c5_i32 : i32
    %c7_i32_68 = arith.constant 7 : i32
    %220 = arith.subi %c7_i32_68, %c5_i32 : i32
    %221 = arith.muli %arg0, %220 : i32
    %222 = arith.addi %219, %221 : i32
    %c0_69 = arith.constant 0 : index
    %223 = arith.index_cast %222 : i32 to index
    %c0_70 = arith.constant 0 : index
    %c0_71 = arith.constant 0 : index
    %224 = vector.load %arg2[%c0_69, %223, %c0_70, %c0_71] : memref<1x8x2x48xf32, #tpu.memory_space<vmem>>, vector<1x1x2x48xf32>
    %225 = vector.shape_cast %224 : vector<1x1x2x48xf32> to vector<2x48xf32>
    %226 = arith.truncf %213 : vector<2x16xf32> to vector<2x16xbf16>
    %cst_72 = arith.constant dense<0.000000e+00> : vector<2x48xf32>
    %227 = tpu.matmul %226, %4, %cst_72 {dimension_numbers = #tpu.dot_dimension_numbers<[1], [0], [0], [1], [0, 0, 1, 1], [], []>} : vector<2x16xbf16>, vector<16x48xbf16>, vector<2x48xf32> -> vector<2x48xf32>
    %228 = vector.broadcast %6 : vector<1x48xf32> to vector<2x48xf32>
    %229 = arith.addf %227, %228 : vector<2x48xf32>
    %230 = vector.extract_strided_slice %225 {offsets = [0, 0], sizes = [2, 16], strides = [1, 1]} : vector<2x48xf32> to vector<2x16xf32>
    %231 = vector.extract_strided_slice %229 {offsets = [0, 0], sizes = [2, 16], strides = [1, 1]} : vector<2x48xf32> to vector<2x16xf32>
    %232 = arith.addf %230, %231 : vector<2x16xf32>
    %233 = arith.negf %232 : vector<2x16xf32>
    %234 = math.exp %233 : vector<2x16xf32>
    %cst_73 = arith.constant 1.000000e+00 : f32
    %235 = vector.broadcast %cst_73 : f32 to vector<2x16xf32>
    %236 = arith.addf %235, %234 : vector<2x16xf32>
    %237 = arith.divf %235, %236 : vector<2x16xf32>
    %238 = vector.extract_strided_slice %225 {offsets = [0, 16], sizes = [2, 16], strides = [1, 1]} : vector<2x48xf32> to vector<2x16xf32>
    %239 = vector.extract_strided_slice %229 {offsets = [0, 16], sizes = [2, 16], strides = [1, 1]} : vector<2x48xf32> to vector<2x16xf32>
    %240 = arith.addf %238, %239 : vector<2x16xf32>
    %241 = arith.negf %240 : vector<2x16xf32>
    %242 = math.exp %241 : vector<2x16xf32>
    %cst_74 = arith.constant 1.000000e+00 : f32
    %243 = vector.broadcast %cst_74 : f32 to vector<2x16xf32>
    %244 = arith.addf %243, %242 : vector<2x16xf32>
    %245 = arith.divf %243, %244 : vector<2x16xf32>
    %246 = vector.extract_strided_slice %225 {offsets = [0, 32], sizes = [2, 16], strides = [1, 1]} : vector<2x48xf32> to vector<2x16xf32>
    %247 = vector.extract_strided_slice %229 {offsets = [0, 32], sizes = [2, 16], strides = [1, 1]} : vector<2x48xf32> to vector<2x16xf32>
    %248 = arith.mulf %237, %247 : vector<2x16xf32>
    %249 = arith.addf %246, %248 : vector<2x16xf32>
    %250 = math.tanh %249 : vector<2x16xf32>
    %cst_75 = arith.constant 1.000000e+00 : f32
    %251 = vector.broadcast %cst_75 : f32 to vector<2x16xf32>
    %252 = arith.subf %251, %245 : vector<2x16xf32>
    %253 = arith.mulf %252, %250 : vector<2x16xf32>
    %254 = arith.mulf %245, %213 : vector<2x16xf32>
    %255 = arith.addf %253, %254 : vector<2x16xf32>
    %c0_76 = arith.constant 0 : index
    %256 = arith.index_cast %222 : i32 to index
    %c0_77 = arith.constant 0 : index
    %c0_78 = arith.constant 0 : index
    %257 = vector.load %arg5[%c0_76, %256, %c0_77, %c0_78] : memref<1x8x2x16xf32, #tpu.memory_space<vmem>>, vector<1x1x2x16xf32>
    %258 = vector.shape_cast %257 : vector<1x1x2x16xf32> to vector<2x16xf32>
    %259 = vector.shape_cast %255 : vector<2x16xf32> to vector<1x1x2x16xf32>
    tpu.vector_store %arg5[%c0_76, %256, %c0_77, %c0_78], %259 {strides = array<i32>} : memref<1x8x2x16xf32, #tpu.memory_space<vmem>>, vector<1x1x2x16xf32>,
    %c6_i32 = arith.constant 6 : i32
    %c1_i32_79 = arith.constant 1 : i32
    %260 = arith.subi %c1_i32_79, %arg0 : i32
    %261 = arith.muli %260, %c6_i32 : i32
    %c7_i32_80 = arith.constant 7 : i32
    %262 = arith.subi %c7_i32_80, %c6_i32 : i32
    %263 = arith.muli %arg0, %262 : i32
    %264 = arith.addi %261, %263 : i32
    %c0_81 = arith.constant 0 : index
    %265 = arith.index_cast %264 : i32 to index
    %c0_82 = arith.constant 0 : index
    %c0_83 = arith.constant 0 : index
    %266 = vector.load %arg2[%c0_81, %265, %c0_82, %c0_83] : memref<1x8x2x48xf32, #tpu.memory_space<vmem>>, vector<1x1x2x48xf32>
    %267 = vector.shape_cast %266 : vector<1x1x2x48xf32> to vector<2x48xf32>
    %268 = arith.truncf %255 : vector<2x16xf32> to vector<2x16xbf16>
    %cst_84 = arith.constant dense<0.000000e+00> : vector<2x48xf32>
    %269 = tpu.matmul %268, %4, %cst_84 {dimension_numbers = #tpu.dot_dimension_numbers<[1], [0], [0], [1], [0, 0, 1, 1], [], []>} : vector<2x16xbf16>, vector<16x48xbf16>, vector<2x48xf32> -> vector<2x48xf32>
    %270 = vector.broadcast %6 : vector<1x48xf32> to vector<2x48xf32>
    %271 = arith.addf %269, %270 : vector<2x48xf32>
    %272 = vector.extract_strided_slice %267 {offsets = [0, 0], sizes = [2, 16], strides = [1, 1]} : vector<2x48xf32> to vector<2x16xf32>
    %273 = vector.extract_strided_slice %271 {offsets = [0, 0], sizes = [2, 16], strides = [1, 1]} : vector<2x48xf32> to vector<2x16xf32>
    %274 = arith.addf %272, %273 : vector<2x16xf32>
    %275 = arith.negf %274 : vector<2x16xf32>
    %276 = math.exp %275 : vector<2x16xf32>
    %cst_85 = arith.constant 1.000000e+00 : f32
    %277 = vector.broadcast %cst_85 : f32 to vector<2x16xf32>
    %278 = arith.addf %277, %276 : vector<2x16xf32>
    %279 = arith.divf %277, %278 : vector<2x16xf32>
    %280 = vector.extract_strided_slice %267 {offsets = [0, 16], sizes = [2, 16], strides = [1, 1]} : vector<2x48xf32> to vector<2x16xf32>
    %281 = vector.extract_strided_slice %271 {offsets = [0, 16], sizes = [2, 16], strides = [1, 1]} : vector<2x48xf32> to vector<2x16xf32>
    %282 = arith.addf %280, %281 : vector<2x16xf32>
    %283 = arith.negf %282 : vector<2x16xf32>
    %284 = math.exp %283 : vector<2x16xf32>
    %cst_86 = arith.constant 1.000000e+00 : f32
    %285 = vector.broadcast %cst_86 : f32 to vector<2x16xf32>
    %286 = arith.addf %285, %284 : vector<2x16xf32>
    %287 = arith.divf %285, %286 : vector<2x16xf32>
    %288 = vector.extract_strided_slice %267 {offsets = [0, 32], sizes = [2, 16], strides = [1, 1]} : vector<2x48xf32> to vector<2x16xf32>
    %289 = vector.extract_strided_slice %271 {offsets = [0, 32], sizes = [2, 16], strides = [1, 1]} : vector<2x48xf32> to vector<2x16xf32>
    %290 = arith.mulf %279, %289 : vector<2x16xf32>
    %291 = arith.addf %288, %290 : vector<2x16xf32>
    %292 = math.tanh %291 : vector<2x16xf32>
    %cst_87 = arith.constant 1.000000e+00 : f32
    %293 = vector.broadcast %cst_87 : f32 to vector<2x16xf32>
    %294 = arith.subf %293, %287 : vector<2x16xf32>
    %295 = arith.mulf %294, %292 : vector<2x16xf32>
    %296 = arith.mulf %287, %255 : vector<2x16xf32>
    %297 = arith.addf %295, %296 : vector<2x16xf32>
    %c0_88 = arith.constant 0 : index
    %298 = arith.index_cast %264 : i32 to index
    %c0_89 = arith.constant 0 : index
    %c0_90 = arith.constant 0 : index
    %299 = vector.load %arg5[%c0_88, %298, %c0_89, %c0_90] : memref<1x8x2x16xf32, #tpu.memory_space<vmem>>, vector<1x1x2x16xf32>
    %300 = vector.shape_cast %299 : vector<1x1x2x16xf32> to vector<2x16xf32>
    %301 = vector.shape_cast %297 : vector<2x16xf32> to vector<1x1x2x16xf32>
    tpu.vector_store %arg5[%c0_88, %298, %c0_89, %c0_90], %301 {strides = array<i32>} : memref<1x8x2x16xf32, #tpu.memory_space<vmem>>, vector<1x1x2x16xf32>,
    %c7_i32_91 = arith.constant 7 : i32
    %c1_i32_92 = arith.constant 1 : i32
    %302 = arith.subi %c1_i32_92, %arg0 : i32
    %303 = arith.muli %302, %c7_i32_91 : i32
    %c7_i32_93 = arith.constant 7 : i32
    %304 = arith.subi %c7_i32_93, %c7_i32_91 : i32
    %305 = arith.muli %arg0, %304 : i32
    %306 = arith.addi %303, %305 : i32
    %c0_94 = arith.constant 0 : index
    %307 = arith.index_cast %306 : i32 to index
    %c0_95 = arith.constant 0 : index
    %c0_96 = arith.constant 0 : index
    %308 = vector.load %arg2[%c0_94, %307, %c0_95, %c0_96] : memref<1x8x2x48xf32, #tpu.memory_space<vmem>>, vector<1x1x2x48xf32>
    %309 = vector.shape_cast %308 : vector<1x1x2x48xf32> to vector<2x48xf32>
    %310 = arith.truncf %297 : vector<2x16xf32> to vector<2x16xbf16>
    %cst_97 = arith.constant dense<0.000000e+00> : vector<2x48xf32>
    %311 = tpu.matmul %310, %4, %cst_97 {dimension_numbers = #tpu.dot_dimension_numbers<[1], [0], [0], [1], [0, 0, 1, 1], [], []>} : vector<2x16xbf16>, vector<16x48xbf16>, vector<2x48xf32> -> vector<2x48xf32>
    %312 = vector.broadcast %6 : vector<1x48xf32> to vector<2x48xf32>
    %313 = arith.addf %311, %312 : vector<2x48xf32>
    %314 = vector.extract_strided_slice %309 {offsets = [0, 0], sizes = [2, 16], strides = [1, 1]} : vector<2x48xf32> to vector<2x16xf32>
    %315 = vector.extract_strided_slice %313 {offsets = [0, 0], sizes = [2, 16], strides = [1, 1]} : vector<2x48xf32> to vector<2x16xf32>
    %316 = arith.addf %314, %315 : vector<2x16xf32>
    %317 = arith.negf %316 : vector<2x16xf32>
    %318 = math.exp %317 : vector<2x16xf32>
    %cst_98 = arith.constant 1.000000e+00 : f32
    %319 = vector.broadcast %cst_98 : f32 to vector<2x16xf32>
    %320 = arith.addf %319, %318 : vector<2x16xf32>
    %321 = arith.divf %319, %320 : vector<2x16xf32>
    %322 = vector.extract_strided_slice %309 {offsets = [0, 16], sizes = [2, 16], strides = [1, 1]} : vector<2x48xf32> to vector<2x16xf32>
    %323 = vector.extract_strided_slice %313 {offsets = [0, 16], sizes = [2, 16], strides = [1, 1]} : vector<2x48xf32> to vector<2x16xf32>
    %324 = arith.addf %322, %323 : vector<2x16xf32>
    %325 = arith.negf %324 : vector<2x16xf32>
    %326 = math.exp %325 : vector<2x16xf32>
    %cst_99 = arith.constant 1.000000e+00 : f32
    %327 = vector.broadcast %cst_99 : f32 to vector<2x16xf32>
    %328 = arith.addf %327, %326 : vector<2x16xf32>
    %329 = arith.divf %327, %328 : vector<2x16xf32>
    %330 = vector.extract_strided_slice %309 {offsets = [0, 32], sizes = [2, 16], strides = [1, 1]} : vector<2x48xf32> to vector<2x16xf32>
    %331 = vector.extract_strided_slice %313 {offsets = [0, 32], sizes = [2, 16], strides = [1, 1]} : vector<2x48xf32> to vector<2x16xf32>
    %332 = arith.mulf %321, %331 : vector<2x16xf32>
    %333 = arith.addf %330, %332 : vector<2x16xf32>
    %334 = math.tanh %333 : vector<2x16xf32>
    %cst_100 = arith.constant 1.000000e+00 : f32
    %335 = vector.broadcast %cst_100 : f32 to vector<2x16xf32>
    %336 = arith.subf %335, %329 : vector<2x16xf32>
    %337 = arith.mulf %336, %334 : vector<2x16xf32>
    %338 = arith.mulf %329, %297 : vector<2x16xf32>
    %339 = arith.addf %337, %338 : vector<2x16xf32>
    %c0_101 = arith.constant 0 : index
    %340 = arith.index_cast %306 : i32 to index
    %c0_102 = arith.constant 0 : index
    %c0_103 = arith.constant 0 : index
    %341 = vector.load %arg5[%c0_101, %340, %c0_102, %c0_103] : memref<1x8x2x16xf32, #tpu.memory_space<vmem>>, vector<1x1x2x16xf32>
    %342 = vector.shape_cast %341 : vector<1x1x2x16xf32> to vector<2x16xf32>
    %343 = vector.shape_cast %339 : vector<2x16xf32> to vector<1x1x2x16xf32>
    tpu.vector_store %arg5[%c0_101, %340, %c0_102, %c0_103], %343 {strides = array<i32>} : memref<1x8x2x16xf32, #tpu.memory_space<vmem>>, vector<1x1x2x16xf32>,
    %c8_i32 = arith.constant 8 : i32
    %c0_104 = arith.constant 0 : index
    %c0_105 = arith.constant 0 : index
    %344 = vector.load %arg7[%c0_104, %c0_105] : memref<2x16xf32, #tpu.memory_space<vmem>>, vector<2x16xf32>
    tpu.vector_store %arg7[%c0_104, %c0_105], %339 {strides = array<i32>} : memref<2x16xf32, #tpu.memory_space<vmem>>, vector<2x16xf32>,
    %c0_106 = arith.constant 0 : index
    %c0_107 = arith.constant 0 : index
    %c0_108 = arith.constant 0 : index
    %345 = vector.load %arg6[%c0_106, %c0_107, %c0_108] : memref<1x2x16xf32, #tpu.memory_space<vmem>>, vector<1x2x16xf32>
    %346 = vector.shape_cast %345 : vector<1x2x16xf32> to vector<2x16xf32>
    %347 = vector.shape_cast %339 : vector<2x16xf32> to vector<1x2x16xf32>
    tpu.vector_store %arg6[%c0_106, %c0_107, %c0_108], %347 {strides = array<i32>} : memref<1x2x16xf32, #tpu.memory_space<vmem>>, vector<1x2x16xf32>,
    return
  }
  func.func @transform_0(%arg0: i32, %arg1: i32) -> (i32, i32, i32, i32) {
    %c1_i32 = arith.constant 1 : i32
    %0 = arith.subi %c1_i32, %arg0 : i32
    %1 = arith.muli %0, %arg1 : i32
    %c0_i32 = arith.constant 0 : i32
    %2 = arith.subi %c0_i32, %arg1 : i32
    %3 = arith.muli %arg0, %2 : i32
    %4 = arith.addi %1, %3 : i32
    %c0_i32_0 = arith.constant 0 : i32
    %c0_i32_1 = arith.constant 0 : i32
    %c0_i32_2 = arith.constant 0 : i32
    return %arg0, %4, %c0_i32_0, %c0_i32_1 : i32, i32, i32, i32
  }
  func.func @transform_1(%arg0: i32, %arg1: i32) -> (i32, i32, i32) {
    %c0_i32 = arith.constant 0 : i32
    %c0_i32_0 = arith.constant 0 : i32
    %c0_i32_1 = arith.constant 0 : i32
    return %arg0, %c0_i32, %c0_i32_0 : i32, i32, i32
  }
  func.func @transform_2(%arg0: i32, %arg1: i32) -> (i32, i32, i32) {
    %c0_i32 = arith.constant 0 : i32
    %c0_i32_0 = arith.constant 0 : i32
    %c0_i32_1 = arith.constant 0 : i32
    return %arg0, %c0_i32, %c0_i32_0 : i32, i32, i32
  }
  func.func @transform_3(%arg0: i32, %arg1: i32) -> (i32, i32, i32, i32) {
    %c1_i32 = arith.constant 1 : i32
    %0 = arith.subi %c1_i32, %arg0 : i32
    %1 = arith.muli %0, %arg1 : i32
    %c0_i32 = arith.constant 0 : i32
    %2 = arith.subi %c0_i32, %arg1 : i32
    %3 = arith.muli %arg0, %2 : i32
    %4 = arith.addi %1, %3 : i32
    %c0_i32_0 = arith.constant 0 : i32
    %c0_i32_1 = arith.constant 0 : i32
    %c0_i32_2 = arith.constant 0 : i32
    return %arg0, %4, %c0_i32_0, %c0_i32_1 : i32, i32, i32, i32
  }
  func.func @transform_4(%arg0: i32, %arg1: i32) -> (i32, i32, i32) {
    %c0_i32 = arith.constant 0 : i32
    %c0_i32_0 = arith.constant 0 : i32
    %c0_i32_1 = arith.constant 0 : i32
    return %arg0, %c0_i32, %c0_i32_0 : i32, i32, i32
  }
}

module attributes {stable_mosaic.version = 11 : i64} {
  func.func @_linear_kernel(%arg0: i32, %arg1: i32, %arg2: i32, %arg3: memref<2x32xf32, #tpu.memory_space<vmem>>, %arg4: memref<32x3xbf16, #tpu.memory_space<vmem>>, %arg5: memref<1x3xf32, #tpu.memory_space<vmem>>, %arg6: memref<2x3xf32, #tpu.memory_space<vmem>>, %arg7: memref<2x3xf32, #tpu.memory_space<vmem>>) attributes {dimension_semantics = [#tpu.dimension_semantics<parallel>, #tpu.dimension_semantics<parallel>, #tpu.dimension_semantics<arbitrary>], iteration_bounds = array<i64: 1, 1, 1>, scalar_prefetch = 0 : i64, scratch_operands = 1 : i64, tpu.core_type = #tpu.core_type<tc>, window_params = [{transform_indices = @transform_0, window_bounds = array<i64: 2, 32>}, {transform_indices = @transform_1, window_bounds = array<i64: 32, 3>}, {transform_indices = @transform_2, window_bounds = array<i64: 1, 3>}, {transform_indices = @transform_3, window_bounds = array<i64: 2, 3>}]} {
    %c0_i32 = arith.constant 0 : i32
    %0 = arith.cmpi eq, %arg2, %c0_i32 : i32
    %1 = arith.extui %0 : i1 to i32
    %c0_i32_0 = arith.constant 0 : i32
    %2 = arith.cmpi ne, %1, %c0_i32_0 : i32
    scf.if %2 {
      %cst_10 = arith.constant 0.000000e+00 : f32
      %13 = vector.broadcast %cst_10 : f32 to vector<2x3xf32>
      %c0_11 = arith.constant 0 : index
      %c0_12 = arith.constant 0 : index
      %14 = vector.load %arg7[%c0_11, %c0_12] : memref<2x3xf32, #tpu.memory_space<vmem>>, vector<2x3xf32>
      tpu.vector_store %arg7[%c0_11, %c0_12], %13 {strides = array<i32>} : memref<2x3xf32, #tpu.memory_space<vmem>>, vector<2x3xf32>,
    } else {
    }
    %c0 = arith.constant 0 : index
    %c0_1 = arith.constant 0 : index
    %3 = vector.load %arg7[%c0, %c0_1] : memref<2x3xf32, #tpu.memory_space<vmem>>, vector<2x3xf32>
    %c0_2 = arith.constant 0 : index
    %c0_3 = arith.constant 0 : index
    %4 = vector.load %arg3[%c0_2, %c0_3] : memref<2x32xf32, #tpu.memory_space<vmem>>, vector<2x32xf32>
    %5 = arith.truncf %4 : vector<2x32xf32> to vector<2x32xbf16>
    %c0_4 = arith.constant 0 : index
    %c0_5 = arith.constant 0 : index
    %6 = vector.load %arg4[%c0_4, %c0_5] : memref<32x3xbf16, #tpu.memory_space<vmem>>, vector<32x3xbf16>
    %cst = arith.constant dense<0.000000e+00> : vector<2x3xf32>
    %7 = tpu.matmul %5, %6, %cst {dimension_numbers = #tpu.dot_dimension_numbers<[1], [0], [0], [1], [0, 0, 1, 1], [], []>} : vector<2x32xbf16>, vector<32x3xbf16>, vector<2x3xf32> -> vector<2x3xf32>
    %8 = arith.addf %3, %7 : vector<2x3xf32>
    %c0_6 = arith.constant 0 : index
    %c0_7 = arith.constant 0 : index
    %9 = vector.load %arg7[%c0_6, %c0_7] : memref<2x3xf32, #tpu.memory_space<vmem>>, vector<2x3xf32>
    tpu.vector_store %arg7[%c0_6, %c0_7], %8 {strides = array<i32>} : memref<2x3xf32, #tpu.memory_space<vmem>>, vector<2x3xf32>,
    %c0_i32_8 = arith.constant 0 : i32
    %10 = arith.cmpi eq, %arg2, %c0_i32_8 : i32
    %11 = arith.extui %10 : i1 to i32
    %c0_i32_9 = arith.constant 0 : i32
    %12 = arith.cmpi ne, %11, %c0_i32_9 : i32
    scf.if %12 {
      %c0_10 = arith.constant 0 : index
      %c0_11 = arith.constant 0 : index
      %13 = vector.load %arg7[%c0_10, %c0_11] : memref<2x3xf32, #tpu.memory_space<vmem>>, vector<2x3xf32>
      %c0_12 = arith.constant 0 : index
      %c0_13 = arith.constant 0 : index
      %14 = vector.load %arg5[%c0_12, %c0_13] : memref<1x3xf32, #tpu.memory_space<vmem>>, vector<1x3xf32>
      %15 = vector.broadcast %14 : vector<1x3xf32> to vector<2x3xf32>
      %16 = arith.addf %13, %15 : vector<2x3xf32>
      %c0_14 = arith.constant 0 : index
      %c0_15 = arith.constant 0 : index
      %17 = vector.load %arg6[%c0_14, %c0_15] : memref<2x3xf32, #tpu.memory_space<vmem>>, vector<2x3xf32>
      tpu.vector_store %arg6[%c0_14, %c0_15], %16 {strides = array<i32>} : memref<2x3xf32, #tpu.memory_space<vmem>>, vector<2x3xf32>,
    } else {
    }
    return
  }
  func.func @transform_0(%arg0: i32, %arg1: i32, %arg2: i32) -> (i32, i32) {
    %c0_i32 = arith.constant 0 : i32
    return %arg0, %arg2 : i32, i32
  }
  func.func @transform_1(%arg0: i32, %arg1: i32, %arg2: i32) -> (i32, i32) {
    %c0_i32 = arith.constant 0 : i32
    return %arg2, %arg1 : i32, i32
  }
  func.func @transform_2(%arg0: i32, %arg1: i32, %arg2: i32) -> (i32, i32) {
    %c0_i32 = arith.constant 0 : i32
    %c0_i32_0 = arith.constant 0 : i32
    return %c0_i32, %arg1 : i32, i32
  }
  func.func @transform_3(%arg0: i32, %arg1: i32, %arg2: i32) -> (i32, i32) {
    %c0_i32 = arith.constant 0 : i32
    return %arg0, %arg1 : i32, i32
  }
}

</mosaic_0001>

<llo_original>
// kernel: _lambda_.16
$region0: #{_lambda_.16}
  #allocation0 [shape = 'u32[]', space=smem, size = 0x4, offset = 0x4, fixed_abs, tag = 'smem constant byte address 0x4 - core index']
  #allocation1 [shape = 'u32[144,128]{1,0:T(1,128)}', space=vmem, size = 0x12000, scoped, tag = 'internal scratch']
  %s0 = inlined_call_operand.vmem [shape: f32[16,32], index: 0, kind: input, shape index: {}]
  %s1 = inlined_call_operand.vmem [shape: f32[1,32], index: 1, kind: input, shape index: {}]
  %s2 = inlined_call_operand.vmem [shape: f32[1,32], index: 2, kind: input, shape index: {}]
  %s3 = inlined_call_operand.vmem [shape: f32[16,32], index: 3, kind: output, shape index: {}]
  %s4 = sld [smem:[#allocation0]]
  $region22: #{_lambda_.16} parent=0
    _
  %s6 = ssub.s32 1, %s4
  %s7 = scalar_select 0, %s6, %s4
  // Predicated region
  $region2: #{_lambda_.16} parent=0 // pred_check
    _
  $region3: #{_lambda_.16} parent=0 // pred_check_branch
    %9 = sbr.rel (0) target = $region5
  $region4: #{_lambda_.16} parent=0 // pred_region
    _
  $region5: #{_lambda_.16} parent=0 // pred_fallthru
    _
  // Predicated region
  $region6: #{_lambda_.16} parent=0 // pred_check
    _
  $region7: #{_lambda_.16} parent=0 // pred_check_branch
    %11 = sbr.rel (0) target = $region9
  $region8: #{_lambda_.16} parent=0 // pred_region
    _
  $region9: #{_lambda_.16} parent=0 // pred_fallthru
    _
  // Predicated region
  $region10: #{_lambda_.16} parent=0 // pred_check
    _
  $region11: #{_lambda_.16} parent=0 // pred_check_branch
    %13 = sbr.rel (0) target = $region13
  $region12: #{_lambda_.16} parent=0 // pred_region
    _
  $region13: #{_lambda_.16} parent=0 // pred_fallthru
    _
  %v14 = vld [vmem:[%s0] sm:$0xff]
  %v15 = vld [vmem:[%s0 + $0x8] sm:$0xff]
  %vm16 = vcmask 261120
  %v17 = vsel %vm16, %v14, 0.0
  %18 = vadd.xlane.f32.xlu0 %v17
  %v19 = vpop.xlane.xlu0 %18
  %v20 = vsel %vm16, %v15, 0.0
  %21 = vadd.xlane.f32.xlu0 %v20
  %v22 = vpop.xlane.xlu0 %21
  %v23 = vrcp.pop 32.0
  %v24 = vmul.f32 %v19, %v23
  %v25 = vmul.f32 %v22, %v23
  %v26 = vsub.f32 %v14, %v24
  %v27 = vsub.f32 %v15, %v25
  %v28 = vmul.f32 %v26, %v26
  %v29 = vmul.f32 %v27, %v27
  %v30 = vsel %vm16, %v28, 0.0
  %31 = vadd.xlane.f32.xlu0 %v30
  %v32 = vpop.xlane.xlu0 %31
  %v33 = vsel %vm16, %v29, 0.0
  %34 = vadd.xlane.f32.xlu0 %v33
  %v35 = vpop.xlane.xlu0 %34
  %v36 = vmul.f32 %v32, %v23
  %v37 = vmul.f32 %v35, %v23
  %v38 = vadd.f32 %v36, 1e-12
  %v39 = vadd.f32 %v37, 1e-12
  %v40 = vrsqrt.pop %v38
  %v41 = vrsqrt.pop %v39
  %v42 = vmul.f32 %v26, %v40
  %v43 = vmul.f32 %v27, %v41
  %v44 = vld [vmem:[%s1] sm:$0x1]
  %v46 = vlaneseq
  %v47 = vshrl.u32 %v46, 7
  %v48 = vsub.s32 0, %v47
  %v49 = vrot.slane %v44, %v48
  %v51 = vmul.f32 %v42, %v49
  %v52 = vmul.f32 %v43, %v49
  %v53 = vld [vmem:[%s2] sm:$0x1]
  %v55 = vlaneseq
  %v56 = vshrl.u32 %v55, 7
  %v57 = vsub.s32 0, %v56
  %v58 = vrot.slane %v53, %v57
  %v60 = vadd.f32 %v51, %v58
  %v61 = vadd.f32 %v52, %v58
  %62 = vst.msk [vmem:[%s3] sm:$0xff] %vm16, %v60
  %63 = vst.msk [vmem:[%s3 + $0x8] sm:$0xff] %vm16, %v61
  // Predicated region
  $region14: #{_lambda_.16} parent=0 // pred_check
    _
  $region15: #{_lambda_.16} parent=0 // pred_check_branch
    %65 = sbr.rel (0) target = $region17
  $region16: #{_lambda_.16} parent=0 // pred_region
    _
  $region17: #{_lambda_.16} parent=0 // pred_fallthru
    _
  // Predicated region
  $region18: #{_lambda_.16} parent=0 // pred_check
    _
  $region19: #{_lambda_.16} parent=0 // pred_check_branch
    %67 = sbr.rel (0) target = $region21
  $region20: #{_lambda_.16} parent=0 // pred_region
    _
  $region21: #{_lambda_.16} parent=0 // pred_fallthru
    _

// kernel: _lambda_.17
$region0: #{_lambda_.17}
  #allocation0 [shape = 'u32[]', space=smem, size = 0x4, offset = 0x4, fixed_abs, tag = 'smem constant byte address 0x4 - core index']
  #allocation1 [shape = 'u32[144,128]{1,0:T(1,128)}', space=vmem, size = 0x12000, scoped, tag = 'internal scratch']
  #allocation2 [shape = 'f32[16,96]{1,0:T(8,128)}', space=vmem, size = 0x2000, scoped, tag = 'scratch operand']
  %s0 = inlined_call_operand.vmem [shape: f32[16,32], index: 0, kind: input, shape index: {}]
  %s1 = inlined_call_operand.vmem [shape: bf16[32,96], index: 1, kind: input, shape index: {}]
  %s2 = inlined_call_operand.vmem [shape: f32[1,96], index: 2, kind: input, shape index: {}]
  %s3 = inlined_call_operand.vmem [shape: bf16[16,96], index: 3, kind: output, shape index: {}]
  %s4 = sld [smem:[#allocation0]]
  $region30: #{_lambda_.17} parent=0
    _
  %s6 = ssub.s32 1, %s4
  %s7 = scalar_select 0, %s6, %s4
  // Predicated region
  $region2: #{_lambda_.17} parent=0 // pred_check
    _
  $region3: #{_lambda_.17} parent=0 // pred_check_branch
    %9 = sbr.rel (0) target = $region5
  $region4: #{_lambda_.17} parent=0 // pred_region
    _
  $region5: #{_lambda_.17} parent=0 // pred_fallthru
    _
  // Predicated region
  $region6: #{_lambda_.17} parent=0 // pred_check
    _
  $region7: #{_lambda_.17} parent=0 // pred_check_branch
    %11 = sbr.rel (0) target = $region9
  $region8: #{_lambda_.17} parent=0 // pred_region
    _
  $region9: #{_lambda_.17} parent=0 // pred_fallthru
    _
  // Predicated region
  $region10: #{_lambda_.17} parent=0 // pred_check
    _
  $region11: #{_lambda_.17} parent=0 // pred_check_branch
    %13 = sbr.rel (0) target = $region13
  $region12: #{_lambda_.17} parent=0 // pred_region
    _
  $region13: #{_lambda_.17} parent=0 // pred_fallthru
    _
  %p15 = scmp.eq.s32.totalorder 0, 0
  // Predicated region
  $region14: #{_lambda_.17} parent=0 // pred_check
    %p16 = pneg %p15
  $region15: #{_lambda_.17} parent=0 // pred_check_branch
    %18 = sbr.rel (%p16) target = $region17
  $region16: #{_lambda_.17} parent=0 // pred_region
    %vm19 = vcmask 785408
    %20 = vst.msk [vmem:[#allocation2] sm:$0xff] %vm19, 0.0
    %21 = vst.msk [vmem:[#allocation2 + $0x8] sm:$0xff] %vm19, 0.0
  $region17: #{_lambda_.17} parent=0 // pred_fallthru
    _
  %v22 = vld [vmem:[#allocation2] sm:$0xff]
  %v23 = vld [vmem:[#allocation2 + $0x8] sm:$0xff]
  %v24 = vld [vmem:[%s0] sm:$0xff]
  %v25 = vld [vmem:[%s0 + $0x8] sm:$0xff]
  %v26 = vpack.c.bf16 %v25, %v24
  %v27 = vld [vmem:[%s1] sm:$0xf]
  %v28 = vld [vmem:[%s1 + $0x4] sm:$0xf]
  %v29 = vld [vmem:[%s1 + $0x8] sm:$0xf]
  %v30 = vld [vmem:[%s1 + $0xc] sm:$0xf]
  %v35 = vunpack.c.l.b16 %v27
  %v36 = vunpack.c.l.b16 %v28
  %v37 = vunpack.c.l.b16 %v29
  %v38 = vunpack.c.l.b16 %v30
  %v39 = vpack.c.b16 %v36, %v35
  %v40 = vpack.c.b16 %v38, %v37
  %vm43 = vcmask 261120
  %v45 = vsel %vm43, %v26, 0
  %47 = vmatprep.subr.bf16.mxu0 0
  %48 = vmatpush1.bf16.msra.mxu0 0
  %49 = vmatprep.subr.bf16.mxu0 0
  %50 = vmatpush1.bf16.msra.mxu0 0
  %51 = vmatprep.subr.bf16.mxu0 0
  %52 = vmatpush1.bf16.msra.mxu0 0
  %53 = vmatprep.subr.bf16.mxu0 0
  %54 = vmatpush1.bf16.msra.mxu0 0
  %55 = vmatprep.subr.bf16.mxu0 0
  %56 = vmatpush1.bf16.msra.mxu0 0
  %57 = vmatprep.subr.bf16.mxu0 0
  %58 = vmatpush1.bf16.msra.mxu0 0
  %59 = vmatprep.subr.bf16.mxu0 0
  %60 = vmatpush1.bf16.msra.mxu0 %v40
  %61 = vmatprep.subr.bf16.mxu0 0
  %62 = vmatpush1.bf16.msra.mxu0 %v39
  %63 = vmatprep.subr.bf16.mxu0 0
  %64 = vmatpush2.bf16.msra.mxu0 0
  %65 = vmatprep.subr.bf16.mxu0 0
  %66 = vmatpush2.bf16.msra.mxu0 0
  %67 = vmatprep.subr.bf16.mxu0 0
  %68 = vmatpush2.bf16.msra.mxu0 0
  %69 = vmatprep.subr.bf16.mxu0 0
  %70 = vmatpush2.bf16.msra.mxu0 0
  %71 = vmatprep.subr.bf16.mxu0 0
  %72 = vmatpush2.bf16.msra.mxu0 0
  %73 = vmatprep.subr.bf16.mxu0 0
  %74 = vmatpush2.bf16.msra.mxu0 0
  %75 = vmatprep.subr.bf16.mxu0 0
  %76 = vmatpush2.bf16.msra.mxu0 0
  %77 = vmatprep.subr.bf16.mxu0 0
  %78 = vmatpush2.bf16.msra.mxu0 0
  %79 = vmatprep.mubr.bf16.mxu0 0
  %80 = vmatmul.mubr.bf16.gmra.mxu0 %v45
  %v81 = vpop.f32.mrf.mxu0
  %v82 = vadd.f32 0.0, %v81
  %v83 = vpop.f32.mrf.mxu0
  %v84 = vpop.f32.mrf.mxu0
  %v85 = vadd.f32 0.0, %v84
  %v86 = vpop.f32.mrf.mxu0
  %87 = vdwg.mxu0
  %v88 = vadd.f32 %v22, %v82
  %v89 = vadd.f32 %v23, %v85
  %vm90 = vcmask 785408
  %91 = vst.msk [vmem:[#allocation2] sm:$0xff] %vm90, %v88
  %92 = vst.msk [vmem:[#allocation2 + $0x8] sm:$0xff] %vm90, %v89
  // Predicated region
  $region18: #{_lambda_.17} parent=0 // pred_check
    %p93 = pneg %p15
  $region19: #{_lambda_.17} parent=0 // pred_check_branch
    %95 = sbr.rel (%p93) target = $region21
  $region20: #{_lambda_.17} parent=0 // pred_region
    %v96 = vld [vmem:[#allocation2] sm:$0xff]
    %v97 = vld [vmem:[#allocation2 + $0x8] sm:$0xff]
    %v98 = vld [vmem:[%s2] sm:$0x1]
    %v100 = vlaneseq
    %v101 = vshrl.u32 %v100, 7
    %v102 = vsub.s32 0, %v101
    %v103 = vrot.slane %v98, %v102
    %v105 = vadd.f32 %v96, %v103
    %v106 = vadd.f32 %v97, %v103
    %v107 = vpack.c.bf16 %v106, %v105
    %v109 = vunpack.c.l.b16 %v107
    %v110 = vunpack.c.h.b16 %v107
    %v111 = vpack.c.b16 %v109, %v109
    %v112 = vpack.c.b16 %v110, %v110
    %vm115 = vcmask 781312
    %116 = vst.msk [vmem:[%s3] sm:$0xf] %vm115, %v111
    %117 = vst.msk [vmem:[%s3 + $0x4] sm:$0xf] %vm115, %v112
  $region21: #{_lambda_.17} parent=0 // pred_fallthru
    _
  // Predicated region
  $region22: #{_lambda_.17} parent=0 // pred_check
    _
  $region23: #{_lambda_.17} parent=0 // pred_check_branch
    %119 = sbr.rel (0) target = $region25
  $region24: #{_lambda_.17} parent=0 // pred_region
    _
  $region25: #{_lambda_.17} parent=0 // pred_fallthru
    _
  // Predicated region
  $region26: #{_lambda_.17} parent=0 // pred_check
    _
  $region27: #{_lambda_.17} parent=0 // pred_check_branch
    %121 = sbr.rel (0) target = $region29
  $region28: #{_lambda_.17} parent=0 // pred_region
    _
  $region29: #{_lambda_.17} parent=0 // pred_fallthru
    _

// kernel: _lambda_.19
$region0: #{_lambda_.19}
  #allocation0 [shape = 'u32[]', space=smem, size = 0x4, offset = 0x4, fixed_abs, tag = 'smem constant byte address 0x4 - core index']
  #allocation1 [shape = 'u32[144,128]{1,0:T(1,128)}', space=vmem, size = 0x12000, scoped, tag = 'internal scratch']
  #allocation2 [shape = 'f32[16,32]{1,0:T(8,128)}', space=vmem, size = 0x2000, scoped, tag = 'scratch operand']
  %s0 = inlined_call_operand.vmem [shape: bf16[16,32], index: 0, kind: input, shape index: {}]
  %s1 = inlined_call_operand.vmem [shape: bf16[32,32], index: 1, kind: input, shape index: {}]
  %s2 = inlined_call_operand.vmem [shape: f32[1,32], index: 2, kind: input, shape index: {}, may-alias: {2,5}]
  %s3 = inlined_call_operand.vmem [shape: f32[16,32], index: 3, kind: input, shape index: {}]
  %s4 = inlined_call_operand.vmem [shape: f32[1,32], index: 4, kind: input, shape index: {}]
  %s5 = inlined_call_operand.vmem [shape: f32[1,32], index: 5, kind: input, shape index: {}, may-alias: {2,5}]
  %s6 = inlined_call_operand.vmem [shape: f32[16,32], index: 6, kind: output, shape index: {}]
  %s7 = sld [smem:[#allocation0]]
  $region42: #{_lambda_.19} parent=0
    _
  %s9 = ssub.s32 1, %s7
  %s10 = scalar_select 0, %s9, %s7
  // Predicated region
  $region2: #{_lambda_.19} parent=0 // pred_check
    _
  $region3: #{_lambda_.19} parent=0 // pred_check_branch
    %12 = sbr.rel (0) target = $region5
  $region4: #{_lambda_.19} parent=0 // pred_region
    _
  $region5: #{_lambda_.19} parent=0 // pred_fallthru
    _
  // Predicated region
  $region6: #{_lambda_.19} parent=0 // pred_check
    _
  $region7: #{_lambda_.19} parent=0 // pred_check_branch
    %14 = sbr.rel (0) target = $region9
  $region8: #{_lambda_.19} parent=0 // pred_region
    _
  $region9: #{_lambda_.19} parent=0 // pred_fallthru
    _
  // Predicated region
  $region10: #{_lambda_.19} parent=0 // pred_check
    _
  $region11: #{_lambda_.19} parent=0 // pred_check_branch
    %16 = sbr.rel (0) target = $region13
  $region12: #{_lambda_.19} parent=0 // pred_region
    _
  $region13: #{_lambda_.19} parent=0 // pred_fallthru
    _
  // Predicated region
  $region14: #{_lambda_.19} parent=0 // pred_check
    _
  $region15: #{_lambda_.19} parent=0 // pred_check_branch
    %18 = sbr.rel (0) target = $region17
  $region16: #{_lambda_.19} parent=0 // pred_region
    _
  $region17: #{_lambda_.19} parent=0 // pred_fallthru
    _
  // Predicated region
  $region18: #{_lambda_.19} parent=0 // pred_check
    _
  $region19: #{_lambda_.19} parent=0 // pred_check_branch
    %20 = sbr.rel (0) target = $region21
  $region20: #{_lambda_.19} parent=0 // pred_region
    _
  $region21: #{_lambda_.19} parent=0 // pred_fallthru
    _
  // Predicated region
  $region22: #{_lambda_.19} parent=0 // pred_check
    _
  $region23: #{_lambda_.19} parent=0 // pred_check_branch
    %22 = sbr.rel (0) target = $region25
  $region24: #{_lambda_.19} parent=0 // pred_region
    _
  $region25: #{_lambda_.19} parent=0 // pred_fallthru
    _
  %p24 = scmp.eq.s32.totalorder 0, 0
  // Predicated region
  $region26: #{_lambda_.19} parent=0 // pred_check
    %p25 = pneg %p24
  $region27: #{_lambda_.19} parent=0 // pred_check_branch
    %27 = sbr.rel (%p25) target = $region29
  $region28: #{_lambda_.19} parent=0 // pred_region
    %vm28 = vcmask 261120
    %29 = vst.msk [vmem:[#allocation2] sm:$0xff] %vm28, 0.0
    %30 = vst.msk [vmem:[#allocation2 + $0x8] sm:$0xff] %vm28, 0.0
  $region29: #{_lambda_.19} parent=0 // pred_fallthru
    _
  %v31 = vld [vmem:[#allocation2] sm:$0xff]
  %v32 = vld [vmem:[#allocation2 + $0x8] sm:$0xff]
  %v33 = vld [vmem:[%s0] sm:$0xf]
  %v34 = vld [vmem:[%s0 + $0x4] sm:$0xf]
  %v35 = vld [vmem:[%s1] sm:$0xf]
  %v36 = vld [vmem:[%s1 + $0x4] sm:$0xf]
  %v37 = vld [vmem:[%s1 + $0x8] sm:$0xf]
  %v38 = vld [vmem:[%s1 + $0xc] sm:$0xf]
  %v41 = vunpack.c.l.b16 %v33
  %v42 = vunpack.c.l.b16 %v34
  %v43 = vpack.c.b16 %v42, %v41
  %v48 = vunpack.c.l.b16 %v35
  %v49 = vunpack.c.l.b16 %v36
  %v50 = vunpack.c.l.b16 %v37
  %v51 = vunpack.c.l.b16 %v38
  %v52 = vpack.c.b16 %v49, %v48
  %v53 = vpack.c.b16 %v51, %v50
  %vm56 = vcmask 261120
  %v58 = vsel %vm56, %v43, 0
  %60 = vmatprep.subr.bf16.mxu0 0
  %61 = vmatpush1.bf16.msra.mxu0 0
  %62 = vmatprep.subr.bf16.mxu0 0
  %63 = vmatpush1.bf16.msra.mxu0 0
  %64 = vmatprep.subr.bf16.mxu0 0
  %65 = vmatpush1.bf16.msra.mxu0 0
  %66 = vmatprep.subr.bf16.mxu0 0
  %67 = vmatpush1.bf16.msra.mxu0 0
  %68 = vmatprep.subr.bf16.mxu0 0
  %69 = vmatpush1.bf16.msra.mxu0 0
  %70 = vmatprep.subr.bf16.mxu0 0
  %71 = vmatpush1.bf16.msra.mxu0 0
  %72 = vmatprep.subr.bf16.mxu0 0
  %73 = vmatpush1.bf16.msra.mxu0 %v53
  %74 = vmatprep.subr.bf16.mxu0 0
  %75 = vmatpush1.bf16.msra.mxu0 %v52
  %76 = vmatprep.subr.bf16.mxu0 0
  %77 = vmatpush2.bf16.msra.mxu0 0
  %78 = vmatprep.subr.bf16.mxu0 0
  %79 = vmatpush2.bf16.msra.mxu0 0
  %80 = vmatprep.subr.bf16.mxu0 0
  %81 = vmatpush2.bf16.msra.mxu0 0
  %82 = vmatprep.subr.bf16.mxu0 0
  %83 = vmatpush2.bf16.msra.mxu0 0
  %84 = vmatprep.subr.bf16.mxu0 0
  %85 = vmatpush2.bf16.msra.mxu0 0
  %86 = vmatprep.subr.bf16.mxu0 0
  %87 = vmatpush2.bf16.msra.mxu0 0
  %88 = vmatprep.subr.bf16.mxu0 0
  %89 = vmatpush2.bf16.msra.mxu0 0
  %90 = vmatprep.subr.bf16.mxu0 0
  %91 = vmatpush2.bf16.msra.mxu0 0
  %92 = vmatprep.mubr.bf16.mxu0 0
  %93 = vmatmul.mubr.bf16.gmra.mxu0 %v58
  %v94 = vpop.f32.mrf.mxu0
  %v95 = vadd.f32 0.0, %v94
  %v96 = vpop.f32.mrf.mxu0
  %v97 = vpop.f32.mrf.mxu0
  %v98 = vadd.f32 0.0, %v97
  %v99 = vpop.f32.mrf.mxu0
  %100 = vdwg.mxu0
  %v101 = vadd.f32 %v31, %v95
  %v102 = vadd.f32 %v32, %v98
  %103 = vst.msk [vmem:[#allocation2] sm:$0xff] %vm56, %v101
  %104 = vst.msk [vmem:[#allocation2 + $0x8] sm:$0xff] %vm56, %v102
  // Predicated region
  $region30: #{_lambda_.19} parent=0 // pred_check
    %p105 = pneg %p24
  $region31: #{_lambda_.19} parent=0 // pred_check_branch
    %107 = sbr.rel (%p105) target = $region33
  $region32: #{_lambda_.19} parent=0 // pred_region
    %v108 = vld [vmem:[%s3] sm:$0xff]
    %v109 = vld [vmem:[%s3 + $0x8] sm:$0xff]
    %v110 = vld [vmem:[#allocation2] sm:$0xff]
    %v111 = vld [vmem:[#allocation2 + $0x8] sm:$0xff]
    %v112 = vadd.f32 %v108, %v110
    %v113 = vadd.f32 %v109, %v111
    %v114 = vld [vmem:[%s2] sm:$0x1]
    %v116 = vlaneseq
    %v117 = vshrl.u32 %v116, 7
    %v118 = vsub.s32 0, %v117
    %v119 = vrot.slane %v114, %v118
    %v121 = vadd.f32 %v112, %v119
    %v122 = vadd.f32 %v113, %v119
    %v123 = vsel %vm56, %v121, 0.0
    %124 = vadd.xlane.f32.xlu0 %v123
    %v125 = vpop.xlane.xlu0 %124
    %v126 = vsel %vm56, %v122, 0.0
    %127 = vadd.xlane.f32.xlu0 %v126
    %v128 = vpop.xlane.xlu0 %127
    %v129 = vrcp.pop 32.0
    %v130 = vmul.f32 %v125, %v129
    %v131 = vmul.f32 %v128, %v129
    %v132 = vsub.f32 %v121, %v130
    %v133 = vsub.f32 %v122, %v131
    %v134 = vmul.f32 %v132, %v132
    %v135 = vmul.f32 %v133, %v133
    %v136 = vsel %vm56, %v134, 0.0
    %137 = vadd.xlane.f32.xlu0 %v136
    %v138 = vpop.xlane.xlu0 %137
    %v139 = vsel %vm56, %v135, 0.0
    %140 = vadd.xlane.f32.xlu0 %v139
    %v141 = vpop.xlane.xlu0 %140
    %v142 = vmul.f32 %v138, %v129
    %v143 = vmul.f32 %v141, %v129
    %v144 = vadd.f32 %v142, 1e-12
    %v145 = vadd.f32 %v143, 1e-12
    %v146 = vrsqrt.pop %v144
    %v147 = vrsqrt.pop %v145
    %v148 = vmul.f32 %v132, %v146
    %v149 = vmul.f32 %v133, %v147
    %v150 = vld [vmem:[%s4] sm:$0x1]
    %v152 = vlaneseq
    %v153 = vshrl.u32 %v152, 7
    %v154 = vsub.s32 0, %v153
    %v155 = vrot.slane %v150, %v154
    %v157 = vmul.f32 %v148, %v155
    %v158 = vmul.f32 %v149, %v155
    %v159 = vld [vmem:[%s5] sm:$0x1]
    %v161 = vlaneseq
    %v162 = vshrl.u32 %v161, 7
    %v163 = vsub.s32 0, %v162
    %v164 = vrot.slane %v159, %v163
    %v166 = vadd.f32 %v157, %v164
    %v167 = vadd.f32 %v158, %v164
    %168 = vst.msk [vmem:[%s6] sm:$0xff] %vm56, %v166
    %169 = vst.msk [vmem:[%s6 + $0x8] sm:$0xff] %vm56, %v167
  $region33: #{_lambda_.19} parent=0 // pred_fallthru
    _
  // Predicated region
  $region34: #{_lambda_.19} parent=0 // pred_check
    _
  $region35: #{_lambda_.19} parent=0 // pred_check_branch
    %171 = sbr.rel (0) target = $region37
  $region36: #{_lambda_.19} parent=0 // pred_region
    _
  $region37: #{_lambda_.19} parent=0 // pred_fallthru
    _
  // Predicated region
  $region38: #{_lambda_.19} parent=0 // pred_check
    _
  $region39: #{_lambda_.19} parent=0 // pred_check_branch
    %173 = sbr.rel (0) target = $region41
  $region40: #{_lambda_.19} parent=0 // pred_region
    _
  $region41: #{_lambda_.19} parent=0 // pred_fallthru
    _

// kernel: _lambda_.18
$region0: #{_lambda_.18}
  #allocation0 [shape = 'u32[]', space=smem, size = 0x4, offset = 0x4, fixed_abs, tag = 'smem constant byte address 0x4 - core index']
  #allocation1 [shape = 'u32[144,128]{1,0:T(1,128)}', space=vmem, size = 0x12000, scoped, tag = 'internal scratch']
  #allocation2 [shape = 'f32[8,32]{1,0:T(8,128)}', space=vmem, size = 0x1000, scoped, tag = 'scratch operand']
  %s0 = inlined_call_operand.vmem [shape: bf16[2,8,96], index: 0, kind: input, shape index: {}]
  %s1 = inlined_call_operand.vmem [shape: bf16[2,8,32], index: 1, kind: output, shape index: {}]
  %s2 = sld [smem:[#allocation0]]
  $region37: #{_lambda_.18} parent=0
    _
  %s4 = ssub.s32 1, %s2
  %s5 = scalar_select 0, %s4, %s2
  loop: start=0, step=1, limit=4
  $region2: #{_lambda_.18} parent=0 // loop_pre_header
    _
  $region3: #{_lambda_.18} parent=0 // loop_header
    %s7 = sphi 0, %s11
    %p8 = scmp.ge.s32.totalorder %s7, 4
    %s17 = sphi 0, %s19
    %s20 = sphi 0, %s17
    %s21 = sphi 0, %s20
    %s37 = sphi 0, %s21
    %s43 = sphi 0, %s45
    %s46 = sphi 0, %s43
    %s47 = sphi 0, %s46
    %s63 = sphi 0, %s47
  $region4: #{_lambda_.18} parent=0 // loop_header_branch
    %10 = sbr.rel (%p8) target = $region8
  $region5: #{_lambda_.18} parent=0 // loop_body
    %s12 = ssub.s32 %s7, 1
    %s13 = ssub.s32 %s7, 2
    %s14 = sadd.s32 %s7, 1
    %s15 = ssub.s32 %s7, %s14
    %p16 = scmp.eq.s32.totalorder %s15, 0
    %s18 = sadd.s32 %s17, 1
    %s19 = scalar_select %p16, %s17, %s18
    %p22 = pneg %p16
    %p23 = scmp.eq.s32.totalorder %s7, 1
    %p24 = por %p22, %p23
    %p25 = scmp.ne.s32.totalorder %s17, %s20
    %p26 = scmp.eq.s32.totalorder %s7, 0
    %p27 = por %p25, %p26
    %p28 = scmp.ne.s32.totalorder %s17, %s20
    %p29 = scmp.eq.s32.totalorder %s12, 1
    %p30 = por %p28, %p29
    %p31 = scmp.ne.s32.totalorder %s20, %s21
    %p32 = scmp.eq.s32.totalorder %s12, 0
    %p33 = por %p31, %p32
    %p34 = scmp.ne.s32.totalorder %s20, %s21
    %p35 = scmp.eq.s32.totalorder %s13, 1
    %p36 = por %p34, %p35
    %p38 = scmp.ne.s32.totalorder %s21, %s37
    %p39 = scmp.eq.s32.totalorder %s13, 0
    %p40 = por %p38, %p39
    %s41 = ssub.s32 %s7, %s14
    %p42 = scmp.eq.s32.totalorder %s41, 0
    %s44 = sadd.s32 %s43, 1
    %s45 = scalar_select %p42, %s43, %s44
    %p48 = pneg %p42
    %p49 = scmp.eq.s32.totalorder %s7, 1
    %p50 = por %p48, %p49
    %p51 = scmp.ne.s32.totalorder %s43, %s46
    %p52 = scmp.eq.s32.totalorder %s7, 0
    %p53 = por %p51, %p52
    %p54 = scmp.ne.s32.totalorder %s43, %s46
    %p55 = scmp.eq.s32.totalorder %s12, 1
    %p56 = por %p54, %p55
    %p57 = scmp.ne.s32.totalorder %s46, %s47
    %p58 = scmp.eq.s32.totalorder %s12, 0
    %p59 = por %p57, %p58
    %p60 = scmp.ne.s32.totalorder %s46, %s47
    %p61 = scmp.eq.s32.totalorder %s13, 1
    %p62 = por %p60, %p61
    %p64 = scmp.ne.s32.totalorder %s47, %s63
    %p65 = scmp.eq.s32.totalorder %s13, 0
    %p66 = por %p64, %p65
    %p67 = scmp.le.s32.totalorder 1, %s7
    %p68 = scmp.lt.s32.totalorder %s7, 3
    %p69 = pnand %p67, %p68
    %p70 = pneg %p69
    // Predicated region
    $region9: #{_lambda_.18} parent=5 // pred_check
      _
    $region10: #{_lambda_.18} parent=5 // pred_check_branch
      %72 = sbr.rel (%p69) target = $region12
    $region11: #{_lambda_.18} parent=5 // pred_region
      %s73 = ssub.s32 %s7, 1
    $region12: #{_lambda_.18} parent=5 // pred_fallthru
      _
    %p74 = scmp.lt.s32.totalorder %s7, 2
    // Predicated region
    $region13: #{_lambda_.18} parent=5 // pred_check
      %p75 = pneg %p74
    $region14: #{_lambda_.18} parent=5 // pred_check_branch
      %77 = sbr.rel (%p75) target = $region16
    $region15: #{_lambda_.18} parent=5 // pred_region
      // Predicated region
      $region17: #{_lambda_.18} parent=15 // pred_check
        %p78 = pneg %p27
      $region18: #{_lambda_.18} parent=15 // pred_check_branch
        %80 = sbr.rel (%p78) target = $region20
      $region19: #{_lambda_.18} parent=15 // pred_region
        %p81 = scmp.lt.s32.totalorder %s7, 1
        %s82 = scalar_select %p81, %s7, 1
        %s83 = smul.addr %s82, 4
        %s84 = scalar_lea.vmem %s0, %s83
      $region20: #{_lambda_.18} parent=15 // pred_fallthru
        _
    $region16: #{_lambda_.18} parent=5 // pred_fallthru
      _
    %p85 = scmp.le.s32.totalorder 1, %s7
    %p86 = scmp.lt.s32.totalorder %s7, 3
    %p87 = pnand %p85, %p86
    %p88 = pneg %p87
    // Predicated region
    $region21: #{_lambda_.18} parent=5 // pred_check
      _
    $region22: #{_lambda_.18} parent=5 // pred_check_branch
      %90 = sbr.rel (%p87) target = $region24
    $region23: #{_lambda_.18} parent=5 // pred_region
      %s91 = ssub.s32 %s7, 1
      %p92 = scmp.lt.s32.totalorder %s12, 1
      %s93 = scalar_select %p92, %s12, 1
      %s94 = smul.addr %s93, 4
      %s95 = scalar_lea.vmem %s0, %s94
      %p96 = pneg %p33
      %p97 = pneg %p30
      %p98 = pneg %p59
      %p99 = pneg %p56
      %p100 = scmp.lt.s32.totalorder %s12, 1
      %s101 = scalar_select %p100, %s12, 1
      %s102 = smul.addr %s101, 4
      %s103 = scalar_lea.vmem %s1, %s102
      %p104 = scmp.lt.s32.totalorder %s12, 1
      %s105 = scalar_select %p104, %s12, 1
      %s106 = smul.addr %s105, 4
      %s107 = scalar_lea.vmem %s0, %s106
      %p108 = scmp.lt.s32.totalorder %s12, 1
      %s109 = scalar_select %p108, %s12, 1
      %s110 = smul.addr %s109, 4
      %s111 = scalar_lea.vmem %s1, %s110
      %v113 = vld [vmem:[%s107] sm:$0xf]
      %v115 = vunpack.c.l.b16 %v113
      %v116 = vpack.c.b16 %v115, %v115
      %117 = vrot.lane.b32.xlu0 %v116, 96
      %v118 = vpop.permute.xlu0 %117
      %vm119 = vcmask 130048
      %v121 = vsel %vm119, %v113, 0
      %v124 = vsel %vm119, %v118, 0
      %126 = vmatprep.subr.bf16.mxu0 0
      %127 = vmatpush1.bf16.xpose.msra.mxu0 0
      %128 = vmatprep.subr.bf16.mxu0 0
      %129 = vmatpush1.bf16.xpose.msra.mxu0 0
      %130 = vmatprep.subr.bf16.mxu0 0
      %131 = vmatpush1.bf16.xpose.msra.mxu0 0
      %132 = vmatprep.subr.bf16.mxu0 0
      %133 = vmatpush1.bf16.xpose.msra.mxu0 0
      %134 = vmatprep.subr.bf16.mxu0 0
      %135 = vmatpush1.bf16.xpose.msra.mxu0 0
      %136 = vmatprep.subr.bf16.mxu0 0
      %137 = vmatpush1.bf16.xpose.msra.mxu0 0
      %138 = vmatprep.subr.bf16.mxu0 0
      %139 = vmatpush1.bf16.xpose.msra.mxu0 0
      %140 = vmatprep.subr.bf16.mxu0 0
      %141 = vmatpush1.bf16.xpose.msra.mxu0 %v124
      %142 = vmatprep.subr.bf16.mxu0 0
      %143 = vmatpush2.bf16.xpose.msra.mxu0 0
      %144 = vmatprep.subr.bf16.mxu0 0
      %145 = vmatpush2.bf16.xpose.msra.mxu0 0
      %146 = vmatprep.subr.bf16.mxu0 0
      %147 = vmatpush2.bf16.xpose.msra.mxu0 0
      %148 = vmatprep.subr.bf16.mxu0 0
      %149 = vmatpush2.bf16.xpose.msra.mxu0 0
      %150 = vmatprep.subr.bf16.mxu0 0
      %151 = vmatpush2.bf16.xpose.msra.mxu0 0
      %152 = vmatprep.subr.bf16.mxu0 0
      %153 = vmatpush2.bf16.xpose.msra.mxu0 0
      %154 = vmatprep.subr.bf16.mxu0 0
      %155 = vmatpush2.bf16.xpose.msra.mxu0 0
      %156 = vmatprep.subr.bf16.mxu0 0
      %157 = vmatpush2.bf16.xpose.msra.mxu0 0
      %158 = vmatprep.mubr.bf16.mxu0 0
      %159 = vmatmul.mubr.bf16.gmra.mxu0 %v121
      %v160 = vpop.f32.mrf.mxu0
      %v161 = vadd.f32 0.0, %v160
      %v162 = vpop.f32.mrf.mxu0
      %v163 = vpop.f32.mrf.mxu0
      %v164 = vpop.f32.mrf.mxu0
      %165 = vdwg.mxu0
      %v166 = vmul.f32 %v161, 0.25
      %vm167 = vcmask 64512
      %v168 = vsel %vm167, %v166, -inf
      %169 = vmax.xlane.f32.xlu0 %v168
      %v170 = vpop.xlane.xlu0 %169
      %v171 = vsub.f32 %v166, %v170
      %v172 = vmul.f32 %v171, 1.442695
      %v173 = vpow.pop %v172
      %v174 = vsel %vm167, %v173, 0.0
      %175 = vadd.xlane.f32.xlu0 %v174
      %v176 = vpop.xlane.xlu0 %175
      %v177 = vrcp.pop %v176
      %v178 = vmul.f32 %v173, %v177
      %v179 = vpack.c.bf16 %v178, %v178
      %180 = vrot.lane.b32.xlu0 %v116, 64
      %v181 = vpop.permute.xlu0 %180
      %v183 = vsel %vm167, %v179, 0
      %vm185 = vcmask 1043456
      %v187 = vsel %vm185, %v181, 0
      %189 = vmatprep.subr.bf16.mxu0 0
      %190 = vmatpush1.bf16.msra.mxu0 0
      %191 = vmatprep.subr.bf16.mxu0 0
      %192 = vmatpush1.bf16.msra.mxu0 0
      %193 = vmatprep.subr.bf16.mxu0 0
      %194 = vmatpush1.bf16.msra.mxu0 0
      %195 = vmatprep.subr.bf16.mxu0 0
      %196 = vmatpush1.bf16.msra.mxu0 0
      %197 = vmatprep.subr.bf16.mxu0 0
      %198 = vmatpush1.bf16.msra.mxu0 0
      %199 = vmatprep.subr.bf16.mxu0 0
      %200 = vmatpush1.bf16.msra.mxu0 0
      %201 = vmatprep.subr.bf16.mxu0 0
      %202 = vmatpush1.bf16.msra.mxu0 0
      %203 = vmatprep.subr.bf16.mxu0 0
      %204 = vmatpush1.bf16.msra.mxu0 %v187
      %205 = vmatprep.subr.bf16.mxu0 0
      %206 = vmatpush2.bf16.msra.mxu0 0
      %207 = vmatprep.subr.bf16.mxu0 0
      %208 = vmatpush2.bf16.msra.mxu0 0
      %209 = vmatprep.subr.bf16.mxu0 0
      %210 = vmatpush2.bf16.msra.mxu0 0
      %211 = vmatprep.subr.bf16.mxu0 0
      %212 = vmatpush2.bf16.msra.mxu0 0
      %213 = vmatprep.subr.bf16.mxu0 0
      %214 = vmatpush2.bf16.msra.mxu0 0
      %215 = vmatprep.subr.bf16.mxu0 0
      %216 = vmatpush2.bf16.msra.mxu0 0
      %217 = vmatprep.subr.bf16.mxu0 0
      %218 = vmatpush2.bf16.msra.mxu0 0
      %219 = vmatprep.subr.bf16.mxu0 0
      %220 = vmatpush2.bf16.msra.mxu0 0
      %221 = vmatprep.mubr.bf16.mxu0 0
      %222 = vmatmul.mubr.bf16.gmra.mxu0 %v183
      %v223 = vpop.f32.mrf.mxu0
      %v224 = vadd.f32 0.0, %v223
      %v225 = vpop.f32.mrf.mxu0
      %v226 = vpop.f32.mrf.mxu0
      %v227 = vpop.f32.mrf.mxu0
      %228 = vdwg.mxu0
      %229 = vst.msk [vmem:[#allocation2] sm:$0xff] %vm119, %v224
      %230 = vrot.lane.b32.xlu0 %v116, 112
      %v231 = vpop.permute.xlu0 %230
      %232 = vrot.lane.b32.xlu0 %v116, 80
      %v233 = vpop.permute.xlu0 %232
      %v235 = vsel %vm119, %v231, 0
      %v238 = vsel %vm119, %v233, 0
      %240 = vmatprep.subr.bf16.mxu0 0
      %241 = vmatpush1.bf16.xpose.msra.mxu0 0
      %242 = vmatprep.subr.bf16.mxu0 0
      %243 = vmatpush1.bf16.xpose.msra.mxu0 0
      %244 = vmatprep.subr.bf16.mxu0 0
      %245 = vmatpush1.bf16.xpose.msra.mxu0 0
      %246 = vmatprep.subr.bf16.mxu0 0
      %247 = vmatpush1.bf16.xpose.msra.mxu0 0
      %248 = vmatprep.subr.bf16.mxu0 0
      %249 = vmatpush1.bf16.xpose.msra.mxu0 0
      %250 = vmatprep.subr.bf16.mxu0 0
      %251 = vmatpush1.bf16.xpose.msra.mxu0 0
      %252 = vmatprep.subr.bf16.mxu0 0
      %253 = vmatpush1.bf16.xpose.msra.mxu0 0
      %254 = vmatprep.subr.bf16.mxu0 0
      %255 = vmatpush1.bf16.xpose.msra.mxu0 %v238
      %256 = vmatprep.subr.bf16.mxu0 0
      %257 = vmatpush2.bf16.xpose.msra.mxu0 0
      %258 = vmatprep.subr.bf16.mxu0 0
      %259 = vmatpush2.bf16.xpose.msra.mxu0 0
      %260 = vmatprep.subr.bf16.mxu0 0
      %261 = vmatpush2.bf16.xpose.msra.mxu0 0
      %262 = vmatprep.subr.bf16.mxu0 0
      %263 = vmatpush2.bf16.xpose.msra.mxu0 0
      %264 = vmatprep.subr.bf16.mxu0 0
      %265 = vmatpush2.bf16.xpose.msra.mxu0 0
      %266 = vmatprep.subr.bf16.mxu0 0
      %267 = vmatpush2.bf16.xpose.msra.mxu0 0
      %268 = vmatprep.subr.bf16.mxu0 0
      %269 = vmatpush2.bf16.xpose.msra.mxu0 0
      %270 = vmatprep.subr.bf16.mxu0 0
      %271 = vmatpush2.bf16.xpose.msra.mxu0 0
      %272 = vmatprep.mubr.bf16.mxu0 0
      %273 = vmatmul.mubr.bf16.gmra.mxu0 %v235
      %v274 = vpop.f32.mrf.mxu0
      %v275 = vadd.f32 0.0, %v274
      %v276 = vpop.f32.mrf.mxu0
      %v277 = vpop.f32.mrf.mxu0
      %v278 = vpop.f32.mrf.mxu0
      %279 = vdwg.mxu0
      %v280 = vmul.f32 %v275, 0.25
      %v281 = vsel %vm167, %v280, -inf
      %282 = vmax.xlane.f32.xlu0 %v281
      %v283 = vpop.xlane.xlu0 %282
      %v284 = vsub.f32 %v280, %v283
      %v285 = vmul.f32 %v284, 1.442695
      %v286 = vpow.pop %v285
      %v287 = vsel %vm167, %v286, 0.0
      %288 = vadd.xlane.f32.xlu0 %v287
      %v289 = vpop.xlane.xlu0 %288
      %v290 = vrcp.pop %v289
      %v291 = vmul.f32 %v286, %v290
      %v292 = vpack.c.bf16 %v291, %v291
      %293 = vrot.lane.b32.xlu0 %v116, 48
      %v294 = vpop.permute.xlu0 %293
      %v296 = vsel %vm167, %v292, 0
      %v299 = vsel %vm185, %v294, 0
      %301 = vmatprep.subr.bf16.mxu0 0
      %302 = vmatpush1.bf16.msra.mxu0 0
      %303 = vmatprep.subr.bf16.mxu0 0
      %304 = vmatpush1.bf16.msra.mxu0 0
      %305 = vmatprep.subr.bf16.mxu0 0
      %306 = vmatpush1.bf16.msra.mxu0 0
      %307 = vmatprep.subr.bf16.mxu0 0
      %308 = vmatpush1.bf16.msra.mxu0 0
      %309 = vmatprep.subr.bf16.mxu0 0
      %310 = vmatpush1.bf16.msra.mxu0 0
      %311 = vmatprep.subr.bf16.mxu0 0
      %312 = vmatpush1.bf16.msra.mxu0 0
      %313 = vmatprep.subr.bf16.mxu0 0
      %314 = vmatpush1.bf16.msra.mxu0 0
      %315 = vmatprep.subr.bf16.mxu0 0
      %316 = vmatpush1.bf16.msra.mxu0 %v299
      %317 = vmatprep.subr.bf16.mxu0 0
      %318 = vmatpush2.bf16.msra.mxu0 0
      %319 = vmatprep.subr.bf16.mxu0 0
      %320 = vmatpush2.bf16.msra.mxu0 0
      %321 = vmatprep.subr.bf16.mxu0 0
      %322 = vmatpush2.bf16.msra.mxu0 0
      %323 = vmatprep.subr.bf16.mxu0 0
      %324 = vmatpush2.bf16.msra.mxu0 0
      %325 = vmatprep.subr.bf16.mxu0 0
      %326 = vmatpush2.bf16.msra.mxu0 0
      %327 = vmatprep.subr.bf16.mxu0 0
      %328 = vmatpush2.bf16.msra.mxu0 0
      %329 = vmatprep.subr.bf16.mxu0 0
      %330 = vmatpush2.bf16.msra.mxu0 0
      %331 = vmatprep.subr.bf16.mxu0 0
      %332 = vmatpush2.bf16.msra.mxu0 0
      %333 = vmatprep.mubr.bf16.mxu0 0
      %334 = vmatmul.mubr.bf16.gmra.mxu0 %v296
      %v335 = vpop.f32.mrf.mxu0
      %v336 = vadd.f32 0.0, %v335
      %v337 = vpop.f32.mrf.mxu0
      %v338 = vpop.f32.mrf.mxu0
      %v339 = vpop.f32.mrf.mxu0
      %340 = vdwg.mxu0
      %342 = vrot.lane.b32.xlu0 %v336, 16
      %v343 = vpop.permute.xlu0 %342
      %vm345 = vcmask 261248
      %346 = vst.msk [vmem:[#allocation2] sm:$0xff] %vm345, %v343
      %v347 = vld [vmem:[#allocation2] sm:$0xff]
      %v348 = vpack.c.bf16 %v347, %v347
      %vm349 = vcmask 257024
      %350 = vst.msk [vmem:[%s111] sm:$0xf] %vm349, %v348
      %p351 = scmp.lt.s32.totalorder %s12, 1
      %s352 = scalar_select %p351, %s12, 1
      %s353 = smul.addr %s352, 4
      %s354 = scalar_lea.vmem %s1, %s353
      // Predicated region
      $region25: #{_lambda_.18} parent=23 // pred_check
        %p355 = pneg %p56
      $region26: #{_lambda_.18} parent=23 // pred_check_branch
        %357 = sbr.rel (%p355) target = $region28
      $region27: #{_lambda_.18} parent=23 // pred_region
        _
      $region28: #{_lambda_.18} parent=23 // pred_fallthru
        _
    $region24: #{_lambda_.18} parent=5 // pred_fallthru
      _
    %p358 = scmp.le.s32.totalorder 2, %s7
    // Predicated region
    $region29: #{_lambda_.18} parent=5 // pred_check
      %p359 = pneg %p358
    $region30: #{_lambda_.18} parent=5 // pred_check_branch
      %361 = sbr.rel (%p359) target = $region32
    $region31: #{_lambda_.18} parent=5 // pred_region
      %s362 = ssub.s32 %s7, 2
      // Predicated region
      $region33: #{_lambda_.18} parent=31 // pred_check
        %p363 = pneg %p62
      $region34: #{_lambda_.18} parent=31 // pred_check_branch
        %365 = sbr.rel (%p363) target = $region36
      $region35: #{_lambda_.18} parent=31 // pred_region
        %p366 = scmp.lt.s32.totalorder %s13, 1
        %s367 = scalar_select %p366, %s13, 1
        %s368 = smul.addr %s367, 4
        %s369 = scalar_lea.vmem %s1, %s368
      $region36: #{_lambda_.18} parent=31 // pred_fallthru
        _
    $region32: #{_lambda_.18} parent=5 // pred_fallthru
      _
  $region6: #{_lambda_.18} parent=0 // loop_footer
    %s11 = sadd.s32 1, %s7
  $region7: #{_lambda_.18} parent=0 // loop_footer_branch
    %6 = sbr.rel target = $region3
  $region8: #{_lambda_.18} parent=0 // loop_exit
    _

// kernel: _lambda_.21
$region0: #{_lambda_.21}
  #allocation0 [shape = 'u32[]', space=smem, size = 0x4, offset = 0x4, fixed_abs, tag = 'smem constant byte address 0x4 - core index']
  #allocation1 [shape = 'u32[144,128]{1,0:T(1,128)}', space=vmem, size = 0x12000, scoped, tag = 'internal scratch']
  #allocation2 [shape = 'f32[16,32]{1,0:T(8,128)}', space=vmem, size = 0x2000, scoped, tag = 'scratch operand']
  %s0 = inlined_call_operand.vmem [shape: bf16[16,64], index: 0, kind: input, shape index: {}]
  %s1 = inlined_call_operand.vmem [shape: bf16[64,32], index: 1, kind: input, shape index: {}]
  %s2 = inlined_call_operand.vmem [shape: f32[1,32], index: 2, kind: input, shape index: {}, may-alias: {2,5}]
  %s3 = inlined_call_operand.vmem [shape: f32[16,32], index: 3, kind: input, shape index: {}]
  %s4 = inlined_call_operand.vmem [shape: f32[1,32], index: 4, kind: input, shape index: {}]
  %s5 = inlined_call_operand.vmem [shape: f32[1,32], index: 5, kind: input, shape index: {}, may-alias: {2,5}]
  %s6 = inlined_call_operand.vmem [shape: f32[16,32], index: 6, kind: output, shape index: {}]
  %s7 = sld [smem:[#allocation0]]
  $region42: #{_lambda_.21} parent=0
    _
  %s9 = ssub.s32 1, %s7
  %s10 = scalar_select 0, %s9, %s7
  // Predicated region
  $region2: #{_lambda_.21} parent=0 // pred_check
    _
  $region3: #{_lambda_.21} parent=0 // pred_check_branch
    %12 = sbr.rel (0) target = $region5
  $region4: #{_lambda_.21} parent=0 // pred_region
    _
  $region5: #{_lambda_.21} parent=0 // pred_fallthru
    _
  // Predicated region
  $region6: #{_lambda_.21} parent=0 // pred_check
    _
  $region7: #{_lambda_.21} parent=0 // pred_check_branch
    %14 = sbr.rel (0) target = $region9
  $region8: #{_lambda_.21} parent=0 // pred_region
    _
  $region9: #{_lambda_.21} parent=0 // pred_fallthru
    _
  // Predicated region
  $region10: #{_lambda_.21} parent=0 // pred_check
    _
  $region11: #{_lambda_.21} parent=0 // pred_check_branch
    %16 = sbr.rel (0) target = $region13
  $region12: #{_lambda_.21} parent=0 // pred_region
    _
  $region13: #{_lambda_.21} parent=0 // pred_fallthru
    _
  // Predicated region
  $region14: #{_lambda_.21} parent=0 // pred_check
    _
  $region15: #{_lambda_.21} parent=0 // pred_check_branch
    %18 = sbr.rel (0) target = $region17
  $region16: #{_lambda_.21} parent=0 // pred_region
    _
  $region17: #{_lambda_.21} parent=0 // pred_fallthru
    _
  // Predicated region
  $region18: #{_lambda_.21} parent=0 // pred_check
    _
  $region19: #{_lambda_.21} parent=0 // pred_check_branch
    %20 = sbr.rel (0) target = $region21
  $region20: #{_lambda_.21} parent=0 // pred_region
    _
  $region21: #{_lambda_.21} parent=0 // pred_fallthru
    _
  // Predicated region
  $region22: #{_lambda_.21} parent=0 // pred_check
    _
  $region23: #{_lambda_.21} parent=0 // pred_check_branch
    %22 = sbr.rel (0) target = $region25
  $region24: #{_lambda_.21} parent=0 // pred_region
    _
  $region25: #{_lambda_.21} parent=0 // pred_fallthru
    _
  %p24 = scmp.eq.s32.totalorder 0, 0
  // Predicated region
  $region26: #{_lambda_.21} parent=0 // pred_check
    %p25 = pneg %p24
  $region27: #{_lambda_.21} parent=0 // pred_check_branch
    %27 = sbr.rel (%p25) target = $region29
  $region28: #{_lambda_.21} parent=0 // pred_region
    %vm28 = vcmask 261120
    %29 = vst.msk [vmem:[#allocation2] sm:$0xff] %vm28, 0.0
    %30 = vst.msk [vmem:[#allocation2 + $0x8] sm:$0xff] %vm28, 0.0
  $region29: #{_lambda_.21} parent=0 // pred_fallthru
    _
  %v31 = vld [vmem:[#allocation2] sm:$0xff]
  %v32 = vld [vmem:[#allocation2 + $0x8] sm:$0xff]
  %v33 = vld [vmem:[%s0] sm:$0xf]
  %v34 = vld [vmem:[%s0 + $0x4] sm:$0xf]
  %v35 = vld [vmem:[%s1] sm:$0xf]
  %v36 = vld [vmem:[%s1 + $0x4] sm:$0xf]
  %v37 = vld [vmem:[%s1 + $0x8] sm:$0xf]
  %v38 = vld [vmem:[%s1 + $0xc] sm:$0xf]
  %v39 = vld [vmem:[%s1 + $0x10] sm:$0xf]
  %v40 = vld [vmem:[%s1 + $0x14] sm:$0xf]
  %v41 = vld [vmem:[%s1 + $0x18] sm:$0xf]
  %v42 = vld [vmem:[%s1 + $0x1c] sm:$0xf]
  %v45 = vunpack.c.l.b16 %v33
  %v46 = vunpack.c.l.b16 %v34
  %v47 = vpack.c.b16 %v46, %v45
  %v56 = vunpack.c.l.b16 %v35
  %v57 = vunpack.c.l.b16 %v36
  %v58 = vunpack.c.l.b16 %v37
  %v59 = vunpack.c.l.b16 %v38
  %v60 = vunpack.c.l.b16 %v39
  %v61 = vunpack.c.l.b16 %v40
  %v62 = vunpack.c.l.b16 %v41
  %v63 = vunpack.c.l.b16 %v42
  %v64 = vpack.c.b16 %v57, %v56
  %v65 = vpack.c.b16 %v59, %v58
  %v66 = vpack.c.b16 %v61, %v60
  %v67 = vpack.c.b16 %v63, %v62
  %vm72 = vcmask 523264
  %v74 = vsel %vm72, %v47, 0
  %76 = vmatprep.subr.bf16.mxu0 0
  %77 = vmatpush1.bf16.msra.mxu0 0
  %78 = vmatprep.subr.bf16.mxu0 0
  %79 = vmatpush1.bf16.msra.mxu0 0
  %80 = vmatprep.subr.bf16.mxu0 0
  %81 = vmatpush1.bf16.msra.mxu0 0
  %82 = vmatprep.subr.bf16.mxu0 0
  %83 = vmatpush1.bf16.msra.mxu0 0
  %84 = vmatprep.subr.bf16.mxu0 0
  %85 = vmatpush1.bf16.msra.mxu0 %v67
  %86 = vmatprep.subr.bf16.mxu0 0
  %87 = vmatpush1.bf16.msra.mxu0 %v66
  %88 = vmatprep.subr.bf16.mxu0 0
  %89 = vmatpush1.bf16.msra.mxu0 %v65
  %90 = vmatprep.subr.bf16.mxu0 0
  %91 = vmatpush1.bf16.msra.mxu0 %v64
  %92 = vmatprep.subr.bf16.mxu0 0
  %93 = vmatpush2.bf16.msra.mxu0 0
  %94 = vmatprep.subr.bf16.mxu0 0
  %95 = vmatpush2.bf16.msra.mxu0 0
  %96 = vmatprep.subr.bf16.mxu0 0
  %97 = vmatpush2.bf16.msra.mxu0 0
  %98 = vmatprep.subr.bf16.mxu0 0
  %99 = vmatpush2.bf16.msra.mxu0 0
  %100 = vmatprep.subr.bf16.mxu0 0
  %101 = vmatpush2.bf16.msra.mxu0 0
  %102 = vmatprep.subr.bf16.mxu0 0
  %103 = vmatpush2.bf16.msra.mxu0 0
  %104 = vmatprep.subr.bf16.mxu0 0
  %105 = vmatpush2.bf16.msra.mxu0 0
  %106 = vmatprep.subr.bf16.mxu0 0
  %107 = vmatpush2.bf16.msra.mxu0 0
  %108 = vmatprep.mubr.bf16.mxu0 0
  %109 = vmatmul.mubr.bf16.gmra.mxu0 %v74
  %v110 = vpop.f32.mrf.mxu0
  %v111 = vadd.f32 0.0, %v110
  %v112 = vpop.f32.mrf.mxu0
  %v113 = vpop.f32.mrf.mxu0
  %v114 = vadd.f32 0.0, %v113
  %v115 = vpop.f32.mrf.mxu0
  %116 = vdwg.mxu0
  %v117 = vadd.f32 %v31, %v111
  %v118 = vadd.f32 %v32, %v114
  %vm119 = vcmask 261120
  %120 = vst.msk [vmem:[#allocation2] sm:$0xff] %vm119, %v117
  %121 = vst.msk [vmem:[#allocation2 + $0x8] sm:$0xff] %vm119, %v118
  // Predicated region
  $region30: #{_lambda_.21} parent=0 // pred_check
    %p122 = pneg %p24
  $region31: #{_lambda_.21} parent=0 // pred_check_branch
    %124 = sbr.rel (%p122) target = $region33
  $region32: #{_lambda_.21} parent=0 // pred_region
    %v125 = vld [vmem:[%s3] sm:$0xff]
    %v126 = vld [vmem:[%s3 + $0x8] sm:$0xff]
    %v127 = vld [vmem:[#allocation2] sm:$0xff]
    %v128 = vld [vmem:[#allocation2 + $0x8] sm:$0xff]
    %v129 = vadd.f32 %v125, %v127
    %v130 = vadd.f32 %v126, %v128
    %v131 = vld [vmem:[%s2] sm:$0x1]
    %v133 = vlaneseq
    %v134 = vshrl.u32 %v133, 7
    %v135 = vsub.s32 0, %v134
    %v136 = vrot.slane %v131, %v135
    %v138 = vadd.f32 %v129, %v136
    %v139 = vadd.f32 %v130, %v136
    %v140 = vsel %vm119, %v138, 0.0
    %141 = vadd.xlane.f32.xlu0 %v140
    %v142 = vpop.xlane.xlu0 %141
    %v143 = vsel %vm119, %v139, 0.0
    %144 = vadd.xlane.f32.xlu0 %v143
    %v145 = vpop.xlane.xlu0 %144
    %v146 = vrcp.pop 32.0
    %v147 = vmul.f32 %v142, %v146
    %v148 = vmul.f32 %v145, %v146
    %v149 = vsub.f32 %v138, %v147
    %v150 = vsub.f32 %v139, %v148
    %v151 = vmul.f32 %v149, %v149
    %v152 = vmul.f32 %v150, %v150
    %v153 = vsel %vm119, %v151, 0.0
    %154 = vadd.xlane.f32.xlu0 %v153
    %v155 = vpop.xlane.xlu0 %154
    %v156 = vsel %vm119, %v152, 0.0
    %157 = vadd.xlane.f32.xlu0 %v156
    %v158 = vpop.xlane.xlu0 %157
    %v159 = vmul.f32 %v155, %v146
    %v160 = vmul.f32 %v158, %v146
    %v161 = vadd.f32 %v159, 1e-12
    %v162 = vadd.f32 %v160, 1e-12
    %v163 = vrsqrt.pop %v161
    %v164 = vrsqrt.pop %v162
    %v165 = vmul.f32 %v149, %v163
    %v166 = vmul.f32 %v150, %v164
    %v167 = vld [vmem:[%s4] sm:$0x1]
    %v169 = vlaneseq
    %v170 = vshrl.u32 %v169, 7
    %v171 = vsub.s32 0, %v170
    %v172 = vrot.slane %v167, %v171
    %v174 = vmul.f32 %v165, %v172
    %v175 = vmul.f32 %v166, %v172
    %v176 = vld [vmem:[%s5] sm:$0x1]
    %v178 = vlaneseq
    %v179 = vshrl.u32 %v178, 7
    %v180 = vsub.s32 0, %v179
    %v181 = vrot.slane %v176, %v180
    %v183 = vadd.f32 %v174, %v181
    %v184 = vadd.f32 %v175, %v181
    %185 = vst.msk [vmem:[%s6] sm:$0xff] %vm119, %v183
    %186 = vst.msk [vmem:[%s6 + $0x8] sm:$0xff] %vm119, %v184
  $region33: #{_lambda_.21} parent=0 // pred_fallthru
    _
  // Predicated region
  $region34: #{_lambda_.21} parent=0 // pred_check
    _
  $region35: #{_lambda_.21} parent=0 // pred_check_branch
    %188 = sbr.rel (0) target = $region37
  $region36: #{_lambda_.21} parent=0 // pred_region
    _
  $region37: #{_lambda_.21} parent=0 // pred_fallthru
    _
  // Predicated region
  $region38: #{_lambda_.21} parent=0 // pred_check
    _
  $region39: #{_lambda_.21} parent=0 // pred_check_branch
    %190 = sbr.rel (0) target = $region41
  $region40: #{_lambda_.21} parent=0 // pred_region
    _
  $region41: #{_lambda_.21} parent=0 // pred_fallthru
    _

// kernel: _lambda_.20
$region0: #{_lambda_.20}
  #allocation0 [shape = 'u32[]', space=smem, size = 0x4, offset = 0x4, fixed_abs, tag = 'smem constant byte address 0x4 - core index']
  #allocation1 [shape = 'u32[144,128]{1,0:T(1,128)}', space=vmem, size = 0x12000, scoped, tag = 'internal scratch']
  #allocation2 [shape = 'f32[16,64]{1,0:T(8,128)}', space=vmem, size = 0x2000, scoped, tag = 'scratch operand']
  %s0 = inlined_call_operand.vmem [shape: f32[16,32], index: 0, kind: input, shape index: {}]
  %s1 = inlined_call_operand.vmem [shape: bf16[32,64], index: 1, kind: input, shape index: {}]
  %s2 = inlined_call_operand.vmem [shape: f32[1,64], index: 2, kind: input, shape index: {}]
  %s3 = inlined_call_operand.vmem [shape: bf16[16,64], index: 3, kind: output, shape index: {}]
  %s4 = sld [smem:[#allocation0]]
  $region30: #{_lambda_.20} parent=0
    _
  %s6 = ssub.s32 1, %s4
  %s7 = scalar_select 0, %s6, %s4
  // Predicated region
  $region2: #{_lambda_.20} parent=0 // pred_check
    _
  $region3: #{_lambda_.20} parent=0 // pred_check_branch
    %9 = sbr.rel (0) target = $region5
  $region4: #{_lambda_.20} parent=0 // pred_region
    _
  $region5: #{_lambda_.20} parent=0 // pred_fallthru
    _
  // Predicated region
  $region6: #{_lambda_.20} parent=0 // pred_check
    _
  $region7: #{_lambda_.20} parent=0 // pred_check_branch
    %11 = sbr.rel (0) target = $region9
  $region8: #{_lambda_.20} parent=0 // pred_region
    _
  $region9: #{_lambda_.20} parent=0 // pred_fallthru
    _
  // Predicated region
  $region10: #{_lambda_.20} parent=0 // pred_check
    _
  $region11: #{_lambda_.20} parent=0 // pred_check_branch
    %13 = sbr.rel (0) target = $region13
  $region12: #{_lambda_.20} parent=0 // pred_region
    _
  $region13: #{_lambda_.20} parent=0 // pred_fallthru
    _
  %p15 = scmp.eq.s32.totalorder 0, 0
  // Predicated region
  $region14: #{_lambda_.20} parent=0 // pred_check
    %p16 = pneg %p15
  $region15: #{_lambda_.20} parent=0 // pred_check_branch
    %18 = sbr.rel (%p16) target = $region17
  $region16: #{_lambda_.20} parent=0 // pred_region
    %vm19 = vcmask 523264
    %20 = vst.msk [vmem:[#allocation2] sm:$0xff] %vm19, 0.0
    %21 = vst.msk [vmem:[#allocation2 + $0x8] sm:$0xff] %vm19, 0.0
  $region17: #{_lambda_.20} parent=0 // pred_fallthru
    _
  %v22 = vld [vmem:[#allocation2] sm:$0xff]
  %v23 = vld [vmem:[#allocation2 + $0x8] sm:$0xff]
  %v24 = vld [vmem:[%s0] sm:$0xff]
  %v25 = vld [vmem:[%s0 + $0x8] sm:$0xff]
  %v26 = vpack.c.bf16 %v25, %v24
  %v27 = vld [vmem:[%s1] sm:$0xf]
  %v28 = vld [vmem:[%s1 + $0x4] sm:$0xf]
  %v29 = vld [vmem:[%s1 + $0x8] sm:$0xf]
  %v30 = vld [vmem:[%s1 + $0xc] sm:$0xf]
  %v35 = vunpack.c.l.b16 %v27
  %v36 = vunpack.c.l.b16 %v28
  %v37 = vunpack.c.l.b16 %v29
  %v38 = vunpack.c.l.b16 %v30
  %v39 = vpack.c.b16 %v36, %v35
  %v40 = vpack.c.b16 %v38, %v37
  %vm43 = vcmask 261120
  %v45 = vsel %vm43, %v26, 0
  %47 = vmatprep.subr.bf16.mxu0 0
  %48 = vmatpush1.bf16.msra.mxu0 0
  %49 = vmatprep.subr.bf16.mxu0 0
  %50 = vmatpush1.bf16.msra.mxu0 0
  %51 = vmatprep.subr.bf16.mxu0 0
  %52 = vmatpush1.bf16.msra.mxu0 0
  %53 = vmatprep.subr.bf16.mxu0 0
  %54 = vmatpush1.bf16.msra.mxu0 0
  %55 = vmatprep.subr.bf16.mxu0 0
  %56 = vmatpush1.bf16.msra.mxu0 0
  %57 = vmatprep.subr.bf16.mxu0 0
  %58 = vmatpush1.bf16.msra.mxu0 0
  %59 = vmatprep.subr.bf16.mxu0 0
  %60 = vmatpush1.bf16.msra.mxu0 %v40
  %61 = vmatprep.subr.bf16.mxu0 0
  %62 = vmatpush1.bf16.msra.mxu0 %v39
  %63 = vmatprep.subr.bf16.mxu0 0
  %64 = vmatpush2.bf16.msra.mxu0 0
  %65 = vmatprep.subr.bf16.mxu0 0
  %66 = vmatpush2.bf16.msra.mxu0 0
  %67 = vmatprep.subr.bf16.mxu0 0
  %68 = vmatpush2.bf16.msra.mxu0 0
  %69 = vmatprep.subr.bf16.mxu0 0
  %70 = vmatpush2.bf16.msra.mxu0 0
  %71 = vmatprep.subr.bf16.mxu0 0
  %72 = vmatpush2.bf16.msra.mxu0 0
  %73 = vmatprep.subr.bf16.mxu0 0
  %74 = vmatpush2.bf16.msra.mxu0 0
  %75 = vmatprep.subr.bf16.mxu0 0
  %76 = vmatpush2.bf16.msra.mxu0 0
  %77 = vmatprep.subr.bf16.mxu0 0
  %78 = vmatpush2.bf16.msra.mxu0 0
  %79 = vmatprep.mubr.bf16.mxu0 0
  %80 = vmatmul.mubr.bf16.gmra.mxu0 %v45
  %v81 = vpop.f32.mrf.mxu0
  %v82 = vadd.f32 0.0, %v81
  %v83 = vpop.f32.mrf.mxu0
  %v84 = vpop.f32.mrf.mxu0
  %v85 = vadd.f32 0.0, %v84
  %v86 = vpop.f32.mrf.mxu0
  %87 = vdwg.mxu0
  %v88 = vadd.f32 %v22, %v82
  %v89 = vadd.f32 %v23, %v85
  %vm90 = vcmask 523264
  %91 = vst.msk [vmem:[#allocation2] sm:$0xff] %vm90, %v88
  %92 = vst.msk [vmem:[#allocation2 + $0x8] sm:$0xff] %vm90, %v89
  // Predicated region
  $region18: #{_lambda_.20} parent=0 // pred_check
    %p93 = pneg %p15
  $region19: #{_lambda_.20} parent=0 // pred_check_branch
    %95 = sbr.rel (%p93) target = $region21
  $region20: #{_lambda_.20} parent=0 // pred_region
    %v96 = vld [vmem:[#allocation2] sm:$0xff]
    %v97 = vld [vmem:[#allocation2 + $0x8] sm:$0xff]
    %v98 = vld [vmem:[%s2] sm:$0x1]
    %v100 = vlaneseq
    %v101 = vshrl.u32 %v100, 7
    %v102 = vsub.s32 0, %v101
    %v103 = vrot.slane %v98, %v102
    %v105 = vadd.f32 %v96, %v103
    %v106 = vadd.f32 %v97, %v103
    %v107 = vmul.f32 %v105, 0.5
    %v108 = vmul.f32 %v106, 0.5
    %v109 = vmul.f32 %v105, 0.044715
    %v110 = vmul.f32 %v106, 0.044715
    %v111 = vmul.f32 %v109, %v105
    %v112 = vmul.f32 %v110, %v106
    %v113 = vmul.f32 %v111, %v105
    %v114 = vmul.f32 %v112, %v106
    %v115 = vadd.f32 %v105, %v113
    %v116 = vadd.f32 %v106, %v114
    %v117 = vmul.f32 %v115, 0.7978846
    %v118 = vmul.f32 %v116, 0.7978846
    %v119 = vtanh.pop %v117
    %v120 = vtanh.pop %v118
    %v121 = vadd.f32 %v119, 1.0
    %v122 = vadd.f32 %v120, 1.0
    %v123 = vmul.f32 %v107, %v121
    %v124 = vmul.f32 %v108, %v122
    %v125 = vpack.c.bf16 %v124, %v123
    %v127 = vunpack.c.l.b16 %v125
    %v128 = vunpack.c.h.b16 %v125
    %v129 = vpack.c.b16 %v127, %v127
    %v130 = vpack.c.b16 %v128, %v128
    %vm133 = vcmask 519168
    %134 = vst.msk [vmem:[%s3] sm:$0xf] %vm133, %v129
    %135 = vst.msk [vmem:[%s3 + $0x4] sm:$0xf] %vm133, %v130
  $region21: #{_lambda_.20} parent=0 // pred_fallthru
    _
  // Predicated region
  $region22: #{_lambda_.20} parent=0 // pred_check
    _
  $region23: #{_lambda_.20} parent=0 // pred_check_branch
    %137 = sbr.rel (0) target = $region25
  $region24: #{_lambda_.20} parent=0 // pred_region
    _
  $region25: #{_lambda_.20} parent=0 // pred_fallthru
    _
  // Predicated region
  $region26: #{_lambda_.20} parent=0 // pred_check
    _
  $region27: #{_lambda_.20} parent=0 // pred_check_branch
    %139 = sbr.rel (0) target = $region29
  $region28: #{_lambda_.20} parent=0 // pred_region
    _
  $region29: #{_lambda_.20} parent=0 // pred_fallthru
    _

// kernel: _lambda_.27
$region0: #{_lambda_.27}
  #allocation0 [shape = 'u32[]', space=smem, size = 0x4, offset = 0x4, fixed_abs, tag = 'smem constant byte address 0x4 - core index']
  #allocation1 [shape = 'u32[144,128]{1,0:T(1,128)}', space=vmem, size = 0x12000, scoped, tag = 'internal scratch']
  #allocation2 [shape = 'f32[2,16,48]{2,1,0:T(8,128)}', space=vmem, size = 0x4000, scoped, tag = 'scratch operand']
  %s0 = inlined_call_operand.vmem [shape: f32[1,16,32], index: 0, kind: input, shape index: {}]
  %s1 = inlined_call_operand.vmem [shape: bf16[2,1,32,48], index: 1, kind: input, shape index: {}]
  %s2 = inlined_call_operand.vmem [shape: f32[2,1,48], index: 2, kind: input, shape index: {}]
  %s3 = inlined_call_operand.vmem [shape: f32[2,16,48], index: 3, kind: output, shape index: {}]
  %s4 = sld [smem:[#allocation0]]
  $region30: #{_lambda_.27} parent=0
    _
  %s6 = ssub.s32 1, %s4
  %s7 = scalar_select 0, %s6, %s4
  // Predicated region
  $region2: #{_lambda_.27} parent=0 // pred_check
    _
  $region3: #{_lambda_.27} parent=0 // pred_check_branch
    %9 = sbr.rel (0) target = $region5
  $region4: #{_lambda_.27} parent=0 // pred_region
    _
  $region5: #{_lambda_.27} parent=0 // pred_fallthru
    _
  // Predicated region
  $region6: #{_lambda_.27} parent=0 // pred_check
    _
  $region7: #{_lambda_.27} parent=0 // pred_check_branch
    %11 = sbr.rel (0) target = $region9
  $region8: #{_lambda_.27} parent=0 // pred_region
    _
  $region9: #{_lambda_.27} parent=0 // pred_fallthru
    _
  // Predicated region
  $region10: #{_lambda_.27} parent=0 // pred_check
    _
  $region11: #{_lambda_.27} parent=0 // pred_check_branch
    %13 = sbr.rel (0) target = $region13
  $region12: #{_lambda_.27} parent=0 // pred_region
    _
  $region13: #{_lambda_.27} parent=0 // pred_fallthru
    _
  %p15 = scmp.eq.s32.totalorder 0, 0
  // Predicated region
  $region14: #{_lambda_.27} parent=0 // pred_check
    %p16 = pneg %p15
  $region15: #{_lambda_.27} parent=0 // pred_check_branch
    %18 = sbr.rel (%p16) target = $region17
  $region16: #{_lambda_.27} parent=0 // pred_region
    %vm19 = vcmask 392192
    %20 = vst.msk [vmem:[#allocation2] sm:$0xff] %vm19, 0.0
    %21 = vst.msk [vmem:[#allocation2 + $0x8] sm:$0xff] %vm19, 0.0
    %22 = vst.msk [vmem:[#allocation2 + $0x10] sm:$0xff] %vm19, 0.0
    %23 = vst.msk [vmem:[#allocation2 + $0x18] sm:$0xff] %vm19, 0.0
  $region17: #{_lambda_.27} parent=0 // pred_fallthru
    _
  %v24 = vld [vmem:[#allocation2] sm:$0xff]
  %v25 = vld [vmem:[#allocation2 + $0x8] sm:$0xff]
  %v26 = vld [vmem:[%s0] sm:$0xff]
  %v27 = vld [vmem:[%s0 + $0x8] sm:$0xff]
  %v28 = vpack.c.bf16 %v27, %v26
  %v29 = vld [vmem:[%s1] sm:$0xf]
  %v30 = vld [vmem:[%s1 + $0x4] sm:$0xf]
  %v31 = vld [vmem:[%s1 + $0x8] sm:$0xf]
  %v32 = vld [vmem:[%s1 + $0xc] sm:$0xf]
  %v37 = vunpack.c.l.b16 %v29
  %v38 = vunpack.c.l.b16 %v30
  %v39 = vunpack.c.l.b16 %v31
  %v40 = vunpack.c.l.b16 %v32
  %v41 = vpack.c.b16 %v38, %v37
  %v42 = vpack.c.b16 %v40, %v39
  %vm45 = vcmask 261120
  %v47 = vsel %vm45, %v28, 0
  %49 = vmatprep.subr.bf16.mxu0 0
  %50 = vmatpush1.bf16.msra.mxu0 0
  %51 = vmatprep.subr.bf16.mxu0 0
  %52 = vmatpush1.bf16.msra.mxu0 0
  %53 = vmatprep.subr.bf16.mxu0 0
  %54 = vmatpush1.bf16.msra.mxu0 0
  %55 = vmatprep.subr.bf16.mxu0 0
  %56 = vmatpush1.bf16.msra.mxu0 0
  %57 = vmatprep.subr.bf16.mxu0 0
  %58 = vmatpush1.bf16.msra.mxu0 0
  %59 = vmatprep.subr.bf16.mxu0 0
  %60 = vmatpush1.bf16.msra.mxu0 0
  %61 = vmatprep.subr.bf16.mxu0 0
  %62 = vmatpush1.bf16.msra.mxu0 %v42
  %63 = vmatprep.subr.bf16.mxu0 0
  %64 = vmatpush1.bf16.msra.mxu0 %v41
  %65 = vmatprep.subr.bf16.mxu0 0
  %66 = vmatpush2.bf16.msra.mxu0 0
  %67 = vmatprep.subr.bf16.mxu0 0
  %68 = vmatpush2.bf16.msra.mxu0 0
  %69 = vmatprep.subr.bf16.mxu0 0
  %70 = vmatpush2.bf16.msra.mxu0 0
  %71 = vmatprep.subr.bf16.mxu0 0
  %72 = vmatpush2.bf16.msra.mxu0 0
  %73 = vmatprep.subr.bf16.mxu0 0
  %74 = vmatpush2.bf16.msra.mxu0 0
  %75 = vmatprep.subr.bf16.mxu0 0
  %76 = vmatpush2.bf16.msra.mxu0 0
  %77 = vmatprep.subr.bf16.mxu0 0
  %78 = vmatpush2.bf16.msra.mxu0 0
  %79 = vmatprep.subr.bf16.mxu0 0
  %80 = vmatpush2.bf16.msra.mxu0 0
  %81 = vmatprep.mubr.bf16.mxu0 0
  %82 = vmatmul.mubr.bf16.gmra.mxu0 %v47
  %v83 = vpop.f32.mrf.mxu0
  %v84 = vadd.f32 0.0, %v83
  %v85 = vpop.f32.mrf.mxu0
  %v86 = vpop.f32.mrf.mxu0
  %v87 = vadd.f32 0.0, %v86
  %v88 = vpop.f32.mrf.mxu0
  %89 = vdwg.mxu0
  %v90 = vadd.f32 %v24, %v84
  %v91 = vadd.f32 %v25, %v87
  %vm92 = vcmask 392192
  %93 = vst.msk [vmem:[#allocation2] sm:$0xff] %vm92, %v90
  %94 = vst.msk [vmem:[#allocation2 + $0x8] sm:$0xff] %vm92, %v91
  %s95 = scalar_lea.vmem [#allocation2], 16
  %v96 = vld [vmem:[%s95] sm:$0xff]
  %v97 = vld [vmem:[%s95 + $0x8] sm:$0xff]
  %v98 = vld [vmem:[%s0] sm:$0xff]
  %v99 = vld [vmem:[%s0 + $0x8] sm:$0xff]
  %v100 = vpack.c.bf16 %v99, %v98
  %s101 = scalar_lea.vmem %s1, 16
  %v102 = vld [vmem:[%s101] sm:$0xf]
  %v103 = vld [vmem:[%s101 + $0x4] sm:$0xf]
  %v104 = vld [vmem:[%s101 + $0x8] sm:$0xf]
  %v105 = vld [vmem:[%s101 + $0xc] sm:$0xf]
  %v110 = vunpack.c.l.b16 %v102
  %v111 = vunpack.c.l.b16 %v103
  %v112 = vunpack.c.l.b16 %v104
  %v113 = vunpack.c.l.b16 %v105
  %v114 = vpack.c.b16 %v111, %v110
  %v115 = vpack.c.b16 %v113, %v112
  %v119 = vsel %vm45, %v100, 0
  %121 = vmatprep.subr.bf16.mxu0 0
  %122 = vmatpush1.bf16.msra.mxu0 0
  %123 = vmatprep.subr.bf16.mxu0 0
  %124 = vmatpush1.bf16.msra.mxu0 0
  %125 = vmatprep.subr.bf16.mxu0 0
  %126 = vmatpush1.bf16.msra.mxu0 0
  %127 = vmatprep.subr.bf16.mxu0 0
  %128 = vmatpush1.bf16.msra.mxu0 0
  %129 = vmatprep.subr.bf16.mxu0 0
  %130 = vmatpush1.bf16.msra.mxu0 0
  %131 = vmatprep.subr.bf16.mxu0 0
  %132 = vmatpush1.bf16.msra.mxu0 0
  %133 = vmatprep.subr.bf16.mxu0 0
  %134 = vmatpush1.bf16.msra.mxu0 %v115
  %135 = vmatprep.subr.bf16.mxu0 0
  %136 = vmatpush1.bf16.msra.mxu0 %v114
  %137 = vmatprep.subr.bf16.mxu0 0
  %138 = vmatpush2.bf16.msra.mxu0 0
  %139 = vmatprep.subr.bf16.mxu0 0
  %140 = vmatpush2.bf16.msra.mxu0 0
  %141 = vmatprep.subr.bf16.mxu0 0
  %142 = vmatpush2.bf16.msra.mxu0 0
  %143 = vmatprep.subr.bf16.mxu0 0
  %144 = vmatpush2.bf16.msra.mxu0 0
  %145 = vmatprep.subr.bf16.mxu0 0
  %146 = vmatpush2.bf16.msra.mxu0 0
  %147 = vmatprep.subr.bf16.mxu0 0
  %148 = vmatpush2.bf16.msra.mxu0 0
  %149 = vmatprep.subr.bf16.mxu0 0
  %150 = vmatpush2.bf16.msra.mxu0 0
  %151 = vmatprep.subr.bf16.mxu0 0
  %152 = vmatpush2.bf16.msra.mxu0 0
  %153 = vmatprep.mubr.bf16.mxu0 0
  %154 = vmatmul.mubr.bf16.gmra.mxu0 %v119
  %v155 = vpop.f32.mrf.mxu0
  %v156 = vadd.f32 0.0, %v155
  %v157 = vpop.f32.mrf.mxu0
  %v158 = vpop.f32.mrf.mxu0
  %v159 = vadd.f32 0.0, %v158
  %v160 = vpop.f32.mrf.mxu0
  %161 = vdwg.mxu0
  %v162 = vadd.f32 %v96, %v156
  %v163 = vadd.f32 %v97, %v159
  %164 = vst.msk [vmem:[%s95] sm:$0xff] %vm92, %v162
  %165 = vst.msk [vmem:[%s95 + $0x8] sm:$0xff] %vm92, %v163
  // Predicated region
  $region18: #{_lambda_.27} parent=0 // pred_check
    %p166 = pneg %p15
  $region19: #{_lambda_.27} parent=0 // pred_check_branch
    %168 = sbr.rel (%p166) target = $region21
  $region20: #{_lambda_.27} parent=0 // pred_region
    %v169 = vld [vmem:[#allocation2] sm:$0xff]
    %v170 = vld [vmem:[#allocation2 + $0x8] sm:$0xff]
    %v171 = vld [vmem:[#allocation2 + $0x10] sm:$0xff]
    %v172 = vld [vmem:[#allocation2 + $0x18] sm:$0xff]
    %v173 = vld [vmem:[%s2] sm:$0x1]
    %v174 = vld [vmem:[%s2 + $0x1] sm:$0x1]
    %v177 = vlaneseq
    %v178 = vshrl.u32 %v177, 7
    %v179 = vsub.s32 0, %v178
    %v180 = vrot.slane %v173, %v179
    %v181 = vlaneseq
    %v182 = vshrl.u32 %v181, 7
    %v183 = vsub.s32 0, %v182
    %v184 = vrot.slane %v174, %v183
    %v187 = vadd.f32 %v169, %v180
    %v188 = vadd.f32 %v170, %v180
    %v189 = vadd.f32 %v171, %v184
    %v190 = vadd.f32 %v172, %v184
    %191 = vst.msk [vmem:[%s3] sm:$0xff] %vm92, %v187
    %192 = vst.msk [vmem:[%s3 + $0x8] sm:$0xff] %vm92, %v188
    %193 = vst.msk [vmem:[%s3 + $0x10] sm:$0xff] %vm92, %v189
    %194 = vst.msk [vmem:[%s3 + $0x18] sm:$0xff] %vm92, %v190
  $region21: #{_lambda_.27} parent=0 // pred_fallthru
    _
  // Predicated region
  $region22: #{_lambda_.27} parent=0 // pred_check
    _
  $region23: #{_lambda_.27} parent=0 // pred_check_branch
    %196 = sbr.rel (0) target = $region25
  $region24: #{_lambda_.27} parent=0 // pred_region
    _
  $region25: #{_lambda_.27} parent=0 // pred_fallthru
    _
  // Predicated region
  $region26: #{_lambda_.27} parent=0 // pred_check
    _
  $region27: #{_lambda_.27} parent=0 // pred_check_branch
    %198 = sbr.rel (0) target = $region29
  $region28: #{_lambda_.27} parent=0 // pred_region
    _
  $region29: #{_lambda_.27} parent=0 // pred_fallthru
    _

// kernel: _lambda_.28
$region0: #{_lambda_.28}
  #allocation0 [shape = 'u32[]', space=smem, size = 0x4, offset = 0x4, fixed_abs, tag = 'smem constant byte address 0x4 - core index']
  #allocation1 [shape = 'u32[144,128]{1,0:T(1,128)}', space=vmem, size = 0x12000, scoped, tag = 'internal scratch']
  #allocation2 [shape = 'f32[2,16]{1,0:T(2,128)}', space=vmem, size = 0x400, scoped, tag = 'scratch operand']
  %s0 = inlined_call_operand.vmem [shape: f32[2,8,2,48], index: 0, kind: input, shape index: {}]
  %s1 = inlined_call_operand.vmem [shape: bf16[2,16,48], index: 1, kind: input, shape index: {}]
  %s2 = inlined_call_operand.vmem [shape: f32[2,1,48], index: 2, kind: input, shape index: {}]
  %s3 = inlined_call_operand.vmem [shape: f32[2,8,2,16], index: 3, kind: output, shape index: {0}]
  %s4 = inlined_call_operand.hbm [shape: f32[2,2,16], index: 4, kind: output, shape index: {1}]
  %5 = xla_tuple %s3, %s4
  %s6 = sld [smem:[#allocation0]]
  $region57: #{_lambda_.28} parent=0
    _
  %s8 = ssub.s32 1, %s6
  %s9 = scalar_select 0, %s8, %s6
  $region1: #{_lambda_.28} parent=0
    #allocation3 [shape = 'u8[2048]{0}', space=vmem, size = 0x800, scoped, tag = 'output window, operand 1']
    #allocation4 [shape = 's32[2]{0}', space=sflag, size = 0x8, scoped, tag = 'scoped memory for _lambda_.28']
    %10 = vsyncpa [#allocation4], 0
    %s11 = scalar_lea.sflag [#allocation4], 1
    %12 = vsyncpa %s11, 0
    loop: start=0, step=1, limit=4
    $region2: #{_lambda_.28} parent=1 // loop_pre_header
      _
    $region3: #{_lambda_.28} parent=1 // loop_header
      %s14 = sphi 0, %s18
      %p15 = scmp.ge.s32.totalorder %s14, 4
      %s21 = sphi 0, %s33
      %s22 = sphi 0, %s29
      %s23 = sphi 0, %s21
      %s24 = sphi 0, %s22
      %s25 = sphi 0, %s23
      %s26 = sphi 0, %s24
      %s48 = sphi 0, %s50
      %s51 = sphi 0, %s48
      %s52 = sphi 0, %s51
      %s68 = sphi 0, %s52
      %s74 = sphi 0, %s76
      %s77 = sphi 0, %s74
      %s78 = sphi 0, %s77
      %s94 = sphi 0, %s78
      %s100 = sphi 0, %s102
      %s103 = sphi 0, %s100
      %s104 = sphi 0, %s103
      %s120 = sphi 0, %s104
      %s138 = sphi 0, %s140
      %s141 = sphi 0, %s138
      %s142 = sphi 0, %s141
      %s158 = sphi 0, %s142
      %s164 = sphi 0, %s166
      %s167 = sphi 0, %s164
      %s168 = sphi 0, %s167
      %s184 = sphi 0, %s168
    $region4: #{_lambda_.28} parent=1 // loop_header_branch
      %17 = sbr.rel (%p15) target = $region8
    $region5: #{_lambda_.28} parent=1 // loop_body
      %s19 = ssub.s32 %s14, 1
      %s20 = ssub.s32 %s14, 2
      %s27 = sadd.s32 1, %s22
      %p28 = scmp.ge.s32.totalorder %s27, 1
      %s29 = scalar_select %p28, 0, %s27
      %s30 = sadd.s32 1, %s21
      %s31 = scalar_select %p28, %s30, %s21
      %p32 = scmp.ge.s32.totalorder %s31, 2
      %s33 = scalar_select %p32, 0, %s31
      %s34 = ssub.s32 1, %s21
      %s35 = smul.u32 %s34, %s22
      %s36 = ssub.s32 0, %s22
      %s37 = smul.u32 %s21, %s36
      %s38 = sadd.s32 %s35, %s37
      %s39 = ssub.s32 1, %s33
      %s40 = smul.u32 %s39, %s29
      %s41 = ssub.s32 0, %s29
      %s42 = smul.u32 %s33, %s41
      %s43 = sadd.s32 %s40, %s42
      %s44 = ssub.s32 %s21, %s33
      %s45 = ssub.s32 %s38, %s43
      %s46 = sor.u32 %s44, %s45
      %p47 = scmp.eq.s32.totalorder %s46, 0
      %s49 = sadd.s32 %s48, 1
      %s50 = scalar_select %p47, %s48, %s49
      %p53 = pneg %p47
      %p54 = scmp.eq.s32.totalorder %s14, 1
      %p55 = por %p53, %p54
      %p56 = scmp.ne.s32.totalorder %s48, %s51
      %p57 = scmp.eq.s32.totalorder %s14, 0
      %p58 = por %p56, %p57
      %p59 = scmp.ne.s32.totalorder %s48, %s51
      %p60 = scmp.eq.s32.totalorder %s19, 1
      %p61 = por %p59, %p60
      %p62 = scmp.ne.s32.totalorder %s51, %s52
      %p63 = scmp.eq.s32.totalorder %s19, 0
      %p64 = por %p62, %p63
      %p65 = scmp.ne.s32.totalorder %s51, %s52
      %p66 = scmp.eq.s32.totalorder %s20, 1
      %p67 = por %p65, %p66
      %p69 = scmp.ne.s32.totalorder %s52, %s68
      %p70 = scmp.eq.s32.totalorder %s20, 0
      %p71 = por %p69, %p70
      %s72 = ssub.s32 %s21, %s33
      %p73 = scmp.eq.s32.totalorder %s72, 0
      %s75 = sadd.s32 %s74, 1
      %s76 = scalar_select %p73, %s74, %s75
      %p79 = pneg %p73
      %p80 = scmp.eq.s32.totalorder %s14, 1
      %p81 = por %p79, %p80
      %p82 = scmp.ne.s32.totalorder %s74, %s77
      %p83 = scmp.eq.s32.totalorder %s14, 0
      %p84 = por %p82, %p83
      %p85 = scmp.ne.s32.totalorder %s74, %s77
      %p86 = scmp.eq.s32.totalorder %s19, 1
      %p87 = por %p85, %p86
      %p88 = scmp.ne.s32.totalorder %s77, %s78
      %p89 = scmp.eq.s32.totalorder %s19, 0
      %p90 = por %p88, %p89
      %p91 = scmp.ne.s32.totalorder %s77, %s78
      %p92 = scmp.eq.s32.totalorder %s20, 1
      %p93 = por %p91, %p92
      %p95 = scmp.ne.s32.totalorder %s78, %s94
      %p96 = scmp.eq.s32.totalorder %s20, 0
      %p97 = por %p95, %p96
      %s98 = ssub.s32 %s21, %s33
      %p99 = scmp.eq.s32.totalorder %s98, 0
      %s101 = sadd.s32 %s100, 1
      %s102 = scalar_select %p99, %s100, %s101
      %p105 = pneg %p99
      %p106 = scmp.eq.s32.totalorder %s14, 1
      %p107 = por %p105, %p106
      %p108 = scmp.ne.s32.totalorder %s100, %s103
      %p109 = scmp.eq.s32.totalorder %s14, 0
      %p110 = por %p108, %p109
      %p111 = scmp.ne.s32.totalorder %s100, %s103
      %p112 = scmp.eq.s32.totalorder %s19, 1
      %p113 = por %p111, %p112
      %p114 = scmp.ne.s32.totalorder %s103, %s104
      %p115 = scmp.eq.s32.totalorder %s19, 0
      %p116 = por %p114, %p115
      %p117 = scmp.ne.s32.totalorder %s103, %s104
      %p118 = scmp.eq.s32.totalorder %s20, 1
      %p119 = por %p117, %p118
      %p121 = scmp.ne.s32.totalorder %s104, %s120
      %p122 = scmp.eq.s32.totalorder %s20, 0
      %p123 = por %p121, %p122
      %s124 = ssub.s32 1, %s21
      %s125 = smul.u32 %s124, %s22
      %s126 = ssub.s32 0, %s22
      %s127 = smul.u32 %s21, %s126
      %s128 = sadd.s32 %s125, %s127
      %s129 = ssub.s32 1, %s33
      %s130 = smul.u32 %s129, %s29
      %s131 = ssub.s32 0, %s29
      %s132 = smul.u32 %s33, %s131
      %s133 = sadd.s32 %s130, %s132
      %s134 = ssub.s32 %s21, %s33
      %s135 = ssub.s32 %s128, %s133
      %s136 = sor.u32 %s134, %s135
      %p137 = scmp.eq.s32.totalorder %s136, 0
      %s139 = sadd.s32 %s138, 1
      %s140 = scalar_select %p137, %s138, %s139
      %p143 = pneg %p137
      %p144 = scmp.eq.s32.totalorder %s14, 1
      %p145 = por %p143, %p144
      %p146 = scmp.ne.s32.totalorder %s138, %s141
      %p147 = scmp.eq.s32.totalorder %s14, 0
      %p148 = por %p146, %p147
      %p149 = scmp.ne.s32.totalorder %s138, %s141
      %p150 = scmp.eq.s32.totalorder %s19, 1
      %p151 = por %p149, %p150
      %p152 = scmp.ne.s32.totalorder %s141, %s142
      %p153 = scmp.eq.s32.totalorder %s19, 0
      %p154 = por %p152, %p153
      %p155 = scmp.ne.s32.totalorder %s141, %s142
      %p156 = scmp.eq.s32.totalorder %s20, 1
      %p157 = por %p155, %p156
      %p159 = scmp.ne.s32.totalorder %s142, %s158
      %p160 = scmp.eq.s32.totalorder %s20, 0
      %p161 = por %p159, %p160
      %s162 = ssub.s32 %s21, %s33
      %p163 = scmp.eq.s32.totalorder %s162, 0
      %s165 = sadd.s32 %s164, 1
      %s166 = scalar_select %p163, %s164, %s165
      %p169 = pneg %p163
      %p170 = scmp.eq.s32.totalorder %s14, 1
      %p171 = por %p169, %p170
      %p172 = scmp.ne.s32.totalorder %s164, %s167
      %p173 = scmp.eq.s32.totalorder %s14, 0
      %p174 = por %p172, %p173
      %p175 = scmp.ne.s32.totalorder %s164, %s167
      %p176 = scmp.eq.s32.totalorder %s19, 1
      %p177 = por %p175, %p176
      %p178 = scmp.ne.s32.totalorder %s167, %s168
      %p179 = scmp.eq.s32.totalorder %s19, 0
      %p180 = por %p178, %p179
      %p181 = scmp.ne.s32.totalorder %s167, %s168
      %p182 = scmp.eq.s32.totalorder %s20, 1
      %p183 = por %p181, %p182
      %p185 = scmp.ne.s32.totalorder %s168, %s184
      %p186 = scmp.eq.s32.totalorder %s20, 0
      %p187 = por %p185, %p186
      %p188 = scmp.le.s32.totalorder 1, %s14
      %p189 = scmp.lt.s32.totalorder %s14, 3
      %p190 = pnand %p188, %p189
      %p191 = pneg %p190
      // Predicated region
      $region9: #{_lambda_.28} parent=5 // pred_check
        _
      $region10: #{_lambda_.28} parent=5 // pred_check_branch
        %193 = sbr.rel (%p190) target = $region12
      $region11: #{_lambda_.28} parent=5 // pred_region
        %s194 = ssub.s32 %s14, 1
      $region12: #{_lambda_.28} parent=5 // pred_fallthru
        _
      %p195 = scmp.lt.s32.totalorder %s14, 2
      // Predicated region
      $region13: #{_lambda_.28} parent=5 // pred_check
        %p196 = pneg %p195
      $region14: #{_lambda_.28} parent=5 // pred_check_branch
        %198 = sbr.rel (%p196) target = $region16
      $region15: #{_lambda_.28} parent=5 // pred_region
        // Predicated region
        $region17: #{_lambda_.28} parent=15 // pred_check
          %p199 = pneg %p58
        $region18: #{_lambda_.28} parent=15 // pred_check_branch
          %201 = sbr.rel (%p199) target = $region20
        $region19: #{_lambda_.28} parent=15 // pred_region
          %s202 = ssub.s32 1, %s21
          %s203 = smul.u32 %s202, %s22
          %s204 = ssub.s32 0, %s22
          %s205 = smul.u32 %s21, %s204
          %s206 = sadd.s32 %s203, %s205
          %s207 = smul.u32 8, %s206
          %p208 = scmp.lt.s32.totalorder %s21, 1
          %s209 = scalar_select %p208, %s21, 1
          %p210 = scmp.lt.s32.totalorder %s207, 7
          %s211 = scalar_select %p210, %s207, 7
          %s212 = smul.addr %s209, 8
          %s213 = sadd.s32 %s211, %s212
          %s214 = smul.addr %s213, 2
          %s215 = scalar_lea.vmem %s0, %s214
          %s216 = ssub.s32 1, %s21
          %s217 = smul.u32 %s216, %s22
          %s218 = ssub.s32 0, %s22
          %s219 = smul.u32 %s21, %s218
          %s220 = sadd.s32 %s217, %s219
          %s221 = smul.u32 8, %s220
        $region20: #{_lambda_.28} parent=15 // pred_fallthru
          _
        // Predicated region
        $region21: #{_lambda_.28} parent=15 // pred_check
          %p222 = pneg %p84
        $region22: #{_lambda_.28} parent=15 // pred_check_branch
          %224 = sbr.rel (%p222) target = $region24
        $region23: #{_lambda_.28} parent=15 // pred_region
          %p225 = scmp.lt.s32.totalorder %s21, 1
          %s226 = scalar_select %p225, %s21, 1
          %s227 = smul.addr %s226, 2
          %s228 = smul.addr %s227, 4
          %s229 = scalar_lea.vmem %s1, %s228
        $region24: #{_lambda_.28} parent=15 // pred_fallthru
          _
        // Predicated region
        $region25: #{_lambda_.28} parent=15 // pred_check
          %p230 = pneg %p110
        $region26: #{_lambda_.28} parent=15 // pred_check_branch
          %232 = sbr.rel (%p230) target = $region28
        $region27: #{_lambda_.28} parent=15 // pred_region
          %p233 = scmp.lt.s32.totalorder %s21, 1
          %s234 = scalar_select %p233, %s21, 1
          %s235 = scalar_lea.vmem %s2, %s234
        $region28: #{_lambda_.28} parent=15 // pred_fallthru
          _
      $region16: #{_lambda_.28} parent=5 // pred_fallthru
        _
      %p236 = scmp.le.s32.totalorder 1, %s14
      %p237 = scmp.lt.s32.totalorder %s14, 3
      %p238 = pnand %p236, %p237
      %p239 = pneg %p238
      // Predicated region
      $region29: #{_lambda_.28} parent=5 // pred_check
        _
      $region30: #{_lambda_.28} parent=5 // pred_check_branch
        %241 = sbr.rel (%p238) target = $region32
      $region31: #{_lambda_.28} parent=5 // pred_region
        %s242 = ssub.s32 %s14, 1
        %s243 = ssub.s32 1, %s23
        %s244 = smul.u32 %s243, %s24
        %s245 = ssub.s32 0, %s24
        %s246 = smul.u32 %s23, %s245
        %s247 = sadd.s32 %s244, %s246
        %s248 = smul.u32 8, %s247
        %p249 = scmp.lt.s32.totalorder %s23, 1
        %s250 = scalar_select %p249, %s23, 1
        %p251 = scmp.lt.s32.totalorder %s248, 7
        %s252 = scalar_select %p251, %s248, 7
        %s253 = smul.addr %s250, 8
        %s254 = sadd.s32 %s252, %s253
        %s255 = smul.addr %s254, 2
        %s256 = scalar_lea.vmem %s0, %s255
        %p257 = pneg %p64
        %p258 = pneg %p61
        %p259 = scmp.lt.s32.totalorder %s23, 1
        %s260 = scalar_select %p259, %s23, 1
        %s261 = smul.addr %s260, 2
        %s262 = smul.addr %s261, 4
        %s263 = scalar_lea.vmem %s1, %s262
        %p264 = pneg %p90
        %p265 = pneg %p87
        %p266 = scmp.lt.s32.totalorder %s23, 1
        %s267 = scalar_select %p266, %s23, 1
        %s268 = scalar_lea.vmem %s2, %s267
        %p269 = pneg %p116
        %p270 = pneg %p113
        %p271 = pneg %p154
        %p272 = pneg %p151
        %s273 = ssub.s32 1, %s23
        %s274 = smul.u32 %s273, %s24
        %s275 = ssub.s32 0, %s24
        %s276 = smul.u32 %s23, %s275
        %s277 = sadd.s32 %s274, %s276
        %s278 = smul.u32 8, %s277
        %p279 = scmp.lt.s32.totalorder %s23, 1
        %s280 = scalar_select %p279, %s23, 1
        %p281 = scmp.lt.s32.totalorder %s278, 7
        %s282 = scalar_select %p281, %s278, 7
        %s283 = smul.addr %s280, 8
        %s284 = sadd.s32 %s282, %s283
        %s285 = smul.addr %s284, 2
        %s286 = scalar_lea.vmem %s3, %s285
        %p287 = pneg %p180
        %p288 = pneg %p177
        %s289 = sand.u32 %s167, 1
        %s290 = scalar_lea.sflag [#allocation4], %s289
        %s291 = sand.u32 %s167, 1
        %s292 = smul.addr %s291, 2
        %s293 = scalar_lea.vmem [#allocation3], %s292
        %s294 = ssub.s32 1, %s23
        %s295 = smul.u32 %s294, %s24
        %s296 = ssub.s32 0, %s24
        %s297 = smul.u32 %s23, %s296
        %s298 = sadd.s32 %s295, %s297
        %s299 = smul.u32 8, %s298
        %p300 = scmp.lt.s32.totalorder %s23, 1
        %s301 = scalar_select %p300, %s23, 1
        %p302 = scmp.lt.s32.totalorder %s299, 7
        %s303 = scalar_select %p302, %s299, 7
        %s304 = smul.addr %s301, 8
        %s305 = sadd.s32 %s303, %s304
        %s306 = smul.addr %s305, 2
        %s307 = scalar_lea.vmem %s0, %s306
        %s308 = ssub.s32 1, %s23
        %s309 = smul.u32 %s308, %s24
        %s310 = ssub.s32 0, %s24
        %s311 = smul.u32 %s23, %s310
        %s312 = sadd.s32 %s309, %s311
        %s313 = smul.u32 8, %s312
        %p314 = scmp.lt.s32.totalorder %s23, 1
        %s315 = scalar_select %p314, %s23, 1
        %s316 = smul.addr %s315, 2
        %s317 = smul.addr %s316, 4
        %s318 = scalar_lea.vmem %s1, %s317
        %p319 = scmp.lt.s32.totalorder %s23, 1
        %s320 = scalar_select %p319, %s23, 1
        %s321 = scalar_lea.vmem %s2, %s320
        %s322 = ssub.s32 1, %s23
        %s323 = smul.u32 %s322, %s24
        %s324 = ssub.s32 0, %s24
        %s325 = smul.u32 %s23, %s324
        %s326 = sadd.s32 %s323, %s325
        %s327 = smul.u32 8, %s326
        %p328 = scmp.lt.s32.totalorder %s23, 1
        %s329 = scalar_select %p328, %s23, 1
        %p330 = scmp.lt.s32.totalorder %s327, 7
        %s331 = scalar_select %p330, %s327, 7
        %s332 = smul.addr %s329, 8
        %s333 = sadd.s32 %s331, %s332
        %s334 = smul.addr %s333, 2
        %s335 = scalar_lea.vmem %s3, %s334
        %s336 = ssub.s32 1, %s23
        %s337 = smul.u32 %s336, %s24
        %s338 = ssub.s32 0, %s24
        %s339 = smul.u32 %s23, %s338
        %s340 = sadd.s32 %s337, %s339
        %s341 = smul.u32 8, %s340
        %p343 = scmp.eq.s32.totalorder %s24, 0
        // Predicated region
        $region33: #{_lambda_.28} parent=31 // pred_check
          %p344 = pneg %p343
        $region34: #{_lambda_.28} parent=31 // pred_check_branch
          %346 = sbr.rel (%p344) target = $region36
        $region35: #{_lambda_.28} parent=31 // pred_region
          %vm347 = vcmask 123904
          %348 = vst.msk [vmem:[#allocation2] sm:$0x3] %vm347, 0.0
        $region36: #{_lambda_.28} parent=31 // pred_fallthru
          _
        %v349 = vld [vmem:[%s318] sm:$0xf]
        %v350 = vld [vmem:[%s318 + $0x4] sm:$0xf]
        %v351 = vld [vmem:[%s321] sm:$0x1]
        %v352 = vld [vmem:[#allocation2] sm:$0x3]
        %s353 = smul.u32 %s23, 7
        %s354 = smul.u32 %s353, 2
        %s355 = scalar_lea.vmem %s307, %s354
        %v356 = vld [vmem:[%s355] sm:$0x3]
        %v357 = vpack.c.bf16 %v352, %v352
        %v359 = vlaneseq
        %v360 = vshrl.u32 %v359, 7
        %v361 = vsub.s32 0, %v360
        %v362 = vrot.slane %v351, %v361
        %v366 = vunpack.c.l.b16 %v349
        %v367 = vunpack.c.l.b16 %v350
        %v368 = vpack.c.b16 %v367, %v366
        %vm370 = vcmask 130048
        %v372 = vsel %vm370, %v357, 0
        %374 = vmatprep.subr.bf16.mxu0 0
        %375 = vmatpush1.bf16.msra.mxu0 0
        %376 = vmatprep.subr.bf16.mxu0 0
        %377 = vmatpush1.bf16.msra.mxu0 0
        %378 = vmatprep.subr.bf16.mxu0 0
        %379 = vmatpush1.bf16.msra.mxu0 0
        %380 = vmatprep.subr.bf16.mxu0 0
        %381 = vmatpush1.bf16.msra.mxu0 0
        %382 = vmatprep.subr.bf16.mxu0 0
        %383 = vmatpush1.bf16.msra.mxu0 0
        %384 = vmatprep.subr.bf16.mxu0 0
        %385 = vmatpush1.bf16.msra.mxu0 0
        %386 = vmatprep.subr.bf16.mxu0 0
        %387 = vmatpush1.bf16.msra.mxu0 0
        %388 = vmatprep.subr.bf16.mxu0 0
        %389 = vmatpush1.bf16.msra.mxu0 %v368
        %390 = vmatprep.subr.bf16.mxu0 0
        %391 = vmatpush2.bf16.msra.mxu0 0
        %392 = vmatprep.subr.bf16.mxu0 0
        %393 = vmatpush2.bf16.msra.mxu0 0
        %394 = vmatprep.subr.bf16.mxu0 0
        %395 = vmatpush2.bf16.msra.mxu0 0
        %396 = vmatprep.subr.bf16.mxu0 0
        %397 = vmatpush2.bf16.msra.mxu0 0
        %398 = vmatprep.subr.bf16.mxu0 0
        %399 = vmatpush2.bf16.msra.mxu0 0
        %400 = vmatprep.subr.bf16.mxu0 0
        %401 = vmatpush2.bf16.msra.mxu0 0
        %402 = vmatprep.subr.bf16.mxu0 0
        %403 = vmatpush2.bf16.msra.mxu0 0
        %404 = vmatprep.subr.bf16.mxu0 0
        %405 = vmatpush2.bf16.msra.mxu0 0
        %406 = vmatprep.mubr.bf16.mxu0 0
        %407 = vmatmul.mubr.bf16.gmra.mxu0 %v372
        %v408 = vpop.f32.mrf.mxu0
        %v409 = vadd.f32 %v362, %v408
        %v410 = vpop.f32.mrf.mxu0
        %v411 = vpop.f32.mrf.mxu0
        %v412 = vpop.f32.mrf.mxu0
        %413 = vdwg.mxu0
        %v414 = vadd.f32 %v356, %v409
        %v415 = vxor.u32 %v414, 2147483648
        %v416 = vmul.f32 %v415, 1.442695
        %v417 = vpow.pop %v416
        %v418 = vadd.f32 %v417, 1.0
        %v419 = vrcp.pop %v418
        %v420 = vmul.f32 1.0, %v419
        %422 = vrot.lane.b32.xlu0 %v409, 96
        %v423 = vpop.permute.xlu0 %422
        %v425 = vmul.f32 %v420, %v423
        %427 = vrot.lane.b32.xlu0 %v425, 32
        %v428 = vpop.permute.xlu0 %427
        %v430 = vadd.f32 %v356, %v428
        %v431 = vtanh.pop %v430
        %v432 = vsub.f32 1.0, %v420
        %434 = vrot.lane.b32.xlu0 %v431, 112
        %v435 = vpop.permute.xlu0 %434
        %v437 = vmul.f32 %v432, %v435
        %439 = vrot.lane.b32.xlu0 %v352, 16
        %v440 = vpop.permute.xlu0 %439
        %v442 = vmul.f32 %v420, %v440
        %v443 = vadd.f32 %v437, %v442
        %445 = vrot.lane.b32.xlu0 %v443, 112
        %v446 = vpop.permute.xlu0 %445
        %s448 = scalar_lea.vmem %s335, %s354
        %vm449 = vcmask 123904
        %450 = vst.msk [vmem:[%s448] sm:$0x3] %vm449, %v446
        %s451 = ssub.s32 1, %s23
        %s452 = smul.u32 %s23, 6
        %s453 = sadd.s32 %s451, %s452
        %s454 = smul.u32 %s453, 2
        %s455 = scalar_lea.vmem %s307, %s454
        %v456 = vld [vmem:[%s455] sm:$0x3]
        %v457 = vpack.c.bf16 %v443, %v443
        %459 = vrot.lane.b32.xlu0 %v457, 112
        %v460 = vpop.permute.xlu0 %459
        %v462 = vsel %vm370, %v460, 0
        %464 = vmatprep.subr.bf16.mxu0 0
        %465 = vmatpush1.bf16.msra.mxu0 0
        %466 = vmatprep.subr.bf16.mxu0 0
        %467 = vmatpush1.bf16.msra.mxu0 0
        %468 = vmatprep.subr.bf16.mxu0 0
        %469 = vmatpush1.bf16.msra.mxu0 0
        %470 = vmatprep.subr.bf16.mxu0 0
        %471 = vmatpush1.bf16.msra.mxu0 0
        %472 = vmatprep.subr.bf16.mxu0 0
        %473 = vmatpush1.bf16.msra.mxu0 0
        %474 = vmatprep.subr.bf16.mxu0 0
        %475 = vmatpush1.bf16.msra.mxu0 0
        %476 = vmatprep.subr.bf16.mxu0 0
        %477 = vmatpush1.bf16.msra.mxu0 0
        %478 = vmatprep.subr.bf16.mxu0 0
        %479 = vmatpush1.bf16.msra.mxu0 %v368
        %480 = vmatprep.subr.bf16.mxu0 0
        %481 = vmatpush2.bf16.msra.mxu0 0
        %482 = vmatprep.subr.bf16.mxu0 0
        %483 = vmatpush2.bf16.msra.mxu0 0
        %484 = vmatprep.subr.bf16.mxu0 0
        %485 = vmatpush2.bf16.msra.mxu0 0
        %486 = vmatprep.subr.bf16.mxu0 0
        %487 = vmatpush2.bf16.msra.mxu0 0
        %488 = vmatprep.subr.bf16.mxu0 0
        %489 = vmatpush2.bf16.msra.mxu0 0
        %490 = vmatprep.subr.bf16.mxu0 0
        %491 = vmatpush2.bf16.msra.mxu0 0
        %492 = vmatprep.subr.bf16.mxu0 0
        %493 = vmatpush2.bf16.msra.mxu0 0
        %494 = vmatprep.subr.bf16.mxu0 0
        %495 = vmatpush2.bf16.msra.mxu0 0
        %496 = vmatprep.mubr.bf16.mxu0 0
        %497 = vmatmul.mubr.bf16.gmra.mxu0 %v462
        %v498 = vpop.f32.mrf.mxu0
        %v499 = vadd.f32 %v362, %v498
        %v500 = vpop.f32.mrf.mxu0
        %v501 = vpop.f32.mrf.mxu0
        %v502 = vpop.f32.mrf.mxu0
        %503 = vdwg.mxu0
        %v504 = vadd.f32 %v456, %v499
        %v505 = vxor.u32 %v504, 2147483648
        %v506 = vmul.f32 %v505, 1.442695
        %v507 = vpow.pop %v506
        %v508 = vadd.f32 %v507, 1.0
        %v509 = vrcp.pop %v508
        %v510 = vmul.f32 1.0, %v509
        %512 = vrot.lane.b32.xlu0 %v499, 96
        %v513 = vpop.permute.xlu0 %512
        %v515 = vmul.f32 %v510, %v513
        %517 = vrot.lane.b32.xlu0 %v515, 32
        %v518 = vpop.permute.xlu0 %517
        %v520 = vadd.f32 %v456, %v518
        %v521 = vtanh.pop %v520
        %v522 = vsub.f32 1.0, %v510
        %524 = vrot.lane.b32.xlu0 %v521, 112
        %v525 = vpop.permute.xlu0 %524
        %v527 = vmul.f32 %v522, %v525
        %v528 = vmul.f32 %v510, %v443
        %v529 = vadd.f32 %v527, %v528
        %531 = vrot.lane.b32.xlu0 %v529, 112
        %v532 = vpop.permute.xlu0 %531
        %s534 = scalar_lea.vmem %s335, %s454
        %535 = vst.msk [vmem:[%s534] sm:$0x3] %vm449, %v532
        %s536 = smul.u32 %s451, 2
        %s537 = smul.u32 %s23, 5
        %s538 = sadd.s32 %s536, %s537
        %s539 = smul.u32 %s538, 2
        %s540 = scalar_lea.vmem %s307, %s539
        %v541 = vld [vmem:[%s540] sm:$0x3]
        %v542 = vpack.c.bf16 %v529, %v529
        %544 = vrot.lane.b32.xlu0 %v542, 112
        %v545 = vpop.permute.xlu0 %544
        %v547 = vsel %vm370, %v545, 0
        %549 = vmatprep.subr.bf16.mxu0 0
        %550 = vmatpush1.bf16.msra.mxu0 0
        %551 = vmatprep.subr.bf16.mxu0 0
        %552 = vmatpush1.bf16.msra.mxu0 0
        %553 = vmatprep.subr.bf16.mxu0 0
        %554 = vmatpush1.bf16.msra.mxu0 0
        %555 = vmatprep.subr.bf16.mxu0 0
        %556 = vmatpush1.bf16.msra.mxu0 0
        %557 = vmatprep.subr.bf16.mxu0 0
        %558 = vmatpush1.bf16.msra.mxu0 0
        %559 = vmatprep.subr.bf16.mxu0 0
        %560 = vmatpush1.bf16.msra.mxu0 0
        %561 = vmatprep.subr.bf16.mxu0 0
        %562 = vmatpush1.bf16.msra.mxu0 0
        %563 = vmatprep.subr.bf16.mxu0 0
        %564 = vmatpush1.bf16.msra.mxu0 %v368
        %565 = vmatprep.subr.bf16.mxu0 0
        %566 = vmatpush2.bf16.msra.mxu0 0
        %567 = vmatprep.subr.bf16.mxu0 0
        %568 = vmatpush2.bf16.msra.mxu0 0
        %569 = vmatprep.subr.bf16.mxu0 0
        %570 = vmatpush2.bf16.msra.mxu0 0
        %571 = vmatprep.subr.bf16.mxu0 0
        %572 = vmatpush2.bf16.msra.mxu0 0
        %573 = vmatprep.subr.bf16.mxu0 0
        %574 = vmatpush2.bf16.msra.mxu0 0
        %575 = vmatprep.subr.bf16.mxu0 0
        %576 = vmatpush2.bf16.msra.mxu0 0
        %577 = vmatprep.subr.bf16.mxu0 0
        %578 = vmatpush2.bf16.msra.mxu0 0
        %579 = vmatprep.subr.bf16.mxu0 0
        %580 = vmatpush2.bf16.msra.mxu0 0
        %581 = vmatprep.mubr.bf16.mxu0 0
        %582 = vmatmul.mubr.bf16.gmra.mxu0 %v547
        %v583 = vpop.f32.mrf.mxu0
        %v584 = vadd.f32 %v362, %v583
        %v585 = vpop.f32.mrf.mxu0
        %v586 = vpop.f32.mrf.mxu0
        %v587 = vpop.f32.mrf.mxu0
        %588 = vdwg.mxu0
        %v589 = vadd.f32 %v541, %v584
        %v590 = vxor.u32 %v589, 2147483648
        %v591 = vmul.f32 %v590, 1.442695
        %v592 = vpow.pop %v591
        %v593 = vadd.f32 %v592, 1.0
        %v594 = vrcp.pop %v593
        %v595 = vmul.f32 1.0, %v594
        %597 = vrot.lane.b32.xlu0 %v584, 96
        %v598 = vpop.permute.xlu0 %597
        %v600 = vmul.f32 %v595, %v598
        %602 = vrot.lane.b32.xlu0 %v600, 32
        %v603 = vpop.permute.xlu0 %602
        %v605 = vadd.f32 %v541, %v603
        %v606 = vtanh.pop %v605
        %v607 = vsub.f32 1.0, %v595
        %609 = vrot.lane.b32.xlu0 %v606, 112
        %v610 = vpop.permute.xlu0 %609
        %v612 = vmul.f32 %v607, %v610
        %v613 = vmul.f32 %v595, %v529
        %v614 = vadd.f32 %v612, %v613
        %616 = vrot.lane.b32.xlu0 %v614, 112
        %v617 = vpop.permute.xlu0 %616
        %s619 = scalar_lea.vmem %s335, %s539
        %620 = vst.msk [vmem:[%s619] sm:$0x3] %vm449, %v617
        %s621 = smul.u32 %s451, 3
        %s622 = smul.u32 %s23, 4
        %s623 = sadd.s32 %s621, %s622
        %s624 = smul.u32 %s623, 2
        %s625 = scalar_lea.vmem %s307, %s624
        %v626 = vld [vmem:[%s625] sm:$0x3]
        %v627 = vpack.c.bf16 %v614, %v614
        %629 = vrot.lane.b32.xlu0 %v627, 112
        %v630 = vpop.permute.xlu0 %629
        %v632 = vsel %vm370, %v630, 0
        %634 = vmatprep.subr.bf16.mxu0 0
        %635 = vmatpush1.bf16.msra.mxu0 0
        %636 = vmatprep.subr.bf16.mxu0 0
        %637 = vmatpush1.bf16.msra.mxu0 0
        %638 = vmatprep.subr.bf16.mxu0 0
        %639 = vmatpush1.bf16.msra.mxu0 0
        %640 = vmatprep.subr.bf16.mxu0 0
        %641 = vmatpush1.bf16.msra.mxu0 0
        %642 = vmatprep.subr.bf16.mxu0 0
        %643 = vmatpush1.bf16.msra.mxu0 0
        %644 = vmatprep.subr.bf16.mxu0 0
        %645 = vmatpush1.bf16.msra.mxu0 0
        %646 = vmatprep.subr.bf16.mxu0 0
        %647 = vmatpush1.bf16.msra.mxu0 0
        %648 = vmatprep.subr.bf16.mxu0 0
        %649 = vmatpush1.bf16.msra.mxu0 %v368
        %650 = vmatprep.subr.bf16.mxu0 0
        %651 = vmatpush2.bf16.msra.mxu0 0
        %652 = vmatprep.subr.bf16.mxu0 0
        %653 = vmatpush2.bf16.msra.mxu0 0
        %654 = vmatprep.subr.bf16.mxu0 0
        %655 = vmatpush2.bf16.msra.mxu0 0
        %656 = vmatprep.subr.bf16.mxu0 0
        %657 = vmatpush2.bf16.msra.mxu0 0
        %658 = vmatprep.subr.bf16.mxu0 0
        %659 = vmatpush2.bf16.msra.mxu0 0
        %660 = vmatprep.subr.bf16.mxu0 0
        %661 = vmatpush2.bf16.msra.mxu0 0
        %662 = vmatprep.subr.bf16.mxu0 0
        %663 = vmatpush2.bf16.msra.mxu0 0
        %664 = vmatprep.subr.bf16.mxu0 0
        %665 = vmatpush2.bf16.msra.mxu0 0
        %666 = vmatprep.mubr.bf16.mxu0 0
        %667 = vmatmul.mubr.bf16.gmra.mxu0 %v632
        %v668 = vpop.f32.mrf.mxu0
        %v669 = vadd.f32 %v362, %v668
        %v670 = vpop.f32.mrf.mxu0
        %v671 = vpop.f32.mrf.mxu0
        %v672 = vpop.f32.mrf.mxu0
        %673 = vdwg.mxu0
        %v674 = vadd.f32 %v626, %v669
        %v675 = vxor.u32 %v674, 2147483648
        %v676 = vmul.f32 %v675, 1.442695
        %v677 = vpow.pop %v676
        %v678 = vadd.f32 %v677, 1.0
        %v679 = vrcp.pop %v678
        %v680 = vmul.f32 1.0, %v679
        %682 = vrot.lane.b32.xlu0 %v669, 96
        %v683 = vpop.permute.xlu0 %682
        %v685 = vmul.f32 %v680, %v683
        %687 = vrot.lane.b32.xlu0 %v685, 32
        %v688 = vpop.permute.xlu0 %687
        %v690 = vadd.f32 %v626, %v688
        %v691 = vtanh.pop %v690
        %v692 = vsub.f32 1.0, %v680
        %694 = vrot.lane.b32.xlu0 %v691, 112
        %v695 = vpop.permute.xlu0 %694
        %v697 = vmul.f32 %v692, %v695
        %v698 = vmul.f32 %v680, %v614
        %v699 = vadd.f32 %v697, %v698
        %701 = vrot.lane.b32.xlu0 %v699, 112
        %v702 = vpop.permute.xlu0 %701
        %s704 = scalar_lea.vmem %s335, %s624
        %705 = vst.msk [vmem:[%s704] sm:$0x3] %vm449, %v702
        %s706 = smul.u32 %s451, 4
        %s707 = smul.u32 %s23, 3
        %s708 = sadd.s32 %s706, %s707
        %s709 = smul.u32 %s708, 2
        %s710 = scalar_lea.vmem %s307, %s709
        %v711 = vld [vmem:[%s710] sm:$0x3]
        %v712 = vpack.c.bf16 %v699, %v699
        %714 = vrot.lane.b32.xlu0 %v712, 112
        %v715 = vpop.permute.xlu0 %714
        %v717 = vsel %vm370, %v715, 0
        %719 = vmatprep.subr.bf16.mxu0 0
        %720 = vmatpush1.bf16.msra.mxu0 0
        %721 = vmatprep.subr.bf16.mxu0 0
        %722 = vmatpush1.bf16.msra.mxu0 0
        %723 = vmatprep.subr.bf16.mxu0 0
        %724 = vmatpush1.bf16.msra.mxu0 0
        %725 = vmatprep.subr.bf16.mxu0 0
        %726 = vmatpush1.bf16.msra.mxu0 0
        %727 = vmatprep.subr.bf16.mxu0 0
        %728 = vmatpush1.bf16.msra.mxu0 0
        %729 = vmatprep.subr.bf16.mxu0 0
        %730 = vmatpush1.bf16.msra.mxu0 0
        %731 = vmatprep.subr.bf16.mxu0 0
        %732 = vmatpush1.bf16.msra.mxu0 0
        %733 = vmatprep.subr.bf16.mxu0 0
        %734 = vmatpush1.bf16.msra.mxu0 %v368
        %735 = vmatprep.subr.bf16.mxu0 0
        %736 = vmatpush2.bf16.msra.mxu0 0
        %737 = vmatprep.subr.bf16.mxu0 0
        %738 = vmatpush2.bf16.msra.mxu0 0
        %739 = vmatprep.subr.bf16.mxu0 0
        %740 = vmatpush2.bf16.msra.mxu0 0
        %741 = vmatprep.subr.bf16.mxu0 0
        %742 = vmatpush2.bf16.msra.mxu0 0
        %743 = vmatprep.subr.bf16.mxu0 0
        %744 = vmatpush2.bf16.msra.mxu0 0
        %745 = vmatprep.subr.bf16.mxu0 0
        %746 = vmatpush2.bf16.msra.mxu0 0
        %747 = vmatprep.subr.bf16.mxu0 0
        %748 = vmatpush2.bf16.msra.mxu0 0
        %749 = vmatprep.subr.bf16.mxu0 0
        %750 = vmatpush2.bf16.msra.mxu0 0
        %751 = vmatprep.mubr.bf16.mxu0 0
        %752 = vmatmul.mubr.bf16.gmra.mxu0 %v717
        %v753 = vpop.f32.mrf.mxu0
        %v754 = vadd.f32 %v362, %v753
        %v755 = vpop.f32.mrf.mxu0
        %v756 = vpop.f32.mrf.mxu0
        %v757 = vpop.f32.mrf.mxu0
        %758 = vdwg.mxu0
        %v759 = vadd.f32 %v711, %v754
        %v760 = vxor.u32 %v759, 2147483648
        %v761 = vmul.f32 %v760, 1.442695
        %v762 = vpow.pop %v761
        %v763 = vadd.f32 %v762, 1.0
        %v764 = vrcp.pop %v763
        %v765 = vmul.f32 1.0, %v764
        %767 = vrot.lane.b32.xlu0 %v754, 96
        %v768 = vpop.permute.xlu0 %767
        %v770 = vmul.f32 %v765, %v768
        %772 = vrot.lane.b32.xlu0 %v770, 32
        %v773 = vpop.permute.xlu0 %772
        %v775 = vadd.f32 %v711, %v773
        %v776 = vtanh.pop %v775
        %v777 = vsub.f32 1.0, %v765
        %779 = vrot.lane.b32.xlu0 %v776, 112
        %v780 = vpop.permute.xlu0 %779
        %v782 = vmul.f32 %v777, %v780
        %v783 = vmul.f32 %v765, %v699
        %v784 = vadd.f32 %v782, %v783
        %786 = vrot.lane.b32.xlu0 %v784, 112
        %v787 = vpop.permute.xlu0 %786
        %s789 = scalar_lea.vmem %s335, %s709
        %790 = vst.msk [vmem:[%s789] sm:$0x3] %vm449, %v787
        %s791 = smul.u32 %s451, 5
        %s792 = smul.u32 %s23, 2
        %s793 = sadd.s32 %s791, %s792
        %s794 = smul.u32 %s793, 2
        %s795 = scalar_lea.vmem %s307, %s794
        %v796 = vld [vmem:[%s795] sm:$0x3]
        %v797 = vpack.c.bf16 %v784, %v784
        %799 = vrot.lane.b32.xlu0 %v797, 112
        %v800 = vpop.permute.xlu0 %799
        %v802 = vsel %vm370, %v800, 0
        %804 = vmatprep.subr.bf16.mxu0 0
        %805 = vmatpush1.bf16.msra.mxu0 0
        %806 = vmatprep.subr.bf16.mxu0 0
        %807 = vmatpush1.bf16.msra.mxu0 0
        %808 = vmatprep.subr.bf16.mxu0 0
        %809 = vmatpush1.bf16.msra.mxu0 0
        %810 = vmatprep.subr.bf16.mxu0 0
        %811 = vmatpush1.bf16.msra.mxu0 0
        %812 = vmatprep.subr.bf16.mxu0 0
        %813 = vmatpush1.bf16.msra.mxu0 0
        %814 = vmatprep.subr.bf16.mxu0 0
        %815 = vmatpush1.bf16.msra.mxu0 0
        %816 = vmatprep.subr.bf16.mxu0 0
        %817 = vmatpush1.bf16.msra.mxu0 0
        %818 = vmatprep.subr.bf16.mxu0 0
        %819 = vmatpush1.bf16.msra.mxu0 %v368
        %820 = vmatprep.subr.bf16.mxu0 0
        %821 = vmatpush2.bf16.msra.mxu0 0
        %822 = vmatprep.subr.bf16.mxu0 0
        %823 = vmatpush2.bf16.msra.mxu0 0
        %824 = vmatprep.subr.bf16.mxu0 0
        %825 = vmatpush2.bf16.msra.mxu0 0
        %826 = vmatprep.subr.bf16.mxu0 0
        %827 = vmatpush2.bf16.msra.mxu0 0
        %828 = vmatprep.subr.bf16.mxu0 0
        %829 = vmatpush2.bf16.msra.mxu0 0
        %830 = vmatprep.subr.bf16.mxu0 0
        %831 = vmatpush2.bf16.msra.mxu0 0
        %832 = vmatprep.subr.bf16.mxu0 0
        %833 = vmatpush2.bf16.msra.mxu0 0
        %834 = vmatprep.subr.bf16.mxu0 0
        %835 = vmatpush2.bf16.msra.mxu0 0
        %836 = vmatprep.mubr.bf16.mxu0 0
        %837 = vmatmul.mubr.bf16.gmra.mxu0 %v802
        %v838 = vpop.f32.mrf.mxu0
        %v839 = vadd.f32 %v362, %v838
        %v840 = vpop.f32.mrf.mxu0
        %v841 = vpop.f32.mrf.mxu0
        %v842 = vpop.f32.mrf.mxu0
        %843 = vdwg.mxu0
        %v844 = vadd.f32 %v796, %v839
        %v845 = vxor.u32 %v844, 2147483648
        %v846 = vmul.f32 %v845, 1.442695
        %v847 = vpow.pop %v846
        %v848 = vadd.f32 %v847, 1.0
        %v849 = vrcp.pop %v848
        %v850 = vmul.f32 1.0, %v849
        %852 = vrot.lane.b32.xlu0 %v839, 96
        %v853 = vpop.permute.xlu0 %852
        %v855 = vmul.f32 %v850, %v853
        %857 = vrot.lane.b32.xlu0 %v855, 32
        %v858 = vpop.permute.xlu0 %857
        %v860 = vadd.f32 %v796, %v858
        %v861 = vtanh.pop %v860
        %v862 = vsub.f32 1.0, %v850
        %864 = vrot.lane.b32.xlu0 %v861, 112
        %v865 = vpop.permute.xlu0 %864
        %v867 = vmul.f32 %v862, %v865
        %v868 = vmul.f32 %v850, %v784
        %v869 = vadd.f32 %v867, %v868
        %871 = vrot.lane.b32.xlu0 %v869, 112
        %v872 = vpop.permute.xlu0 %871
        %s874 = scalar_lea.vmem %s335, %s794
        %875 = vst.msk [vmem:[%s874] sm:$0x3] %vm449, %v872
        %s876 = smul.u32 %s451, 6
        %s877 = sadd.s32 %s876, %s23
        %s878 = smul.u32 %s877, 2
        %s879 = scalar_lea.vmem %s307, %s878
        %v880 = vld [vmem:[%s879] sm:$0x3]
        %v881 = vpack.c.bf16 %v869, %v869
        %883 = vrot.lane.b32.xlu0 %v881, 112
        %v884 = vpop.permute.xlu0 %883
        %v886 = vsel %vm370, %v884, 0
        %888 = vmatprep.subr.bf16.mxu0 0
        %889 = vmatpush1.bf16.msra.mxu0 0
        %890 = vmatprep.subr.bf16.mxu0 0
        %891 = vmatpush1.bf16.msra.mxu0 0
        %892 = vmatprep.subr.bf16.mxu0 0
        %893 = vmatpush1.bf16.msra.mxu0 0
        %894 = vmatprep.subr.bf16.mxu0 0
        %895 = vmatpush1.bf16.msra.mxu0 0
        %896 = vmatprep.subr.bf16.mxu0 0
        %897 = vmatpush1.bf16.msra.mxu0 0
        %898 = vmatprep.subr.bf16.mxu0 0
        %899 = vmatpush1.bf16.msra.mxu0 0
        %900 = vmatprep.subr.bf16.mxu0 0
        %901 = vmatpush1.bf16.msra.mxu0 0
        %902 = vmatprep.subr.bf16.mxu0 0
        %903 = vmatpush1.bf16.msra.mxu0 %v368
        %904 = vmatprep.subr.bf16.mxu0 0
        %905 = vmatpush2.bf16.msra.mxu0 0
        %906 = vmatprep.subr.bf16.mxu0 0
        %907 = vmatpush2.bf16.msra.mxu0 0
        %908 = vmatprep.subr.bf16.mxu0 0
        %909 = vmatpush2.bf16.msra.mxu0 0
        %910 = vmatprep.subr.bf16.mxu0 0
        %911 = vmatpush2.bf16.msra.mxu0 0
        %912 = vmatprep.subr.bf16.mxu0 0
        %913 = vmatpush2.bf16.msra.mxu0 0
        %914 = vmatprep.subr.bf16.mxu0 0
        %915 = vmatpush2.bf16.msra.mxu0 0
        %916 = vmatprep.subr.bf16.mxu0 0
        %917 = vmatpush2.bf16.msra.mxu0 0
        %918 = vmatprep.subr.bf16.mxu0 0
        %919 = vmatpush2.bf16.msra.mxu0 0
        %920 = vmatprep.mubr.bf16.mxu0 0
        %921 = vmatmul.mubr.bf16.gmra.mxu0 %v886
        %v922 = vpop.f32.mrf.mxu0
        %v923 = vadd.f32 %v362, %v922
        %v924 = vpop.f32.mrf.mxu0
        %v925 = vpop.f32.mrf.mxu0
        %v926 = vpop.f32.mrf.mxu0
        %927 = vdwg.mxu0
        %v928 = vadd.f32 %v880, %v923
        %v929 = vxor.u32 %v928, 2147483648
        %v930 = vmul.f32 %v929, 1.442695
        %v931 = vpow.pop %v930
        %v932 = vadd.f32 %v931, 1.0
        %v933 = vrcp.pop %v932
        %v934 = vmul.f32 1.0, %v933
        %936 = vrot.lane.b32.xlu0 %v923, 96
        %v937 = vpop.permute.xlu0 %936
        %v939 = vmul.f32 %v934, %v937
        %941 = vrot.lane.b32.xlu0 %v939, 32
        %v942 = vpop.permute.xlu0 %941
        %v944 = vadd.f32 %v880, %v942
        %v945 = vtanh.pop %v944
        %v946 = vsub.f32 1.0, %v934
        %948 = vrot.lane.b32.xlu0 %v945, 112
        %v949 = vpop.permute.xlu0 %948
        %v951 = vmul.f32 %v946, %v949
        %v952 = vmul.f32 %v934, %v869
        %v953 = vadd.f32 %v951, %v952
        %955 = vrot.lane.b32.xlu0 %v953, 112
        %v956 = vpop.permute.xlu0 %955
        %s958 = scalar_lea.vmem %s335, %s878
        %959 = vst.msk [vmem:[%s958] sm:$0x3] %vm449, %v956
        %s960 = smul.u32 %s451, 7
        %s961 = smul.u32 %s960, 2
        %s962 = scalar_lea.vmem %s307, %s961
        %v963 = vld [vmem:[%s962] sm:$0x3]
        %v964 = vpack.c.bf16 %v953, %v953
        %966 = vrot.lane.b32.xlu0 %v964, 112
        %v967 = vpop.permute.xlu0 %966
        %v969 = vsel %vm370, %v967, 0
        %971 = vmatprep.subr.bf16.mxu0 0
        %972 = vmatpush1.bf16.msra.mxu0 0
        %973 = vmatprep.subr.bf16.mxu0 0
        %974 = vmatpush1.bf16.msra.mxu0 0
        %975 = vmatprep.subr.bf16.mxu0 0
        %976 = vmatpush1.bf16.msra.mxu0 0
        %977 = vmatprep.subr.bf16.mxu0 0
        %978 = vmatpush1.bf16.msra.mxu0 0
        %979 = vmatprep.subr.bf16.mxu0 0
        %980 = vmatpush1.bf16.msra.mxu0 0
        %981 = vmatprep.subr.bf16.mxu0 0
        %982 = vmatpush1.bf16.msra.mxu0 0
        %983 = vmatprep.subr.bf16.mxu0 0
        %984 = vmatpush1.bf16.msra.mxu0 0
        %985 = vmatprep.subr.bf16.mxu0 0
        %986 = vmatpush1.bf16.msra.mxu0 %v368
        %987 = vmatprep.subr.bf16.mxu0 0
        %988 = vmatpush2.bf16.msra.mxu0 0
        %989 = vmatprep.subr.bf16.mxu0 0
        %990 = vmatpush2.bf16.msra.mxu0 0
        %991 = vmatprep.subr.bf16.mxu0 0
        %992 = vmatpush2.bf16.msra.mxu0 0
        %993 = vmatprep.subr.bf16.mxu0 0
        %994 = vmatpush2.bf16.msra.mxu0 0
        %995 = vmatprep.subr.bf16.mxu0 0
        %996 = vmatpush2.bf16.msra.mxu0 0
        %997 = vmatprep.subr.bf16.mxu0 0
        %998 = vmatpush2.bf16.msra.mxu0 0
        %999 = vmatprep.subr.bf16.mxu0 0
        %1000 = vmatpush2.bf16.msra.mxu0 0
        %1001 = vmatprep.subr.bf16.mxu0 0
        %1002 = vmatpush2.bf16.msra.mxu0 0
        %1003 = vmatprep.mubr.bf16.mxu0 0
        %1004 = vmatmul.mubr.bf16.gmra.mxu0 %v969
        %v1005 = vpop.f32.mrf.mxu0
        %v1006 = vadd.f32 %v362, %v1005
        %v1007 = vpop.f32.mrf.mxu0
        %v1008 = vpop.f32.mrf.mxu0
        %v1009 = vpop.f32.mrf.mxu0
        %1010 = vdwg.mxu0
        %v1011 = vadd.f32 %v963, %v1006
        %v1012 = vxor.u32 %v1011, 2147483648
        %v1013 = vmul.f32 %v1012, 1.442695
        %v1014 = vpow.pop %v1013
        %v1015 = vadd.f32 %v1014, 1.0
        %v1016 = vrcp.pop %v1015
        %v1017 = vmul.f32 1.0, %v1016
        %1019 = vrot.lane.b32.xlu0 %v1006, 96
        %v1020 = vpop.permute.xlu0 %1019
        %v1022 = vmul.f32 %v1017, %v1020
        %1024 = vrot.lane.b32.xlu0 %v1022, 32
        %v1025 = vpop.permute.xlu0 %1024
        %v1027 = vadd.f32 %v963, %v1025
        %v1028 = vtanh.pop %v1027
        %v1029 = vsub.f32 1.0, %v1017
        %1031 = vrot.lane.b32.xlu0 %v1028, 112
        %v1032 = vpop.permute.xlu0 %1031
        %v1034 = vmul.f32 %v1029, %v1032
        %v1035 = vmul.f32 %v1017, %v953
        %v1036 = vadd.f32 %v1034, %v1035
        %1038 = vrot.lane.b32.xlu0 %v1036, 112
        %v1039 = vpop.permute.xlu0 %1038
        %s1041 = scalar_lea.vmem %s335, %s961
        %1042 = vst.msk [vmem:[%s1041] sm:$0x3] %vm449, %v1039
        %1043 = vst.msk [vmem:[#allocation2] sm:$0x3] %vm449, %v1039
        %1044 = vst.msk [vmem:[%s293] sm:$0x3] %vm449, %v1039
        %s1045 = ssub.s32 1, %s23
        %s1046 = smul.u32 %s1045, %s24
        %s1047 = ssub.s32 0, %s24
        %s1048 = smul.u32 %s23, %s1047
        %s1049 = sadd.s32 %s1046, %s1048
        %s1050 = smul.u32 8, %s1049
        %p1051 = scmp.lt.s32.totalorder %s23, 1
        %s1052 = scalar_select %p1051, %s23, 1
        %p1053 = scmp.lt.s32.totalorder %s1050, 7
        %s1054 = scalar_select %p1053, %s1050, 7
        %s1055 = smul.addr %s1052, 8
        %s1056 = sadd.s32 %s1054, %s1055
        %s1057 = smul.addr %s1056, 2
        %s1058 = scalar_lea.vmem %s3, %s1057
        %s1059 = sand.u32 %s167, 1
        %s1060 = scalar_lea.sflag [#allocation4], %s1059
        %s1061 = sand.u32 %s167, 1
        %s1062 = smul.addr %s1061, 2
        %s1063 = scalar_lea.vmem [#allocation3], %s1062
        // Predicated region
        $region37: #{_lambda_.28} parent=31 // pred_check
          %p1064 = pneg %p151
        $region38: #{_lambda_.28} parent=31 // pred_check_branch
          %1066 = sbr.rel (%p1064) target = $region40
        $region39: #{_lambda_.28} parent=31 // pred_region
          %s1067 = ssub.s32 1, %s23
          %s1068 = smul.u32 %s1067, %s24
          %s1069 = ssub.s32 0, %s24
          %s1070 = smul.u32 %s23, %s1069
          %s1071 = sadd.s32 %s1068, %s1070
          %s1072 = smul.u32 8, %s1071
        $region40: #{_lambda_.28} parent=31 // pred_fallthru
          _
        // Predicated region
        $region41: #{_lambda_.28} parent=31 // pred_check
          %p1073 = pneg %p177
        $region42: #{_lambda_.28} parent=31 // pred_check_branch
          %1075 = sbr.rel (%p1073) target = $region44
        $region43: #{_lambda_.28} parent=31 // pred_region
          %s1077 = ssub.s32 32, 32
          %1078 = vsyncadd %s1060, %s1077
          %s1079 = smul.addr %s23, 32
          %s1080 = scalar_lea.hbm %s4, %s1079
          %s1082 = sshll.u32 %s1063, 4
          %s1083 = int_to_ptr.vmem [resolvable:$true] %s1082
          %1085 = dma.vmem_to_hbm [thread:$0]  %s1083, 32, %s1080, %s1060
        $region44: #{_lambda_.28} parent=31 // pred_fallthru
          _
      $region32: #{_lambda_.28} parent=5 // pred_fallthru
        _
      %p1086 = scmp.le.s32.totalorder 2, %s14
      // Predicated region
      $region45: #{_lambda_.28} parent=5 // pred_check
        %p1087 = pneg %p1086
      $region46: #{_lambda_.28} parent=5 // pred_check_branch
        %1089 = sbr.rel (%p1087) target = $region48
      $region47: #{_lambda_.28} parent=5 // pred_region
        %s1090 = ssub.s32 %s14, 2
        // Predicated region
        $region49: #{_lambda_.28} parent=47 // pred_check
          %p1091 = pneg %p157
        $region50: #{_lambda_.28} parent=47 // pred_check_branch
          %1093 = sbr.rel (%p1091) target = $region52
        $region51: #{_lambda_.28} parent=47 // pred_region
          %s1094 = ssub.s32 1, %s25
          %s1095 = smul.u32 %s1094, %s26
          %s1096 = ssub.s32 0, %s26
          %s1097 = smul.u32 %s25, %s1096
          %s1098 = sadd.s32 %s1095, %s1097
          %s1099 = smul.u32 8, %s1098
          %p1100 = scmp.lt.s32.totalorder %s25, 1
          %s1101 = scalar_select %p1100, %s25, 1
          %p1102 = scmp.lt.s32.totalorder %s1099, 7
          %s1103 = scalar_select %p1102, %s1099, 7
          %s1104 = smul.addr %s1101, 8
          %s1105 = sadd.s32 %s1103, %s1104
          %s1106 = smul.addr %s1105, 2
          %s1107 = scalar_lea.vmem %s3, %s1106
        $region52: #{_lambda_.28} parent=47 // pred_fallthru
          _
        // Predicated region
        $region53: #{_lambda_.28} parent=47 // pred_check
          %p1108 = pneg %p183
        $region54: #{_lambda_.28} parent=47 // pred_check_branch
          %1110 = sbr.rel (%p1108) target = $region56
        $region55: #{_lambda_.28} parent=47 // pred_region
          %s1111 = sand.u32 %s168, 1
          %s1112 = scalar_lea.sflag [#allocation4], %s1111
          %s1113 = sand.u32 %s168, 1
          %s1114 = smul.addr %s1113, 2
          %s1115 = scalar_lea.vmem [#allocation3], %s1114
          %1116 = dma.done %s1112, 32
        $region56: #{_lambda_.28} parent=47 // pred_fallthru
          _
      $region48: #{_lambda_.28} parent=5 // pred_fallthru
        _
    $region6: #{_lambda_.28} parent=1 // loop_footer
      %s18 = sadd.s32 1, %s14
    $region7: #{_lambda_.28} parent=1 // loop_footer_branch
      %13 = sbr.rel target = $region3
    $region8: #{_lambda_.28} parent=1 // loop_exit
      _
    %1117 = vsyncpa [#allocation4], 1
    %s1118 = scalar_lea.sflag [#allocation4], 1
    %1119 = vsyncpa %s1118, 1

// kernel: _lambda_.31
$region0: #{_lambda_.31}
  #allocation0 [shape = 'u32[]', space=smem, size = 0x4, offset = 0x4, fixed_abs, tag = 'smem constant byte address 0x4 - core index']
  #allocation1 [shape = 'u32[144,128]{1,0:T(1,128)}', space=vmem, size = 0x12000, scoped, tag = 'internal scratch']
  #allocation2 [shape = 'f32[2,3]{1,0:T(2,128)}', space=vmem, size = 0x400, scoped, tag = 'scratch operand']
  %s0 = inlined_call_operand.vmem [shape: f32[2,32], index: 0, kind: input, shape index: {}]
  %s1 = inlined_call_operand.vmem [shape: bf16[32,3], index: 1, kind: input, shape index: {}]
  %s2 = inlined_call_operand.vmem [shape: f32[1,3], index: 2, kind: input, shape index: {}]
  %s3 = inlined_call_operand.hbm [shape: f32[2,3], index: 3, kind: output, shape index: {}]
  %s4 = sld [smem:[#allocation0]]
  $region30: #{_lambda_.31} parent=0
    _
  %s6 = ssub.s32 1, %s4
  %s7 = scalar_select 0, %s6, %s4
  $region1: #{_lambda_.31} parent=0
    #allocation3 [shape = 'u8[1024]{0}', space=vmem, size = 0x400, scoped, tag = 'output window, operand 0, single buffered']
    #allocation4 [shape = 's32[1]{0}', space=sflag, size = 0x4, scoped, tag = 'scoped memory for _lambda_.31']
    %8 = vsyncpa [#allocation4], 0
    // Predicated region
    $region2: #{_lambda_.31} parent=1 // pred_check
      _
    $region3: #{_lambda_.31} parent=1 // pred_check_branch
      %10 = sbr.rel (0) target = $region5
    $region4: #{_lambda_.31} parent=1 // pred_region
      _
    $region5: #{_lambda_.31} parent=1 // pred_fallthru
      _
    // Predicated region
    $region6: #{_lambda_.31} parent=1 // pred_check
      _
    $region7: #{_lambda_.31} parent=1 // pred_check_branch
      %12 = sbr.rel (0) target = $region9
    $region8: #{_lambda_.31} parent=1 // pred_region
      _
    $region9: #{_lambda_.31} parent=1 // pred_fallthru
      _
    // Predicated region
    $region10: #{_lambda_.31} parent=1 // pred_check
      _
    $region11: #{_lambda_.31} parent=1 // pred_check_branch
      %14 = sbr.rel (0) target = $region13
    $region12: #{_lambda_.31} parent=1 // pred_region
      _
    $region13: #{_lambda_.31} parent=1 // pred_fallthru
      _
    %p16 = scmp.eq.s32.totalorder 0, 0
    // Predicated region
    $region14: #{_lambda_.31} parent=1 // pred_check
      %p17 = pneg %p16
    $region15: #{_lambda_.31} parent=1 // pred_check_branch
      %19 = sbr.rel (%p17) target = $region17
    $region16: #{_lambda_.31} parent=1 // pred_region
      %vm20 = vcmask 17408
      %21 = vst.msk [vmem:[#allocation2] sm:$0x3] %vm20, 0.0
    $region17: #{_lambda_.31} parent=1 // pred_fallthru
      _
    %v22 = vld [vmem:[#allocation2] sm:$0x3]
    %v23 = vld [vmem:[%s0] sm:$0x3]
    %v24 = vpack.c.bf16 %v23, %v23
    %v25 = vld [vmem:[%s1] sm:$0xf]
    %v26 = vld [vmem:[%s1 + $0x4] sm:$0xf]
    %v27 = vld [vmem:[%s1 + $0x8] sm:$0xf]
    %v28 = vld [vmem:[%s1 + $0xc] sm:$0xf]
    %v33 = vunpack.c.l.b16 %v25
    %v34 = vunpack.c.l.b16 %v26
    %v35 = vunpack.c.l.b16 %v27
    %v36 = vunpack.c.l.b16 %v28
    %v37 = vpack.c.b16 %v34, %v33
    %v38 = vpack.c.b16 %v36, %v35
    %vm41 = vcmask 261120
    %v43 = vsel %vm41, %v24, 0
    %45 = vmatprep.subr.bf16.mxu0 0
    %46 = vmatpush1.bf16.msra.mxu0 0
    %47 = vmatprep.subr.bf16.mxu0 0
    %48 = vmatpush1.bf16.msra.mxu0 0
    %49 = vmatprep.subr.bf16.mxu0 0
    %50 = vmatpush1.bf16.msra.mxu0 0
    %51 = vmatprep.subr.bf16.mxu0 0
    %52 = vmatpush1.bf16.msra.mxu0 0
    %53 = vmatprep.subr.bf16.mxu0 0
    %54 = vmatpush1.bf16.msra.mxu0 0
    %55 = vmatprep.subr.bf16.mxu0 0
    %56 = vmatpush1.bf16.msra.mxu0 0
    %57 = vmatprep.subr.bf16.mxu0 0
    %58 = vmatpush1.bf16.msra.mxu0 %v38
    %59 = vmatprep.subr.bf16.mxu0 0
    %60 = vmatpush1.bf16.msra.mxu0 %v37
    %61 = vmatprep.subr.bf16.mxu0 0
    %62 = vmatpush2.bf16.msra.mxu0 0
    %63 = vmatprep.subr.bf16.mxu0 0
    %64 = vmatpush2.bf16.msra.mxu0 0
    %65 = vmatprep.subr.bf16.mxu0 0
    %66 = vmatpush2.bf16.msra.mxu0 0
    %67 = vmatprep.subr.bf16.mxu0 0
    %68 = vmatpush2.bf16.msra.mxu0 0
    %69 = vmatprep.subr.bf16.mxu0 0
    %70 = vmatpush2.bf16.msra.mxu0 0
    %71 = vmatprep.subr.bf16.mxu0 0
    %72 = vmatpush2.bf16.msra.mxu0 0
    %73 = vmatprep.subr.bf16.mxu0 0
    %74 = vmatpush2.bf16.msra.mxu0 0
    %75 = vmatprep.subr.bf16.mxu0 0
    %76 = vmatpush2.bf16.msra.mxu0 0
    %77 = vmatprep.mubr.bf16.mxu0 0
    %78 = vmatmul.mubr.bf16.gmra.mxu0 %v43
    %v79 = vpop.f32.mrf.mxu0
    %v80 = vadd.f32 0.0, %v79
    %v81 = vpop.f32.mrf.mxu0
    %v82 = vpop.f32.mrf.mxu0
    %v83 = vpop.f32.mrf.mxu0
    %84 = vdwg.mxu0
    %v85 = vadd.f32 %v22, %v80
    %vm86 = vcmask 17408
    %87 = vst.msk [vmem:[#allocation2] sm:$0x3] %vm86, %v85
    // Predicated region
    $region18: #{_lambda_.31} parent=1 // pred_check
      %p88 = pneg %p16
    $region19: #{_lambda_.31} parent=1 // pred_check_branch
      %90 = sbr.rel (%p88) target = $region21
    $region20: #{_lambda_.31} parent=1 // pred_region
      %v91 = vld [vmem:[#allocation2] sm:$0x3]
      %v92 = vld [vmem:[%s2] sm:$0x1]
      %v94 = vlaneseq
      %v95 = vshrl.u32 %v94, 7
      %v96 = vsub.s32 0, %v95
      %v97 = vrot.slane %v92, %v96
      %v99 = vadd.f32 %v91, %v97
      %100 = vst.msk [vmem:[#allocation3] sm:$0x3] %vm86, %v99
    $region21: #{_lambda_.31} parent=1 // pred_fallthru
      _
    // Predicated region
    $region22: #{_lambda_.31} parent=1 // pred_check
      _
    $region23: #{_lambda_.31} parent=1 // pred_check_branch
      %102 = sbr.rel (0) target = $region25
    $region24: #{_lambda_.31} parent=1 // pred_region
      %s104 = ssub.s32 32, 32
      %105 = vsyncadd [#allocation4], %s104
      %s107 = sshll.u32 [#allocation3], 4
      %s108 = int_to_ptr.vmem [resolvable:$true] %s107
      %110 = dma.vmem_to_hbm [thread:$0]  %s108, 32, %s3, [#allocation4]
    $region25: #{_lambda_.31} parent=1 // pred_fallthru
      _
    // Predicated region
    $region26: #{_lambda_.31} parent=1 // pred_check
      _
    $region27: #{_lambda_.31} parent=1 // pred_check_branch
      %112 = sbr.rel (0) target = $region29
    $region28: #{_lambda_.31} parent=1 // pred_region
      %113 = dma.done [#allocation4], 32
    $region29: #{_lambda_.31} parent=1 // pred_fallthru
      _
    %114 = vsyncpa [#allocation4], 1

// kernel: _lambda_.29
$region0: #{_lambda_.29}
  #allocation0 [shape = 'u32[]', space=smem, size = 0x4, offset = 0x4, fixed_abs, tag = 'smem constant byte address 0x4 - core index']
  #allocation1 [shape = 'u32[144,128]{1,0:T(1,128)}', space=vmem, size = 0x12000, scoped, tag = 'internal scratch']
  #allocation2 [shape = 'f32[2,16,48]{2,1,0:T(8,128)}', space=vmem, size = 0x4000, scoped, tag = 'scratch operand']
  %s0 = inlined_call_operand.vmem [shape: f32[2,16,16], index: 0, kind: input, shape index: {}]
  %s1 = inlined_call_operand.vmem [shape: bf16[2,2,16,48], index: 1, kind: input, shape index: {}]
  %s2 = inlined_call_operand.vmem [shape: f32[2,1,48], index: 2, kind: input, shape index: {}]
  %s3 = inlined_call_operand.vmem [shape: f32[2,16,48], index: 3, kind: output, shape index: {}]
  %s4 = sld [smem:[#allocation0]]
  $region30: #{_lambda_.29} parent=0
    _
  %s6 = ssub.s32 1, %s4
  %s7 = scalar_select 0, %s6, %s4
  // Predicated region
  $region2: #{_lambda_.29} parent=0 // pred_check
    _
  $region3: #{_lambda_.29} parent=0 // pred_check_branch
    %9 = sbr.rel (0) target = $region5
  $region4: #{_lambda_.29} parent=0 // pred_region
    _
  $region5: #{_lambda_.29} parent=0 // pred_fallthru
    _
  // Predicated region
  $region6: #{_lambda_.29} parent=0 // pred_check
    _
  $region7: #{_lambda_.29} parent=0 // pred_check_branch
    %11 = sbr.rel (0) target = $region9
  $region8: #{_lambda_.29} parent=0 // pred_region
    _
  $region9: #{_lambda_.29} parent=0 // pred_fallthru
    _
  // Predicated region
  $region10: #{_lambda_.29} parent=0 // pred_check
    _
  $region11: #{_lambda_.29} parent=0 // pred_check_branch
    %13 = sbr.rel (0) target = $region13
  $region12: #{_lambda_.29} parent=0 // pred_region
    _
  $region13: #{_lambda_.29} parent=0 // pred_fallthru
    _
  %p15 = scmp.eq.s32.totalorder 0, 0
  // Predicated region
  $region14: #{_lambda_.29} parent=0 // pred_check
    %p16 = pneg %p15
  $region15: #{_lambda_.29} parent=0 // pred_check_branch
    %18 = sbr.rel (%p16) target = $region17
  $region16: #{_lambda_.29} parent=0 // pred_region
    %vm19 = vcmask 392192
    %20 = vst.msk [vmem:[#allocation2] sm:$0xff] %vm19, 0.0
    %21 = vst.msk [vmem:[#allocation2 + $0x8] sm:$0xff] %vm19, 0.0
    %22 = vst.msk [vmem:[#allocation2 + $0x10] sm:$0xff] %vm19, 0.0
    %23 = vst.msk [vmem:[#allocation2 + $0x18] sm:$0xff] %vm19, 0.0
  $region17: #{_lambda_.29} parent=0 // pred_fallthru
    _
  %v24 = vld [vmem:[#allocation2] sm:$0xff]
  %v25 = vld [vmem:[#allocation2 + $0x8] sm:$0xff]
  %v26 = vld [vmem:[%s0] sm:$0xff]
  %v27 = vld [vmem:[%s0 + $0x8] sm:$0xff]
  %v28 = vpack.c.bf16 %v27, %v26
  %v29 = vld [vmem:[%s1] sm:$0xf]
  %v30 = vld [vmem:[%s1 + $0x4] sm:$0xf]
  %v33 = vunpack.c.l.b16 %v29
  %v34 = vunpack.c.l.b16 %v30
  %v35 = vpack.c.b16 %v34, %v33
  %vm37 = vcmask 130048
  %v39 = vsel %vm37, %v28, 0
  %41 = vmatprep.subr.bf16.mxu0 0
  %42 = vmatpush1.bf16.msra.mxu0 0
  %43 = vmatprep.subr.bf16.mxu0 0
  %44 = vmatpush1.bf16.msra.mxu0 0
  %45 = vmatprep.subr.bf16.mxu0 0
  %46 = vmatpush1.bf16.msra.mxu0 0
  %47 = vmatprep.subr.bf16.mxu0 0
  %48 = vmatpush1.bf16.msra.mxu0 0
  %49 = vmatprep.subr.bf16.mxu0 0
  %50 = vmatpush1.bf16.msra.mxu0 0
  %51 = vmatprep.subr.bf16.mxu0 0
  %52 = vmatpush1.bf16.msra.mxu0 0
  %53 = vmatprep.subr.bf16.mxu0 0
  %54 = vmatpush1.bf16.msra.mxu0 0
  %55 = vmatprep.subr.bf16.mxu0 0
  %56 = vmatpush1.bf16.msra.mxu0 %v35
  %57 = vmatprep.subr.bf16.mxu0 0
  %58 = vmatpush2.bf16.msra.mxu0 0
  %59 = vmatprep.subr.bf16.mxu0 0
  %60 = vmatpush2.bf16.msra.mxu0 0
  %61 = vmatprep.subr.bf16.mxu0 0
  %62 = vmatpush2.bf16.msra.mxu0 0
  %63 = vmatprep.subr.bf16.mxu0 0
  %64 = vmatpush2.bf16.msra.mxu0 0
  %65 = vmatprep.subr.bf16.mxu0 0
  %66 = vmatpush2.bf16.msra.mxu0 0
  %67 = vmatprep.subr.bf16.mxu0 0
  %68 = vmatpush2.bf16.msra.mxu0 0
  %69 = vmatprep.subr.bf16.mxu0 0
  %70 = vmatpush2.bf16.msra.mxu0 0
  %71 = vmatprep.subr.bf16.mxu0 0
  %72 = vmatpush2.bf16.msra.mxu0 0
  %73 = vmatprep.mubr.bf16.mxu0 0
  %74 = vmatmul.mubr.bf16.gmra.mxu0 %v39
  %v75 = vpop.f32.mrf.mxu0
  %v76 = vadd.f32 0.0, %v75
  %v77 = vpop.f32.mrf.mxu0
  %v78 = vpop.f32.mrf.mxu0
  %v79 = vadd.f32 0.0, %v78
  %v80 = vpop.f32.mrf.mxu0
  %81 = vdwg.mxu0
  %v82 = vadd.f32 %v24, %v76
  %v83 = vadd.f32 %v25, %v79
  %s84 = scalar_lea.vmem %s0, 16
  %v85 = vld [vmem:[%s84] sm:$0xff]
  %v86 = vld [vmem:[%s84 + $0x8] sm:$0xff]
  %v87 = vpack.c.bf16 %v86, %v85
  %s88 = scalar_lea.vmem %s1, 8
  %v89 = vld [vmem:[%s88] sm:$0xf]
  %v90 = vld [vmem:[%s88 + $0x4] sm:$0xf]
  %v93 = vunpack.c.l.b16 %v89
  %v94 = vunpack.c.l.b16 %v90
  %v95 = vpack.c.b16 %v94, %v93
  %v98 = vsel %vm37, %v87, 0
  %100 = vmatprep.subr.bf16.mxu0 0
  %101 = vmatpush1.bf16.msra.mxu0 0
  %102 = vmatprep.subr.bf16.mxu0 0
  %103 = vmatpush1.bf16.msra.mxu0 0
  %104 = vmatprep.subr.bf16.mxu0 0
  %105 = vmatpush1.bf16.msra.mxu0 0
  %106 = vmatprep.subr.bf16.mxu0 0
  %107 = vmatpush1.bf16.msra.mxu0 0
  %108 = vmatprep.subr.bf16.mxu0 0
  %109 = vmatpush1.bf16.msra.mxu0 0
  %110 = vmatprep.subr.bf16.mxu0 0
  %111 = vmatpush1.bf16.msra.mxu0 0
  %112 = vmatprep.subr.bf16.mxu0 0
  %113 = vmatpush1.bf16.msra.mxu0 0
  %114 = vmatprep.subr.bf16.mxu0 0
  %115 = vmatpush1.bf16.msra.mxu0 %v95
  %116 = vmatprep.subr.bf16.mxu0 0
  %117 = vmatpush2.bf16.msra.mxu0 0
  %118 = vmatprep.subr.bf16.mxu0 0
  %119 = vmatpush2.bf16.msra.mxu0 0
  %120 = vmatprep.subr.bf16.mxu0 0
  %121 = vmatpush2.bf16.msra.mxu0 0
  %122 = vmatprep.subr.bf16.mxu0 0
  %123 = vmatpush2.bf16.msra.mxu0 0
  %124 = vmatprep.subr.bf16.mxu0 0
  %125 = vmatpush2.bf16.msra.mxu0 0
  %126 = vmatprep.subr.bf16.mxu0 0
  %127 = vmatpush2.bf16.msra.mxu0 0
  %128 = vmatprep.subr.bf16.mxu0 0
  %129 = vmatpush2.bf16.msra.mxu0 0
  %130 = vmatprep.subr.bf16.mxu0 0
  %131 = vmatpush2.bf16.msra.mxu0 0
  %132 = vmatprep.mubr.bf16.mxu0 0
  %133 = vmatmul.mubr.bf16.gmra.mxu0 %v98
  %v134 = vpop.f32.mrf.mxu0
  %v135 = vadd.f32 0.0, %v134
  %v136 = vpop.f32.mrf.mxu0
  %v137 = vpop.f32.mrf.mxu0
  %v138 = vadd.f32 0.0, %v137
  %v139 = vpop.f32.mrf.mxu0
  %140 = vdwg.mxu0
  %v141 = vadd.f32 %v82, %v135
  %v142 = vadd.f32 %v83, %v138
  %vm143 = vcmask 392192
  %144 = vst.msk [vmem:[#allocation2] sm:$0xff] %vm143, %v141
  %145 = vst.msk [vmem:[#allocation2 + $0x8] sm:$0xff] %vm143, %v142
  %s146 = scalar_lea.vmem [#allocation2], 16
  %v147 = vld [vmem:[%s146] sm:$0xff]
  %v148 = vld [vmem:[%s146 + $0x8] sm:$0xff]
  %v149 = vld [vmem:[%s0] sm:$0xff]
  %v150 = vld [vmem:[%s0 + $0x8] sm:$0xff]
  %v151 = vpack.c.bf16 %v150, %v149
  %s152 = scalar_lea.vmem %s1, 16
  %v153 = vld [vmem:[%s152] sm:$0xf]
  %v154 = vld [vmem:[%s152 + $0x4] sm:$0xf]
  %v157 = vunpack.c.l.b16 %v153
  %v158 = vunpack.c.l.b16 %v154
  %v159 = vpack.c.b16 %v158, %v157
  %v162 = vsel %vm37, %v151, 0
  %164 = vmatprep.subr.bf16.mxu0 0
  %165 = vmatpush1.bf16.msra.mxu0 0
  %166 = vmatprep.subr.bf16.mxu0 0
  %167 = vmatpush1.bf16.msra.mxu0 0
  %168 = vmatprep.subr.bf16.mxu0 0
  %169 = vmatpush1.bf16.msra.mxu0 0
  %170 = vmatprep.subr.bf16.mxu0 0
  %171 = vmatpush1.bf16.msra.mxu0 0
  %172 = vmatprep.subr.bf16.mxu0 0
  %173 = vmatpush1.bf16.msra.mxu0 0
  %174 = vmatprep.subr.bf16.mxu0 0
  %175 = vmatpush1.bf16.msra.mxu0 0
  %176 = vmatprep.subr.bf16.mxu0 0
  %177 = vmatpush1.bf16.msra.mxu0 0
  %178 = vmatprep.subr.bf16.mxu0 0
  %179 = vmatpush1.bf16.msra.mxu0 %v159
  %180 = vmatprep.subr.bf16.mxu0 0
  %181 = vmatpush2.bf16.msra.mxu0 0
  %182 = vmatprep.subr.bf16.mxu0 0
  %183 = vmatpush2.bf16.msra.mxu0 0
  %184 = vmatprep.subr.bf16.mxu0 0
  %185 = vmatpush2.bf16.msra.mxu0 0
  %186 = vmatprep.subr.bf16.mxu0 0
  %187 = vmatpush2.bf16.msra.mxu0 0
  %188 = vmatprep.subr.bf16.mxu0 0
  %189 = vmatpush2.bf16.msra.mxu0 0
  %190 = vmatprep.subr.bf16.mxu0 0
  %191 = vmatpush2.bf16.msra.mxu0 0
  %192 = vmatprep.subr.bf16.mxu0 0
  %193 = vmatpush2.bf16.msra.mxu0 0
  %194 = vmatprep.subr.bf16.mxu0 0
  %195 = vmatpush2.bf16.msra.mxu0 0
  %196 = vmatprep.mubr.bf16.mxu0 0
  %197 = vmatmul.mubr.bf16.gmra.mxu0 %v162
  %v198 = vpop.f32.mrf.mxu0
  %v199 = vadd.f32 0.0, %v198
  %v200 = vpop.f32.mrf.mxu0
  %v201 = vpop.f32.mrf.mxu0
  %v202 = vadd.f32 0.0, %v201
  %v203 = vpop.f32.mrf.mxu0
  %204 = vdwg.mxu0
  %v205 = vadd.f32 %v147, %v199
  %v206 = vadd.f32 %v148, %v202
  %v207 = vld [vmem:[%s84] sm:$0xff]
  %v208 = vld [vmem:[%s84 + $0x8] sm:$0xff]
  %v209 = vpack.c.bf16 %v208, %v207
  %s210 = scalar_lea.vmem %s1, 24
  %v211 = vld [vmem:[%s210] sm:$0xf]
  %v212 = vld [vmem:[%s210 + $0x4] sm:$0xf]
  %v215 = vunpack.c.l.b16 %v211
  %v216 = vunpack.c.l.b16 %v212
  %v217 = vpack.c.b16 %v216, %v215
  %v220 = vsel %vm37, %v209, 0
  %222 = vmatprep.subr.bf16.mxu0 0
  %223 = vmatpush1.bf16.msra.mxu0 0
  %224 = vmatprep.subr.bf16.mxu0 0
  %225 = vmatpush1.bf16.msra.mxu0 0
  %226 = vmatprep.subr.bf16.mxu0 0
  %227 = vmatpush1.bf16.msra.mxu0 0
  %228 = vmatprep.subr.bf16.mxu0 0
  %229 = vmatpush1.bf16.msra.mxu0 0
  %230 = vmatprep.subr.bf16.mxu0 0
  %231 = vmatpush1.bf16.msra.mxu0 0
  %232 = vmatprep.subr.bf16.mxu0 0
  %233 = vmatpush1.bf16.msra.mxu0 0
  %234 = vmatprep.subr.bf16.mxu0 0
  %235 = vmatpush1.bf16.msra.mxu0 0
  %236 = vmatprep.subr.bf16.mxu0 0
  %237 = vmatpush1.bf16.msra.mxu0 %v217
  %238 = vmatprep.subr.bf16.mxu0 0
  %239 = vmatpush2.bf16.msra.mxu0 0
  %240 = vmatprep.subr.bf16.mxu0 0
  %241 = vmatpush2.bf16.msra.mxu0 0
  %242 = vmatprep.subr.bf16.mxu0 0
  %243 = vmatpush2.bf16.msra.mxu0 0
  %244 = vmatprep.subr.bf16.mxu0 0
  %245 = vmatpush2.bf16.msra.mxu0 0
  %246 = vmatprep.subr.bf16.mxu0 0
  %247 = vmatpush2.bf16.msra.mxu0 0
  %248 = vmatprep.subr.bf16.mxu0 0
  %249 = vmatpush2.bf16.msra.mxu0 0
  %250 = vmatprep.subr.bf16.mxu0 0
  %251 = vmatpush2.bf16.msra.mxu0 0
  %252 = vmatprep.subr.bf16.mxu0 0
  %253 = vmatpush2.bf16.msra.mxu0 0
  %254 = vmatprep.mubr.bf16.mxu0 0
  %255 = vmatmul.mubr.bf16.gmra.mxu0 %v220
  %v256 = vpop.f32.mrf.mxu0
  %v257 = vadd.f32 0.0, %v256
  %v258 = vpop.f32.mrf.mxu0
  %v259 = vpop.f32.mrf.mxu0
  %v260 = vadd.f32 0.0, %v259
  %v261 = vpop.f32.mrf.mxu0
  %262 = vdwg.mxu0
  %v263 = vadd.f32 %v205, %v257
  %v264 = vadd.f32 %v206, %v260
  %265 = vst.msk [vmem:[%s146] sm:$0xff] %vm143, %v263
  %266 = vst.msk [vmem:[%s146 + $0x8] sm:$0xff] %vm143, %v264
  // Predicated region
  $region18: #{_lambda_.29} parent=0 // pred_check
    %p267 = pneg %p15
  $region19: #{_lambda_.29} parent=0 // pred_check_branch
    %269 = sbr.rel (%p267) target = $region21
  $region20: #{_lambda_.29} parent=0 // pred_region
    %v270 = vld [vmem:[#allocation2] sm:$0xff]
    %v271 = vld [vmem:[#allocation2 + $0x8] sm:$0xff]
    %v272 = vld [vmem:[#allocation2 + $0x10] sm:$0xff]
    %v273 = vld [vmem:[#allocation2 + $0x18] sm:$0xff]
    %v274 = vld [vmem:[%s2] sm:$0x1]
    %v275 = vld [vmem:[%s2 + $0x1] sm:$0x1]
    %v278 = vlaneseq
    %v279 = vshrl.u32 %v278, 7
    %v280 = vsub.s32 0, %v279
    %v281 = vrot.slane %v274, %v280
    %v282 = vlaneseq
    %v283 = vshrl.u32 %v282, 7
    %v284 = vsub.s32 0, %v283
    %v285 = vrot.slane %v275, %v284
    %v288 = vadd.f32 %v270, %v281
    %v289 = vadd.f32 %v271, %v281
    %v290 = vadd.f32 %v272, %v285
    %v291 = vadd.f32 %v273, %v285
    %292 = vst.msk [vmem:[%s3] sm:$0xff] %vm143, %v288
    %293 = vst.msk [vmem:[%s3 + $0x8] sm:$0xff] %vm143, %v289
    %294 = vst.msk [vmem:[%s3 + $0x10] sm:$0xff] %vm143, %v290
    %295 = vst.msk [vmem:[%s3 + $0x18] sm:$0xff] %vm143, %v291
  $region21: #{_lambda_.29} parent=0 // pred_fallthru
    _
  // Predicated region
  $region22: #{_lambda_.29} parent=0 // pred_check
    _
  $region23: #{_lambda_.29} parent=0 // pred_check_branch
    %297 = sbr.rel (0) target = $region25
  $region24: #{_lambda_.29} parent=0 // pred_region
    _
  $region25: #{_lambda_.29} parent=0 // pred_fallthru
    _
  // Predicated region
  $region26: #{_lambda_.29} parent=0 // pred_check
    _
  $region27: #{_lambda_.29} parent=0 // pred_check_branch
    %299 = sbr.rel (0) target = $region29
  $region28: #{_lambda_.29} parent=0 // pred_region
    _
  $region29: #{_lambda_.29} parent=0 // pred_fallthru
    _

// kernel: _lambda_.30
$region0: #{_lambda_.30}
  #allocation0 [shape = 'u32[]', space=smem, size = 0x4, offset = 0x4, fixed_abs, tag = 'smem constant byte address 0x4 - core index']
  #allocation1 [shape = 'u32[144,128]{1,0:T(1,128)}', space=vmem, size = 0x12000, scoped, tag = 'internal scratch']
  #allocation2 [shape = 'f32[2,16]{1,0:T(2,128)}', space=vmem, size = 0x400, scoped, tag = 'scratch operand']
  %s0 = inlined_call_operand.vmem [shape: f32[2,8,2,48], index: 0, kind: input, shape index: {}]
  %s1 = inlined_call_operand.vmem [shape: bf16[2,16,48], index: 1, kind: input, shape index: {}]
  %s2 = inlined_call_operand.vmem [shape: f32[2,1,48], index: 2, kind: input, shape index: {}]
  %s3 = inlined_call_operand.hbm [shape: f32[2,8,2,16], index: 3, kind: output, shape index: {0}]
  %s4 = inlined_call_operand.vmem [shape: f32[2,2,16], index: 4, kind: output, shape index: {1}]
  %5 = xla_tuple %s3, %s4
  %s6 = sld [smem:[#allocation0]]
  $region57: #{_lambda_.30} parent=0
    _
  %s8 = ssub.s32 1, %s6
  %s9 = scalar_select 0, %s8, %s6
  $region1: #{_lambda_.30} parent=0
    #allocation3 [shape = 'u8[16384]{0}', space=vmem, size = 0x4000, scoped, tag = 'output window, operand 0']
    #allocation4 [shape = 's32[2]{0}', space=sflag, size = 0x8, scoped, tag = 'scoped memory for _lambda_.30']
    %10 = vsyncpa [#allocation4], 0
    %s11 = scalar_lea.sflag [#allocation4], 1
    %12 = vsyncpa %s11, 0
    loop: start=0, step=1, limit=4
    $region2: #{_lambda_.30} parent=1 // loop_pre_header
      _
    $region3: #{_lambda_.30} parent=1 // loop_header
      %s14 = sphi 0, %s18
      %p15 = scmp.ge.s32.totalorder %s14, 4
      %s21 = sphi 0, %s33
      %s22 = sphi 0, %s29
      %s23 = sphi 0, %s21
      %s24 = sphi 0, %s22
      %s25 = sphi 0, %s23
      %s26 = sphi 0, %s24
      %s48 = sphi 0, %s50
      %s51 = sphi 0, %s48
      %s52 = sphi 0, %s51
      %s68 = sphi 0, %s52
      %s74 = sphi 0, %s76
      %s77 = sphi 0, %s74
      %s78 = sphi 0, %s77
      %s94 = sphi 0, %s78
      %s100 = sphi 0, %s102
      %s103 = sphi 0, %s100
      %s104 = sphi 0, %s103
      %s120 = sphi 0, %s104
      %s138 = sphi 0, %s140
      %s141 = sphi 0, %s138
      %s142 = sphi 0, %s141
      %s158 = sphi 0, %s142
      %s164 = sphi 0, %s166
      %s167 = sphi 0, %s164
      %s168 = sphi 0, %s167
      %s184 = sphi 0, %s168
    $region4: #{_lambda_.30} parent=1 // loop_header_branch
      %17 = sbr.rel (%p15) target = $region8
    $region5: #{_lambda_.30} parent=1 // loop_body
      %s19 = ssub.s32 %s14, 1
      %s20 = ssub.s32 %s14, 2
      %s27 = sadd.s32 1, %s22
      %p28 = scmp.ge.s32.totalorder %s27, 1
      %s29 = scalar_select %p28, 0, %s27
      %s30 = sadd.s32 1, %s21
      %s31 = scalar_select %p28, %s30, %s21
      %p32 = scmp.ge.s32.totalorder %s31, 2
      %s33 = scalar_select %p32, 0, %s31
      %s34 = ssub.s32 1, %s21
      %s35 = smul.u32 %s34, %s22
      %s36 = ssub.s32 0, %s22
      %s37 = smul.u32 %s21, %s36
      %s38 = sadd.s32 %s35, %s37
      %s39 = ssub.s32 1, %s33
      %s40 = smul.u32 %s39, %s29
      %s41 = ssub.s32 0, %s29
      %s42 = smul.u32 %s33, %s41
      %s43 = sadd.s32 %s40, %s42
      %s44 = ssub.s32 %s21, %s33
      %s45 = ssub.s32 %s38, %s43
      %s46 = sor.u32 %s44, %s45
      %p47 = scmp.eq.s32.totalorder %s46, 0
      %s49 = sadd.s32 %s48, 1
      %s50 = scalar_select %p47, %s48, %s49
      %p53 = pneg %p47
      %p54 = scmp.eq.s32.totalorder %s14, 1
      %p55 = por %p53, %p54
      %p56 = scmp.ne.s32.totalorder %s48, %s51
      %p57 = scmp.eq.s32.totalorder %s14, 0
      %p58 = por %p56, %p57
      %p59 = scmp.ne.s32.totalorder %s48, %s51
      %p60 = scmp.eq.s32.totalorder %s19, 1
      %p61 = por %p59, %p60
      %p62 = scmp.ne.s32.totalorder %s51, %s52
      %p63 = scmp.eq.s32.totalorder %s19, 0
      %p64 = por %p62, %p63
      %p65 = scmp.ne.s32.totalorder %s51, %s52
      %p66 = scmp.eq.s32.totalorder %s20, 1
      %p67 = por %p65, %p66
      %p69 = scmp.ne.s32.totalorder %s52, %s68
      %p70 = scmp.eq.s32.totalorder %s20, 0
      %p71 = por %p69, %p70
      %s72 = ssub.s32 %s21, %s33
      %p73 = scmp.eq.s32.totalorder %s72, 0
      %s75 = sadd.s32 %s74, 1
      %s76 = scalar_select %p73, %s74, %s75
      %p79 = pneg %p73
      %p80 = scmp.eq.s32.totalorder %s14, 1
      %p81 = por %p79, %p80
      %p82 = scmp.ne.s32.totalorder %s74, %s77
      %p83 = scmp.eq.s32.totalorder %s14, 0
      %p84 = por %p82, %p83
      %p85 = scmp.ne.s32.totalorder %s74, %s77
      %p86 = scmp.eq.s32.totalorder %s19, 1
      %p87 = por %p85, %p86
      %p88 = scmp.ne.s32.totalorder %s77, %s78
      %p89 = scmp.eq.s32.totalorder %s19, 0
      %p90 = por %p88, %p89
      %p91 = scmp.ne.s32.totalorder %s77, %s78
      %p92 = scmp.eq.s32.totalorder %s20, 1
      %p93 = por %p91, %p92
      %p95 = scmp.ne.s32.totalorder %s78, %s94
      %p96 = scmp.eq.s32.totalorder %s20, 0
      %p97 = por %p95, %p96
      %s98 = ssub.s32 %s21, %s33
      %p99 = scmp.eq.s32.totalorder %s98, 0
      %s101 = sadd.s32 %s100, 1
      %s102 = scalar_select %p99, %s100, %s101
      %p105 = pneg %p99
      %p106 = scmp.eq.s32.totalorder %s14, 1
      %p107 = por %p105, %p106
      %p108 = scmp.ne.s32.totalorder %s100, %s103
      %p109 = scmp.eq.s32.totalorder %s14, 0
      %p110 = por %p108, %p109
      %p111 = scmp.ne.s32.totalorder %s100, %s103
      %p112 = scmp.eq.s32.totalorder %s19, 1
      %p113 = por %p111, %p112
      %p114 = scmp.ne.s32.totalorder %s103, %s104
      %p115 = scmp.eq.s32.totalorder %s19, 0
      %p116 = por %p114, %p115
      %p117 = scmp.ne.s32.totalorder %s103, %s104
      %p118 = scmp.eq.s32.totalorder %s20, 1
      %p119 = por %p117, %p118
      %p121 = scmp.ne.s32.totalorder %s104, %s120
      %p122 = scmp.eq.s32.totalorder %s20, 0
      %p123 = por %p121, %p122
      %s124 = ssub.s32 1, %s21
      %s125 = smul.u32 %s124, %s22
      %s126 = ssub.s32 0, %s22
      %s127 = smul.u32 %s21, %s126
      %s128 = sadd.s32 %s125, %s127
      %s129 = ssub.s32 1, %s33
      %s130 = smul.u32 %s129, %s29
      %s131 = ssub.s32 0, %s29
      %s132 = smul.u32 %s33, %s131
      %s133 = sadd.s32 %s130, %s132
      %s134 = ssub.s32 %s21, %s33
      %s135 = ssub.s32 %s128, %s133
      %s136 = sor.u32 %s134, %s135
      %p137 = scmp.eq.s32.totalorder %s136, 0
      %s139 = sadd.s32 %s138, 1
      %s140 = scalar_select %p137, %s138, %s139
      %p143 = pneg %p137
      %p144 = scmp.eq.s32.totalorder %s14, 1
      %p145 = por %p143, %p144
      %p146 = scmp.ne.s32.totalorder %s138, %s141
      %p147 = scmp.eq.s32.totalorder %s14, 0
      %p148 = por %p146, %p147
      %p149 = scmp.ne.s32.totalorder %s138, %s141
      %p150 = scmp.eq.s32.totalorder %s19, 1
      %p151 = por %p149, %p150
      %p152 = scmp.ne.s32.totalorder %s141, %s142
      %p153 = scmp.eq.s32.totalorder %s19, 0
      %p154 = por %p152, %p153
      %p155 = scmp.ne.s32.totalorder %s141, %s142
      %p156 = scmp.eq.s32.totalorder %s20, 1
      %p157 = por %p155, %p156
      %p159 = scmp.ne.s32.totalorder %s142, %s158
      %p160 = scmp.eq.s32.totalorder %s20, 0
      %p161 = por %p159, %p160
      %s162 = ssub.s32 %s21, %s33
      %p163 = scmp.eq.s32.totalorder %s162, 0
      %s165 = sadd.s32 %s164, 1
      %s166 = scalar_select %p163, %s164, %s165
      %p169 = pneg %p163
      %p170 = scmp.eq.s32.totalorder %s14, 1
      %p171 = por %p169, %p170
      %p172 = scmp.ne.s32.totalorder %s164, %s167
      %p173 = scmp.eq.s32.totalorder %s14, 0
      %p174 = por %p172, %p173
      %p175 = scmp.ne.s32.totalorder %s164, %s167
      %p176 = scmp.eq.s32.totalorder %s19, 1
      %p177 = por %p175, %p176
      %p178 = scmp.ne.s32.totalorder %s167, %s168
      %p179 = scmp.eq.s32.totalorder %s19, 0
      %p180 = por %p178, %p179
      %p181 = scmp.ne.s32.totalorder %s167, %s168
      %p182 = scmp.eq.s32.totalorder %s20, 1
      %p183 = por %p181, %p182
      %p185 = scmp.ne.s32.totalorder %s168, %s184
      %p186 = scmp.eq.s32.totalorder %s20, 0
      %p187 = por %p185, %p186
      %p188 = scmp.le.s32.totalorder 1, %s14
      %p189 = scmp.lt.s32.totalorder %s14, 3
      %p190 = pnand %p188, %p189
      %p191 = pneg %p190
      // Predicated region
      $region9: #{_lambda_.30} parent=5 // pred_check
        _
      $region10: #{_lambda_.30} parent=5 // pred_check_branch
        %193 = sbr.rel (%p190) target = $region12
      $region11: #{_lambda_.30} parent=5 // pred_region
        %s194 = ssub.s32 %s14, 1
      $region12: #{_lambda_.30} parent=5 // pred_fallthru
        _
      %p195 = scmp.lt.s32.totalorder %s14, 2
      // Predicated region
      $region13: #{_lambda_.30} parent=5 // pred_check
        %p196 = pneg %p195
      $region14: #{_lambda_.30} parent=5 // pred_check_branch
        %198 = sbr.rel (%p196) target = $region16
      $region15: #{_lambda_.30} parent=5 // pred_region
        // Predicated region
        $region17: #{_lambda_.30} parent=15 // pred_check
          %p199 = pneg %p58
        $region18: #{_lambda_.30} parent=15 // pred_check_branch
          %201 = sbr.rel (%p199) target = $region20
        $region19: #{_lambda_.30} parent=15 // pred_region
          %s202 = ssub.s32 1, %s21
          %s203 = smul.u32 %s202, %s22
          %s204 = ssub.s32 0, %s22
          %s205 = smul.u32 %s21, %s204
          %s206 = sadd.s32 %s203, %s205
          %s207 = smul.u32 8, %s206
          %p208 = scmp.lt.s32.totalorder %s21, 1
          %s209 = scalar_select %p208, %s21, 1
          %p210 = scmp.lt.s32.totalorder %s207, 7
          %s211 = scalar_select %p210, %s207, 7
          %s212 = smul.addr %s209, 8
          %s213 = sadd.s32 %s211, %s212
          %s214 = smul.addr %s213, 2
          %s215 = scalar_lea.vmem %s0, %s214
          %s216 = ssub.s32 1, %s21
          %s217 = smul.u32 %s216, %s22
          %s218 = ssub.s32 0, %s22
          %s219 = smul.u32 %s21, %s218
          %s220 = sadd.s32 %s217, %s219
          %s221 = smul.u32 8, %s220
        $region20: #{_lambda_.30} parent=15 // pred_fallthru
          _
        // Predicated region
        $region21: #{_lambda_.30} parent=15 // pred_check
          %p222 = pneg %p84
        $region22: #{_lambda_.30} parent=15 // pred_check_branch
          %224 = sbr.rel (%p222) target = $region24
        $region23: #{_lambda_.30} parent=15 // pred_region
          %p225 = scmp.lt.s32.totalorder %s21, 1
          %s226 = scalar_select %p225, %s21, 1
          %s227 = smul.addr %s226, 2
          %s228 = smul.addr %s227, 4
          %s229 = scalar_lea.vmem %s1, %s228
        $region24: #{_lambda_.30} parent=15 // pred_fallthru
          _
        // Predicated region
        $region25: #{_lambda_.30} parent=15 // pred_check
          %p230 = pneg %p110
        $region26: #{_lambda_.30} parent=15 // pred_check_branch
          %232 = sbr.rel (%p230) target = $region28
        $region27: #{_lambda_.30} parent=15 // pred_region
          %p233 = scmp.lt.s32.totalorder %s21, 1
          %s234 = scalar_select %p233, %s21, 1
          %s235 = scalar_lea.vmem %s2, %s234
        $region28: #{_lambda_.30} parent=15 // pred_fallthru
          _
      $region16: #{_lambda_.30} parent=5 // pred_fallthru
        _
      %p236 = scmp.le.s32.totalorder 1, %s14
      %p237 = scmp.lt.s32.totalorder %s14, 3
      %p238 = pnand %p236, %p237
      %p239 = pneg %p238
      // Predicated region
      $region29: #{_lambda_.30} parent=5 // pred_check
        _
      $region30: #{_lambda_.30} parent=5 // pred_check_branch
        %241 = sbr.rel (%p238) target = $region32
      $region31: #{_lambda_.30} parent=5 // pred_region
        %s242 = ssub.s32 %s14, 1
        %s243 = ssub.s32 1, %s23
        %s244 = smul.u32 %s243, %s24
        %s245 = ssub.s32 0, %s24
        %s246 = smul.u32 %s23, %s245
        %s247 = sadd.s32 %s244, %s246
        %s248 = smul.u32 8, %s247
        %p249 = scmp.lt.s32.totalorder %s23, 1
        %s250 = scalar_select %p249, %s23, 1
        %p251 = scmp.lt.s32.totalorder %s248, 7
        %s252 = scalar_select %p251, %s248, 7
        %s253 = smul.addr %s250, 8
        %s254 = sadd.s32 %s252, %s253
        %s255 = smul.addr %s254, 2
        %s256 = scalar_lea.vmem %s0, %s255
        %p257 = pneg %p64
        %p258 = pneg %p61
        %p259 = scmp.lt.s32.totalorder %s23, 1
        %s260 = scalar_select %p259, %s23, 1
        %s261 = smul.addr %s260, 2
        %s262 = smul.addr %s261, 4
        %s263 = scalar_lea.vmem %s1, %s262
        %p264 = pneg %p90
        %p265 = pneg %p87
        %p266 = scmp.lt.s32.totalorder %s23, 1
        %s267 = scalar_select %p266, %s23, 1
        %s268 = scalar_lea.vmem %s2, %s267
        %p269 = pneg %p116
        %p270 = pneg %p113
        %p271 = pneg %p154
        %p272 = pneg %p151
        %s273 = sand.u32 %s141, 1
        %s274 = scalar_lea.sflag [#allocation4], %s273
        %s275 = sand.u32 %s141, 1
        %s276 = smul.addr %s275, 16
        %s277 = scalar_lea.vmem [#allocation3], %s276
        %p278 = pneg %p180
        %p279 = pneg %p177
        %p280 = scmp.lt.s32.totalorder %s23, 1
        %s281 = scalar_select %p280, %s23, 1
        %s282 = smul.addr %s281, 2
        %s283 = scalar_lea.vmem %s4, %s282
        %s284 = ssub.s32 1, %s23
        %s285 = smul.u32 %s284, %s24
        %s286 = ssub.s32 0, %s24
        %s287 = smul.u32 %s23, %s286
        %s288 = sadd.s32 %s285, %s287
        %s289 = smul.u32 8, %s288
        %p290 = scmp.lt.s32.totalorder %s23, 1
        %s291 = scalar_select %p290, %s23, 1
        %p292 = scmp.lt.s32.totalorder %s289, 7
        %s293 = scalar_select %p292, %s289, 7
        %s294 = smul.addr %s291, 8
        %s295 = sadd.s32 %s293, %s294
        %s296 = smul.addr %s295, 2
        %s297 = scalar_lea.vmem %s0, %s296
        %s298 = ssub.s32 1, %s23
        %s299 = smul.u32 %s298, %s24
        %s300 = ssub.s32 0, %s24
        %s301 = smul.u32 %s23, %s300
        %s302 = sadd.s32 %s299, %s301
        %s303 = smul.u32 8, %s302
        %p304 = scmp.lt.s32.totalorder %s23, 1
        %s305 = scalar_select %p304, %s23, 1
        %s306 = smul.addr %s305, 2
        %s307 = smul.addr %s306, 4
        %s308 = scalar_lea.vmem %s1, %s307
        %p309 = scmp.lt.s32.totalorder %s23, 1
        %s310 = scalar_select %p309, %s23, 1
        %s311 = scalar_lea.vmem %s2, %s310
        %s312 = ssub.s32 1, %s23
        %s313 = smul.u32 %s312, %s24
        %s314 = ssub.s32 0, %s24
        %s315 = smul.u32 %s23, %s314
        %s316 = sadd.s32 %s313, %s315
        %s317 = smul.u32 8, %s316
        %p318 = scmp.lt.s32.totalorder %s23, 1
        %s319 = scalar_select %p318, %s23, 1
        %s320 = smul.addr %s319, 2
        %s321 = scalar_lea.vmem %s4, %s320
        %p323 = scmp.eq.s32.totalorder %s24, 0
        // Predicated region
        $region33: #{_lambda_.30} parent=31 // pred_check
          %p324 = pneg %p323
        $region34: #{_lambda_.30} parent=31 // pred_check_branch
          %326 = sbr.rel (%p324) target = $region36
        $region35: #{_lambda_.30} parent=31 // pred_region
          %vm327 = vcmask 123904
          %328 = vst.msk [vmem:[#allocation2] sm:$0x3] %vm327, 0.0
        $region36: #{_lambda_.30} parent=31 // pred_fallthru
          _
        %v329 = vld [vmem:[%s308] sm:$0xf]
        %v330 = vld [vmem:[%s308 + $0x4] sm:$0xf]
        %v331 = vld [vmem:[%s311] sm:$0x1]
        %v332 = vld [vmem:[#allocation2] sm:$0x3]
        %s333 = smul.u32 %s23, 7
        %s334 = smul.u32 %s333, 2
        %s335 = scalar_lea.vmem %s297, %s334
        %v336 = vld [vmem:[%s335] sm:$0x3]
        %v337 = vpack.c.bf16 %v332, %v332
        %v339 = vlaneseq
        %v340 = vshrl.u32 %v339, 7
        %v341 = vsub.s32 0, %v340
        %v342 = vrot.slane %v331, %v341
        %v346 = vunpack.c.l.b16 %v329
        %v347 = vunpack.c.l.b16 %v330
        %v348 = vpack.c.b16 %v347, %v346
        %vm350 = vcmask 130048
        %v352 = vsel %vm350, %v337, 0
        %354 = vmatprep.subr.bf16.mxu0 0
        %355 = vmatpush1.bf16.msra.mxu0 0
        %356 = vmatprep.subr.bf16.mxu0 0
        %357 = vmatpush1.bf16.msra.mxu0 0
        %358 = vmatprep.subr.bf16.mxu0 0
        %359 = vmatpush1.bf16.msra.mxu0 0
        %360 = vmatprep.subr.bf16.mxu0 0
        %361 = vmatpush1.bf16.msra.mxu0 0
        %362 = vmatprep.subr.bf16.mxu0 0
        %363 = vmatpush1.bf16.msra.mxu0 0
        %364 = vmatprep.subr.bf16.mxu0 0
        %365 = vmatpush1.bf16.msra.mxu0 0
        %366 = vmatprep.subr.bf16.mxu0 0
        %367 = vmatpush1.bf16.msra.mxu0 0
        %368 = vmatprep.subr.bf16.mxu0 0
        %369 = vmatpush1.bf16.msra.mxu0 %v348
        %370 = vmatprep.subr.bf16.mxu0 0
        %371 = vmatpush2.bf16.msra.mxu0 0
        %372 = vmatprep.subr.bf16.mxu0 0
        %373 = vmatpush2.bf16.msra.mxu0 0
        %374 = vmatprep.subr.bf16.mxu0 0
        %375 = vmatpush2.bf16.msra.mxu0 0
        %376 = vmatprep.subr.bf16.mxu0 0
        %377 = vmatpush2.bf16.msra.mxu0 0
        %378 = vmatprep.subr.bf16.mxu0 0
        %379 = vmatpush2.bf16.msra.mxu0 0
        %380 = vmatprep.subr.bf16.mxu0 0
        %381 = vmatpush2.bf16.msra.mxu0 0
        %382 = vmatprep.subr.bf16.mxu0 0
        %383 = vmatpush2.bf16.msra.mxu0 0
        %384 = vmatprep.subr.bf16.mxu0 0
        %385 = vmatpush2.bf16.msra.mxu0 0
        %386 = vmatprep.mubr.bf16.mxu0 0
        %387 = vmatmul.mubr.bf16.gmra.mxu0 %v352
        %v388 = vpop.f32.mrf.mxu0
        %v389 = vadd.f32 %v342, %v388
        %v390 = vpop.f32.mrf.mxu0
        %v391 = vpop.f32.mrf.mxu0
        %v392 = vpop.f32.mrf.mxu0
        %393 = vdwg.mxu0
        %v394 = vadd.f32 %v336, %v389
        %v395 = vxor.u32 %v394, 2147483648
        %v396 = vmul.f32 %v395, 1.442695
        %v397 = vpow.pop %v396
        %v398 = vadd.f32 %v397, 1.0
        %v399 = vrcp.pop %v398
        %v400 = vmul.f32 1.0, %v399
        %402 = vrot.lane.b32.xlu0 %v389, 96
        %v403 = vpop.permute.xlu0 %402
        %v405 = vmul.f32 %v400, %v403
        %407 = vrot.lane.b32.xlu0 %v405, 32
        %v408 = vpop.permute.xlu0 %407
        %v410 = vadd.f32 %v336, %v408
        %v411 = vtanh.pop %v410
        %v412 = vsub.f32 1.0, %v400
        %414 = vrot.lane.b32.xlu0 %v411, 112
        %v415 = vpop.permute.xlu0 %414
        %v417 = vmul.f32 %v412, %v415
        %419 = vrot.lane.b32.xlu0 %v332, 16
        %v420 = vpop.permute.xlu0 %419
        %v422 = vmul.f32 %v400, %v420
        %v423 = vadd.f32 %v417, %v422
        %425 = vrot.lane.b32.xlu0 %v423, 112
        %v426 = vpop.permute.xlu0 %425
        %s428 = scalar_lea.vmem %s277, %s334 [#allocation3]
        %vm429 = vcmask 123904
        %430 = vst.msk [vmem:[%s428] sm:$0x3] %vm429, %v426
        %s431 = ssub.s32 1, %s23
        %s432 = smul.u32 %s23, 6
        %s433 = sadd.s32 %s431, %s432
        %s434 = smul.u32 %s433, 2
        %s435 = scalar_lea.vmem %s297, %s434
        %v436 = vld [vmem:[%s435] sm:$0x3]
        %v437 = vpack.c.bf16 %v423, %v423
        %439 = vrot.lane.b32.xlu0 %v437, 112
        %v440 = vpop.permute.xlu0 %439
        %v442 = vsel %vm350, %v440, 0
        %444 = vmatprep.subr.bf16.mxu0 0
        %445 = vmatpush1.bf16.msra.mxu0 0
        %446 = vmatprep.subr.bf16.mxu0 0
        %447 = vmatpush1.bf16.msra.mxu0 0
        %448 = vmatprep.subr.bf16.mxu0 0
        %449 = vmatpush1.bf16.msra.mxu0 0
        %450 = vmatprep.subr.bf16.mxu0 0
        %451 = vmatpush1.bf16.msra.mxu0 0
        %452 = vmatprep.subr.bf16.mxu0 0
        %453 = vmatpush1.bf16.msra.mxu0 0
        %454 = vmatprep.subr.bf16.mxu0 0
        %455 = vmatpush1.bf16.msra.mxu0 0
        %456 = vmatprep.subr.bf16.mxu0 0
        %457 = vmatpush1.bf16.msra.mxu0 0
        %458 = vmatprep.subr.bf16.mxu0 0
        %459 = vmatpush1.bf16.msra.mxu0 %v348
        %460 = vmatprep.subr.bf16.mxu0 0
        %461 = vmatpush2.bf16.msra.mxu0 0
        %462 = vmatprep.subr.bf16.mxu0 0
        %463 = vmatpush2.bf16.msra.mxu0 0
        %464 = vmatprep.subr.bf16.mxu0 0
        %465 = vmatpush2.bf16.msra.mxu0 0
        %466 = vmatprep.subr.bf16.mxu0 0
        %467 = vmatpush2.bf16.msra.mxu0 0
        %468 = vmatprep.subr.bf16.mxu0 0
        %469 = vmatpush2.bf16.msra.mxu0 0
        %470 = vmatprep.subr.bf16.mxu0 0
        %471 = vmatpush2.bf16.msra.mxu0 0
        %472 = vmatprep.subr.bf16.mxu0 0
        %473 = vmatpush2.bf16.msra.mxu0 0
        %474 = vmatprep.subr.bf16.mxu0 0
        %475 = vmatpush2.bf16.msra.mxu0 0
        %476 = vmatprep.mubr.bf16.mxu0 0
        %477 = vmatmul.mubr.bf16.gmra.mxu0 %v442
        %v478 = vpop.f32.mrf.mxu0
        %v479 = vadd.f32 %v342, %v478
        %v480 = vpop.f32.mrf.mxu0
        %v481 = vpop.f32.mrf.mxu0
        %v482 = vpop.f32.mrf.mxu0
        %483 = vdwg.mxu0
        %v484 = vadd.f32 %v436, %v479
        %v485 = vxor.u32 %v484, 2147483648
        %v486 = vmul.f32 %v485, 1.442695
        %v487 = vpow.pop %v486
        %v488 = vadd.f32 %v487, 1.0
        %v489 = vrcp.pop %v488
        %v490 = vmul.f32 1.0, %v489
        %492 = vrot.lane.b32.xlu0 %v479, 96
        %v493 = vpop.permute.xlu0 %492
        %v495 = vmul.f32 %v490, %v493
        %497 = vrot.lane.b32.xlu0 %v495, 32
        %v498 = vpop.permute.xlu0 %497
        %v500 = vadd.f32 %v436, %v498
        %v501 = vtanh.pop %v500
        %v502 = vsub.f32 1.0, %v490
        %504 = vrot.lane.b32.xlu0 %v501, 112
        %v505 = vpop.permute.xlu0 %504
        %v507 = vmul.f32 %v502, %v505
        %v508 = vmul.f32 %v490, %v423
        %v509 = vadd.f32 %v507, %v508
        %511 = vrot.lane.b32.xlu0 %v509, 112
        %v512 = vpop.permute.xlu0 %511
        %s514 = scalar_lea.vmem %s277, %s434 [#allocation3]
        %515 = vst.msk [vmem:[%s514] sm:$0x3] %vm429, %v512
        %s516 = smul.u32 %s431, 2
        %s517 = smul.u32 %s23, 5
        %s518 = sadd.s32 %s516, %s517
        %s519 = smul.u32 %s518, 2
        %s520 = scalar_lea.vmem %s297, %s519
        %v521 = vld [vmem:[%s520] sm:$0x3]
        %v522 = vpack.c.bf16 %v509, %v509
        %524 = vrot.lane.b32.xlu0 %v522, 112
        %v525 = vpop.permute.xlu0 %524
        %v527 = vsel %vm350, %v525, 0
        %529 = vmatprep.subr.bf16.mxu0 0
        %530 = vmatpush1.bf16.msra.mxu0 0
        %531 = vmatprep.subr.bf16.mxu0 0
        %532 = vmatpush1.bf16.msra.mxu0 0
        %533 = vmatprep.subr.bf16.mxu0 0
        %534 = vmatpush1.bf16.msra.mxu0 0
        %535 = vmatprep.subr.bf16.mxu0 0
        %536 = vmatpush1.bf16.msra.mxu0 0
        %537 = vmatprep.subr.bf16.mxu0 0
        %538 = vmatpush1.bf16.msra.mxu0 0
        %539 = vmatprep.subr.bf16.mxu0 0
        %540 = vmatpush1.bf16.msra.mxu0 0
        %541 = vmatprep.subr.bf16.mxu0 0
        %542 = vmatpush1.bf16.msra.mxu0 0
        %543 = vmatprep.subr.bf16.mxu0 0
        %544 = vmatpush1.bf16.msra.mxu0 %v348
        %545 = vmatprep.subr.bf16.mxu0 0
        %546 = vmatpush2.bf16.msra.mxu0 0
        %547 = vmatprep.subr.bf16.mxu0 0
        %548 = vmatpush2.bf16.msra.mxu0 0
        %549 = vmatprep.subr.bf16.mxu0 0
        %550 = vmatpush2.bf16.msra.mxu0 0
        %551 = vmatprep.subr.bf16.mxu0 0
        %552 = vmatpush2.bf16.msra.mxu0 0
        %553 = vmatprep.subr.bf16.mxu0 0
        %554 = vmatpush2.bf16.msra.mxu0 0
        %555 = vmatprep.subr.bf16.mxu0 0
        %556 = vmatpush2.bf16.msra.mxu0 0
        %557 = vmatprep.subr.bf16.mxu0 0
        %558 = vmatpush2.bf16.msra.mxu0 0
        %559 = vmatprep.subr.bf16.mxu0 0
        %560 = vmatpush2.bf16.msra.mxu0 0
        %561 = vmatprep.mubr.bf16.mxu0 0
        %562 = vmatmul.mubr.bf16.gmra.mxu0 %v527
        %v563 = vpop.f32.mrf.mxu0
        %v564 = vadd.f32 %v342, %v563
        %v565 = vpop.f32.mrf.mxu0
        %v566 = vpop.f32.mrf.mxu0
        %v567 = vpop.f32.mrf.mxu0
        %568 = vdwg.mxu0
        %v569 = vadd.f32 %v521, %v564
        %v570 = vxor.u32 %v569, 2147483648
        %v571 = vmul.f32 %v570, 1.442695
        %v572 = vpow.pop %v571
        %v573 = vadd.f32 %v572, 1.0
        %v574 = vrcp.pop %v573
        %v575 = vmul.f32 1.0, %v574
        %577 = vrot.lane.b32.xlu0 %v564, 96
        %v578 = vpop.permute.xlu0 %577
        %v580 = vmul.f32 %v575, %v578
        %582 = vrot.lane.b32.xlu0 %v580, 32
        %v583 = vpop.permute.xlu0 %582
        %v585 = vadd.f32 %v521, %v583
        %v586 = vtanh.pop %v585
        %v587 = vsub.f32 1.0, %v575
        %589 = vrot.lane.b32.xlu0 %v586, 112
        %v590 = vpop.permute.xlu0 %589
        %v592 = vmul.f32 %v587, %v590
        %v593 = vmul.f32 %v575, %v509
        %v594 = vadd.f32 %v592, %v593
        %596 = vrot.lane.b32.xlu0 %v594, 112
        %v597 = vpop.permute.xlu0 %596
        %s599 = scalar_lea.vmem %s277, %s519 [#allocation3]
        %600 = vst.msk [vmem:[%s599] sm:$0x3] %vm429, %v597
        %s601 = smul.u32 %s431, 3
        %s602 = smul.u32 %s23, 4
        %s603 = sadd.s32 %s601, %s602
        %s604 = smul.u32 %s603, 2
        %s605 = scalar_lea.vmem %s297, %s604
        %v606 = vld [vmem:[%s605] sm:$0x3]
        %v607 = vpack.c.bf16 %v594, %v594
        %609 = vrot.lane.b32.xlu0 %v607, 112
        %v610 = vpop.permute.xlu0 %609
        %v612 = vsel %vm350, %v610, 0
        %614 = vmatprep.subr.bf16.mxu0 0
        %615 = vmatpush1.bf16.msra.mxu0 0
        %616 = vmatprep.subr.bf16.mxu0 0
        %617 = vmatpush1.bf16.msra.mxu0 0
        %618 = vmatprep.subr.bf16.mxu0 0
        %619 = vmatpush1.bf16.msra.mxu0 0
        %620 = vmatprep.subr.bf16.mxu0 0
        %621 = vmatpush1.bf16.msra.mxu0 0
        %622 = vmatprep.subr.bf16.mxu0 0
        %623 = vmatpush1.bf16.msra.mxu0 0
        %624 = vmatprep.subr.bf16.mxu0 0
        %625 = vmatpush1.bf16.msra.mxu0 0
        %626 = vmatprep.subr.bf16.mxu0 0
        %627 = vmatpush1.bf16.msra.mxu0 0
        %628 = vmatprep.subr.bf16.mxu0 0
        %629 = vmatpush1.bf16.msra.mxu0 %v348
        %630 = vmatprep.subr.bf16.mxu0 0
        %631 = vmatpush2.bf16.msra.mxu0 0
        %632 = vmatprep.subr.bf16.mxu0 0
        %633 = vmatpush2.bf16.msra.mxu0 0
        %634 = vmatprep.subr.bf16.mxu0 0
        %635 = vmatpush2.bf16.msra.mxu0 0
        %636 = vmatprep.subr.bf16.mxu0 0
        %637 = vmatpush2.bf16.msra.mxu0 0
        %638 = vmatprep.subr.bf16.mxu0 0
        %639 = vmatpush2.bf16.msra.mxu0 0
        %640 = vmatprep.subr.bf16.mxu0 0
        %641 = vmatpush2.bf16.msra.mxu0 0
        %642 = vmatprep.subr.bf16.mxu0 0
        %643 = vmatpush2.bf16.msra.mxu0 0
        %644 = vmatprep.subr.bf16.mxu0 0
        %645 = vmatpush2.bf16.msra.mxu0 0
        %646 = vmatprep.mubr.bf16.mxu0 0
        %647 = vmatmul.mubr.bf16.gmra.mxu0 %v612
        %v648 = vpop.f32.mrf.mxu0
        %v649 = vadd.f32 %v342, %v648
        %v650 = vpop.f32.mrf.mxu0
        %v651 = vpop.f32.mrf.mxu0
        %v652 = vpop.f32.mrf.mxu0
        %653 = vdwg.mxu0
        %v654 = vadd.f32 %v606, %v649
        %v655 = vxor.u32 %v654, 2147483648
        %v656 = vmul.f32 %v655, 1.442695
        %v657 = vpow.pop %v656
        %v658 = vadd.f32 %v657, 1.0
        %v659 = vrcp.pop %v658
        %v660 = vmul.f32 1.0, %v659
        %662 = vrot.lane.b32.xlu0 %v649, 96
        %v663 = vpop.permute.xlu0 %662
        %v665 = vmul.f32 %v660, %v663
        %667 = vrot.lane.b32.xlu0 %v665, 32
        %v668 = vpop.permute.xlu0 %667
        %v670 = vadd.f32 %v606, %v668
        %v671 = vtanh.pop %v670
        %v672 = vsub.f32 1.0, %v660
        %674 = vrot.lane.b32.xlu0 %v671, 112
        %v675 = vpop.permute.xlu0 %674
        %v677 = vmul.f32 %v672, %v675
        %v678 = vmul.f32 %v660, %v594
        %v679 = vadd.f32 %v677, %v678
        %681 = vrot.lane.b32.xlu0 %v679, 112
        %v682 = vpop.permute.xlu0 %681
        %s684 = scalar_lea.vmem %s277, %s604 [#allocation3]
        %685 = vst.msk [vmem:[%s684] sm:$0x3] %vm429, %v682
        %s686 = smul.u32 %s431, 4
        %s687 = smul.u32 %s23, 3
        %s688 = sadd.s32 %s686, %s687
        %s689 = smul.u32 %s688, 2
        %s690 = scalar_lea.vmem %s297, %s689
        %v691 = vld [vmem:[%s690] sm:$0x3]
        %v692 = vpack.c.bf16 %v679, %v679
        %694 = vrot.lane.b32.xlu0 %v692, 112
        %v695 = vpop.permute.xlu0 %694
        %v697 = vsel %vm350, %v695, 0
        %699 = vmatprep.subr.bf16.mxu0 0
        %700 = vmatpush1.bf16.msra.mxu0 0
        %701 = vmatprep.subr.bf16.mxu0 0
        %702 = vmatpush1.bf16.msra.mxu0 0
        %703 = vmatprep.subr.bf16.mxu0 0
        %704 = vmatpush1.bf16.msra.mxu0 0
        %705 = vmatprep.subr.bf16.mxu0 0
        %706 = vmatpush1.bf16.msra.mxu0 0
        %707 = vmatprep.subr.bf16.mxu0 0
        %708 = vmatpush1.bf16.msra.mxu0 0
        %709 = vmatprep.subr.bf16.mxu0 0
        %710 = vmatpush1.bf16.msra.mxu0 0
        %711 = vmatprep.subr.bf16.mxu0 0
        %712 = vmatpush1.bf16.msra.mxu0 0
        %713 = vmatprep.subr.bf16.mxu0 0
        %714 = vmatpush1.bf16.msra.mxu0 %v348
        %715 = vmatprep.subr.bf16.mxu0 0
        %716 = vmatpush2.bf16.msra.mxu0 0
        %717 = vmatprep.subr.bf16.mxu0 0
        %718 = vmatpush2.bf16.msra.mxu0 0
        %719 = vmatprep.subr.bf16.mxu0 0
        %720 = vmatpush2.bf16.msra.mxu0 0
        %721 = vmatprep.subr.bf16.mxu0 0
        %722 = vmatpush2.bf16.msra.mxu0 0
        %723 = vmatprep.subr.bf16.mxu0 0
        %724 = vmatpush2.bf16.msra.mxu0 0
        %725 = vmatprep.subr.bf16.mxu0 0
        %726 = vmatpush2.bf16.msra.mxu0 0
        %727 = vmatprep.subr.bf16.mxu0 0
        %728 = vmatpush2.bf16.msra.mxu0 0
        %729 = vmatprep.subr.bf16.mxu0 0
        %730 = vmatpush2.bf16.msra.mxu0 0
        %731 = vmatprep.mubr.bf16.mxu0 0
        %732 = vmatmul.mubr.bf16.gmra.mxu0 %v697
        %v733 = vpop.f32.mrf.mxu0
        %v734 = vadd.f32 %v342, %v733
        %v735 = vpop.f32.mrf.mxu0
        %v736 = vpop.f32.mrf.mxu0
        %v737 = vpop.f32.mrf.mxu0
        %738 = vdwg.mxu0
        %v739 = vadd.f32 %v691, %v734
        %v740 = vxor.u32 %v739, 2147483648
        %v741 = vmul.f32 %v740, 1.442695
        %v742 = vpow.pop %v741
        %v743 = vadd.f32 %v742, 1.0
        %v744 = vrcp.pop %v743
        %v745 = vmul.f32 1.0, %v744
        %747 = vrot.lane.b32.xlu0 %v734, 96
        %v748 = vpop.permute.xlu0 %747
        %v750 = vmul.f32 %v745, %v748
        %752 = vrot.lane.b32.xlu0 %v750, 32
        %v753 = vpop.permute.xlu0 %752
        %v755 = vadd.f32 %v691, %v753
        %v756 = vtanh.pop %v755
        %v757 = vsub.f32 1.0, %v745
        %759 = vrot.lane.b32.xlu0 %v756, 112
        %v760 = vpop.permute.xlu0 %759
        %v762 = vmul.f32 %v757, %v760
        %v763 = vmul.f32 %v745, %v679
        %v764 = vadd.f32 %v762, %v763
        %766 = vrot.lane.b32.xlu0 %v764, 112
        %v767 = vpop.permute.xlu0 %766
        %s769 = scalar_lea.vmem %s277, %s689 [#allocation3]
        %770 = vst.msk [vmem:[%s769] sm:$0x3] %vm429, %v767
        %s771 = smul.u32 %s431, 5
        %s772 = smul.u32 %s23, 2
        %s773 = sadd.s32 %s771, %s772
        %s774 = smul.u32 %s773, 2
        %s775 = scalar_lea.vmem %s297, %s774
        %v776 = vld [vmem:[%s775] sm:$0x3]
        %v777 = vpack.c.bf16 %v764, %v764
        %779 = vrot.lane.b32.xlu0 %v777, 112
        %v780 = vpop.permute.xlu0 %779
        %v782 = vsel %vm350, %v780, 0
        %784 = vmatprep.subr.bf16.mxu0 0
        %785 = vmatpush1.bf16.msra.mxu0 0
        %786 = vmatprep.subr.bf16.mxu0 0
        %787 = vmatpush1.bf16.msra.mxu0 0
        %788 = vmatprep.subr.bf16.mxu0 0
        %789 = vmatpush1.bf16.msra.mxu0 0
        %790 = vmatprep.subr.bf16.mxu0 0
        %791 = vmatpush1.bf16.msra.mxu0 0
        %792 = vmatprep.subr.bf16.mxu0 0
        %793 = vmatpush1.bf16.msra.mxu0 0
        %794 = vmatprep.subr.bf16.mxu0 0
        %795 = vmatpush1.bf16.msra.mxu0 0
        %796 = vmatprep.subr.bf16.mxu0 0
        %797 = vmatpush1.bf16.msra.mxu0 0
        %798 = vmatprep.subr.bf16.mxu0 0
        %799 = vmatpush1.bf16.msra.mxu0 %v348
        %800 = vmatprep.subr.bf16.mxu0 0
        %801 = vmatpush2.bf16.msra.mxu0 0
        %802 = vmatprep.subr.bf16.mxu0 0
        %803 = vmatpush2.bf16.msra.mxu0 0
        %804 = vmatprep.subr.bf16.mxu0 0
        %805 = vmatpush2.bf16.msra.mxu0 0
        %806 = vmatprep.subr.bf16.mxu0 0
        %807 = vmatpush2.bf16.msra.mxu0 0
        %808 = vmatprep.subr.bf16.mxu0 0
        %809 = vmatpush2.bf16.msra.mxu0 0
        %810 = vmatprep.subr.bf16.mxu0 0
        %811 = vmatpush2.bf16.msra.mxu0 0
        %812 = vmatprep.subr.bf16.mxu0 0
        %813 = vmatpush2.bf16.msra.mxu0 0
        %814 = vmatprep.subr.bf16.mxu0 0
        %815 = vmatpush2.bf16.msra.mxu0 0
        %816 = vmatprep.mubr.bf16.mxu0 0
        %817 = vmatmul.mubr.bf16.gmra.mxu0 %v782
        %v818 = vpop.f32.mrf.mxu0
        %v819 = vadd.f32 %v342, %v818
        %v820 = vpop.f32.mrf.mxu0
        %v821 = vpop.f32.mrf.mxu0
        %v822 = vpop.f32.mrf.mxu0
        %823 = vdwg.mxu0
        %v824 = vadd.f32 %v776, %v819
        %v825 = vxor.u32 %v824, 2147483648
        %v826 = vmul.f32 %v825, 1.442695
        %v827 = vpow.pop %v826
        %v828 = vadd.f32 %v827, 1.0
        %v829 = vrcp.pop %v828
        %v830 = vmul.f32 1.0, %v829
        %832 = vrot.lane.b32.xlu0 %v819, 96
        %v833 = vpop.permute.xlu0 %832
        %v835 = vmul.f32 %v830, %v833
        %837 = vrot.lane.b32.xlu0 %v835, 32
        %v838 = vpop.permute.xlu0 %837
        %v840 = vadd.f32 %v776, %v838
        %v841 = vtanh.pop %v840
        %v842 = vsub.f32 1.0, %v830
        %844 = vrot.lane.b32.xlu0 %v841, 112
        %v845 = vpop.permute.xlu0 %844
        %v847 = vmul.f32 %v842, %v845
        %v848 = vmul.f32 %v830, %v764
        %v849 = vadd.f32 %v847, %v848
        %851 = vrot.lane.b32.xlu0 %v849, 112
        %v852 = vpop.permute.xlu0 %851
        %s854 = scalar_lea.vmem %s277, %s774 [#allocation3]
        %855 = vst.msk [vmem:[%s854] sm:$0x3] %vm429, %v852
        %s856 = smul.u32 %s431, 6
        %s857 = sadd.s32 %s856, %s23
        %s858 = smul.u32 %s857, 2
        %s859 = scalar_lea.vmem %s297, %s858
        %v860 = vld [vmem:[%s859] sm:$0x3]
        %v861 = vpack.c.bf16 %v849, %v849
        %863 = vrot.lane.b32.xlu0 %v861, 112
        %v864 = vpop.permute.xlu0 %863
        %v866 = vsel %vm350, %v864, 0
        %868 = vmatprep.subr.bf16.mxu0 0
        %869 = vmatpush1.bf16.msra.mxu0 0
        %870 = vmatprep.subr.bf16.mxu0 0
        %871 = vmatpush1.bf16.msra.mxu0 0
        %872 = vmatprep.subr.bf16.mxu0 0
        %873 = vmatpush1.bf16.msra.mxu0 0
        %874 = vmatprep.subr.bf16.mxu0 0
        %875 = vmatpush1.bf16.msra.mxu0 0
        %876 = vmatprep.subr.bf16.mxu0 0
        %877 = vmatpush1.bf16.msra.mxu0 0
        %878 = vmatprep.subr.bf16.mxu0 0
        %879 = vmatpush1.bf16.msra.mxu0 0
        %880 = vmatprep.subr.bf16.mxu0 0
        %881 = vmatpush1.bf16.msra.mxu0 0
        %882 = vmatprep.subr.bf16.mxu0 0
        %883 = vmatpush1.bf16.msra.mxu0 %v348
        %884 = vmatprep.subr.bf16.mxu0 0
        %885 = vmatpush2.bf16.msra.mxu0 0
        %886 = vmatprep.subr.bf16.mxu0 0
        %887 = vmatpush2.bf16.msra.mxu0 0
        %888 = vmatprep.subr.bf16.mxu0 0
        %889 = vmatpush2.bf16.msra.mxu0 0
        %890 = vmatprep.subr.bf16.mxu0 0
        %891 = vmatpush2.bf16.msra.mxu0 0
        %892 = vmatprep.subr.bf16.mxu0 0
        %893 = vmatpush2.bf16.msra.mxu0 0
        %894 = vmatprep.subr.bf16.mxu0 0
        %895 = vmatpush2.bf16.msra.mxu0 0
        %896 = vmatprep.subr.bf16.mxu0 0
        %897 = vmatpush2.bf16.msra.mxu0 0
        %898 = vmatprep.subr.bf16.mxu0 0
        %899 = vmatpush2.bf16.msra.mxu0 0
        %900 = vmatprep.mubr.bf16.mxu0 0
        %901 = vmatmul.mubr.bf16.gmra.mxu0 %v866
        %v902 = vpop.f32.mrf.mxu0
        %v903 = vadd.f32 %v342, %v902
        %v904 = vpop.f32.mrf.mxu0
        %v905 = vpop.f32.mrf.mxu0
        %v906 = vpop.f32.mrf.mxu0
        %907 = vdwg.mxu0
        %v908 = vadd.f32 %v860, %v903
        %v909 = vxor.u32 %v908, 2147483648
        %v910 = vmul.f32 %v909, 1.442695
        %v911 = vpow.pop %v910
        %v912 = vadd.f32 %v911, 1.0
        %v913 = vrcp.pop %v912
        %v914 = vmul.f32 1.0, %v913
        %916 = vrot.lane.b32.xlu0 %v903, 96
        %v917 = vpop.permute.xlu0 %916
        %v919 = vmul.f32 %v914, %v917
        %921 = vrot.lane.b32.xlu0 %v919, 32
        %v922 = vpop.permute.xlu0 %921
        %v924 = vadd.f32 %v860, %v922
        %v925 = vtanh.pop %v924
        %v926 = vsub.f32 1.0, %v914
        %928 = vrot.lane.b32.xlu0 %v925, 112
        %v929 = vpop.permute.xlu0 %928
        %v931 = vmul.f32 %v926, %v929
        %v932 = vmul.f32 %v914, %v849
        %v933 = vadd.f32 %v931, %v932
        %935 = vrot.lane.b32.xlu0 %v933, 112
        %v936 = vpop.permute.xlu0 %935
        %s938 = scalar_lea.vmem %s277, %s858 [#allocation3]
        %939 = vst.msk [vmem:[%s938] sm:$0x3] %vm429, %v936
        %s940 = smul.u32 %s431, 7
        %s941 = smul.u32 %s940, 2
        %s942 = scalar_lea.vmem %s297, %s941
        %v943 = vld [vmem:[%s942] sm:$0x3]
        %v944 = vpack.c.bf16 %v933, %v933
        %946 = vrot.lane.b32.xlu0 %v944, 112
        %v947 = vpop.permute.xlu0 %946
        %v949 = vsel %vm350, %v947, 0
        %951 = vmatprep.subr.bf16.mxu0 0
        %952 = vmatpush1.bf16.msra.mxu0 0
        %953 = vmatprep.subr.bf16.mxu0 0
        %954 = vmatpush1.bf16.msra.mxu0 0
        %955 = vmatprep.subr.bf16.mxu0 0
        %956 = vmatpush1.bf16.msra.mxu0 0
        %957 = vmatprep.subr.bf16.mxu0 0
        %958 = vmatpush1.bf16.msra.mxu0 0
        %959 = vmatprep.subr.bf16.mxu0 0
        %960 = vmatpush1.bf16.msra.mxu0 0
        %961 = vmatprep.subr.bf16.mxu0 0
        %962 = vmatpush1.bf16.msra.mxu0 0
        %963 = vmatprep.subr.bf16.mxu0 0
        %964 = vmatpush1.bf16.msra.mxu0 0
        %965 = vmatprep.subr.bf16.mxu0 0
        %966 = vmatpush1.bf16.msra.mxu0 %v348
        %967 = vmatprep.subr.bf16.mxu0 0
        %968 = vmatpush2.bf16.msra.mxu0 0
        %969 = vmatprep.subr.bf16.mxu0 0
        %970 = vmatpush2.bf16.msra.mxu0 0
        %971 = vmatprep.subr.bf16.mxu0 0
        %972 = vmatpush2.bf16.msra.mxu0 0
        %973 = vmatprep.subr.bf16.mxu0 0
        %974 = vmatpush2.bf16.msra.mxu0 0
        %975 = vmatprep.subr.bf16.mxu0 0
        %976 = vmatpush2.bf16.msra.mxu0 0
        %977 = vmatprep.subr.bf16.mxu0 0
        %978 = vmatpush2.bf16.msra.mxu0 0
        %979 = vmatprep.subr.bf16.mxu0 0
        %980 = vmatpush2.bf16.msra.mxu0 0
        %981 = vmatprep.subr.bf16.mxu0 0
        %982 = vmatpush2.bf16.msra.mxu0 0
        %983 = vmatprep.mubr.bf16.mxu0 0
        %984 = vmatmul.mubr.bf16.gmra.mxu0 %v949
        %v985 = vpop.f32.mrf.mxu0
        %v986 = vadd.f32 %v342, %v985
        %v987 = vpop.f32.mrf.mxu0
        %v988 = vpop.f32.mrf.mxu0
        %v989 = vpop.f32.mrf.mxu0
        %990 = vdwg.mxu0
        %v991 = vadd.f32 %v943, %v986
        %v992 = vxor.u32 %v991, 2147483648
        %v993 = vmul.f32 %v992, 1.442695
        %v994 = vpow.pop %v993
        %v995 = vadd.f32 %v994, 1.0
        %v996 = vrcp.pop %v995
        %v997 = vmul.f32 1.0, %v996
        %999 = vrot.lane.b32.xlu0 %v986, 96
        %v1000 = vpop.permute.xlu0 %999
        %v1002 = vmul.f32 %v997, %v1000
        %1004 = vrot.lane.b32.xlu0 %v1002, 32
        %v1005 = vpop.permute.xlu0 %1004
        %v1007 = vadd.f32 %v943, %v1005
        %v1008 = vtanh.pop %v1007
        %v1009 = vsub.f32 1.0, %v997
        %1011 = vrot.lane.b32.xlu0 %v1008, 112
        %v1012 = vpop.permute.xlu0 %1011
        %v1014 = vmul.f32 %v1009, %v1012
        %v1015 = vmul.f32 %v997, %v933
        %v1016 = vadd.f32 %v1014, %v1015
        %1018 = vrot.lane.b32.xlu0 %v1016, 112
        %v1019 = vpop.permute.xlu0 %1018
        %s1021 = scalar_lea.vmem %s277, %s941 [#allocation3]
        %1022 = vst.msk [vmem:[%s1021] sm:$0x3] %vm429, %v1019
        %1023 = vst.msk [vmem:[#allocation2] sm:$0x3] %vm429, %v1019
        %1024 = vst.msk [vmem:[%s321] sm:$0x3] %vm429, %v1019
        %s1025 = sand.u32 %s141, 1
        %s1026 = scalar_lea.sflag [#allocation4], %s1025
        %s1027 = sand.u32 %s141, 1
        %s1028 = smul.addr %s1027, 16
        %s1029 = scalar_lea.vmem [#allocation3], %s1028
        %p1030 = scmp.lt.s32.totalorder %s23, 1
        %s1031 = scalar_select %p1030, %s23, 1
        %s1032 = smul.addr %s1031, 2
        %s1033 = scalar_lea.vmem %s4, %s1032
        // Predicated region
        $region37: #{_lambda_.30} parent=31 // pred_check
          %p1034 = pneg %p151
        $region38: #{_lambda_.30} parent=31 // pred_check_branch
          %1036 = sbr.rel (%p1034) target = $region40
        $region39: #{_lambda_.30} parent=31 // pred_region
          %s1037 = ssub.s32 1, %s23
          %s1038 = smul.u32 %s1037, %s24
          %s1039 = ssub.s32 0, %s24
          %s1040 = smul.u32 %s23, %s1039
          %s1041 = sadd.s32 %s1038, %s1040
          %s1042 = smul.u32 8, %s1041
          %s1044 = ssub.s32 256, 256
          %1045 = vsyncadd %s1026, %s1044
          %s1046 = smul.addr %s23, 8
          %s1047 = sadd.s32 %s1042, %s1046
          %s1048 = smul.addr %s1047, 32
          %s1049 = scalar_lea.hbm %s3, %s1048
          %s1050 = sshll.u32 %s1029, 4
          %s1051 = int_to_ptr.vmem [resolvable:$true] %s1050
          %1056 = dma.vmem_to_hbm [thread:$0]  %s1051, 256, %s1049, %s1026, 32, 32, 2
        $region40: #{_lambda_.30} parent=31 // pred_fallthru
          _
        // Predicated region
        $region41: #{_lambda_.30} parent=31 // pred_check
          %p1057 = pneg %p177
        $region42: #{_lambda_.30} parent=31 // pred_check_branch
          %1059 = sbr.rel (%p1057) target = $region44
        $region43: #{_lambda_.30} parent=31 // pred_region
          _
        $region44: #{_lambda_.30} parent=31 // pred_fallthru
          _
      $region32: #{_lambda_.30} parent=5 // pred_fallthru
        _
      %p1060 = scmp.le.s32.totalorder 2, %s14
      // Predicated region
      $region45: #{_lambda_.30} parent=5 // pred_check
        %p1061 = pneg %p1060
      $region46: #{_lambda_.30} parent=5 // pred_check_branch
        %1063 = sbr.rel (%p1061) target = $region48
      $region47: #{_lambda_.30} parent=5 // pred_region
        %s1064 = ssub.s32 %s14, 2
        // Predicated region
        $region49: #{_lambda_.30} parent=47 // pred_check
          %p1065 = pneg %p157
        $region50: #{_lambda_.30} parent=47 // pred_check_branch
          %1067 = sbr.rel (%p1065) target = $region52
        $region51: #{_lambda_.30} parent=47 // pred_region
          %s1068 = sand.u32 %s142, 1
          %s1069 = scalar_lea.sflag [#allocation4], %s1068
          %s1070 = sand.u32 %s142, 1
          %s1071 = smul.addr %s1070, 16
          %s1072 = scalar_lea.vmem [#allocation3], %s1071
          %1073 = dma.done %s1069, 256
        $region52: #{_lambda_.30} parent=47 // pred_fallthru
          _
        // Predicated region
        $region53: #{_lambda_.30} parent=47 // pred_check
          %p1074 = pneg %p183
        $region54: #{_lambda_.30} parent=47 // pred_check_branch
          %1076 = sbr.rel (%p1074) target = $region56
        $region55: #{_lambda_.30} parent=47 // pred_region
          %p1077 = scmp.lt.s32.totalorder %s25, 1
          %s1078 = scalar_select %p1077, %s25, 1
          %s1079 = smul.addr %s1078, 2
          %s1080 = scalar_lea.vmem %s4, %s1079
        $region56: #{_lambda_.30} parent=47 // pred_fallthru
          _
      $region48: #{_lambda_.30} parent=5 // pred_fallthru
        _
    $region6: #{_lambda_.30} parent=1 // loop_footer
      %s18 = sadd.s32 1, %s14
    $region7: #{_lambda_.30} parent=1 // loop_footer_branch
      %13 = sbr.rel target = $region3
    $region8: #{_lambda_.30} parent=1 // loop_exit
      _
    %1081 = vsyncpa [#allocation4], 1
    %s1082 = scalar_lea.sflag [#allocation4], 1
    %1083 = vsyncpa %s1082, 1

</llo_original>
